<compile_context>
chip_gen: v7x
topology: tpu7x:2x2x1
jax: 0.10.0
libtpu: 0.0.40
codegen_flags: <defaults>
</compile_context>

<pallas_src>
import functools
import math

import jax
import jax.numpy as jnp
from jax.experimental import pallas as pl
from jax.experimental.pallas import tpu as pltpu

_EPS = 1e-5


def _nbytes(shape, dtype):
    return math.prod(shape) * jnp.dtype(dtype).itemsize


def _make_kernel(pool, B, H, W, Cin, Cout, matmul_dtype):
    """pool = 2 if down_size (the wrapper stacks the 4 corners of every 2x2 window on
    the two leading dims of the kernel input), else 1.  H, W are post-pool dims."""
    N = B * H * W
    inv_n = 1.0 / N

    def zero_pad_rows(pad_ref, c):
        # Zero only the top/bottom padded rows as full-width (lane-parallel) slabs.
        zrow = jnp.zeros((B, 1, W + 2, c), matmul_dtype)
        pad_ref[:, 0:1, :, :] = zrow
        pad_ref[:, H + 1:H + 2, :, :] = zrow

    def fill_padded(pad_ref, x, c):
        # Interior store with the 1-pixel left/right zero columns folded into the same
        # full-width store, so no separate 1-sublane masked column stores are needed.
        zcol = jnp.zeros((B, H, 1, c), matmul_dtype)
        pad_ref[:, 1:H + 1, :, :] = jnp.concatenate(
            [zcol, x.astype(matmul_dtype), zcol], axis=2)

    def conv_bn_relu(xpad_ref, patches_ref, w_ref, gamma, beta, cin):
        # --- im2col directly into a preallocated VMEM scratch: each 3x3 tap writes its
        #     (N, cin) shifted window into its own channel slice (no concat temporary),
        #     then ONE MXU matmul (N, 9*cin) @ (9*cin, Cout) with f32 accumulation. ---
        for dy in range(3):
            for dx in range(3):
                t = dy * 3 + dx
                win = xpad_ref[:, dy:dy + H, dx:dx + W, :]          # (B, H, W, cin)
                patches_ref[:, t * cin:(t + 1) * cin] = win.reshape(N, cin)
        y = jnp.dot(patches_ref[...], w_ref[...],
                    preferred_element_type=jnp.float32)             # (N, Cout) f32
        # Conv bias intentionally omitted: training-mode BN subtracts the per-channel
        # mean, which cancels any constant per-channel bias exactly.

        # --- BatchNorm2d (training mode): centered two-pass variance (robust against
        #     cancellation with bf16 matmul operands), fused affine + ReLU (all f32). ---
        mean = jnp.sum(y, axis=0, keepdims=True) * inv_n             # (1, Cout)
        d = y - mean
        var = jnp.maximum(jnp.sum(d * d, axis=0, keepdims=True) * inv_n, 0.0)
        scale = jax.lax.rsqrt(var + _EPS) * gamma                    # gamma folded in
        out = jnp.maximum(d * scale + beta, 0.0)                     # one FMA + max
        return out.reshape(B, H, W, Cout)

    def kernel(x_ref,
               w1_ref, g1_ref, be1_ref,
               w2_ref, g2_ref, be2_ref,
               w3_ref, g3_ref, be3_ref,
               o_ref, pad_a_ref, pad_b_ref, patch_a_ref, patch_b_ref):
        # --- optional 2x2 / stride-2 max pool: elementwise max of the 4 corner planes
        #     (kept in f32 on the VPU; v5e has no bf16 VPU path). ---
        x = x_ref[0, 0]
        for i in range(pool):
            for j in range(pool):
                if i == 0 and j == 0:
                    continue
                x = jnp.maximum(x, x_ref[i, j])

        # Zero the padded top/bottom rows once per scratch; interiors (with folded-in
        # zero columns) are fully overwritten before every conv.
        zero_pad_rows(pad_a_ref, Cin)
        zero_pad_rows(pad_b_ref, Cout)

        # --- conv1 + bn1 + relu ---
        fill_padded(pad_a_ref, x, Cin)
        h = conv_bn_relu(pad_a_ref, patch_a_ref, w1_ref,
                         g1_ref[...], be1_ref[...], Cin)

        # --- conv2 + bn2 + relu ---
        fill_padded(pad_b_ref, h, Cout)
        h = conv_bn_relu(pad_b_ref, patch_b_ref, w2_ref,
                         g2_ref[...], be2_ref[...], Cout)

        # --- conv3 + bn3 + relu (pad_b's zero border rows are still valid) ---
        fill_padded(pad_b_ref, h, Cout)
        h = conv_bn_relu(pad_b_ref, patch_b_ref, w3_ref,
                         g3_ref[...], be3_ref[...], Cout)

        # TODO(synk): at toy Cout=8 this store uses 8/128 lanes (masked vst); at
        # production UNet channel counts (Cout >= 128, kept a multiple of 128) the
        # channels-last layout is already lane-dense, so keep the safe layout here.
        o_ref[...] = h

    return kernel


def unet_down_block_forward(x_nchw, params, *, down_size,
                            matmul_dtype=jnp.bfloat16):
    """Forward pass.  matmul_dtype controls MXU operand precision only (accumulation
    and all BatchNorm math stay f32); pass jnp.float32 for bit-parity with PyTorch."""
    x = x_nchw.astype(jnp.float32)
    B, Cin, H, W = x.shape
    Cout = params["w1"].shape[-1]
    if down_size:
        H2, W2 = H // 2, W // 2                      # floor, like MaxPool2d(2, 2)
        # Single fused reshape+transpose: NCHW -> (2, 2, B, H2, W2, Cin); the two
        # leading dims index the 4 corners of each 2x2 pool window (one HBM pass).
        xk = x[:, :, :2 * H2, :2 * W2].reshape(B, Cin, H2, 2, W2, 2)
        xk = xk.transpose(3, 5, 0, 2, 4, 1)
        pool = 2
    else:
        H2, W2 = H, W
        xk = jnp.transpose(x, (0, 2, 3, 1))[None, None]   # (1, 1, B, H, W, Cin)
        pool = 1
    N = B * H2 * W2

    # Conv weights (HWIO) reshaped wrapper-side to im2col form (9*Cin, Cout) — row order
    # (dy, dx, cin) matches the in-kernel patch layout — and cast to the MXU operand
    # dtype.  At production sizes keep Cout a multiple of 128 (MXU / lane alignment).
    w1 = params["w1"].reshape(9 * Cin, Cout).astype(matmul_dtype)
    w2 = params["w2"].reshape(9 * Cout, Cout).astype(matmul_dtype)
    w3 = params["w3"].reshape(9 * Cout, Cout).astype(matmul_dtype)

    # VMEM budget derived from the actual allocations (+25% / +4 MiB headroom for
    # Mosaic-internal relayout copies), capped below physical VMEM.
    f32 = jnp.float32
    buf_bytes = (
        _nbytes(xk.shape, f32)
        + sum(_nbytes(w.shape, matmul_dtype) for w in (w1, w2, w3))
        + 6 * _nbytes((1, Cout), f32)
        + _nbytes((B, H2, W2, Cout), f32)                      # output
        + _nbytes((B, H2 + 2, W2 + 2, Cin), matmul_dtype)      # pad_a scratch
        + _nbytes((B, H2 + 2, W2 + 2, Cout), matmul_dtype)     # pad_b scratch
        + _nbytes((N, 9 * Cin), matmul_dtype)                  # patches (conv1)
        + _nbytes((N, 9 * Cout), matmul_dtype)                 # patches (conv2/3)
        + 4 * _nbytes((N, Cout), f32)                          # y / y-mean / BN temps
        + _nbytes((B, H2, W2 + 2, max(Cin, Cout)), f32)        # folded-border slab temp
    )
    vmem_limit = min(int(buf_bytes * 1.25) + (4 << 20), 96 << 20)

    kernel = _make_kernel(pool, B, H2, W2, Cin, Cout, matmul_dtype)
    # TODO(synk): training-mode BatchNorm couples every pixel at each of the 3 stages,
    # so this stays one gridless invocation at small shapes.  For production UNet
    # shapes (and v7x's 64 MiB VMEM / 2 TensorCores) tile over H-strips with a 1-row
    # halo and a two-phase BN (pass 1: per-strip conv + partial sum(y)/sum(y^2);
    # pass 2: scale/shift + ReLU), marking the strip axis "parallel" for megacore.
    out_nhwc = pl.pallas_call(
        kernel,
        out_shape=jax.ShapeDtypeStruct((B, H2, W2, Cout), jnp.float32),
        in_specs=[pl.BlockSpec(memory_space=pltpu.MemorySpace.VMEM)] * 10,
        out_specs=pl.BlockSpec(memory_space=pltpu.MemorySpace.VMEM),
        scratch_shapes=[
            pltpu.VMEM((B, H2 + 2, W2 + 2, Cin), matmul_dtype),   # padded conv1 input
            pltpu.VMEM((B, H2 + 2, W2 + 2, Cout), matmul_dtype),  # padded conv2/3 input
            pltpu.VMEM((N, 9 * Cin), matmul_dtype),               # im2col patches conv1
            pltpu.VMEM((N, 9 * Cout), matmul_dtype),              # im2col patches conv2/3
        ],
        compiler_params=pltpu.CompilerParams(vmem_limit_bytes=vmem_limit),
    )(xk,
      w1, params["g1"], params["be1"],
      w2, params["g2"], params["be2"],
      w3, params["g3"], params["be3"])
    # TODO(synk): when chaining down blocks, keep the NHWC boundary (skip this transpose
    # and accept NHWC input) to avoid a full HBM relayout of the activation per block.
    return jnp.transpose(out_nhwc, (0, 3, 1, 2))                   # NHWC -> NCHW


def unet_down_block_reference(x_nchw, params, *, down_size,
                              matmul_dtype=jnp.float32):
    """Plain-JAX reference with the original module semantics (bias kept, two-pass BN).
    matmul_dtype matches the kernel's MXU operand precision for apples-to-apples."""
    x = jnp.transpose(x_nchw, (0, 2, 3, 1)).astype(jnp.float32)
    if down_size:
        B, H, W, C = x.shape
        x = jnp.max(x[:, :H // 2 * 2, :W // 2 * 2, :]
                    .reshape(B, H // 2, 2, W // 2, 2, C), axis=(2, 4))

    def layer(x, w, b, g, be):
        y = jax.lax.conv_general_dilated(
            x.astype(matmul_dtype), w.astype(matmul_dtype),
            window_strides=(1, 1), padding=((1, 1), (1, 1)),
            dimension_numbers=("NHWC", "HWIO", "NHWC"),
            preferred_element_type=jnp.float32) + b.reshape(1, 1, 1, -1)
        mean = jnp.mean(y, axis=(0, 1, 2), keepdims=True)
        var = jnp.mean(jnp.square(y - mean), axis=(0, 1, 2), keepdims=True)
        yh = (y - mean) * jax.lax.rsqrt(var + _EPS)
        return jnp.maximum(yh * g.reshape(1, 1, 1, -1) + be.reshape(1, 1, 1, -1), 0.0)

    x = layer(x, params["w1"], params["b1"], params["g1"], params["be1"])
    x = layer(x, params["w2"], params["b2"], params["g2"], params["be2"])
    x = layer(x, params["w3"], params["b3"], params["g3"], params["be3"])
    return jnp.transpose(x, (0, 3, 1, 2))


def init_params(key, cin, cout):
    """Deterministic init mimicking torch.nn.Conv2d / BatchNorm2d defaults (HWIO)."""
    ks = jax.random.split(key, 6)

    def conv_init(kw, kb, ci):
        bound = (ci * 9) ** -0.5
        w = jax.random.uniform(kw, (3, 3, ci, cout), jnp.float32, -bound, bound)
        b = jax.random.uniform(kb, (1, cout), jnp.float32, -bound, bound)
        return w, b

    w1, b1 = conv_init(ks[0], ks[1], cin)
    w2, b2 = conv_init(ks[2], ks[3], cout)
    w3, b3 = conv_init(ks[4], ks[5], cout)
    g = jnp.ones((1, cout), jnp.float32)     # BatchNorm weight (gamma) init
    be = jnp.zeros((1, cout), jnp.float32)   # BatchNorm bias (beta) init
    return dict(w1=w1, b1=b1, g1=g, be1=be,
                w2=w2, b2=b2, g2=g, be2=be,
                w3=w3, b3=b3, g3=g, be3=be)


if __name__ == "__main__":
    key = jax.random.PRNGKey(0)
    kx, kp = jax.random.split(key)
    B, Cin, Cout, H, W = 2, 4, 8, 16, 16        # input_channel=4, output_channel=8
    x = jax.random.normal(kx, (B, Cin, H, W), jnp.float32)
    params = init_params(kp, Cin, Cout)

    # Check both the bf16-MXU default (v6e/v7x) and the f32 bit-parity path, each
    # against a matmul-dtype-matched plain-JAX reference of the original module.
    for dtype, tol in ((jnp.bfloat16, 2e-2), (jnp.float32, 1e-3)):
        fwd = jax.jit(functools.partial(unet_down_block_forward,
                                        down_size=True, matmul_dtype=dtype))
        out = jax.block_until_ready(fwd(x, params))
        assert out.shape == (B, Cout, H // 2, W // 2), out.shape
        ref = unet_down_block_reference(x, params, down_size=True, matmul_dtype=dtype)
        err = float(jnp.max(jnp.abs(out - ref)))
        if err > tol:
            raise AssertionError(
                f"mismatch vs reference (matmul_dtype={jnp.dtype(dtype).name}): "
                f"max abs err {err}")
    print("KERNEL_OK")
</pallas_src>

<mosaic_0001>
module attributes {stable_mosaic.version = 11 : i64} {
  func.func @kernel(%arg0: memref<2x2x2x8x8x4xf32, #tpu.memory_space<vmem>>, %arg1: memref<36x8xbf16, #tpu.memory_space<vmem>>, %arg2: memref<1x8xf32, #tpu.memory_space<vmem>>, %arg3: memref<1x8xf32, #tpu.memory_space<vmem>>, %arg4: memref<72x8xbf16, #tpu.memory_space<vmem>>, %arg5: memref<1x8xf32, #tpu.memory_space<vmem>>, %arg6: memref<1x8xf32, #tpu.memory_space<vmem>>, %arg7: memref<72x8xbf16, #tpu.memory_space<vmem>>, %arg8: memref<1x8xf32, #tpu.memory_space<vmem>>, %arg9: memref<1x8xf32, #tpu.memory_space<vmem>>, %arg10: memref<2x8x8x8xf32, #tpu.memory_space<vmem>>, %arg11: memref<2x10x10x4xbf16, #tpu.memory_space<vmem>>, %arg12: memref<2x10x10x8xbf16, #tpu.memory_space<vmem>>, %arg13: memref<128x36xbf16, #tpu.memory_space<vmem>>, %arg14: memref<128x72xbf16, #tpu.memory_space<vmem>>) attributes {dimension_semantics = [], scalar_prefetch = 0 : i64, scratch_operands = 4 : i64, tpu.core_type = #tpu.core_type<tc>} {
    %c0 = arith.constant 0 : index
    %c0_0 = arith.constant 0 : index
    %c0_1 = arith.constant 0 : index
    %c0_2 = arith.constant 0 : index
    %c0_3 = arith.constant 0 : index
    %c0_4 = arith.constant 0 : index
    %0 = vector.load %arg0[%c0, %c0_0, %c0_1, %c0_2, %c0_3, %c0_4] : memref<2x2x2x8x8x4xf32, #tpu.memory_space<vmem>>, vector<1x1x2x8x8x4xf32>
    %1 = vector.shape_cast %0 : vector<1x1x2x8x8x4xf32> to vector<2x8x8x4xf32>
    %c0_5 = arith.constant 0 : index
    %c1 = arith.constant 1 : index
    %c0_6 = arith.constant 0 : index
    %c0_7 = arith.constant 0 : index
    %c0_8 = arith.constant 0 : index
    %c0_9 = arith.constant 0 : index
    %2 = vector.load %arg0[%c0_5, %c1, %c0_6, %c0_7, %c0_8, %c0_9] : memref<2x2x2x8x8x4xf32, #tpu.memory_space<vmem>>, vector<1x1x2x8x8x4xf32>
    %3 = vector.shape_cast %2 : vector<1x1x2x8x8x4xf32> to vector<2x8x8x4xf32>
    %4 = arith.maximumf %1, %3 : vector<2x8x8x4xf32>
    %c1_10 = arith.constant 1 : index
    %c0_11 = arith.constant 0 : index
    %c0_12 = arith.constant 0 : index
    %c0_13 = arith.constant 0 : index
    %c0_14 = arith.constant 0 : index
    %c0_15 = arith.constant 0 : index
    %5 = vector.load %arg0[%c1_10, %c0_11, %c0_12, %c0_13, %c0_14, %c0_15] : memref<2x2x2x8x8x4xf32, #tpu.memory_space<vmem>>, vector<1x1x2x8x8x4xf32>
    %6 = vector.shape_cast %5 : vector<1x1x2x8x8x4xf32> to vector<2x8x8x4xf32>
    %7 = arith.maximumf %4, %6 : vector<2x8x8x4xf32>
    %c1_16 = arith.constant 1 : index
    %c1_17 = arith.constant 1 : index
    %c0_18 = arith.constant 0 : index
    %c0_19 = arith.constant 0 : index
    %c0_20 = arith.constant 0 : index
    %c0_21 = arith.constant 0 : index
    %8 = vector.load %arg0[%c1_16, %c1_17, %c0_18, %c0_19, %c0_20, %c0_21] : memref<2x2x2x8x8x4xf32, #tpu.memory_space<vmem>>, vector<1x1x2x8x8x4xf32>
    %9 = vector.shape_cast %8 : vector<1x1x2x8x8x4xf32> to vector<2x8x8x4xf32>
    %10 = arith.maximumf %7, %9 : vector<2x8x8x4xf32>
    %cst = arith.constant 0.000000e+00 : bf16
    %11 = vector.broadcast %cst : bf16 to vector<2x1x10x4xbf16>
    %c0_22 = arith.constant 0 : index
    %c0_23 = arith.constant 0 : index
    %c0_24 = arith.constant 0 : index
    %c0_25 = arith.constant 0 : index
    %12 = vector.load %arg11[%c0_22, %c0_23, %c0_24, %c0_25] : memref<2x10x10x4xbf16, #tpu.memory_space<vmem>>, vector<2x1x10x4xbf16>
    tpu.vector_store %arg11[%c0_22, %c0_23, %c0_24, %c0_25], %11 {strides = array<i32>} : memref<2x10x10x4xbf16, #tpu.memory_space<vmem>>, vector<2x1x10x4xbf16>,
    %c0_26 = arith.constant 0 : index
    %c9 = arith.constant 9 : index
    %c0_27 = arith.constant 0 : index
    %c0_28 = arith.constant 0 : index
    %13 = vector.load %arg11[%c0_26, %c9, %c0_27, %c0_28] : memref<2x10x10x4xbf16, #tpu.memory_space<vmem>>, vector<2x1x10x4xbf16>
    tpu.vector_store %arg11[%c0_26, %c9, %c0_27, %c0_28], %11 {strides = array<i32>} : memref<2x10x10x4xbf16, #tpu.memory_space<vmem>>, vector<2x1x10x4xbf16>,
    %cst_29 = arith.constant 0.000000e+00 : bf16
    %14 = vector.broadcast %cst_29 : bf16 to vector<2x1x10x8xbf16>
    %c0_30 = arith.constant 0 : index
    %c0_31 = arith.constant 0 : index
    %c0_32 = arith.constant 0 : index
    %c0_33 = arith.constant 0 : index
    %15 = vector.load %arg12[%c0_30, %c0_31, %c0_32, %c0_33] : memref<2x10x10x8xbf16, #tpu.memory_space<vmem>>, vector<2x1x10x8xbf16>
    tpu.vector_store %arg12[%c0_30, %c0_31, %c0_32, %c0_33], %14 {strides = array<i32>} : memref<2x10x10x8xbf16, #tpu.memory_space<vmem>>, vector<2x1x10x8xbf16>,
    %c0_34 = arith.constant 0 : index
    %c9_35 = arith.constant 9 : index
    %c0_36 = arith.constant 0 : index
    %c0_37 = arith.constant 0 : index
    %16 = vector.load %arg12[%c0_34, %c9_35, %c0_36, %c0_37] : memref<2x10x10x8xbf16, #tpu.memory_space<vmem>>, vector<2x1x10x8xbf16>
    tpu.vector_store %arg12[%c0_34, %c9_35, %c0_36, %c0_37], %14 {strides = array<i32>} : memref<2x10x10x8xbf16, #tpu.memory_space<vmem>>, vector<2x1x10x8xbf16>,
    %cst_38 = arith.constant 0.000000e+00 : bf16
    %17 = vector.broadcast %cst_38 : bf16 to vector<2x8x1x4xbf16>
    %18 = arith.truncf %10 : vector<2x8x8x4xf32> to vector<2x8x8x4xbf16>
    %19 = tpu.concatenate %17, %18, %17 in 2 : vector<2x8x1x4xbf16>, vector<2x8x8x4xbf16>, vector<2x8x1x4xbf16> -> vector<2x8x10x4xbf16>
    %c0_39 = arith.constant 0 : index
    %c1_40 = arith.constant 1 : index
    %c0_41 = arith.constant 0 : index
    %c0_42 = arith.constant 0 : index
    %20 = vector.load %arg11[%c0_39, %c1_40, %c0_41, %c0_42] : memref<2x10x10x4xbf16, #tpu.memory_space<vmem>>, vector<2x8x10x4xbf16>
    tpu.vector_store %arg11[%c0_39, %c1_40, %c0_41, %c0_42], %19 {strides = array<i32>} : memref<2x10x10x4xbf16, #tpu.memory_space<vmem>>, vector<2x8x10x4xbf16>,
    %c0_43 = arith.constant 0 : index
    %c0_44 = arith.constant 0 : index
    %21 = vector.load %arg2[%c0_43, %c0_44] : memref<1x8xf32, #tpu.memory_space<vmem>>, vector<1x8xf32>
    %c0_45 = arith.constant 0 : index
    %c0_46 = arith.constant 0 : index
    %22 = vector.load %arg3[%c0_45, %c0_46] : memref<1x8xf32, #tpu.memory_space<vmem>>, vector<1x8xf32>
    %c0_47 = arith.constant 0 : index
    %c0_48 = arith.constant 0 : index
    %c0_49 = arith.constant 0 : index
    %c0_50 = arith.constant 0 : index
    %23 = vector.load %arg11[%c0_47, %c0_48, %c0_49, %c0_50] : memref<2x10x10x4xbf16, #tpu.memory_space<vmem>>, vector<2x8x8x4xbf16>
    %24 = vector.shape_cast %23 : vector<2x8x8x4xbf16> to vector<128x4xbf16>
    %c0_51 = arith.constant 0 : index
    %c0_52 = arith.constant 0 : index
    %25 = vector.load %arg13[%c0_51, %c0_52] : memref<128x36xbf16, #tpu.memory_space<vmem>>, vector<128x4xbf16>
    tpu.vector_store %arg13[%c0_51, %c0_52], %24 {strides = array<i32>} : memref<128x36xbf16, #tpu.memory_space<vmem>>, vector<128x4xbf16>,
    %c0_53 = arith.constant 0 : index
    %c0_54 = arith.constant 0 : index
    %c1_55 = arith.constant 1 : index
    %c0_56 = arith.constant 0 : index
    %26 = vector.load %arg11[%c0_53, %c0_54, %c1_55, %c0_56] : memref<2x10x10x4xbf16, #tpu.memory_space<vmem>>, vector<2x8x8x4xbf16>
    %27 = vector.shape_cast %26 : vector<2x8x8x4xbf16> to vector<128x4xbf16>
    %c0_57 = arith.constant 0 : index
    %c4 = arith.constant 4 : index
    %28 = vector.load %arg13[%c0_57, %c4] : memref<128x36xbf16, #tpu.memory_space<vmem>>, vector<128x4xbf16>
    tpu.vector_store %arg13[%c0_57, %c4], %27 {strides = array<i32>} : memref<128x36xbf16, #tpu.memory_space<vmem>>, vector<128x4xbf16>,
    %c0_58 = arith.constant 0 : index
    %c0_59 = arith.constant 0 : index
    %c2 = arith.constant 2 : index
    %c0_60 = arith.constant 0 : index
    %29 = vector.load %arg11[%c0_58, %c0_59, %c2, %c0_60] : memref<2x10x10x4xbf16, #tpu.memory_space<vmem>>, vector<2x8x8x4xbf16>
    %30 = vector.shape_cast %29 : vector<2x8x8x4xbf16> to vector<128x4xbf16>
    %c0_61 = arith.constant 0 : index
    %c8 = arith.constant 8 : index
    %31 = vector.load %arg13[%c0_61, %c8] : memref<128x36xbf16, #tpu.memory_space<vmem>>, vector<128x4xbf16>
    tpu.vector_store %arg13[%c0_61, %c8], %30 {strides = array<i32>} : memref<128x36xbf16, #tpu.memory_space<vmem>>, vector<128x4xbf16>,
    %c0_62 = arith.constant 0 : index
    %c1_63 = arith.constant 1 : index
    %c0_64 = arith.constant 0 : index
    %c0_65 = arith.constant 0 : index
    %32 = vector.load %arg11[%c0_62, %c1_63, %c0_64, %c0_65] : memref<2x10x10x4xbf16, #tpu.memory_space<vmem>>, vector<2x8x8x4xbf16>
    %33 = vector.shape_cast %32 : vector<2x8x8x4xbf16> to vector<128x4xbf16>
    %c0_66 = arith.constant 0 : index
    %c12 = arith.constant 12 : index
    %34 = vector.load %arg13[%c0_66, %c12] : memref<128x36xbf16, #tpu.memory_space<vmem>>, vector<128x4xbf16>
    tpu.vector_store %arg13[%c0_66, %c12], %33 {strides = array<i32>} : memref<128x36xbf16, #tpu.memory_space<vmem>>, vector<128x4xbf16>,
    %c0_67 = arith.constant 0 : index
    %c1_68 = arith.constant 1 : index
    %c1_69 = arith.constant 1 : index
    %c0_70 = arith.constant 0 : index
    %35 = vector.load %arg11[%c0_67, %c1_68, %c1_69, %c0_70] : memref<2x10x10x4xbf16, #tpu.memory_space<vmem>>, vector<2x8x8x4xbf16>
    %36 = vector.shape_cast %35 : vector<2x8x8x4xbf16> to vector<128x4xbf16>
    %c0_71 = arith.constant 0 : index
    %c16 = arith.constant 16 : index
    %37 = vector.load %arg13[%c0_71, %c16] : memref<128x36xbf16, #tpu.memory_space<vmem>>, vector<128x4xbf16>
    tpu.vector_store %arg13[%c0_71, %c16], %36 {strides = array<i32>} : memref<128x36xbf16, #tpu.memory_space<vmem>>, vector<128x4xbf16>,
    %c0_72 = arith.constant 0 : index
    %c1_73 = arith.constant 1 : index
    %c2_74 = arith.constant 2 : index
    %c0_75 = arith.constant 0 : index
    %38 = vector.load %arg11[%c0_72, %c1_73, %c2_74, %c0_75] : memref<2x10x10x4xbf16, #tpu.memory_space<vmem>>, vector<2x8x8x4xbf16>
    %39 = vector.shape_cast %38 : vector<2x8x8x4xbf16> to vector<128x4xbf16>
    %c0_76 = arith.constant 0 : index
    %c20 = arith.constant 20 : index
    %40 = vector.load %arg13[%c0_76, %c20] : memref<128x36xbf16, #tpu.memory_space<vmem>>, vector<128x4xbf16>
    tpu.vector_store %arg13[%c0_76, %c20], %39 {strides = array<i32>} : memref<128x36xbf16, #tpu.memory_space<vmem>>, vector<128x4xbf16>,
    %c0_77 = arith.constant 0 : index
    %c2_78 = arith.constant 2 : index
    %c0_79 = arith.constant 0 : index
    %c0_80 = arith.constant 0 : index
    %41 = vector.load %arg11[%c0_77, %c2_78, %c0_79, %c0_80] : memref<2x10x10x4xbf16, #tpu.memory_space<vmem>>, vector<2x8x8x4xbf16>
    %42 = vector.shape_cast %41 : vector<2x8x8x4xbf16> to vector<128x4xbf16>
    %c0_81 = arith.constant 0 : index
    %c24 = arith.constant 24 : index
    %43 = vector.load %arg13[%c0_81, %c24] : memref<128x36xbf16, #tpu.memory_space<vmem>>, vector<128x4xbf16>
    tpu.vector_store %arg13[%c0_81, %c24], %42 {strides = array<i32>} : memref<128x36xbf16, #tpu.memory_space<vmem>>, vector<128x4xbf16>,
    %c0_82 = arith.constant 0 : index
    %c2_83 = arith.constant 2 : index
    %c1_84 = arith.constant 1 : index
    %c0_85 = arith.constant 0 : index
    %44 = vector.load %arg11[%c0_82, %c2_83, %c1_84, %c0_85] : memref<2x10x10x4xbf16, #tpu.memory_space<vmem>>, vector<2x8x8x4xbf16>
    %45 = vector.shape_cast %44 : vector<2x8x8x4xbf16> to vector<128x4xbf16>
    %c0_86 = arith.constant 0 : index
    %c28 = arith.constant 28 : index
    %46 = vector.load %arg13[%c0_86, %c28] : memref<128x36xbf16, #tpu.memory_space<vmem>>, vector<128x4xbf16>
    tpu.vector_store %arg13[%c0_86, %c28], %45 {strides = array<i32>} : memref<128x36xbf16, #tpu.memory_space<vmem>>, vector<128x4xbf16>,
    %c0_87 = arith.constant 0 : index
    %c2_88 = arith.constant 2 : index
    %c2_89 = arith.constant 2 : index
    %c0_90 = arith.constant 0 : index
    %47 = vector.load %arg11[%c0_87, %c2_88, %c2_89, %c0_90] : memref<2x10x10x4xbf16, #tpu.memory_space<vmem>>, vector<2x8x8x4xbf16>
    %48 = vector.shape_cast %47 : vector<2x8x8x4xbf16> to vector<128x4xbf16>
    %c0_91 = arith.constant 0 : index
    %c32 = arith.constant 32 : index
    %49 = vector.load %arg13[%c0_91, %c32] : memref<128x36xbf16, #tpu.memory_space<vmem>>, vector<128x4xbf16>
    tpu.vector_store %arg13[%c0_91, %c32], %48 {strides = array<i32>} : memref<128x36xbf16, #tpu.memory_space<vmem>>, vector<128x4xbf16>,
    %c0_92 = arith.constant 0 : index
    %c0_93 = arith.constant 0 : index
    %50 = vector.load %arg13[%c0_92, %c0_93] : memref<128x36xbf16, #tpu.memory_space<vmem>>, vector<128x36xbf16>
    %c0_94 = arith.constant 0 : index
    %c0_95 = arith.constant 0 : index
    %51 = vector.load %arg1[%c0_94, %c0_95] : memref<36x8xbf16, #tpu.memory_space<vmem>>, vector<36x8xbf16>
    %cst_96 = arith.constant dense<0.000000e+00> : vector<128x8xf32>
    %52 = tpu.matmul %50, %51, %cst_96 {dimension_numbers = #tpu.dot_dimension_numbers<[1], [0], [0], [1], [0, 0, 1, 1], [], []>} : vector<128x36xbf16>, vector<36x8xbf16>, vector<128x8xf32> -> vector<128x8xf32>
    %cst_97 = arith.constant dense<0.000000e+00> : vector<8xf32>
    %53 = vector.multi_reduction <add>, %52, %cst_97 [0] : vector<128x8xf32> to vector<8xf32>
    %54 = vector.shape_cast %53 : vector<8xf32> to vector<1x8xf32>
    %cst_98 = arith.constant 7.812500e-03 : f32
    %55 = vector.broadcast %cst_98 : f32 to vector<1x8xf32>
    %56 = arith.mulf %54, %55 : vector<1x8xf32>
    %57 = vector.broadcast %56 : vector<1x8xf32> to vector<128x8xf32>
    %58 = arith.subf %52, %57 : vector<128x8xf32>
    %59 = arith.mulf %58, %58 : vector<128x8xf32>
    %cst_99 = arith.constant dense<0.000000e+00> : vector<8xf32>
    %60 = vector.multi_reduction <add>, %59, %cst_99 [0] : vector<128x8xf32> to vector<8xf32>
    %61 = vector.shape_cast %60 : vector<8xf32> to vector<1x8xf32>
    %cst_100 = arith.constant 7.812500e-03 : f32
    %62 = vector.broadcast %cst_100 : f32 to vector<1x8xf32>
    %63 = arith.mulf %61, %62 : vector<1x8xf32>
    %cst_101 = arith.constant 0.000000e+00 : f32
    %64 = vector.broadcast %cst_101 : f32 to vector<1x8xf32>
    %65 = arith.maximumf %63, %64 : vector<1x8xf32>
    %cst_102 = arith.constant 9.99999974E-6 : f32
    %66 = vector.broadcast %cst_102 : f32 to vector<1x8xf32>
    %67 = arith.addf %65, %66 : vector<1x8xf32>
    %68 = math.rsqrt %67 : vector<1x8xf32>
    %69 = arith.mulf %68, %21 : vector<1x8xf32>
    %70 = vector.broadcast %69 : vector<1x8xf32> to vector<128x8xf32>
    %71 = arith.mulf %58, %70 : vector<128x8xf32>
    %72 = vector.broadcast %22 : vector<1x8xf32> to vector<128x8xf32>
    %73 = arith.addf %71, %72 : vector<128x8xf32>
    %cst_103 = arith.constant 0.000000e+00 : f32
    %74 = vector.broadcast %cst_103 : f32 to vector<128x8xf32>
    %75 = arith.maximumf %73, %74 : vector<128x8xf32>
    %76 = vector.shape_cast %75 : vector<128x8xf32> to vector<2x8x8x8xf32>
    %cst_104 = arith.constant 0.000000e+00 : bf16
    %77 = vector.broadcast %cst_104 : bf16 to vector<2x8x1x8xbf16>
    %78 = arith.truncf %76 : vector<2x8x8x8xf32> to vector<2x8x8x8xbf16>
    %79 = tpu.concatenate %77, %78, %77 in 2 : vector<2x8x1x8xbf16>, vector<2x8x8x8xbf16>, vector<2x8x1x8xbf16> -> vector<2x8x10x8xbf16>
    %c0_105 = arith.constant 0 : index
    %c1_106 = arith.constant 1 : index
    %c0_107 = arith.constant 0 : index
    %c0_108 = arith.constant 0 : index
    %80 = vector.load %arg12[%c0_105, %c1_106, %c0_107, %c0_108] : memref<2x10x10x8xbf16, #tpu.memory_space<vmem>>, vector<2x8x10x8xbf16>
    tpu.vector_store %arg12[%c0_105, %c1_106, %c0_107, %c0_108], %79 {strides = array<i32>} : memref<2x10x10x8xbf16, #tpu.memory_space<vmem>>, vector<2x8x10x8xbf16>,
    %c0_109 = arith.constant 0 : index
    %c0_110 = arith.constant 0 : index
    %81 = vector.load %arg5[%c0_109, %c0_110] : memref<1x8xf32, #tpu.memory_space<vmem>>, vector<1x8xf32>
    %c0_111 = arith.constant 0 : index
    %c0_112 = arith.constant 0 : index
    %82 = vector.load %arg6[%c0_111, %c0_112] : memref<1x8xf32, #tpu.memory_space<vmem>>, vector<1x8xf32>
    %c0_113 = arith.constant 0 : index
    %c0_114 = arith.constant 0 : index
    %c0_115 = arith.constant 0 : index
    %c0_116 = arith.constant 0 : index
    %83 = vector.load %arg12[%c0_113, %c0_114, %c0_115, %c0_116] : memref<2x10x10x8xbf16, #tpu.memory_space<vmem>>, vector<2x8x8x8xbf16>
    %84 = vector.shape_cast %83 : vector<2x8x8x8xbf16> to vector<128x8xbf16>
    %c0_117 = arith.constant 0 : index
    %c0_118 = arith.constant 0 : index
    %85 = vector.load %arg14[%c0_117, %c0_118] : memref<128x72xbf16, #tpu.memory_space<vmem>>, vector<128x8xbf16>
    tpu.vector_store %arg14[%c0_117, %c0_118], %84 {strides = array<i32>} : memref<128x72xbf16, #tpu.memory_space<vmem>>, vector<128x8xbf16>,
    %c0_119 = arith.constant 0 : index
    %c0_120 = arith.constant 0 : index
    %c1_121 = arith.constant 1 : index
    %c0_122 = arith.constant 0 : index
    %86 = vector.load %arg12[%c0_119, %c0_120, %c1_121, %c0_122] : memref<2x10x10x8xbf16, #tpu.memory_space<vmem>>, vector<2x8x8x8xbf16>
    %87 = vector.shape_cast %86 : vector<2x8x8x8xbf16> to vector<128x8xbf16>
    %c0_123 = arith.constant 0 : index
    %c8_124 = arith.constant 8 : index
    %88 = vector.load %arg14[%c0_123, %c8_124] : memref<128x72xbf16, #tpu.memory_space<vmem>>, vector<128x8xbf16>
    tpu.vector_store %arg14[%c0_123, %c8_124], %87 {strides = array<i32>} : memref<128x72xbf16, #tpu.memory_space<vmem>>, vector<128x8xbf16>,
    %c0_125 = arith.constant 0 : index
    %c0_126 = arith.constant 0 : index
    %c2_127 = arith.constant 2 : index
    %c0_128 = arith.constant 0 : index
    %89 = vector.load %arg12[%c0_125, %c0_126, %c2_127, %c0_128] : memref<2x10x10x8xbf16, #tpu.memory_space<vmem>>, vector<2x8x8x8xbf16>
    %90 = vector.shape_cast %89 : vector<2x8x8x8xbf16> to vector<128x8xbf16>
    %c0_129 = arith.constant 0 : index
    %c16_130 = arith.constant 16 : index
    %91 = vector.load %arg14[%c0_129, %c16_130] : memref<128x72xbf16, #tpu.memory_space<vmem>>, vector<128x8xbf16>
    tpu.vector_store %arg14[%c0_129, %c16_130], %90 {strides = array<i32>} : memref<128x72xbf16, #tpu.memory_space<vmem>>, vector<128x8xbf16>,
    %c0_131 = arith.constant 0 : index
    %c1_132 = arith.constant 1 : index
    %c0_133 = arith.constant 0 : index
    %c0_134 = arith.constant 0 : index
    %92 = vector.load %arg12[%c0_131, %c1_132, %c0_133, %c0_134] : memref<2x10x10x8xbf16, #tpu.memory_space<vmem>>, vector<2x8x8x8xbf16>
    %93 = vector.shape_cast %92 : vector<2x8x8x8xbf16> to vector<128x8xbf16>
    %c0_135 = arith.constant 0 : index
    %c24_136 = arith.constant 24 : index
    %94 = vector.load %arg14[%c0_135, %c24_136] : memref<128x72xbf16, #tpu.memory_space<vmem>>, vector<128x8xbf16>
    tpu.vector_store %arg14[%c0_135, %c24_136], %93 {strides = array<i32>} : memref<128x72xbf16, #tpu.memory_space<vmem>>, vector<128x8xbf16>,
    %c0_137 = arith.constant 0 : index
    %c1_138 = arith.constant 1 : index
    %c1_139 = arith.constant 1 : index
    %c0_140 = arith.constant 0 : index
    %95 = vector.load %arg12[%c0_137, %c1_138, %c1_139, %c0_140] : memref<2x10x10x8xbf16, #tpu.memory_space<vmem>>, vector<2x8x8x8xbf16>
    %96 = vector.shape_cast %95 : vector<2x8x8x8xbf16> to vector<128x8xbf16>
    %c0_141 = arith.constant 0 : index
    %c32_142 = arith.constant 32 : index
    %97 = vector.load %arg14[%c0_141, %c32_142] : memref<128x72xbf16, #tpu.memory_space<vmem>>, vector<128x8xbf16>
    tpu.vector_store %arg14[%c0_141, %c32_142], %96 {strides = array<i32>} : memref<128x72xbf16, #tpu.memory_space<vmem>>, vector<128x8xbf16>,
    %c0_143 = arith.constant 0 : index
    %c1_144 = arith.constant 1 : index
    %c2_145 = arith.constant 2 : index
    %c0_146 = arith.constant 0 : index
    %98 = vector.load %arg12[%c0_143, %c1_144, %c2_145, %c0_146] : memref<2x10x10x8xbf16, #tpu.memory_space<vmem>>, vector<2x8x8x8xbf16>
    %99 = vector.shape_cast %98 : vector<2x8x8x8xbf16> to vector<128x8xbf16>
    %c0_147 = arith.constant 0 : index
    %c40 = arith.constant 40 : index
    %100 = vector.load %arg14[%c0_147, %c40] : memref<128x72xbf16, #tpu.memory_space<vmem>>, vector<128x8xbf16>
    tpu.vector_store %arg14[%c0_147, %c40], %99 {strides = array<i32>} : memref<128x72xbf16, #tpu.memory_space<vmem>>, vector<128x8xbf16>,
    %c0_148 = arith.constant 0 : index
    %c2_149 = arith.constant 2 : index
    %c0_150 = arith.constant 0 : index
    %c0_151 = arith.constant 0 : index
    %101 = vector.load %arg12[%c0_148, %c2_149, %c0_150, %c0_151] : memref<2x10x10x8xbf16, #tpu.memory_space<vmem>>, vector<2x8x8x8xbf16>
    %102 = vector.shape_cast %101 : vector<2x8x8x8xbf16> to vector<128x8xbf16>
    %c0_152 = arith.constant 0 : index
    %c48 = arith.constant 48 : index
    %103 = vector.load %arg14[%c0_152, %c48] : memref<128x72xbf16, #tpu.memory_space<vmem>>, vector<128x8xbf16>
    tpu.vector_store %arg14[%c0_152, %c48], %102 {strides = array<i32>} : memref<128x72xbf16, #tpu.memory_space<vmem>>, vector<128x8xbf16>,
    %c0_153 = arith.constant 0 : index
    %c2_154 = arith.constant 2 : index
    %c1_155 = arith.constant 1 : index
    %c0_156 = arith.constant 0 : index
    %104 = vector.load %arg12[%c0_153, %c2_154, %c1_155, %c0_156] : memref<2x10x10x8xbf16, #tpu.memory_space<vmem>>, vector<2x8x8x8xbf16>
    %105 = vector.shape_cast %104 : vector<2x8x8x8xbf16> to vector<128x8xbf16>
    %c0_157 = arith.constant 0 : index
    %c56 = arith.constant 56 : index
    %106 = vector.load %arg14[%c0_157, %c56] : memref<128x72xbf16, #tpu.memory_space<vmem>>, vector<128x8xbf16>
    tpu.vector_store %arg14[%c0_157, %c56], %105 {strides = array<i32>} : memref<128x72xbf16, #tpu.memory_space<vmem>>, vector<128x8xbf16>,
    %c0_158 = arith.constant 0 : index
    %c2_159 = arith.constant 2 : index
    %c2_160 = arith.constant 2 : index
    %c0_161 = arith.constant 0 : index
    %107 = vector.load %arg12[%c0_158, %c2_159, %c2_160, %c0_161] : memref<2x10x10x8xbf16, #tpu.memory_space<vmem>>, vector<2x8x8x8xbf16>
    %108 = vector.shape_cast %107 : vector<2x8x8x8xbf16> to vector<128x8xbf16>
    %c0_162 = arith.constant 0 : index
    %c64 = arith.constant 64 : index
    %109 = vector.load %arg14[%c0_162, %c64] : memref<128x72xbf16, #tpu.memory_space<vmem>>, vector<128x8xbf16>
    tpu.vector_store %arg14[%c0_162, %c64], %108 {strides = array<i32>} : memref<128x72xbf16, #tpu.memory_space<vmem>>, vector<128x8xbf16>,
    %c0_163 = arith.constant 0 : index
    %c0_164 = arith.constant 0 : index
    %110 = vector.load %arg14[%c0_163, %c0_164] : memref<128x72xbf16, #tpu.memory_space<vmem>>, vector<128x72xbf16>
    %c0_165 = arith.constant 0 : index
    %c0_166 = arith.constant 0 : index
    %111 = vector.load %arg4[%c0_165, %c0_166] : memref<72x8xbf16, #tpu.memory_space<vmem>>, vector<72x8xbf16>
    %cst_167 = arith.constant dense<0.000000e+00> : vector<128x8xf32>
    %112 = tpu.matmul %110, %111, %cst_167 {dimension_numbers = #tpu.dot_dimension_numbers<[1], [0], [0], [1], [0, 0, 1, 1], [], []>} : vector<128x72xbf16>, vector<72x8xbf16>, vector<128x8xf32> -> vector<128x8xf32>
    %cst_168 = arith.constant dense<0.000000e+00> : vector<8xf32>
    %113 = vector.multi_reduction <add>, %112, %cst_168 [0] : vector<128x8xf32> to vector<8xf32>
    %114 = vector.shape_cast %113 : vector<8xf32> to vector<1x8xf32>
    %cst_169 = arith.constant 7.812500e-03 : f32
    %115 = vector.broadcast %cst_169 : f32 to vector<1x8xf32>
    %116 = arith.mulf %114, %115 : vector<1x8xf32>
    %117 = vector.broadcast %116 : vector<1x8xf32> to vector<128x8xf32>
    %118 = arith.subf %112, %117 : vector<128x8xf32>
    %119 = arith.mulf %118, %118 : vector<128x8xf32>
    %cst_170 = arith.constant dense<0.000000e+00> : vector<8xf32>
    %120 = vector.multi_reduction <add>, %119, %cst_170 [0] : vector<128x8xf32> to vector<8xf32>
    %121 = vector.shape_cast %120 : vector<8xf32> to vector<1x8xf32>
    %cst_171 = arith.constant 7.812500e-03 : f32
    %122 = vector.broadcast %cst_171 : f32 to vector<1x8xf32>
    %123 = arith.mulf %121, %122 : vector<1x8xf32>
    %cst_172 = arith.constant 0.000000e+00 : f32
    %124 = vector.broadcast %cst_172 : f32 to vector<1x8xf32>
    %125 = arith.maximumf %123, %124 : vector<1x8xf32>
    %cst_173 = arith.constant 9.99999974E-6 : f32
    %126 = vector.broadcast %cst_173 : f32 to vector<1x8xf32>
    %127 = arith.addf %125, %126 : vector<1x8xf32>
    %128 = math.rsqrt %127 : vector<1x8xf32>
    %129 = arith.mulf %128, %81 : vector<1x8xf32>
    %130 = vector.broadcast %129 : vector<1x8xf32> to vector<128x8xf32>
    %131 = arith.mulf %118, %130 : vector<128x8xf32>
    %132 = vector.broadcast %82 : vector<1x8xf32> to vector<128x8xf32>
    %133 = arith.addf %131, %132 : vector<128x8xf32>
    %cst_174 = arith.constant 0.000000e+00 : f32
    %134 = vector.broadcast %cst_174 : f32 to vector<128x8xf32>
    %135 = arith.maximumf %133, %134 : vector<128x8xf32>
    %136 = vector.shape_cast %135 : vector<128x8xf32> to vector<2x8x8x8xf32>
    %cst_175 = arith.constant 0.000000e+00 : bf16
    %137 = vector.broadcast %cst_175 : bf16 to vector<2x8x1x8xbf16>
    %138 = arith.truncf %136 : vector<2x8x8x8xf32> to vector<2x8x8x8xbf16>
    %139 = tpu.concatenate %137, %138, %137 in 2 : vector<2x8x1x8xbf16>, vector<2x8x8x8xbf16>, vector<2x8x1x8xbf16> -> vector<2x8x10x8xbf16>
    %c0_176 = arith.constant 0 : index
    %c1_177 = arith.constant 1 : index
    %c0_178 = arith.constant 0 : index
    %c0_179 = arith.constant 0 : index
    %140 = vector.load %arg12[%c0_176, %c1_177, %c0_178, %c0_179] : memref<2x10x10x8xbf16, #tpu.memory_space<vmem>>, vector<2x8x10x8xbf16>
    tpu.vector_store %arg12[%c0_176, %c1_177, %c0_178, %c0_179], %139 {strides = array<i32>} : memref<2x10x10x8xbf16, #tpu.memory_space<vmem>>, vector<2x8x10x8xbf16>,
    %c0_180 = arith.constant 0 : index
    %c0_181 = arith.constant 0 : index
    %141 = vector.load %arg8[%c0_180, %c0_181] : memref<1x8xf32, #tpu.memory_space<vmem>>, vector<1x8xf32>
    %c0_182 = arith.constant 0 : index
    %c0_183 = arith.constant 0 : index
    %142 = vector.load %arg9[%c0_182, %c0_183] : memref<1x8xf32, #tpu.memory_space<vmem>>, vector<1x8xf32>
    %c0_184 = arith.constant 0 : index
    %c0_185 = arith.constant 0 : index
    %c0_186 = arith.constant 0 : index
    %c0_187 = arith.constant 0 : index
    %143 = vector.load %arg12[%c0_184, %c0_185, %c0_186, %c0_187] : memref<2x10x10x8xbf16, #tpu.memory_space<vmem>>, vector<2x8x8x8xbf16>
    %144 = vector.shape_cast %143 : vector<2x8x8x8xbf16> to vector<128x8xbf16>
    %c0_188 = arith.constant 0 : index
    %c0_189 = arith.constant 0 : index
    %145 = vector.load %arg14[%c0_188, %c0_189] : memref<128x72xbf16, #tpu.memory_space<vmem>>, vector<128x8xbf16>
    tpu.vector_store %arg14[%c0_188, %c0_189], %144 {strides = array<i32>} : memref<128x72xbf16, #tpu.memory_space<vmem>>, vector<128x8xbf16>,
    %c0_190 = arith.constant 0 : index
    %c0_191 = arith.constant 0 : index
    %c1_192 = arith.constant 1 : index
    %c0_193 = arith.constant 0 : index
    %146 = vector.load %arg12[%c0_190, %c0_191, %c1_192, %c0_193] : memref<2x10x10x8xbf16, #tpu.memory_space<vmem>>, vector<2x8x8x8xbf16>
    %147 = vector.shape_cast %146 : vector<2x8x8x8xbf16> to vector<128x8xbf16>
    %c0_194 = arith.constant 0 : index
    %c8_195 = arith.constant 8 : index
    %148 = vector.load %arg14[%c0_194, %c8_195] : memref<128x72xbf16, #tpu.memory_space<vmem>>, vector<128x8xbf16>
    tpu.vector_store %arg14[%c0_194, %c8_195], %147 {strides = array<i32>} : memref<128x72xbf16, #tpu.memory_space<vmem>>, vector<128x8xbf16>,
    %c0_196 = arith.constant 0 : index
    %c0_197 = arith.constant 0 : index
    %c2_198 = arith.constant 2 : index
    %c0_199 = arith.constant 0 : index
    %149 = vector.load %arg12[%c0_196, %c0_197, %c2_198, %c0_199] : memref<2x10x10x8xbf16, #tpu.memory_space<vmem>>, vector<2x8x8x8xbf16>
    %150 = vector.shape_cast %149 : vector<2x8x8x8xbf16> to vector<128x8xbf16>
    %c0_200 = arith.constant 0 : index
    %c16_201 = arith.constant 16 : index
    %151 = vector.load %arg14[%c0_200, %c16_201] : memref<128x72xbf16, #tpu.memory_space<vmem>>, vector<128x8xbf16>
    tpu.vector_store %arg14[%c0_200, %c16_201], %150 {strides = array<i32>} : memref<128x72xbf16, #tpu.memory_space<vmem>>, vector<128x8xbf16>,
    %c0_202 = arith.constant 0 : index
    %c1_203 = arith.constant 1 : index
    %c0_204 = arith.constant 0 : index
    %c0_205 = arith.constant 0 : index
    %152 = vector.load %arg12[%c0_202, %c1_203, %c0_204, %c0_205] : memref<2x10x10x8xbf16, #tpu.memory_space<vmem>>, vector<2x8x8x8xbf16>
    %153 = vector.shape_cast %152 : vector<2x8x8x8xbf16> to vector<128x8xbf16>
    %c0_206 = arith.constant 0 : index
    %c24_207 = arith.constant 24 : index
    %154 = vector.load %arg14[%c0_206, %c24_207] : memref<128x72xbf16, #tpu.memory_space<vmem>>, vector<128x8xbf16>
    tpu.vector_store %arg14[%c0_206, %c24_207], %153 {strides = array<i32>} : memref<128x72xbf16, #tpu.memory_space<vmem>>, vector<128x8xbf16>,
    %c0_208 = arith.constant 0 : index
    %c1_209 = arith.constant 1 : index
    %c1_210 = arith.constant 1 : index
    %c0_211 = arith.constant 0 : index
    %155 = vector.load %arg12[%c0_208, %c1_209, %c1_210, %c0_211] : memref<2x10x10x8xbf16, #tpu.memory_space<vmem>>, vector<2x8x8x8xbf16>
    %156 = vector.shape_cast %155 : vector<2x8x8x8xbf16> to vector<128x8xbf16>
    %c0_212 = arith.constant 0 : index
    %c32_213 = arith.constant 32 : index
    %157 = vector.load %arg14[%c0_212, %c32_213] : memref<128x72xbf16, #tpu.memory_space<vmem>>, vector<128x8xbf16>
    tpu.vector_store %arg14[%c0_212, %c32_213], %156 {strides = array<i32>} : memref<128x72xbf16, #tpu.memory_space<vmem>>, vector<128x8xbf16>,
    %c0_214 = arith.constant 0 : index
    %c1_215 = arith.constant 1 : index
    %c2_216 = arith.constant 2 : index
    %c0_217 = arith.constant 0 : index
    %158 = vector.load %arg12[%c0_214, %c1_215, %c2_216, %c0_217] : memref<2x10x10x8xbf16, #tpu.memory_space<vmem>>, vector<2x8x8x8xbf16>
    %159 = vector.shape_cast %158 : vector<2x8x8x8xbf16> to vector<128x8xbf16>
    %c0_218 = arith.constant 0 : index
    %c40_219 = arith.constant 40 : index
    %160 = vector.load %arg14[%c0_218, %c40_219] : memref<128x72xbf16, #tpu.memory_space<vmem>>, vector<128x8xbf16>
    tpu.vector_store %arg14[%c0_218, %c40_219], %159 {strides = array<i32>} : memref<128x72xbf16, #tpu.memory_space<vmem>>, vector<128x8xbf16>,
    %c0_220 = arith.constant 0 : index
    %c2_221 = arith.constant 2 : index
    %c0_222 = arith.constant 0 : index
    %c0_223 = arith.constant 0 : index
    %161 = vector.load %arg12[%c0_220, %c2_221, %c0_222, %c0_223] : memref<2x10x10x8xbf16, #tpu.memory_space<vmem>>, vector<2x8x8x8xbf16>
    %162 = vector.shape_cast %161 : vector<2x8x8x8xbf16> to vector<128x8xbf16>
    %c0_224 = arith.constant 0 : index
    %c48_225 = arith.constant 48 : index
    %163 = vector.load %arg14[%c0_224, %c48_225] : memref<128x72xbf16, #tpu.memory_space<vmem>>, vector<128x8xbf16>
    tpu.vector_store %arg14[%c0_224, %c48_225], %162 {strides = array<i32>} : memref<128x72xbf16, #tpu.memory_space<vmem>>, vector<128x8xbf16>,
    %c0_226 = arith.constant 0 : index
    %c2_227 = arith.constant 2 : index
    %c1_228 = arith.constant 1 : index
    %c0_229 = arith.constant 0 : index
    %164 = vector.load %arg12[%c0_226, %c2_227, %c1_228, %c0_229] : memref<2x10x10x8xbf16, #tpu.memory_space<vmem>>, vector<2x8x8x8xbf16>
    %165 = vector.shape_cast %164 : vector<2x8x8x8xbf16> to vector<128x8xbf16>
    %c0_230 = arith.constant 0 : index
    %c56_231 = arith.constant 56 : index
    %166 = vector.load %arg14[%c0_230, %c56_231] : memref<128x72xbf16, #tpu.memory_space<vmem>>, vector<128x8xbf16>
    tpu.vector_store %arg14[%c0_230, %c56_231], %165 {strides = array<i32>} : memref<128x72xbf16, #tpu.memory_space<vmem>>, vector<128x8xbf16>,
    %c0_232 = arith.constant 0 : index
    %c2_233 = arith.constant 2 : index
    %c2_234 = arith.constant 2 : index
    %c0_235 = arith.constant 0 : index
    %167 = vector.load %arg12[%c0_232, %c2_233, %c2_234, %c0_235] : memref<2x10x10x8xbf16, #tpu.memory_space<vmem>>, vector<2x8x8x8xbf16>
    %168 = vector.shape_cast %167 : vector<2x8x8x8xbf16> to vector<128x8xbf16>
    %c0_236 = arith.constant 0 : index
    %c64_237 = arith.constant 64 : index
    %169 = vector.load %arg14[%c0_236, %c64_237] : memref<128x72xbf16, #tpu.memory_space<vmem>>, vector<128x8xbf16>
    tpu.vector_store %arg14[%c0_236, %c64_237], %168 {strides = array<i32>} : memref<128x72xbf16, #tpu.memory_space<vmem>>, vector<128x8xbf16>,
    %c0_238 = arith.constant 0 : index
    %c0_239 = arith.constant 0 : index
    %170 = vector.load %arg14[%c0_238, %c0_239] : memref<128x72xbf16, #tpu.memory_space<vmem>>, vector<128x72xbf16>
    %c0_240 = arith.constant 0 : index
    %c0_241 = arith.constant 0 : index
    %171 = vector.load %arg7[%c0_240, %c0_241] : memref<72x8xbf16, #tpu.memory_space<vmem>>, vector<72x8xbf16>
    %cst_242 = arith.constant dense<0.000000e+00> : vector<128x8xf32>
    %172 = tpu.matmul %170, %171, %cst_242 {dimension_numbers = #tpu.dot_dimension_numbers<[1], [0], [0], [1], [0, 0, 1, 1], [], []>} : vector<128x72xbf16>, vector<72x8xbf16>, vector<128x8xf32> -> vector<128x8xf32>
    %cst_243 = arith.constant dense<0.000000e+00> : vector<8xf32>
    %173 = vector.multi_reduction <add>, %172, %cst_243 [0] : vector<128x8xf32> to vector<8xf32>
    %174 = vector.shape_cast %173 : vector<8xf32> to vector<1x8xf32>
    %cst_244 = arith.constant 7.812500e-03 : f32
    %175 = vector.broadcast %cst_244 : f32 to vector<1x8xf32>
    %176 = arith.mulf %174, %175 : vector<1x8xf32>
    %177 = vector.broadcast %176 : vector<1x8xf32> to vector<128x8xf32>
    %178 = arith.subf %172, %177 : vector<128x8xf32>
    %179 = arith.mulf %178, %178 : vector<128x8xf32>
    %cst_245 = arith.constant dense<0.000000e+00> : vector<8xf32>
    %180 = vector.multi_reduction <add>, %179, %cst_245 [0] : vector<128x8xf32> to vector<8xf32>
    %181 = vector.shape_cast %180 : vector<8xf32> to vector<1x8xf32>
    %cst_246 = arith.constant 7.812500e-03 : f32
    %182 = vector.broadcast %cst_246 : f32 to vector<1x8xf32>
    %183 = arith.mulf %181, %182 : vector<1x8xf32>
    %cst_247 = arith.constant 0.000000e+00 : f32
    %184 = vector.broadcast %cst_247 : f32 to vector<1x8xf32>
    %185 = arith.maximumf %183, %184 : vector<1x8xf32>
    %cst_248 = arith.constant 9.99999974E-6 : f32
    %186 = vector.broadcast %cst_248 : f32 to vector<1x8xf32>
    %187 = arith.addf %185, %186 : vector<1x8xf32>
    %188 = math.rsqrt %187 : vector<1x8xf32>
    %189 = arith.mulf %188, %141 : vector<1x8xf32>
    %190 = vector.broadcast %189 : vector<1x8xf32> to vector<128x8xf32>
    %191 = arith.mulf %178, %190 : vector<128x8xf32>
    %192 = vector.broadcast %142 : vector<1x8xf32> to vector<128x8xf32>
    %193 = arith.addf %191, %192 : vector<128x8xf32>
    %cst_249 = arith.constant 0.000000e+00 : f32
    %194 = vector.broadcast %cst_249 : f32 to vector<128x8xf32>
    %195 = arith.maximumf %193, %194 : vector<128x8xf32>
    %196 = vector.shape_cast %195 : vector<128x8xf32> to vector<2x8x8x8xf32>
    %c0_250 = arith.constant 0 : index
    %c0_251 = arith.constant 0 : index
    %c0_252 = arith.constant 0 : index
    %c0_253 = arith.constant 0 : index
    %197 = vector.load %arg10[%c0_250, %c0_251, %c0_252, %c0_253] : memref<2x8x8x8xf32, #tpu.memory_space<vmem>>, vector<2x8x8x8xf32>
    tpu.vector_store %arg10[%c0_250, %c0_251, %c0_252, %c0_253], %196 {strides = array<i32>} : memref<2x8x8x8xf32, #tpu.memory_space<vmem>>, vector<2x8x8x8xf32>,
    return
  }
}

</mosaic_0001>

<llo_original>
// kernel: unet_down_block_forward.1
$region0: #{unet_down_block_forward.1}
  #allocation0 [shape = 'u32[]', space=smem, size = 0x4, offset = 0x4, fixed_abs, tag = 'smem constant byte address 0x4 - core index']
  #allocation1 [shape = 'u32[144,128]{1,0:T(1,128)}', space=vmem, size = 0x12000, scoped, tag = 'internal scratch']
  #allocation2 [shape = 'bf16[2,10,10,4]{3,2,1,0:T(8,128)(2,1)}', space=vmem, size = 0x14000, scoped, tag = 'scratch operand']
  #allocation3 [shape = 'bf16[2,10,10,8]{3,2,1,0:T(8,128)(2,1)}', space=vmem, size = 0x14000, scoped, tag = 'scratch operand']
  #allocation4 [shape = 'bf16[128,36]{1,0:T(16,128)(2,1)}', space=vmem, size = 0x8000, scoped, tag = 'scratch operand']
  #allocation5 [shape = 'bf16[128,72]{1,0:T(16,128)(2,1)}', space=vmem, size = 0x8000, scoped, tag = 'scratch operand']
  %s0 = inlined_call_operand.vmem [shape: f32[2,2,2,8,8,4], index: 0, kind: input, shape index: {}]
  %s1 = inlined_call_operand.vmem [shape: bf16[36,8], index: 1, kind: input, shape index: {}]
  %s2 = inlined_call_operand.vmem [shape: f32[1,8], index: 2, kind: input, shape index: {}]
  %s3 = inlined_call_operand.vmem [shape: f32[1,8], index: 3, kind: input, shape index: {}]
  %s4 = inlined_call_operand.vmem [shape: bf16[72,8], index: 4, kind: input, shape index: {}]
  %s5 = inlined_call_operand.vmem [shape: f32[1,8], index: 5, kind: input, shape index: {}]
  %s6 = inlined_call_operand.vmem [shape: f32[1,8], index: 6, kind: input, shape index: {}]
  %s7 = inlined_call_operand.vmem [shape: bf16[72,8], index: 7, kind: input, shape index: {}]
  %s8 = inlined_call_operand.vmem [shape: f32[1,8], index: 8, kind: input, shape index: {}]
  %s9 = inlined_call_operand.vmem [shape: f32[1,8], index: 9, kind: input, shape index: {}]
  %s10 = inlined_call_operand.vmem [shape: f32[2,8,8,8], index: 10, kind: output, shape index: {}]
  %s11 = sld [smem:[#allocation0]]
  $region50: #{unet_down_block_forward.1} parent=0
    _
  %s13 = ssub.s32 1, %s11
  %s14 = scalar_select 0, %s13, %s11
  // Predicated region
  $region2: #{unet_down_block_forward.1} parent=0 // pred_check
    _
  $region3: #{unet_down_block_forward.1} parent=0 // pred_check_branch
    %16 = sbr.rel (0) target = $region5
  $region4: #{unet_down_block_forward.1} parent=0 // pred_region
    _
  $region5: #{unet_down_block_forward.1} parent=0 // pred_fallthru
    _
  // Predicated region
  $region6: #{unet_down_block_forward.1} parent=0 // pred_check
    _
  $region7: #{unet_down_block_forward.1} parent=0 // pred_check_branch
    %18 = sbr.rel (0) target = $region9
  $region8: #{unet_down_block_forward.1} parent=0 // pred_region
    _
  $region9: #{unet_down_block_forward.1} parent=0 // pred_fallthru
    _
  // Predicated region
  $region10: #{unet_down_block_forward.1} parent=0 // pred_check
    _
  $region11: #{unet_down_block_forward.1} parent=0 // pred_check_branch
    %20 = sbr.rel (0) target = $region13
  $region12: #{unet_down_block_forward.1} parent=0 // pred_region
    _
  $region13: #{unet_down_block_forward.1} parent=0 // pred_fallthru
    _
  // Predicated region
  $region14: #{unet_down_block_forward.1} parent=0 // pred_check
    _
  $region15: #{unet_down_block_forward.1} parent=0 // pred_check_branch
    %22 = sbr.rel (0) target = $region17
  $region16: #{unet_down_block_forward.1} parent=0 // pred_region
    _
  $region17: #{unet_down_block_forward.1} parent=0 // pred_fallthru
    _
  // Predicated region
  $region18: #{unet_down_block_forward.1} parent=0 // pred_check
    _
  $region19: #{unet_down_block_forward.1} parent=0 // pred_check_branch
    %24 = sbr.rel (0) target = $region21
  $region20: #{unet_down_block_forward.1} parent=0 // pred_region
    _
  $region21: #{unet_down_block_forward.1} parent=0 // pred_fallthru
    _
  // Predicated region
  $region22: #{unet_down_block_forward.1} parent=0 // pred_check
    _
  $region23: #{unet_down_block_forward.1} parent=0 // pred_check_branch
    %26 = sbr.rel (0) target = $region25
  $region24: #{unet_down_block_forward.1} parent=0 // pred_region
    _
  $region25: #{unet_down_block_forward.1} parent=0 // pred_fallthru
    _
  // Predicated region
  $region26: #{unet_down_block_forward.1} parent=0 // pred_check
    _
  $region27: #{unet_down_block_forward.1} parent=0 // pred_check_branch
    %28 = sbr.rel (0) target = $region29
  $region28: #{unet_down_block_forward.1} parent=0 // pred_region
    _
  $region29: #{unet_down_block_forward.1} parent=0 // pred_fallthru
    _
  // Predicated region
  $region30: #{unet_down_block_forward.1} parent=0 // pred_check
    _
  $region31: #{unet_down_block_forward.1} parent=0 // pred_check_branch
    %30 = sbr.rel (0) target = $region33
  $region32: #{unet_down_block_forward.1} parent=0 // pred_region
    _
  $region33: #{unet_down_block_forward.1} parent=0 // pred_fallthru
    _
  // Predicated region
  $region34: #{unet_down_block_forward.1} parent=0 // pred_check
    _
  $region35: #{unet_down_block_forward.1} parent=0 // pred_check_branch
    %32 = sbr.rel (0) target = $region37
  $region36: #{unet_down_block_forward.1} parent=0 // pred_region
    _
  $region37: #{unet_down_block_forward.1} parent=0 // pred_fallthru
    _
  // Predicated region
  $region38: #{unet_down_block_forward.1} parent=0 // pred_check
    _
  $region39: #{unet_down_block_forward.1} parent=0 // pred_check_branch
    %34 = sbr.rel (0) target = $region41
  $region40: #{unet_down_block_forward.1} parent=0 // pred_region
    _
  $region41: #{unet_down_block_forward.1} parent=0 // pred_fallthru
    _
  %v36 = vld [vmem:[%s0] sm:$0xff]
  %v37 = vld [vmem:[%s0 + $0x8] sm:$0xff]
  %v38 = vld [vmem:[%s0 + $0x10] sm:$0xff]
  %v39 = vld [vmem:[%s0 + $0x18] sm:$0xff]
  %v40 = vld [vmem:[%s0 + $0x20] sm:$0xff]
  %v41 = vld [vmem:[%s0 + $0x28] sm:$0xff]
  %v42 = vld [vmem:[%s0 + $0x30] sm:$0xff]
  %v43 = vld [vmem:[%s0 + $0x38] sm:$0xff]
  %v44 = vld [vmem:[%s0 + $0x40] sm:$0xff]
  %v45 = vld [vmem:[%s0 + $0x48] sm:$0xff]
  %v46 = vld [vmem:[%s0 + $0x50] sm:$0xff]
  %v47 = vld [vmem:[%s0 + $0x58] sm:$0xff]
  %v48 = vld [vmem:[%s0 + $0x60] sm:$0xff]
  %v49 = vld [vmem:[%s0 + $0x68] sm:$0xff]
  %v50 = vld [vmem:[%s0 + $0x70] sm:$0xff]
  %v51 = vld [vmem:[%s0 + $0x78] sm:$0xff]
  %s52 = scalar_lea.vmem %s0, 128
  %v53 = vld [vmem:[%s52] sm:$0xff]
  %v54 = vld [vmem:[%s52 + $0x8] sm:$0xff]
  %v55 = vld [vmem:[%s52 + $0x10] sm:$0xff]
  %v56 = vld [vmem:[%s52 + $0x18] sm:$0xff]
  %v57 = vld [vmem:[%s52 + $0x20] sm:$0xff]
  %v58 = vld [vmem:[%s52 + $0x28] sm:$0xff]
  %v59 = vld [vmem:[%s52 + $0x30] sm:$0xff]
  %v60 = vld [vmem:[%s52 + $0x38] sm:$0xff]
  %v61 = vld [vmem:[%s52 + $0x40] sm:$0xff]
  %v62 = vld [vmem:[%s52 + $0x48] sm:$0xff]
  %v63 = vld [vmem:[%s52 + $0x50] sm:$0xff]
  %v64 = vld [vmem:[%s52 + $0x58] sm:$0xff]
  %v65 = vld [vmem:[%s52 + $0x60] sm:$0xff]
  %v66 = vld [vmem:[%s52 + $0x68] sm:$0xff]
  %v67 = vld [vmem:[%s52 + $0x70] sm:$0xff]
  %v68 = vld [vmem:[%s52 + $0x78] sm:$0xff]
  %v69 = vmax.f32 %v36, %v53
  %v70 = vmax.f32 %v37, %v54
  %v71 = vmax.f32 %v38, %v55
  %v72 = vmax.f32 %v39, %v56
  %v73 = vmax.f32 %v40, %v57
  %v74 = vmax.f32 %v41, %v58
  %v75 = vmax.f32 %v42, %v59
  %v76 = vmax.f32 %v43, %v60
  %v77 = vmax.f32 %v44, %v61
  %v78 = vmax.f32 %v45, %v62
  %v79 = vmax.f32 %v46, %v63
  %v80 = vmax.f32 %v47, %v64
  %v81 = vmax.f32 %v48, %v65
  %v82 = vmax.f32 %v49, %v66
  %v83 = vmax.f32 %v50, %v67
  %v84 = vmax.f32 %v51, %v68
  %s85 = scalar_lea.vmem %s0, 256
  %v86 = vld [vmem:[%s85] sm:$0xff]
  %v87 = vld [vmem:[%s85 + $0x8] sm:$0xff]
  %v88 = vld [vmem:[%s85 + $0x10] sm:$0xff]
  %v89 = vld [vmem:[%s85 + $0x18] sm:$0xff]
  %v90 = vld [vmem:[%s85 + $0x20] sm:$0xff]
  %v91 = vld [vmem:[%s85 + $0x28] sm:$0xff]
  %v92 = vld [vmem:[%s85 + $0x30] sm:$0xff]
  %v93 = vld [vmem:[%s85 + $0x38] sm:$0xff]
  %v94 = vld [vmem:[%s85 + $0x40] sm:$0xff]
  %v95 = vld [vmem:[%s85 + $0x48] sm:$0xff]
  %v96 = vld [vmem:[%s85 + $0x50] sm:$0xff]
  %v97 = vld [vmem:[%s85 + $0x58] sm:$0xff]
  %v98 = vld [vmem:[%s85 + $0x60] sm:$0xff]
  %v99 = vld [vmem:[%s85 + $0x68] sm:$0xff]
  %v100 = vld [vmem:[%s85 + $0x70] sm:$0xff]
  %v101 = vld [vmem:[%s85 + $0x78] sm:$0xff]
  %v102 = vmax.f32 %v69, %v86
  %v103 = vmax.f32 %v70, %v87
  %v104 = vmax.f32 %v71, %v88
  %v105 = vmax.f32 %v72, %v89
  %v106 = vmax.f32 %v73, %v90
  %v107 = vmax.f32 %v74, %v91
  %v108 = vmax.f32 %v75, %v92
  %v109 = vmax.f32 %v76, %v93
  %v110 = vmax.f32 %v77, %v94
  %v111 = vmax.f32 %v78, %v95
  %v112 = vmax.f32 %v79, %v96
  %v113 = vmax.f32 %v80, %v97
  %v114 = vmax.f32 %v81, %v98
  %v115 = vmax.f32 %v82, %v99
  %v116 = vmax.f32 %v83, %v100
  %v117 = vmax.f32 %v84, %v101
  %s118 = scalar_lea.vmem %s0, 384
  %v119 = vld [vmem:[%s118] sm:$0xff]
  %v120 = vld [vmem:[%s118 + $0x8] sm:$0xff]
  %v121 = vld [vmem:[%s118 + $0x10] sm:$0xff]
  %v122 = vld [vmem:[%s118 + $0x18] sm:$0xff]
  %v123 = vld [vmem:[%s118 + $0x20] sm:$0xff]
  %v124 = vld [vmem:[%s118 + $0x28] sm:$0xff]
  %v125 = vld [vmem:[%s118 + $0x30] sm:$0xff]
  %v126 = vld [vmem:[%s118 + $0x38] sm:$0xff]
  %v127 = vld [vmem:[%s118 + $0x40] sm:$0xff]
  %v128 = vld [vmem:[%s118 + $0x48] sm:$0xff]
  %v129 = vld [vmem:[%s118 + $0x50] sm:$0xff]
  %v130 = vld [vmem:[%s118 + $0x58] sm:$0xff]
  %v131 = vld [vmem:[%s118 + $0x60] sm:$0xff]
  %v132 = vld [vmem:[%s118 + $0x68] sm:$0xff]
  %v133 = vld [vmem:[%s118 + $0x70] sm:$0xff]
  %v134 = vld [vmem:[%s118 + $0x78] sm:$0xff]
  %v135 = vmax.f32 %v102, %v119
  %v136 = vmax.f32 %v103, %v120
  %v137 = vmax.f32 %v104, %v121
  %v138 = vmax.f32 %v105, %v122
  %v139 = vmax.f32 %v106, %v123
  %v140 = vmax.f32 %v107, %v124
  %v141 = vmax.f32 %v108, %v125
  %v142 = vmax.f32 %v109, %v126
  %v143 = vmax.f32 %v110, %v127
  %v144 = vmax.f32 %v111, %v128
  %v145 = vmax.f32 %v112, %v129
  %v146 = vmax.f32 %v113, %v130
  %v147 = vmax.f32 %v114, %v131
  %v148 = vmax.f32 %v115, %v132
  %v149 = vmax.f32 %v116, %v133
  %v150 = vmax.f32 %v117, %v134
  %vm151 = vcmask 27648
  %152 = vst.msk [vmem:[#allocation2] sm:$0xf] %vm151, 0
  %vm153 = vcmask 24576
  %154 = vst.msk [vmem:[#allocation2 + $0x4] sm:$0x1] %vm153, 0
  %155 = vst.msk [vmem:[#allocation2 + $0x50] sm:$0xf] %vm151, 0
  %156 = vst.msk [vmem:[#allocation2 + $0x54] sm:$0x1] %vm153, 0
  %s157 = scalar_lea.vmem [#allocation2], 72
  %158 = vst.msk [vmem:[%s157] sm:$0xf] %vm151, 0
  %159 = vst.msk [vmem:[%s157 + $0x4] sm:$0x1] %vm153, 0
  %160 = vst.msk [vmem:[%s157 + $0x50] sm:$0xf] %vm151, 0
  %161 = vst.msk [vmem:[%s157 + $0x54] sm:$0x1] %vm153, 0
  %vm162 = vcmask 60416
  %163 = vst.msk [vmem:[#allocation3] sm:$0xf] %vm162, 0
  %vm164 = vcmask 57344
  %165 = vst.msk [vmem:[#allocation3 + $0x4] sm:$0x1] %vm164, 0
  %166 = vst.msk [vmem:[#allocation3 + $0x50] sm:$0xf] %vm162, 0
  %167 = vst.msk [vmem:[#allocation3 + $0x54] sm:$0x1] %vm164, 0
  %s168 = scalar_lea.vmem [#allocation3], 72
  %169 = vst.msk [vmem:[%s168] sm:$0xf] %vm162, 0
  %170 = vst.msk [vmem:[%s168 + $0x4] sm:$0x1] %vm164, 0
  %171 = vst.msk [vmem:[%s168 + $0x50] sm:$0xf] %vm162, 0
  %172 = vst.msk [vmem:[%s168 + $0x54] sm:$0x1] %vm164, 0
  %v173 = vpack.c.bf16 %v135, %v135
  %v174 = vpack.c.bf16 %v136, %v136
  %v175 = vpack.c.bf16 %v137, %v137
  %v176 = vpack.c.bf16 %v138, %v138
  %v177 = vpack.c.bf16 %v139, %v139
  %v178 = vpack.c.bf16 %v140, %v140
  %v179 = vpack.c.bf16 %v141, %v141
  %v180 = vpack.c.bf16 %v142, %v142
  %v181 = vpack.c.bf16 %v143, %v143
  %v182 = vpack.c.bf16 %v144, %v144
  %v183 = vpack.c.bf16 %v145, %v145
  %v184 = vpack.c.bf16 %v146, %v146
  %v185 = vpack.c.bf16 %v147, %v147
  %v186 = vpack.c.bf16 %v148, %v148
  %v187 = vpack.c.bf16 %v149, %v149
  %v188 = vpack.c.bf16 %v150, %v150
  %v190 = vshrl.u32 %v173, 16
  %v192 = vrot.slane %v190, 7
  %v193 = vshll.u32 %v173, 16
  %v195 = vor.u32 %v192, %v193
  %v197 = vshrl.u32 %v174, 16
  %v199 = vrot.slane %v197, 7
  %v200 = vshll.u32 %v174, 16
  %v202 = vor.u32 %v199, %v200
  %v204 = vshrl.u32 %v175, 16
  %v206 = vrot.slane %v204, 7
  %v207 = vshll.u32 %v175, 16
  %v209 = vor.u32 %v206, %v207
  %v211 = vshrl.u32 %v176, 16
  %v213 = vrot.slane %v211, 7
  %v214 = vshll.u32 %v176, 16
  %v216 = vor.u32 %v213, %v214
  %v218 = vshrl.u32 %v177, 16
  %v220 = vrot.slane %v218, 7
  %v221 = vshll.u32 %v177, 16
  %v223 = vor.u32 %v220, %v221
  %v225 = vshrl.u32 %v178, 16
  %v227 = vrot.slane %v225, 7
  %v228 = vshll.u32 %v178, 16
  %v230 = vor.u32 %v227, %v228
  %v232 = vshrl.u32 %v179, 16
  %v234 = vrot.slane %v232, 7
  %v235 = vshll.u32 %v179, 16
  %v237 = vor.u32 %v234, %v235
  %v239 = vshrl.u32 %v180, 16
  %v241 = vrot.slane %v239, 7
  %v242 = vshll.u32 %v180, 16
  %v244 = vor.u32 %v241, %v242
  %v246 = vshrl.u32 %v181, 16
  %v248 = vrot.slane %v246, 7
  %v249 = vshll.u32 %v181, 16
  %v251 = vor.u32 %v248, %v249
  %v253 = vshrl.u32 %v182, 16
  %v255 = vrot.slane %v253, 7
  %v256 = vshll.u32 %v182, 16
  %v258 = vor.u32 %v255, %v256
  %v260 = vshrl.u32 %v183, 16
  %v262 = vrot.slane %v260, 7
  %v263 = vshll.u32 %v183, 16
  %v265 = vor.u32 %v262, %v263
  %v267 = vshrl.u32 %v184, 16
  %v269 = vrot.slane %v267, 7
  %v270 = vshll.u32 %v184, 16
  %v272 = vor.u32 %v269, %v270
  %v274 = vshrl.u32 %v185, 16
  %v276 = vrot.slane %v274, 7
  %v277 = vshll.u32 %v185, 16
  %v279 = vor.u32 %v276, %v277
  %v281 = vshrl.u32 %v186, 16
  %v283 = vrot.slane %v281, 7
  %v284 = vshll.u32 %v186, 16
  %v286 = vor.u32 %v283, %v284
  %v288 = vshrl.u32 %v187, 16
  %v290 = vrot.slane %v288, 7
  %v291 = vshll.u32 %v187, 16
  %v293 = vor.u32 %v290, %v291
  %v295 = vshrl.u32 %v188, 16
  %v297 = vrot.slane %v295, 7
  %v298 = vshll.u32 %v188, 16
  %v300 = vor.u32 %v297, %v298
  %vm317 = vcmask 1040384
  %vm318 = vsmask.f32 256
  %vm319 = vmand %vm317, %vm318
  %v320 = vsel %vm319, 0, %v195
  %v321 = vsel %vm319, 0, %v202
  %v322 = vsel %vm319, 0, %v209
  %v323 = vsel %vm319, 0, %v216
  %v324 = vsel %vm319, 0, %v223
  %v325 = vsel %vm319, 0, %v230
  %v326 = vsel %vm319, 0, %v237
  %v327 = vsel %vm319, 0, %v244
  %v328 = vsel %vm319, 0, %v251
  %v329 = vsel %vm319, 0, %v258
  %v330 = vsel %vm319, 0, %v265
  %v331 = vsel %vm319, 0, %v272
  %v332 = vsel %vm319, 0, %v279
  %v333 = vsel %vm319, 0, %v286
  %v334 = vsel %vm319, 0, %v293
  %v335 = vsel %vm319, 0, %v300
  %vm336 = vcmask 1044480
  %vm337 = vsmask.f32 4352
  %vm338 = vmand %vm336, %vm337
  %v339 = vsel %vm338, %v320, 0
  %v340 = vsel %vm338, %v321, 0
  %v341 = vsel %vm338, %v322, 0
  %v342 = vsel %vm338, %v323, 0
  %v343 = vsel %vm338, %v324, 0
  %v344 = vsel %vm338, %v325, 0
  %v345 = vsel %vm338, %v326, 0
  %v346 = vsel %vm338, %v327, 0
  %v347 = vsel %vm338, %v328, 0
  %v348 = vsel %vm338, %v329, 0
  %v349 = vsel %vm338, %v330, 0
  %v350 = vsel %vm338, %v331, 0
  %v351 = vsel %vm338, %v332, 0
  %v352 = vsel %vm338, %v333, 0
  %v353 = vsel %vm338, %v334, 0
  %v354 = vsel %vm338, %v335, 0
  %v371 = vunpack.c.l.b16 %v339
  %v372 = vunpack.c.h.b16 %v339
  %v373 = vunpack.c.l.b16 %v340
  %v374 = vunpack.c.h.b16 %v340
  %v375 = vunpack.c.l.b16 %v341
  %v376 = vunpack.c.h.b16 %v341
  %v377 = vunpack.c.l.b16 %v342
  %v378 = vunpack.c.h.b16 %v342
  %v379 = vunpack.c.l.b16 %v343
  %v380 = vunpack.c.h.b16 %v343
  %v381 = vunpack.c.l.b16 %v344
  %v382 = vunpack.c.h.b16 %v344
  %v383 = vunpack.c.l.b16 %v345
  %v384 = vunpack.c.h.b16 %v345
  %v385 = vunpack.c.l.b16 %v346
  %v386 = vunpack.c.h.b16 %v346
  %v387 = vunpack.c.l.b16 %v347
  %v388 = vunpack.c.h.b16 %v347
  %v389 = vunpack.c.l.b16 %v348
  %v390 = vunpack.c.h.b16 %v348
  %v391 = vunpack.c.l.b16 %v349
  %v392 = vunpack.c.h.b16 %v349
  %v393 = vunpack.c.l.b16 %v350
  %v394 = vunpack.c.h.b16 %v350
  %v395 = vunpack.c.l.b16 %v351
  %v396 = vunpack.c.h.b16 %v351
  %v397 = vunpack.c.l.b16 %v352
  %v398 = vunpack.c.h.b16 %v352
  %v399 = vunpack.c.l.b16 %v353
  %v400 = vunpack.c.h.b16 %v353
  %v401 = vunpack.c.l.b16 %v354
  %v402 = vunpack.c.h.b16 %v354
  %v403 = vpack.c.b16 %v371, %v371
  %v404 = vpack.c.b16 %v372, %v372
  %v405 = vpack.c.b16 %v373, %v373
  %v406 = vpack.c.b16 %v374, %v374
  %v407 = vpack.c.b16 %v375, %v375
  %v408 = vpack.c.b16 %v376, %v376
  %v409 = vpack.c.b16 %v377, %v377
  %v410 = vpack.c.b16 %v378, %v378
  %v411 = vpack.c.b16 %v379, %v379
  %v412 = vpack.c.b16 %v380, %v380
  %v413 = vpack.c.b16 %v381, %v381
  %v414 = vpack.c.b16 %v382, %v382
  %v415 = vpack.c.b16 %v383, %v383
  %v416 = vpack.c.b16 %v384, %v384
  %v417 = vpack.c.b16 %v385, %v385
  %v418 = vpack.c.b16 %v386, %v386
  %v419 = vpack.c.b16 %v387, %v387
  %v420 = vpack.c.b16 %v388, %v388
  %v421 = vpack.c.b16 %v389, %v389
  %v422 = vpack.c.b16 %v390, %v390
  %v423 = vpack.c.b16 %v391, %v391
  %v424 = vpack.c.b16 %v392, %v392
  %v425 = vpack.c.b16 %v393, %v393
  %v426 = vpack.c.b16 %v394, %v394
  %v427 = vpack.c.b16 %v395, %v395
  %v428 = vpack.c.b16 %v396, %v396
  %v429 = vpack.c.b16 %v397, %v397
  %v430 = vpack.c.b16 %v398, %v398
  %v431 = vpack.c.b16 %v399, %v399
  %v432 = vpack.c.b16 %v400, %v400
  %v433 = vpack.c.b16 %v401, %v401
  %v434 = vpack.c.b16 %v402, %v402
  %s467 = scalar_lea.vmem [#allocation2], 8
  %468 = vst.msk [vmem:[%s467] sm:$0xf] %vm151, %v403
  %469 = vst.msk [vmem:[%s467 + $0x4] sm:$0x1] %vm153, %v404
  %470 = vst.msk [vmem:[%s467 + $0x8] sm:$0xf] %vm151, %v405
  %471 = vst.msk [vmem:[%s467 + $0xc] sm:$0x1] %vm153, %v406
  %472 = vst.msk [vmem:[%s467 + $0x10] sm:$0xf] %vm151, %v407
  %473 = vst.msk [vmem:[%s467 + $0x14] sm:$0x1] %vm153, %v408
  %474 = vst.msk [vmem:[%s467 + $0x18] sm:$0xf] %vm151, %v409
  %475 = vst.msk [vmem:[%s467 + $0x1c] sm:$0x1] %vm153, %v410
  %476 = vst.msk [vmem:[%s467 + $0x20] sm:$0xf] %vm151, %v411
  %477 = vst.msk [vmem:[%s467 + $0x24] sm:$0x1] %vm153, %v412
  %478 = vst.msk [vmem:[%s467 + $0x28] sm:$0xf] %vm151, %v413
  %479 = vst.msk [vmem:[%s467 + $0x2c] sm:$0x1] %vm153, %v414
  %480 = vst.msk [vmem:[%s467 + $0x30] sm:$0xf] %vm151, %v415
  %481 = vst.msk [vmem:[%s467 + $0x34] sm:$0x1] %vm153, %v416
  %482 = vst.msk [vmem:[%s467 + $0x38] sm:$0xf] %vm151, %v417
  %483 = vst.msk [vmem:[%s467 + $0x3c] sm:$0x1] %vm153, %v418
  %484 = vst.msk [vmem:[%s467 + $0x50] sm:$0xf] %vm151, %v419
  %485 = vst.msk [vmem:[%s467 + $0x54] sm:$0x1] %vm153, %v420
  %486 = vst.msk [vmem:[%s467 + $0x58] sm:$0xf] %vm151, %v421
  %487 = vst.msk [vmem:[%s467 + $0x5c] sm:$0x1] %vm153, %v422
  %488 = vst.msk [vmem:[%s467 + $0x60] sm:$0xf] %vm151, %v423
  %489 = vst.msk [vmem:[%s467 + $0x64] sm:$0x1] %vm153, %v424
  %490 = vst.msk [vmem:[%s467 + $0x68] sm:$0xf] %vm151, %v425
  %491 = vst.msk [vmem:[%s467 + $0x6c] sm:$0x1] %vm153, %v426
  %492 = vst.msk [vmem:[%s467 + $0x70] sm:$0xf] %vm151, %v427
  %493 = vst.msk [vmem:[%s467 + $0x74] sm:$0x1] %vm153, %v428
  %494 = vst.msk [vmem:[%s467 + $0x78] sm:$0xf] %vm151, %v429
  %495 = vst.msk [vmem:[%s467 + $0x7c] sm:$0x1] %vm153, %v430
  %496 = vst.msk [vmem:[%s467 + $0x80] sm:$0xf] %vm151, %v431
  %497 = vst.msk [vmem:[%s467 + $0x84] sm:$0x1] %vm153, %v432
  %498 = vst.msk [vmem:[%s467 + $0x88] sm:$0xf] %vm151, %v433
  %499 = vst.msk [vmem:[%s467 + $0x8c] sm:$0x1] %vm153, %v434
  %v500 = vld [vmem:[%s2] sm:$0x1]
  %v501 = vld [vmem:[%s3] sm:$0x1]
  %v502 = vld [vmem:[#allocation2] sm:$0xf]
  %v503 = vld [vmem:[#allocation2 + $0x8] sm:$0xf]
  %v504 = vld [vmem:[#allocation2 + $0x10] sm:$0xf]
  %v505 = vld [vmem:[#allocation2 + $0x18] sm:$0xf]
  %v506 = vld [vmem:[#allocation2 + $0x20] sm:$0xf]
  %v507 = vld [vmem:[#allocation2 + $0x28] sm:$0xf]
  %v508 = vld [vmem:[#allocation2 + $0x30] sm:$0xf]
  %v509 = vld [vmem:[#allocation2 + $0x38] sm:$0xf]
  %v510 = vld [vmem:[#allocation2 + $0x50] sm:$0xf]
  %v511 = vld [vmem:[#allocation2 + $0x58] sm:$0xf]
  %v512 = vld [vmem:[#allocation2 + $0x60] sm:$0xf]
  %v513 = vld [vmem:[#allocation2 + $0x68] sm:$0xf]
  %v514 = vld [vmem:[#allocation2 + $0x70] sm:$0xf]
  %v515 = vld [vmem:[#allocation2 + $0x78] sm:$0xf]
  %v516 = vld [vmem:[#allocation2 + $0x80] sm:$0xf]
  %v517 = vld [vmem:[#allocation2 + $0x88] sm:$0xf]
  %v534 = vunpack.c.l.b16 %v502
  %v535 = vunpack.c.l.b16 %v503
  %v536 = vunpack.c.l.b16 %v504
  %v537 = vunpack.c.l.b16 %v505
  %v538 = vunpack.c.l.b16 %v506
  %v539 = vunpack.c.l.b16 %v507
  %v540 = vunpack.c.l.b16 %v508
  %v541 = vunpack.c.l.b16 %v509
  %v542 = vunpack.c.l.b16 %v510
  %v543 = vunpack.c.l.b16 %v511
  %v544 = vunpack.c.l.b16 %v512
  %v545 = vunpack.c.l.b16 %v513
  %v546 = vunpack.c.l.b16 %v514
  %v547 = vunpack.c.l.b16 %v515
  %v548 = vunpack.c.l.b16 %v516
  %v549 = vunpack.c.l.b16 %v517
  %v550 = vpack.c.b16 %v535, %v534
  %v551 = vpack.c.b16 %v537, %v536
  %v552 = vpack.c.b16 %v539, %v538
  %v553 = vpack.c.b16 %v541, %v540
  %v554 = vpack.c.b16 %v543, %v542
  %v555 = vpack.c.b16 %v545, %v544
  %v556 = vpack.c.b16 %v547, %v546
  %v557 = vpack.c.b16 %v549, %v548
  %vm566 = vcmask 31744
  %567 = vst.msk [vmem:[#allocation4] sm:$0xff] %vm566, %v550
  %568 = vst.msk [vmem:[#allocation4 + $0x8] sm:$0xff] %vm566, %v551
  %569 = vst.msk [vmem:[#allocation4 + $0x10] sm:$0xff] %vm566, %v552
  %570 = vst.msk [vmem:[#allocation4 + $0x18] sm:$0xff] %vm566, %v553
  %571 = vst.msk [vmem:[#allocation4 + $0x20] sm:$0xff] %vm566, %v554
  %572 = vst.msk [vmem:[#allocation4 + $0x28] sm:$0xff] %vm566, %v555
  %573 = vst.msk [vmem:[#allocation4 + $0x30] sm:$0xff] %vm566, %v556
  %574 = vst.msk [vmem:[#allocation4 + $0x38] sm:$0xff] %vm566, %v557
  %v575 = vld [vmem:[#allocation2] sm:$0xf]
  %v576 = vld [vmem:[#allocation2 + $0x4] sm:$0x1]
  %v577 = vld [vmem:[#allocation2 + $0x8] sm:$0xf]
  %v578 = vld [vmem:[#allocation2 + $0xc] sm:$0x1]
  %v579 = vld [vmem:[#allocation2 + $0x10] sm:$0xf]
  %v580 = vld [vmem:[#allocation2 + $0x14] sm:$0x1]
  %v581 = vld [vmem:[#allocation2 + $0x18] sm:$0xf]
  %v582 = vld [vmem:[#allocation2 + $0x1c] sm:$0x1]
  %v583 = vld [vmem:[#allocation2 + $0x20] sm:$0xf]
  %v584 = vld [vmem:[#allocation2 + $0x24] sm:$0x1]
  %v585 = vld [vmem:[#allocation2 + $0x28] sm:$0xf]
  %v586 = vld [vmem:[#allocation2 + $0x2c] sm:$0x1]
  %v587 = vld [vmem:[#allocation2 + $0x30] sm:$0xf]
  %v588 = vld [vmem:[#allocation2 + $0x34] sm:$0x1]
  %v589 = vld [vmem:[#allocation2 + $0x38] sm:$0xf]
  %v590 = vld [vmem:[#allocation2 + $0x3c] sm:$0x1]
  %v591 = vld [vmem:[#allocation2 + $0x50] sm:$0xf]
  %v592 = vld [vmem:[#allocation2 + $0x54] sm:$0x1]
  %v593 = vld [vmem:[#allocation2 + $0x58] sm:$0xf]
  %v594 = vld [vmem:[#allocation2 + $0x5c] sm:$0x1]
  %v595 = vld [vmem:[#allocation2 + $0x60] sm:$0xf]
  %v596 = vld [vmem:[#allocation2 + $0x64] sm:$0x1]
  %v597 = vld [vmem:[#allocation2 + $0x68] sm:$0xf]
  %v598 = vld [vmem:[#allocation2 + $0x6c] sm:$0x1]
  %v599 = vld [vmem:[#allocation2 + $0x70] sm:$0xf]
  %v600 = vld [vmem:[#allocation2 + $0x74] sm:$0x1]
  %v601 = vld [vmem:[#allocation2 + $0x78] sm:$0xf]
  %v602 = vld [vmem:[#allocation2 + $0x7c] sm:$0x1]
  %v603 = vld [vmem:[#allocation2 + $0x80] sm:$0xf]
  %v604 = vld [vmem:[#allocation2 + $0x84] sm:$0x1]
  %v605 = vld [vmem:[#allocation2 + $0x88] sm:$0xf]
  %v606 = vld [vmem:[#allocation2 + $0x8c] sm:$0x1]
  %vm607 = vsmask.f32 3328
  %vm608 = vsmask.f32 7440
  %vm609 = vmor %vm607, %vm608
  %v611 = vshrl.u32 %v575, 16
  %v613 = vrot.slane %v611, 4
  %v614 = vshll.u32 %v575, 16
  %v616 = vrot.slane %v614, 5
  %v617 = vor.u32 %v613, %v616
  %v618 = vrot.slane %v617, 4
  %v620 = vshll.u32 %v576, 16
  %v622 = vrot.slane %v620, 5
  %v623 = vsel %vm609, %v618, %v622
  %v625 = vshrl.u32 %v577, 16
  %v627 = vrot.slane %v625, 4
  %v628 = vshll.u32 %v577, 16
  %v630 = vrot.slane %v628, 5
  %v631 = vor.u32 %v627, %v630
  %v632 = vrot.slane %v631, 4
  %v634 = vshll.u32 %v578, 16
  %v636 = vrot.slane %v634, 5
  %v637 = vsel %vm609, %v632, %v636
  %v639 = vshrl.u32 %v579, 16
  %v641 = vrot.slane %v639, 4
  %v642 = vshll.u32 %v579, 16
  %v644 = vrot.slane %v642, 5
  %v645 = vor.u32 %v641, %v644
  %v646 = vrot.slane %v645, 4
  %v648 = vshll.u32 %v580, 16
  %v650 = vrot.slane %v648, 5
  %v651 = vsel %vm609, %v646, %v650
  %v653 = vshrl.u32 %v581, 16
  %v655 = vrot.slane %v653, 4
  %v656 = vshll.u32 %v581, 16
  %v658 = vrot.slane %v656, 5
  %v659 = vor.u32 %v655, %v658
  %v660 = vrot.slane %v659, 4
  %v662 = vshll.u32 %v582, 16
  %v664 = vrot.slane %v662, 5
  %v665 = vsel %vm609, %v660, %v664
  %v667 = vshrl.u32 %v583, 16
  %v669 = vrot.slane %v667, 4
  %v670 = vshll.u32 %v583, 16
  %v672 = vrot.slane %v670, 5
  %v673 = vor.u32 %v669, %v672
  %v674 = vrot.slane %v673, 4
  %v676 = vshll.u32 %v584, 16
  %v678 = vrot.slane %v676, 5
  %v679 = vsel %vm609, %v674, %v678
  %v681 = vshrl.u32 %v585, 16
  %v683 = vrot.slane %v681, 4
  %v684 = vshll.u32 %v585, 16
  %v686 = vrot.slane %v684, 5
  %v687 = vor.u32 %v683, %v686
  %v688 = vrot.slane %v687, 4
  %v690 = vshll.u32 %v586, 16
  %v692 = vrot.slane %v690, 5
  %v693 = vsel %vm609, %v688, %v692
  %v695 = vshrl.u32 %v587, 16
  %v697 = vrot.slane %v695, 4
  %v698 = vshll.u32 %v587, 16
  %v700 = vrot.slane %v698, 5
  %v701 = vor.u32 %v697, %v700
  %v702 = vrot.slane %v701, 4
  %v704 = vshll.u32 %v588, 16
  %v706 = vrot.slane %v704, 5
  %v707 = vsel %vm609, %v702, %v706
  %v709 = vshrl.u32 %v589, 16
  %v711 = vrot.slane %v709, 4
  %v712 = vshll.u32 %v589, 16
  %v714 = vrot.slane %v712, 5
  %v715 = vor.u32 %v711, %v714
  %v716 = vrot.slane %v715, 4
  %v718 = vshll.u32 %v590, 16
  %v720 = vrot.slane %v718, 5
  %v721 = vsel %vm609, %v716, %v720
  %v723 = vshrl.u32 %v591, 16
  %v725 = vrot.slane %v723, 4
  %v726 = vshll.u32 %v591, 16
  %v728 = vrot.slane %v726, 5
  %v729 = vor.u32 %v725, %v728
  %v730 = vrot.slane %v729, 4
  %v732 = vshll.u32 %v592, 16
  %v734 = vrot.slane %v732, 5
  %v735 = vsel %vm609, %v730, %v734
  %v737 = vshrl.u32 %v593, 16
  %v739 = vrot.slane %v737, 4
  %v740 = vshll.u32 %v593, 16
  %v742 = vrot.slane %v740, 5
  %v743 = vor.u32 %v739, %v742
  %v744 = vrot.slane %v743, 4
  %v746 = vshll.u32 %v594, 16
  %v748 = vrot.slane %v746, 5
  %v749 = vsel %vm609, %v744, %v748
  %v751 = vshrl.u32 %v595, 16
  %v753 = vrot.slane %v751, 4
  %v754 = vshll.u32 %v595, 16
  %v756 = vrot.slane %v754, 5
  %v757 = vor.u32 %v753, %v756
  %v758 = vrot.slane %v757, 4
  %v760 = vshll.u32 %v596, 16
  %v762 = vrot.slane %v760, 5
  %v763 = vsel %vm609, %v758, %v762
  %v765 = vshrl.u32 %v597, 16
  %v767 = vrot.slane %v765, 4
  %v768 = vshll.u32 %v597, 16
  %v770 = vrot.slane %v768, 5
  %v771 = vor.u32 %v767, %v770
  %v772 = vrot.slane %v771, 4
  %v774 = vshll.u32 %v598, 16
  %v776 = vrot.slane %v774, 5
  %v777 = vsel %vm609, %v772, %v776
  %v779 = vshrl.u32 %v599, 16
  %v781 = vrot.slane %v779, 4
  %v782 = vshll.u32 %v599, 16
  %v784 = vrot.slane %v782, 5
  %v785 = vor.u32 %v781, %v784
  %v786 = vrot.slane %v785, 4
  %v788 = vshll.u32 %v600, 16
  %v790 = vrot.slane %v788, 5
  %v791 = vsel %vm609, %v786, %v790
  %v793 = vshrl.u32 %v601, 16
  %v795 = vrot.slane %v793, 4
  %v796 = vshll.u32 %v601, 16
  %v798 = vrot.slane %v796, 5
  %v799 = vor.u32 %v795, %v798
  %v800 = vrot.slane %v799, 4
  %v802 = vshll.u32 %v602, 16
  %v804 = vrot.slane %v802, 5
  %v805 = vsel %vm609, %v800, %v804
  %v807 = vshrl.u32 %v603, 16
  %v809 = vrot.slane %v807, 4
  %v810 = vshll.u32 %v603, 16
  %v812 = vrot.slane %v810, 5
  %v813 = vor.u32 %v809, %v812
  %v814 = vrot.slane %v813, 4
  %v816 = vshll.u32 %v604, 16
  %v818 = vrot.slane %v816, 5
  %v819 = vsel %vm609, %v814, %v818
  %v821 = vshrl.u32 %v605, 16
  %v823 = vrot.slane %v821, 4
  %v824 = vshll.u32 %v605, 16
  %v826 = vrot.slane %v824, 5
  %v827 = vor.u32 %v823, %v826
  %v828 = vrot.slane %v827, 4
  %v830 = vshll.u32 %v606, 16
  %v832 = vrot.slane %v830, 5
  %v833 = vsel %vm609, %v828, %v832
  %v834 = vunpack.c.l.b16 %v623
  %v835 = vunpack.c.l.b16 %v637
  %v836 = vunpack.c.l.b16 %v651
  %v837 = vunpack.c.l.b16 %v665
  %v838 = vunpack.c.l.b16 %v679
  %v839 = vunpack.c.l.b16 %v693
  %v840 = vunpack.c.l.b16 %v707
  %v841 = vunpack.c.l.b16 %v721
  %v842 = vunpack.c.l.b16 %v735
  %v843 = vunpack.c.l.b16 %v749
  %v844 = vunpack.c.l.b16 %v763
  %v845 = vunpack.c.l.b16 %v777
  %v846 = vunpack.c.l.b16 %v791
  %v847 = vunpack.c.l.b16 %v805
  %v848 = vunpack.c.l.b16 %v819
  %v849 = vunpack.c.l.b16 %v833
  %v850 = vpack.c.b16 %v835, %v834
  %v851 = vpack.c.b16 %v837, %v836
  %v852 = vpack.c.b16 %v839, %v838
  %v853 = vpack.c.b16 %v841, %v840
  %v854 = vpack.c.b16 %v843, %v842
  %v855 = vpack.c.b16 %v845, %v844
  %v856 = vpack.c.b16 %v847, %v846
  %v857 = vpack.c.b16 %v849, %v848
  %858 = vrot.lane.b32.xlu0 %v850, 4
  %v859 = vpop.permute.xlu0 %858
  %860 = vrot.lane.b32.xlu0 %v851, 4
  %v861 = vpop.permute.xlu0 %860
  %862 = vrot.lane.b32.xlu0 %v852, 4
  %v863 = vpop.permute.xlu0 %862
  %864 = vrot.lane.b32.xlu0 %v853, 4
  %v865 = vpop.permute.xlu0 %864
  %866 = vrot.lane.b32.xlu0 %v854, 4
  %v867 = vpop.permute.xlu0 %866
  %868 = vrot.lane.b32.xlu0 %v855, 4
  %v869 = vpop.permute.xlu0 %868
  %870 = vrot.lane.b32.xlu0 %v856, 4
  %v871 = vpop.permute.xlu0 %870
  %872 = vrot.lane.b32.xlu0 %v857, 4
  %v873 = vpop.permute.xlu0 %872
  %vm882 = vcmask 64544
  %883 = vst.msk [vmem:[#allocation4] sm:$0xff] %vm882, %v859
  %884 = vst.msk [vmem:[#allocation4 + $0x8] sm:$0xff] %vm882, %v861
  %885 = vst.msk [vmem:[#allocation4 + $0x10] sm:$0xff] %vm882, %v863
  %886 = vst.msk [vmem:[#allocation4 + $0x18] sm:$0xff] %vm882, %v865
  %887 = vst.msk [vmem:[#allocation4 + $0x20] sm:$0xff] %vm882, %v867
  %888 = vst.msk [vmem:[#allocation4 + $0x28] sm:$0xff] %vm882, %v869
  %889 = vst.msk [vmem:[#allocation4 + $0x30] sm:$0xff] %vm882, %v871
  %890 = vst.msk [vmem:[#allocation4 + $0x38] sm:$0xff] %vm882, %v873
  %v891 = vld [vmem:[#allocation2] sm:$0xe]
  %v892 = vld [vmem:[#allocation2 + $0x4] sm:$0x1]
  %v893 = vld [vmem:[#allocation2 + $0x8] sm:$0xe]
  %v894 = vld [vmem:[#allocation2 + $0xc] sm:$0x1]
  %v895 = vld [vmem:[#allocation2 + $0x10] sm:$0xe]
  %v896 = vld [vmem:[#allocation2 + $0x14] sm:$0x1]
  %v897 = vld [vmem:[#allocation2 + $0x18] sm:$0xe]
  %v898 = vld [vmem:[#allocation2 + $0x1c] sm:$0x1]
  %v899 = vld [vmem:[#allocation2 + $0x20] sm:$0xe]
  %v900 = vld [vmem:[#allocation2 + $0x24] sm:$0x1]
  %v901 = vld [vmem:[#allocation2 + $0x28] sm:$0xe]
  %v902 = vld [vmem:[#allocation2 + $0x2c] sm:$0x1]
  %v903 = vld [vmem:[#allocation2 + $0x30] sm:$0xe]
  %v904 = vld [vmem:[#allocation2 + $0x34] sm:$0x1]
  %v905 = vld [vmem:[#allocation2 + $0x38] sm:$0xe]
  %v906 = vld [vmem:[#allocation2 + $0x3c] sm:$0x1]
  %v907 = vld [vmem:[#allocation2 + $0x50] sm:$0xe]
  %v908 = vld [vmem:[#allocation2 + $0x54] sm:$0x1]
  %v909 = vld [vmem:[#allocation2 + $0x58] sm:$0xe]
  %v910 = vld [vmem:[#allocation2 + $0x5c] sm:$0x1]
  %v911 = vld [vmem:[#allocation2 + $0x60] sm:$0xe]
  %v912 = vld [vmem:[#allocation2 + $0x64] sm:$0x1]
  %v913 = vld [vmem:[#allocation2 + $0x68] sm:$0xe]
  %v914 = vld [vmem:[#allocation2 + $0x6c] sm:$0x1]
  %v915 = vld [vmem:[#allocation2 + $0x70] sm:$0xe]
  %v916 = vld [vmem:[#allocation2 + $0x74] sm:$0x1]
  %v917 = vld [vmem:[#allocation2 + $0x78] sm:$0xe]
  %v918 = vld [vmem:[#allocation2 + $0x7c] sm:$0x1]
  %v919 = vld [vmem:[#allocation2 + $0x80] sm:$0xe]
  %v920 = vld [vmem:[#allocation2 + $0x84] sm:$0x1]
  %v921 = vld [vmem:[#allocation2 + $0x88] sm:$0xe]
  %v922 = vld [vmem:[#allocation2 + $0x8c] sm:$0x1]
  %vm955 = vcmask 1042432
  %vm956 = vcmask 1046532
  %vm957 = vmor %vm955, %vm956
  %v958 = vrot.slane %v891, 5
  %v959 = vrot.slane %v958, 4
  %v960 = vrot.slane %v892, 5
  %v961 = vsel %vm957, %v959, %v960
  %v962 = vrot.slane %v893, 5
  %v963 = vrot.slane %v962, 4
  %v964 = vrot.slane %v894, 5
  %v965 = vsel %vm957, %v963, %v964
  %v966 = vrot.slane %v895, 5
  %v967 = vrot.slane %v966, 4
  %v968 = vrot.slane %v896, 5
  %v969 = vsel %vm957, %v967, %v968
  %v970 = vrot.slane %v897, 5
  %v971 = vrot.slane %v970, 4
  %v972 = vrot.slane %v898, 5
  %v973 = vsel %vm957, %v971, %v972
  %v974 = vrot.slane %v899, 5
  %v975 = vrot.slane %v974, 4
  %v976 = vrot.slane %v900, 5
  %v977 = vsel %vm957, %v975, %v976
  %v978 = vrot.slane %v901, 5
  %v979 = vrot.slane %v978, 4
  %v980 = vrot.slane %v902, 5
  %v981 = vsel %vm957, %v979, %v980
  %v982 = vrot.slane %v903, 5
  %v983 = vrot.slane %v982, 4
  %v984 = vrot.slane %v904, 5
  %v985 = vsel %vm957, %v983, %v984
  %v986 = vrot.slane %v905, 5
  %v987 = vrot.slane %v986, 4
  %v988 = vrot.slane %v906, 5
  %v989 = vsel %vm957, %v987, %v988
  %v990 = vrot.slane %v907, 5
  %v991 = vrot.slane %v990, 4
  %v992 = vrot.slane %v908, 5
  %v993 = vsel %vm957, %v991, %v992
  %v994 = vrot.slane %v909, 5
  %v995 = vrot.slane %v994, 4
  %v996 = vrot.slane %v910, 5
  %v997 = vsel %vm957, %v995, %v996
  %v998 = vrot.slane %v911, 5
  %v999 = vrot.slane %v998, 4
  %v1000 = vrot.slane %v912, 5
  %v1001 = vsel %vm957, %v999, %v1000
  %v1002 = vrot.slane %v913, 5
  %v1003 = vrot.slane %v1002, 4
  %v1004 = vrot.slane %v914, 5
  %v1005 = vsel %vm957, %v1003, %v1004
  %v1006 = vrot.slane %v915, 5
  %v1007 = vrot.slane %v1006, 4
  %v1008 = vrot.slane %v916, 5
  %v1009 = vsel %vm957, %v1007, %v1008
  %v1010 = vrot.slane %v917, 5
  %v1011 = vrot.slane %v1010, 4
  %v1012 = vrot.slane %v918, 5
  %v1013 = vsel %vm957, %v1011, %v1012
  %v1014 = vrot.slane %v919, 5
  %v1015 = vrot.slane %v1014, 4
  %v1016 = vrot.slane %v920, 5
  %v1017 = vsel %vm957, %v1015, %v1016
  %v1018 = vrot.slane %v921, 5
  %v1019 = vrot.slane %v1018, 4
  %v1020 = vrot.slane %v922, 5
  %v1021 = vsel %vm957, %v1019, %v1020
  %v1022 = vunpack.c.l.b16 %v961
  %v1023 = vunpack.c.l.b16 %v965
  %v1024 = vunpack.c.l.b16 %v969
  %v1025 = vunpack.c.l.b16 %v973
  %v1026 = vunpack.c.l.b16 %v977
  %v1027 = vunpack.c.l.b16 %v981
  %v1028 = vunpack.c.l.b16 %v985
  %v1029 = vunpack.c.l.b16 %v989
  %v1030 = vunpack.c.l.b16 %v993
  %v1031 = vunpack.c.l.b16 %v997
  %v1032 = vunpack.c.l.b16 %v1001
  %v1033 = vunpack.c.l.b16 %v1005
  %v1034 = vunpack.c.l.b16 %v1009
  %v1035 = vunpack.c.l.b16 %v1013
  %v1036 = vunpack.c.l.b16 %v1017
  %v1037 = vunpack.c.l.b16 %v1021
  %v1038 = vpack.c.b16 %v1023, %v1022
  %v1039 = vpack.c.b16 %v1025, %v1024
  %v1040 = vpack.c.b16 %v1027, %v1026
  %v1041 = vpack.c.b16 %v1029, %v1028
  %v1042 = vpack.c.b16 %v1031, %v1030
  %v1043 = vpack.c.b16 %v1033, %v1032
  %v1044 = vpack.c.b16 %v1035, %v1034
  %v1045 = vpack.c.b16 %v1037, %v1036
  %1046 = vrot.lane.b32.xlu0 %v1038, 8
  %v1047 = vpop.permute.xlu0 %1046
  %1048 = vrot.lane.b32.xlu0 %v1039, 8
  %v1049 = vpop.permute.xlu0 %1048
  %1050 = vrot.lane.b32.xlu0 %v1040, 8
  %v1051 = vpop.permute.xlu0 %1050
  %1052 = vrot.lane.b32.xlu0 %v1041, 8
  %v1053 = vpop.permute.xlu0 %1052
  %1054 = vrot.lane.b32.xlu0 %v1042, 8
  %v1055 = vpop.permute.xlu0 %1054
  %1056 = vrot.lane.b32.xlu0 %v1043, 8
  %v1057 = vpop.permute.xlu0 %1056
  %1058 = vrot.lane.b32.xlu0 %v1044, 8
  %v1059 = vpop.permute.xlu0 %1058
  %1060 = vrot.lane.b32.xlu0 %v1045, 8
  %v1061 = vpop.permute.xlu0 %1060
  %vm1070 = vcmask 97344
  %1071 = vst.msk [vmem:[#allocation4] sm:$0xff] %vm1070, %v1047
  %1072 = vst.msk [vmem:[#allocation4 + $0x8] sm:$0xff] %vm1070, %v1049
  %1073 = vst.msk [vmem:[#allocation4 + $0x10] sm:$0xff] %vm1070, %v1051
  %1074 = vst.msk [vmem:[#allocation4 + $0x18] sm:$0xff] %vm1070, %v1053
  %1075 = vst.msk [vmem:[#allocation4 + $0x20] sm:$0xff] %vm1070, %v1055
  %1076 = vst.msk [vmem:[#allocation4 + $0x28] sm:$0xff] %vm1070, %v1057
  %1077 = vst.msk [vmem:[#allocation4 + $0x30] sm:$0xff] %vm1070, %v1059
  %1078 = vst.msk [vmem:[#allocation4 + $0x38] sm:$0xff] %vm1070, %v1061
  %v1079 = vld [vmem:[%s467] sm:$0xf]
  %v1080 = vld [vmem:[%s467 + $0x8] sm:$0xf]
  %v1081 = vld [vmem:[%s467 + $0x10] sm:$0xf]
  %v1082 = vld [vmem:[%s467 + $0x18] sm:$0xf]
  %v1083 = vld [vmem:[%s467 + $0x20] sm:$0xf]
  %v1084 = vld [vmem:[%s467 + $0x28] sm:$0xf]
  %v1085 = vld [vmem:[%s467 + $0x30] sm:$0xf]
  %v1086 = vld [vmem:[%s467 + $0x38] sm:$0xf]
  %v1087 = vld [vmem:[%s467 + $0x50] sm:$0xf]
  %v1088 = vld [vmem:[%s467 + $0x58] sm:$0xf]
  %v1089 = vld [vmem:[%s467 + $0x60] sm:$0xf]
  %v1090 = vld [vmem:[%s467 + $0x68] sm:$0xf]
  %v1091 = vld [vmem:[%s467 + $0x70] sm:$0xf]
  %v1092 = vld [vmem:[%s467 + $0x78] sm:$0xf]
  %v1093 = vld [vmem:[%s467 + $0x80] sm:$0xf]
  %v1094 = vld [vmem:[%s467 + $0x88] sm:$0xf]
  %v1111 = vunpack.c.l.b16 %v1079
  %v1112 = vunpack.c.l.b16 %v1080
  %v1113 = vunpack.c.l.b16 %v1081
  %v1114 = vunpack.c.l.b16 %v1082
  %v1115 = vunpack.c.l.b16 %v1083
  %v1116 = vunpack.c.l.b16 %v1084
  %v1117 = vunpack.c.l.b16 %v1085
  %v1118 = vunpack.c.l.b16 %v1086
  %v1119 = vunpack.c.l.b16 %v1087
  %v1120 = vunpack.c.l.b16 %v1088
  %v1121 = vunpack.c.l.b16 %v1089
  %v1122 = vunpack.c.l.b16 %v1090
  %v1123 = vunpack.c.l.b16 %v1091
  %v1124 = vunpack.c.l.b16 %v1092
  %v1125 = vunpack.c.l.b16 %v1093
  %v1126 = vunpack.c.l.b16 %v1094
  %v1127 = vpack.c.b16 %v1112, %v1111
  %v1128 = vpack.c.b16 %v1114, %v1113
  %v1129 = vpack.c.b16 %v1116, %v1115
  %v1130 = vpack.c.b16 %v1118, %v1117
  %v1131 = vpack.c.b16 %v1120, %v1119
  %v1132 = vpack.c.b16 %v1122, %v1121
  %v1133 = vpack.c.b16 %v1124, %v1123
  %v1134 = vpack.c.b16 %v1126, %v1125
  %1135 = vrot.lane.b32.xlu0 %v1127, 12
  %v1136 = vpop.permute.xlu0 %1135
  %1137 = vrot.lane.b32.xlu0 %v1128, 12
  %v1138 = vpop.permute.xlu0 %1137
  %1139 = vrot.lane.b32.xlu0 %v1129, 12
  %v1140 = vpop.permute.xlu0 %1139
  %1141 = vrot.lane.b32.xlu0 %v1130, 12
  %v1142 = vpop.permute.xlu0 %1141
  %1143 = vrot.lane.b32.xlu0 %v1131, 12
  %v1144 = vpop.permute.xlu0 %1143
  %1145 = vrot.lane.b32.xlu0 %v1132, 12
  %v1146 = vpop.permute.xlu0 %1145
  %1147 = vrot.lane.b32.xlu0 %v1133, 12
  %v1148 = vpop.permute.xlu0 %1147
  %1149 = vrot.lane.b32.xlu0 %v1134, 12
  %v1150 = vpop.permute.xlu0 %1149
  %vm1159 = vcmask 130144
  %1160 = vst.msk [vmem:[#allocation4] sm:$0xff] %vm1159, %v1136
  %1161 = vst.msk [vmem:[#allocation4 + $0x8] sm:$0xff] %vm1159, %v1138
  %1162 = vst.msk [vmem:[#allocation4 + $0x10] sm:$0xff] %vm1159, %v1140
  %1163 = vst.msk [vmem:[#allocation4 + $0x18] sm:$0xff] %vm1159, %v1142
  %1164 = vst.msk [vmem:[#allocation4 + $0x20] sm:$0xff] %vm1159, %v1144
  %1165 = vst.msk [vmem:[#allocation4 + $0x28] sm:$0xff] %vm1159, %v1146
  %1166 = vst.msk [vmem:[#allocation4 + $0x30] sm:$0xff] %vm1159, %v1148
  %1167 = vst.msk [vmem:[#allocation4 + $0x38] sm:$0xff] %vm1159, %v1150
  %v1168 = vld [vmem:[%s467] sm:$0xf]
  %v1169 = vld [vmem:[%s467 + $0x4] sm:$0x1]
  %v1170 = vld [vmem:[%s467 + $0x8] sm:$0xf]
  %v1171 = vld [vmem:[%s467 + $0xc] sm:$0x1]
  %v1172 = vld [vmem:[%s467 + $0x10] sm:$0xf]
  %v1173 = vld [vmem:[%s467 + $0x14] sm:$0x1]
  %v1174 = vld [vmem:[%s467 + $0x18] sm:$0xf]
  %v1175 = vld [vmem:[%s467 + $0x1c] sm:$0x1]
  %v1176 = vld [vmem:[%s467 + $0x20] sm:$0xf]
  %v1177 = vld [vmem:[%s467 + $0x24] sm:$0x1]
  %v1178 = vld [vmem:[%s467 + $0x28] sm:$0xf]
  %v1179 = vld [vmem:[%s467 + $0x2c] sm:$0x1]
  %v1180 = vld [vmem:[%s467 + $0x30] sm:$0xf]
  %v1181 = vld [vmem:[%s467 + $0x34] sm:$0x1]
  %v1182 = vld [vmem:[%s467 + $0x38] sm:$0xf]
  %v1183 = vld [vmem:[%s467 + $0x3c] sm:$0x1]
  %v1184 = vld [vmem:[%s467 + $0x50] sm:$0xf]
  %v1185 = vld [vmem:[%s467 + $0x54] sm:$0x1]
  %v1186 = vld [vmem:[%s467 + $0x58] sm:$0xf]
  %v1187 = vld [vmem:[%s467 + $0x5c] sm:$0x1]
  %v1188 = vld [vmem:[%s467 + $0x60] sm:$0xf]
  %v1189 = vld [vmem:[%s467 + $0x64] sm:$0x1]
  %v1190 = vld [vmem:[%s467 + $0x68] sm:$0xf]
  %v1191 = vld [vmem:[%s467 + $0x6c] sm:$0x1]
  %v1192 = vld [vmem:[%s467 + $0x70] sm:$0xf]
  %v1193 = vld [vmem:[%s467 + $0x74] sm:$0x1]
  %v1194 = vld [vmem:[%s467 + $0x78] sm:$0xf]
  %v1195 = vld [vmem:[%s467 + $0x7c] sm:$0x1]
  %v1196 = vld [vmem:[%s467 + $0x80] sm:$0xf]
  %v1197 = vld [vmem:[%s467 + $0x84] sm:$0x1]
  %v1198 = vld [vmem:[%s467 + $0x88] sm:$0xf]
  %v1199 = vld [vmem:[%s467 + $0x8c] sm:$0x1]
  %v1201 = vshrl.u32 %v1168, 16
  %v1203 = vrot.slane %v1201, 4
  %v1204 = vshll.u32 %v1168, 16
  %v1206 = vrot.slane %v1204, 5
  %v1207 = vor.u32 %v1203, %v1206
  %v1208 = vrot.slane %v1207, 4
  %v1210 = vshll.u32 %v1169, 16
  %v1212 = vrot.slane %v1210, 5
  %v1213 = vsel %vm609, %v1208, %v1212
  %v1215 = vshrl.u32 %v1170, 16
  %v1217 = vrot.slane %v1215, 4
  %v1218 = vshll.u32 %v1170, 16
  %v1220 = vrot.slane %v1218, 5
  %v1221 = vor.u32 %v1217, %v1220
  %v1222 = vrot.slane %v1221, 4
  %v1224 = vshll.u32 %v1171, 16
  %v1226 = vrot.slane %v1224, 5
  %v1227 = vsel %vm609, %v1222, %v1226
  %v1229 = vshrl.u32 %v1172, 16
  %v1231 = vrot.slane %v1229, 4
  %v1232 = vshll.u32 %v1172, 16
  %v1234 = vrot.slane %v1232, 5
  %v1235 = vor.u32 %v1231, %v1234
  %v1236 = vrot.slane %v1235, 4
  %v1238 = vshll.u32 %v1173, 16
  %v1240 = vrot.slane %v1238, 5
  %v1241 = vsel %vm609, %v1236, %v1240
  %v1243 = vshrl.u32 %v1174, 16
  %v1245 = vrot.slane %v1243, 4
  %v1246 = vshll.u32 %v1174, 16
  %v1248 = vrot.slane %v1246, 5
  %v1249 = vor.u32 %v1245, %v1248
  %v1250 = vrot.slane %v1249, 4
  %v1252 = vshll.u32 %v1175, 16
  %v1254 = vrot.slane %v1252, 5
  %v1255 = vsel %vm609, %v1250, %v1254
  %v1257 = vshrl.u32 %v1176, 16
  %v1259 = vrot.slane %v1257, 4
  %v1260 = vshll.u32 %v1176, 16
  %v1262 = vrot.slane %v1260, 5
  %v1263 = vor.u32 %v1259, %v1262
  %v1264 = vrot.slane %v1263, 4
  %v1266 = vshll.u32 %v1177, 16
  %v1268 = vrot.slane %v1266, 5
  %v1269 = vsel %vm609, %v1264, %v1268
  %v1271 = vshrl.u32 %v1178, 16
  %v1273 = vrot.slane %v1271, 4
  %v1274 = vshll.u32 %v1178, 16
  %v1276 = vrot.slane %v1274, 5
  %v1277 = vor.u32 %v1273, %v1276
  %v1278 = vrot.slane %v1277, 4
  %v1280 = vshll.u32 %v1179, 16
  %v1282 = vrot.slane %v1280, 5
  %v1283 = vsel %vm609, %v1278, %v1282
  %v1285 = vshrl.u32 %v1180, 16
  %v1287 = vrot.slane %v1285, 4
  %v1288 = vshll.u32 %v1180, 16
  %v1290 = vrot.slane %v1288, 5
  %v1291 = vor.u32 %v1287, %v1290
  %v1292 = vrot.slane %v1291, 4
  %v1294 = vshll.u32 %v1181, 16
  %v1296 = vrot.slane %v1294, 5
  %v1297 = vsel %vm609, %v1292, %v1296
  %v1299 = vshrl.u32 %v1182, 16
  %v1301 = vrot.slane %v1299, 4
  %v1302 = vshll.u32 %v1182, 16
  %v1304 = vrot.slane %v1302, 5
  %v1305 = vor.u32 %v1301, %v1304
  %v1306 = vrot.slane %v1305, 4
  %v1308 = vshll.u32 %v1183, 16
  %v1310 = vrot.slane %v1308, 5
  %v1311 = vsel %vm609, %v1306, %v1310
  %v1313 = vshrl.u32 %v1184, 16
  %v1315 = vrot.slane %v1313, 4
  %v1316 = vshll.u32 %v1184, 16
  %v1318 = vrot.slane %v1316, 5
  %v1319 = vor.u32 %v1315, %v1318
  %v1320 = vrot.slane %v1319, 4
  %v1322 = vshll.u32 %v1185, 16
  %v1324 = vrot.slane %v1322, 5
  %v1325 = vsel %vm609, %v1320, %v1324
  %v1327 = vshrl.u32 %v1186, 16
  %v1329 = vrot.slane %v1327, 4
  %v1330 = vshll.u32 %v1186, 16
  %v1332 = vrot.slane %v1330, 5
  %v1333 = vor.u32 %v1329, %v1332
  %v1334 = vrot.slane %v1333, 4
  %v1336 = vshll.u32 %v1187, 16
  %v1338 = vrot.slane %v1336, 5
  %v1339 = vsel %vm609, %v1334, %v1338
  %v1341 = vshrl.u32 %v1188, 16
  %v1343 = vrot.slane %v1341, 4
  %v1344 = vshll.u32 %v1188, 16
  %v1346 = vrot.slane %v1344, 5
  %v1347 = vor.u32 %v1343, %v1346
  %v1348 = vrot.slane %v1347, 4
  %v1350 = vshll.u32 %v1189, 16
  %v1352 = vrot.slane %v1350, 5
  %v1353 = vsel %vm609, %v1348, %v1352
  %v1355 = vshrl.u32 %v1190, 16
  %v1357 = vrot.slane %v1355, 4
  %v1358 = vshll.u32 %v1190, 16
  %v1360 = vrot.slane %v1358, 5
  %v1361 = vor.u32 %v1357, %v1360
  %v1362 = vrot.slane %v1361, 4
  %v1364 = vshll.u32 %v1191, 16
  %v1366 = vrot.slane %v1364, 5
  %v1367 = vsel %vm609, %v1362, %v1366
  %v1369 = vshrl.u32 %v1192, 16
  %v1371 = vrot.slane %v1369, 4
  %v1372 = vshll.u32 %v1192, 16
  %v1374 = vrot.slane %v1372, 5
  %v1375 = vor.u32 %v1371, %v1374
  %v1376 = vrot.slane %v1375, 4
  %v1378 = vshll.u32 %v1193, 16
  %v1380 = vrot.slane %v1378, 5
  %v1381 = vsel %vm609, %v1376, %v1380
  %v1383 = vshrl.u32 %v1194, 16
  %v1385 = vrot.slane %v1383, 4
  %v1386 = vshll.u32 %v1194, 16
  %v1388 = vrot.slane %v1386, 5
  %v1389 = vor.u32 %v1385, %v1388
  %v1390 = vrot.slane %v1389, 4
  %v1392 = vshll.u32 %v1195, 16
  %v1394 = vrot.slane %v1392, 5
  %v1395 = vsel %vm609, %v1390, %v1394
  %v1397 = vshrl.u32 %v1196, 16
  %v1399 = vrot.slane %v1397, 4
  %v1400 = vshll.u32 %v1196, 16
  %v1402 = vrot.slane %v1400, 5
  %v1403 = vor.u32 %v1399, %v1402
  %v1404 = vrot.slane %v1403, 4
  %v1406 = vshll.u32 %v1197, 16
  %v1408 = vrot.slane %v1406, 5
  %v1409 = vsel %vm609, %v1404, %v1408
  %v1411 = vshrl.u32 %v1198, 16
  %v1413 = vrot.slane %v1411, 4
  %v1414 = vshll.u32 %v1198, 16
  %v1416 = vrot.slane %v1414, 5
  %v1417 = vor.u32 %v1413, %v1416
  %v1418 = vrot.slane %v1417, 4
  %v1420 = vshll.u32 %v1199, 16
  %v1422 = vrot.slane %v1420, 5
  %v1423 = vsel %vm609, %v1418, %v1422
  %v1424 = vunpack.c.l.b16 %v1213
  %v1425 = vunpack.c.l.b16 %v1227
  %v1426 = vunpack.c.l.b16 %v1241
  %v1427 = vunpack.c.l.b16 %v1255
  %v1428 = vunpack.c.l.b16 %v1269
  %v1429 = vunpack.c.l.b16 %v1283
  %v1430 = vunpack.c.l.b16 %v1297
  %v1431 = vunpack.c.l.b16 %v1311
  %v1432 = vunpack.c.l.b16 %v1325
  %v1433 = vunpack.c.l.b16 %v1339
  %v1434 = vunpack.c.l.b16 %v1353
  %v1435 = vunpack.c.l.b16 %v1367
  %v1436 = vunpack.c.l.b16 %v1381
  %v1437 = vunpack.c.l.b16 %v1395
  %v1438 = vunpack.c.l.b16 %v1409
  %v1439 = vunpack.c.l.b16 %v1423
  %v1440 = vpack.c.b16 %v1425, %v1424
  %v1441 = vpack.c.b16 %v1427, %v1426
  %v1442 = vpack.c.b16 %v1429, %v1428
  %v1443 = vpack.c.b16 %v1431, %v1430
  %v1444 = vpack.c.b16 %v1433, %v1432
  %v1445 = vpack.c.b16 %v1435, %v1434
  %v1446 = vpack.c.b16 %v1437, %v1436
  %v1447 = vpack.c.b16 %v1439, %v1438
  %1448 = vrot.lane.b32.xlu0 %v1440, 16
  %v1449 = vpop.permute.xlu0 %1448
  %1450 = vrot.lane.b32.xlu0 %v1441, 16
  %v1451 = vpop.permute.xlu0 %1450
  %1452 = vrot.lane.b32.xlu0 %v1442, 16
  %v1453 = vpop.permute.xlu0 %1452
  %1454 = vrot.lane.b32.xlu0 %v1443, 16
  %v1455 = vpop.permute.xlu0 %1454
  %1456 = vrot.lane.b32.xlu0 %v1444, 16
  %v1457 = vpop.permute.xlu0 %1456
  %1458 = vrot.lane.b32.xlu0 %v1445, 16
  %v1459 = vpop.permute.xlu0 %1458
  %1460 = vrot.lane.b32.xlu0 %v1446, 16
  %v1461 = vpop.permute.xlu0 %1460
  %1462 = vrot.lane.b32.xlu0 %v1447, 16
  %v1463 = vpop.permute.xlu0 %1462
  %vm1472 = vcmask 162944
  %1473 = vst.msk [vmem:[#allocation4] sm:$0xff] %vm1472, %v1449
  %1474 = vst.msk [vmem:[#allocation4 + $0x8] sm:$0xff] %vm1472, %v1451
  %1475 = vst.msk [vmem:[#allocation4 + $0x10] sm:$0xff] %vm1472, %v1453
  %1476 = vst.msk [vmem:[#allocation4 + $0x18] sm:$0xff] %vm1472, %v1455
  %1477 = vst.msk [vmem:[#allocation4 + $0x20] sm:$0xff] %vm1472, %v1457
  %1478 = vst.msk [vmem:[#allocation4 + $0x28] sm:$0xff] %vm1472, %v1459
  %1479 = vst.msk [vmem:[#allocation4 + $0x30] sm:$0xff] %vm1472, %v1461
  %1480 = vst.msk [vmem:[#allocation4 + $0x38] sm:$0xff] %vm1472, %v1463
  %v1481 = vld [vmem:[%s467] sm:$0xe]
  %v1482 = vld [vmem:[%s467 + $0x4] sm:$0x1]
  %v1483 = vld [vmem:[%s467 + $0x8] sm:$0xe]
  %v1484 = vld [vmem:[%s467 + $0xc] sm:$0x1]
  %v1485 = vld [vmem:[%s467 + $0x10] sm:$0xe]
  %v1486 = vld [vmem:[%s467 + $0x14] sm:$0x1]
  %v1487 = vld [vmem:[%s467 + $0x18] sm:$0xe]
  %v1488 = vld [vmem:[%s467 + $0x1c] sm:$0x1]
  %v1489 = vld [vmem:[%s467 + $0x20] sm:$0xe]
  %v1490 = vld [vmem:[%s467 + $0x24] sm:$0x1]
  %v1491 = vld [vmem:[%s467 + $0x28] sm:$0xe]
  %v1492 = vld [vmem:[%s467 + $0x2c] sm:$0x1]
  %v1493 = vld [vmem:[%s467 + $0x30] sm:$0xe]
  %v1494 = vld [vmem:[%s467 + $0x34] sm:$0x1]
  %v1495 = vld [vmem:[%s467 + $0x38] sm:$0xe]
  %v1496 = vld [vmem:[%s467 + $0x3c] sm:$0x1]
  %v1497 = vld [vmem:[%s467 + $0x50] sm:$0xe]
  %v1498 = vld [vmem:[%s467 + $0x54] sm:$0x1]
  %v1499 = vld [vmem:[%s467 + $0x58] sm:$0xe]
  %v1500 = vld [vmem:[%s467 + $0x5c] sm:$0x1]
  %v1501 = vld [vmem:[%s467 + $0x60] sm:$0xe]
  %v1502 = vld [vmem:[%s467 + $0x64] sm:$0x1]
  %v1503 = vld [vmem:[%s467 + $0x68] sm:$0xe]
  %v1504 = vld [vmem:[%s467 + $0x6c] sm:$0x1]
  %v1505 = vld [vmem:[%s467 + $0x70] sm:$0xe]
  %v1506 = vld [vmem:[%s467 + $0x74] sm:$0x1]
  %v1507 = vld [vmem:[%s467 + $0x78] sm:$0xe]
  %v1508 = vld [vmem:[%s467 + $0x7c] sm:$0x1]
  %v1509 = vld [vmem:[%s467 + $0x80] sm:$0xe]
  %v1510 = vld [vmem:[%s467 + $0x84] sm:$0x1]
  %v1511 = vld [vmem:[%s467 + $0x88] sm:$0xe]
  %v1512 = vld [vmem:[%s467 + $0x8c] sm:$0x1]
  %v1545 = vrot.slane %v1481, 5
  %v1546 = vrot.slane %v1545, 4
  %v1547 = vrot.slane %v1482, 5
  %v1548 = vsel %vm957, %v1546, %v1547
  %v1549 = vrot.slane %v1483, 5
  %v1550 = vrot.slane %v1549, 4
  %v1551 = vrot.slane %v1484, 5
  %v1552 = vsel %vm957, %v1550, %v1551
  %v1553 = vrot.slane %v1485, 5
  %v1554 = vrot.slane %v1553, 4
  %v1555 = vrot.slane %v1486, 5
  %v1556 = vsel %vm957, %v1554, %v1555
  %v1557 = vrot.slane %v1487, 5
  %v1558 = vrot.slane %v1557, 4
  %v1559 = vrot.slane %v1488, 5
  %v1560 = vsel %vm957, %v1558, %v1559
  %v1561 = vrot.slane %v1489, 5
  %v1562 = vrot.slane %v1561, 4
  %v1563 = vrot.slane %v1490, 5
  %v1564 = vsel %vm957, %v1562, %v1563
  %v1565 = vrot.slane %v1491, 5
  %v1566 = vrot.slane %v1565, 4
  %v1567 = vrot.slane %v1492, 5
  %v1568 = vsel %vm957, %v1566, %v1567
  %v1569 = vrot.slane %v1493, 5
  %v1570 = vrot.slane %v1569, 4
  %v1571 = vrot.slane %v1494, 5
  %v1572 = vsel %vm957, %v1570, %v1571
  %v1573 = vrot.slane %v1495, 5
  %v1574 = vrot.slane %v1573, 4
  %v1575 = vrot.slane %v1496, 5
  %v1576 = vsel %vm957, %v1574, %v1575
  %v1577 = vrot.slane %v1497, 5
  %v1578 = vrot.slane %v1577, 4
  %v1579 = vrot.slane %v1498, 5
  %v1580 = vsel %vm957, %v1578, %v1579
  %v1581 = vrot.slane %v1499, 5
  %v1582 = vrot.slane %v1581, 4
  %v1583 = vrot.slane %v1500, 5
  %v1584 = vsel %vm957, %v1582, %v1583
  %v1585 = vrot.slane %v1501, 5
  %v1586 = vrot.slane %v1585, 4
  %v1587 = vrot.slane %v1502, 5
  %v1588 = vsel %vm957, %v1586, %v1587
  %v1589 = vrot.slane %v1503, 5
  %v1590 = vrot.slane %v1589, 4
  %v1591 = vrot.slane %v1504, 5
  %v1592 = vsel %vm957, %v1590, %v1591
  %v1593 = vrot.slane %v1505, 5
  %v1594 = vrot.slane %v1593, 4
  %v1595 = vrot.slane %v1506, 5
  %v1596 = vsel %vm957, %v1594, %v1595
  %v1597 = vrot.slane %v1507, 5
  %v1598 = vrot.slane %v1597, 4
  %v1599 = vrot.slane %v1508, 5
  %v1600 = vsel %vm957, %v1598, %v1599
  %v1601 = vrot.slane %v1509, 5
  %v1602 = vrot.slane %v1601, 4
  %v1603 = vrot.slane %v1510, 5
  %v1604 = vsel %vm957, %v1602, %v1603
  %v1605 = vrot.slane %v1511, 5
  %v1606 = vrot.slane %v1605, 4
  %v1607 = vrot.slane %v1512, 5
  %v1608 = vsel %vm957, %v1606, %v1607
  %v1609 = vunpack.c.l.b16 %v1548
  %v1610 = vunpack.c.l.b16 %v1552
  %v1611 = vunpack.c.l.b16 %v1556
  %v1612 = vunpack.c.l.b16 %v1560
  %v1613 = vunpack.c.l.b16 %v1564
  %v1614 = vunpack.c.l.b16 %v1568
  %v1615 = vunpack.c.l.b16 %v1572
  %v1616 = vunpack.c.l.b16 %v1576
  %v1617 = vunpack.c.l.b16 %v1580
  %v1618 = vunpack.c.l.b16 %v1584
  %v1619 = vunpack.c.l.b16 %v1588
  %v1620 = vunpack.c.l.b16 %v1592
  %v1621 = vunpack.c.l.b16 %v1596
  %v1622 = vunpack.c.l.b16 %v1600
  %v1623 = vunpack.c.l.b16 %v1604
  %v1624 = vunpack.c.l.b16 %v1608
  %v1625 = vpack.c.b16 %v1610, %v1609
  %v1626 = vpack.c.b16 %v1612, %v1611
  %v1627 = vpack.c.b16 %v1614, %v1613
  %v1628 = vpack.c.b16 %v1616, %v1615
  %v1629 = vpack.c.b16 %v1618, %v1617
  %v1630 = vpack.c.b16 %v1620, %v1619
  %v1631 = vpack.c.b16 %v1622, %v1621
  %v1632 = vpack.c.b16 %v1624, %v1623
  %1633 = vrot.lane.b32.xlu0 %v1625, 20
  %v1634 = vpop.permute.xlu0 %1633
  %1635 = vrot.lane.b32.xlu0 %v1626, 20
  %v1636 = vpop.permute.xlu0 %1635
  %1637 = vrot.lane.b32.xlu0 %v1627, 20
  %v1638 = vpop.permute.xlu0 %1637
  %1639 = vrot.lane.b32.xlu0 %v1628, 20
  %v1640 = vpop.permute.xlu0 %1639
  %1641 = vrot.lane.b32.xlu0 %v1629, 20
  %v1642 = vpop.permute.xlu0 %1641
  %1643 = vrot.lane.b32.xlu0 %v1630, 20
  %v1644 = vpop.permute.xlu0 %1643
  %1645 = vrot.lane.b32.xlu0 %v1631, 20
  %v1646 = vpop.permute.xlu0 %1645
  %1647 = vrot.lane.b32.xlu0 %v1632, 20
  %v1648 = vpop.permute.xlu0 %1647
  %vm1657 = vcmask 195744
  %1658 = vst.msk [vmem:[#allocation4] sm:$0xff] %vm1657, %v1634
  %1659 = vst.msk [vmem:[#allocation4 + $0x8] sm:$0xff] %vm1657, %v1636
  %1660 = vst.msk [vmem:[#allocation4 + $0x10] sm:$0xff] %vm1657, %v1638
  %1661 = vst.msk [vmem:[#allocation4 + $0x18] sm:$0xff] %vm1657, %v1640
  %1662 = vst.msk [vmem:[#allocation4 + $0x20] sm:$0xff] %vm1657, %v1642
  %1663 = vst.msk [vmem:[#allocation4 + $0x28] sm:$0xff] %vm1657, %v1644
  %1664 = vst.msk [vmem:[#allocation4 + $0x30] sm:$0xff] %vm1657, %v1646
  %1665 = vst.msk [vmem:[#allocation4 + $0x38] sm:$0xff] %vm1657, %v1648
  %s1666 = scalar_lea.vmem [#allocation2], 16
  %v1667 = vld [vmem:[%s1666] sm:$0xf]
  %v1668 = vld [vmem:[%s1666 + $0x8] sm:$0xf]
  %v1669 = vld [vmem:[%s1666 + $0x10] sm:$0xf]
  %v1670 = vld [vmem:[%s1666 + $0x18] sm:$0xf]
  %v1671 = vld [vmem:[%s1666 + $0x20] sm:$0xf]
  %v1672 = vld [vmem:[%s1666 + $0x28] sm:$0xf]
  %v1673 = vld [vmem:[%s1666 + $0x30] sm:$0xf]
  %v1674 = vld [vmem:[%s1666 + $0x38] sm:$0xf]
  %v1675 = vld [vmem:[%s1666 + $0x50] sm:$0xf]
  %v1676 = vld [vmem:[%s1666 + $0x58] sm:$0xf]
  %v1677 = vld [vmem:[%s1666 + $0x60] sm:$0xf]
  %v1678 = vld [vmem:[%s1666 + $0x68] sm:$0xf]
  %v1679 = vld [vmem:[%s1666 + $0x70] sm:$0xf]
  %v1680 = vld [vmem:[%s1666 + $0x78] sm:$0xf]
  %v1681 = vld [vmem:[%s1666 + $0x80] sm:$0xf]
  %v1682 = vld [vmem:[%s1666 + $0x88] sm:$0xf]
  %v1699 = vunpack.c.l.b16 %v1667
  %v1700 = vunpack.c.l.b16 %v1668
  %v1701 = vunpack.c.l.b16 %v1669
  %v1702 = vunpack.c.l.b16 %v1670
  %v1703 = vunpack.c.l.b16 %v1671
  %v1704 = vunpack.c.l.b16 %v1672
  %v1705 = vunpack.c.l.b16 %v1673
  %v1706 = vunpack.c.l.b16 %v1674
  %v1707 = vunpack.c.l.b16 %v1675
  %v1708 = vunpack.c.l.b16 %v1676
  %v1709 = vunpack.c.l.b16 %v1677
  %v1710 = vunpack.c.l.b16 %v1678
  %v1711 = vunpack.c.l.b16 %v1679
  %v1712 = vunpack.c.l.b16 %v1680
  %v1713 = vunpack.c.l.b16 %v1681
  %v1714 = vunpack.c.l.b16 %v1682
  %v1715 = vpack.c.b16 %v1700, %v1699
  %v1716 = vpack.c.b16 %v1702, %v1701
  %v1717 = vpack.c.b16 %v1704, %v1703
  %v1718 = vpack.c.b16 %v1706, %v1705
  %v1719 = vpack.c.b16 %v1708, %v1707
  %v1720 = vpack.c.b16 %v1710, %v1709
  %v1721 = vpack.c.b16 %v1712, %v1711
  %v1722 = vpack.c.b16 %v1714, %v1713
  %1723 = vrot.lane.b32.xlu0 %v1715, 24
  %v1724 = vpop.permute.xlu0 %1723
  %1725 = vrot.lane.b32.xlu0 %v1716, 24
  %v1726 = vpop.permute.xlu0 %1725
  %1727 = vrot.lane.b32.xlu0 %v1717, 24
  %v1728 = vpop.permute.xlu0 %1727
  %1729 = vrot.lane.b32.xlu0 %v1718, 24
  %v1730 = vpop.permute.xlu0 %1729
  %1731 = vrot.lane.b32.xlu0 %v1719, 24
  %v1732 = vpop.permute.xlu0 %1731
  %1733 = vrot.lane.b32.xlu0 %v1720, 24
  %v1734 = vpop.permute.xlu0 %1733
  %1735 = vrot.lane.b32.xlu0 %v1721, 24
  %v1736 = vpop.permute.xlu0 %1735
  %1737 = vrot.lane.b32.xlu0 %v1722, 24
  %v1738 = vpop.permute.xlu0 %1737
  %vm1747 = vcmask 228544
  %1748 = vst.msk [vmem:[#allocation4] sm:$0xff] %vm1747, %v1724
  %1749 = vst.msk [vmem:[#allocation4 + $0x8] sm:$0xff] %vm1747, %v1726
  %1750 = vst.msk [vmem:[#allocation4 + $0x10] sm:$0xff] %vm1747, %v1728
  %1751 = vst.msk [vmem:[#allocation4 + $0x18] sm:$0xff] %vm1747, %v1730
  %1752 = vst.msk [vmem:[#allocation4 + $0x20] sm:$0xff] %vm1747, %v1732
  %1753 = vst.msk [vmem:[#allocation4 + $0x28] sm:$0xff] %vm1747, %v1734
  %1754 = vst.msk [vmem:[#allocation4 + $0x30] sm:$0xff] %vm1747, %v1736
  %1755 = vst.msk [vmem:[#allocation4 + $0x38] sm:$0xff] %vm1747, %v1738
  %v1756 = vld [vmem:[%s1666] sm:$0xf]
  %v1757 = vld [vmem:[%s1666 + $0x4] sm:$0x1]
  %v1758 = vld [vmem:[%s1666 + $0x8] sm:$0xf]
  %v1759 = vld [vmem:[%s1666 + $0xc] sm:$0x1]
  %v1760 = vld [vmem:[%s1666 + $0x10] sm:$0xf]
  %v1761 = vld [vmem:[%s1666 + $0x14] sm:$0x1]
  %v1762 = vld [vmem:[%s1666 + $0x18] sm:$0xf]
  %v1763 = vld [vmem:[%s1666 + $0x1c] sm:$0x1]
  %v1764 = vld [vmem:[%s1666 + $0x20] sm:$0xf]
  %v1765 = vld [vmem:[%s1666 + $0x24] sm:$0x1]
  %v1766 = vld [vmem:[%s1666 + $0x28] sm:$0xf]
  %v1767 = vld [vmem:[%s1666 + $0x2c] sm:$0x1]
  %v1768 = vld [vmem:[%s1666 + $0x30] sm:$0xf]
  %v1769 = vld [vmem:[%s1666 + $0x34] sm:$0x1]
  %v1770 = vld [vmem:[%s1666 + $0x38] sm:$0xf]
  %v1771 = vld [vmem:[%s1666 + $0x3c] sm:$0x1]
  %v1772 = vld [vmem:[%s1666 + $0x50] sm:$0xf]
  %v1773 = vld [vmem:[%s1666 + $0x54] sm:$0x1]
  %v1774 = vld [vmem:[%s1666 + $0x58] sm:$0xf]
  %v1775 = vld [vmem:[%s1666 + $0x5c] sm:$0x1]
  %v1776 = vld [vmem:[%s1666 + $0x60] sm:$0xf]
  %v1777 = vld [vmem:[%s1666 + $0x64] sm:$0x1]
  %v1778 = vld [vmem:[%s1666 + $0x68] sm:$0xf]
  %v1779 = vld [vmem:[%s1666 + $0x6c] sm:$0x1]
  %v1780 = vld [vmem:[%s1666 + $0x70] sm:$0xf]
  %v1781 = vld [vmem:[%s1666 + $0x74] sm:$0x1]
  %v1782 = vld [vmem:[%s1666 + $0x78] sm:$0xf]
  %v1783 = vld [vmem:[%s1666 + $0x7c] sm:$0x1]
  %v1784 = vld [vmem:[%s1666 + $0x80] sm:$0xf]
  %v1785 = vld [vmem:[%s1666 + $0x84] sm:$0x1]
  %v1786 = vld [vmem:[%s1666 + $0x88] sm:$0xf]
  %v1787 = vld [vmem:[%s1666 + $0x8c] sm:$0x1]
  %v1789 = vshrl.u32 %v1756, 16
  %v1791 = vrot.slane %v1789, 4
  %v1792 = vshll.u32 %v1756, 16
  %v1794 = vrot.slane %v1792, 5
  %v1795 = vor.u32 %v1791, %v1794
  %v1796 = vrot.slane %v1795, 4
  %v1798 = vshll.u32 %v1757, 16
  %v1800 = vrot.slane %v1798, 5
  %v1801 = vsel %vm609, %v1796, %v1800
  %v1803 = vshrl.u32 %v1758, 16
  %v1805 = vrot.slane %v1803, 4
  %v1806 = vshll.u32 %v1758, 16
  %v1808 = vrot.slane %v1806, 5
  %v1809 = vor.u32 %v1805, %v1808
  %v1810 = vrot.slane %v1809, 4
  %v1812 = vshll.u32 %v1759, 16
  %v1814 = vrot.slane %v1812, 5
  %v1815 = vsel %vm609, %v1810, %v1814
  %v1817 = vshrl.u32 %v1760, 16
  %v1819 = vrot.slane %v1817, 4
  %v1820 = vshll.u32 %v1760, 16
  %v1822 = vrot.slane %v1820, 5
  %v1823 = vor.u32 %v1819, %v1822
  %v1824 = vrot.slane %v1823, 4
  %v1826 = vshll.u32 %v1761, 16
  %v1828 = vrot.slane %v1826, 5
  %v1829 = vsel %vm609, %v1824, %v1828
  %v1831 = vshrl.u32 %v1762, 16
  %v1833 = vrot.slane %v1831, 4
  %v1834 = vshll.u32 %v1762, 16
  %v1836 = vrot.slane %v1834, 5
  %v1837 = vor.u32 %v1833, %v1836
  %v1838 = vrot.slane %v1837, 4
  %v1840 = vshll.u32 %v1763, 16
  %v1842 = vrot.slane %v1840, 5
  %v1843 = vsel %vm609, %v1838, %v1842
  %v1845 = vshrl.u32 %v1764, 16
  %v1847 = vrot.slane %v1845, 4
  %v1848 = vshll.u32 %v1764, 16
  %v1850 = vrot.slane %v1848, 5
  %v1851 = vor.u32 %v1847, %v1850
  %v1852 = vrot.slane %v1851, 4
  %v1854 = vshll.u32 %v1765, 16
  %v1856 = vrot.slane %v1854, 5
  %v1857 = vsel %vm609, %v1852, %v1856
  %v1859 = vshrl.u32 %v1766, 16
  %v1861 = vrot.slane %v1859, 4
  %v1862 = vshll.u32 %v1766, 16
  %v1864 = vrot.slane %v1862, 5
  %v1865 = vor.u32 %v1861, %v1864
  %v1866 = vrot.slane %v1865, 4
  %v1868 = vshll.u32 %v1767, 16
  %v1870 = vrot.slane %v1868, 5
  %v1871 = vsel %vm609, %v1866, %v1870
  %v1873 = vshrl.u32 %v1768, 16
  %v1875 = vrot.slane %v1873, 4
  %v1876 = vshll.u32 %v1768, 16
  %v1878 = vrot.slane %v1876, 5
  %v1879 = vor.u32 %v1875, %v1878
  %v1880 = vrot.slane %v1879, 4
  %v1882 = vshll.u32 %v1769, 16
  %v1884 = vrot.slane %v1882, 5
  %v1885 = vsel %vm609, %v1880, %v1884
  %v1887 = vshrl.u32 %v1770, 16
  %v1889 = vrot.slane %v1887, 4
  %v1890 = vshll.u32 %v1770, 16
  %v1892 = vrot.slane %v1890, 5
  %v1893 = vor.u32 %v1889, %v1892
  %v1894 = vrot.slane %v1893, 4
  %v1896 = vshll.u32 %v1771, 16
  %v1898 = vrot.slane %v1896, 5
  %v1899 = vsel %vm609, %v1894, %v1898
  %v1901 = vshrl.u32 %v1772, 16
  %v1903 = vrot.slane %v1901, 4
  %v1904 = vshll.u32 %v1772, 16
  %v1906 = vrot.slane %v1904, 5
  %v1907 = vor.u32 %v1903, %v1906
  %v1908 = vrot.slane %v1907, 4
  %v1910 = vshll.u32 %v1773, 16
  %v1912 = vrot.slane %v1910, 5
  %v1913 = vsel %vm609, %v1908, %v1912
  %v1915 = vshrl.u32 %v1774, 16
  %v1917 = vrot.slane %v1915, 4
  %v1918 = vshll.u32 %v1774, 16
  %v1920 = vrot.slane %v1918, 5
  %v1921 = vor.u32 %v1917, %v1920
  %v1922 = vrot.slane %v1921, 4
  %v1924 = vshll.u32 %v1775, 16
  %v1926 = vrot.slane %v1924, 5
  %v1927 = vsel %vm609, %v1922, %v1926
  %v1929 = vshrl.u32 %v1776, 16
  %v1931 = vrot.slane %v1929, 4
  %v1932 = vshll.u32 %v1776, 16
  %v1934 = vrot.slane %v1932, 5
  %v1935 = vor.u32 %v1931, %v1934
  %v1936 = vrot.slane %v1935, 4
  %v1938 = vshll.u32 %v1777, 16
  %v1940 = vrot.slane %v1938, 5
  %v1941 = vsel %vm609, %v1936, %v1940
  %v1943 = vshrl.u32 %v1778, 16
  %v1945 = vrot.slane %v1943, 4
  %v1946 = vshll.u32 %v1778, 16
  %v1948 = vrot.slane %v1946, 5
  %v1949 = vor.u32 %v1945, %v1948
  %v1950 = vrot.slane %v1949, 4
  %v1952 = vshll.u32 %v1779, 16
  %v1954 = vrot.slane %v1952, 5
  %v1955 = vsel %vm609, %v1950, %v1954
  %v1957 = vshrl.u32 %v1780, 16
  %v1959 = vrot.slane %v1957, 4
  %v1960 = vshll.u32 %v1780, 16
  %v1962 = vrot.slane %v1960, 5
  %v1963 = vor.u32 %v1959, %v1962
  %v1964 = vrot.slane %v1963, 4
  %v1966 = vshll.u32 %v1781, 16
  %v1968 = vrot.slane %v1966, 5
  %v1969 = vsel %vm609, %v1964, %v1968
  %v1971 = vshrl.u32 %v1782, 16
  %v1973 = vrot.slane %v1971, 4
  %v1974 = vshll.u32 %v1782, 16
  %v1976 = vrot.slane %v1974, 5
  %v1977 = vor.u32 %v1973, %v1976
  %v1978 = vrot.slane %v1977, 4
  %v1980 = vshll.u32 %v1783, 16
  %v1982 = vrot.slane %v1980, 5
  %v1983 = vsel %vm609, %v1978, %v1982
  %v1985 = vshrl.u32 %v1784, 16
  %v1987 = vrot.slane %v1985, 4
  %v1988 = vshll.u32 %v1784, 16
  %v1990 = vrot.slane %v1988, 5
  %v1991 = vor.u32 %v1987, %v1990
  %v1992 = vrot.slane %v1991, 4
  %v1994 = vshll.u32 %v1785, 16
  %v1996 = vrot.slane %v1994, 5
  %v1997 = vsel %vm609, %v1992, %v1996
  %v1999 = vshrl.u32 %v1786, 16
  %v2001 = vrot.slane %v1999, 4
  %v2002 = vshll.u32 %v1786, 16
  %v2004 = vrot.slane %v2002, 5
  %v2005 = vor.u32 %v2001, %v2004
  %v2006 = vrot.slane %v2005, 4
  %v2008 = vshll.u32 %v1787, 16
  %v2010 = vrot.slane %v2008, 5
  %v2011 = vsel %vm609, %v2006, %v2010
  %v2012 = vunpack.c.l.b16 %v1801
  %v2013 = vunpack.c.l.b16 %v1815
  %v2014 = vunpack.c.l.b16 %v1829
  %v2015 = vunpack.c.l.b16 %v1843
  %v2016 = vunpack.c.l.b16 %v1857
  %v2017 = vunpack.c.l.b16 %v1871
  %v2018 = vunpack.c.l.b16 %v1885
  %v2019 = vunpack.c.l.b16 %v1899
  %v2020 = vunpack.c.l.b16 %v1913
  %v2021 = vunpack.c.l.b16 %v1927
  %v2022 = vunpack.c.l.b16 %v1941
  %v2023 = vunpack.c.l.b16 %v1955
  %v2024 = vunpack.c.l.b16 %v1969
  %v2025 = vunpack.c.l.b16 %v1983
  %v2026 = vunpack.c.l.b16 %v1997
  %v2027 = vunpack.c.l.b16 %v2011
  %v2028 = vpack.c.b16 %v2013, %v2012
  %v2029 = vpack.c.b16 %v2015, %v2014
  %v2030 = vpack.c.b16 %v2017, %v2016
  %v2031 = vpack.c.b16 %v2019, %v2018
  %v2032 = vpack.c.b16 %v2021, %v2020
  %v2033 = vpack.c.b16 %v2023, %v2022
  %v2034 = vpack.c.b16 %v2025, %v2024
  %v2035 = vpack.c.b16 %v2027, %v2026
  %2036 = vrot.lane.b32.xlu0 %v2028, 28
  %v2037 = vpop.permute.xlu0 %2036
  %2038 = vrot.lane.b32.xlu0 %v2029, 28
  %v2039 = vpop.permute.xlu0 %2038
  %2040 = vrot.lane.b32.xlu0 %v2030, 28
  %v2041 = vpop.permute.xlu0 %2040
  %2042 = vrot.lane.b32.xlu0 %v2031, 28
  %v2043 = vpop.permute.xlu0 %2042
  %2044 = vrot.lane.b32.xlu0 %v2032, 28
  %v2045 = vpop.permute.xlu0 %2044
  %2046 = vrot.lane.b32.xlu0 %v2033, 28
  %v2047 = vpop.permute.xlu0 %2046
  %2048 = vrot.lane.b32.xlu0 %v2034, 28
  %v2049 = vpop.permute.xlu0 %2048
  %2050 = vrot.lane.b32.xlu0 %v2035, 28
  %v2051 = vpop.permute.xlu0 %2050
  %vm2060 = vcmask 261344
  %2061 = vst.msk [vmem:[#allocation4] sm:$0xff] %vm2060, %v2037
  %2062 = vst.msk [vmem:[#allocation4 + $0x8] sm:$0xff] %vm2060, %v2039
  %2063 = vst.msk [vmem:[#allocation4 + $0x10] sm:$0xff] %vm2060, %v2041
  %2064 = vst.msk [vmem:[#allocation4 + $0x18] sm:$0xff] %vm2060, %v2043
  %2065 = vst.msk [vmem:[#allocation4 + $0x20] sm:$0xff] %vm2060, %v2045
  %2066 = vst.msk [vmem:[#allocation4 + $0x28] sm:$0xff] %vm2060, %v2047
  %2067 = vst.msk [vmem:[#allocation4 + $0x30] sm:$0xff] %vm2060, %v2049
  %2068 = vst.msk [vmem:[#allocation4 + $0x38] sm:$0xff] %vm2060, %v2051
  %v2069 = vld [vmem:[%s1666] sm:$0xe]
  %v2070 = vld [vmem:[%s1666 + $0x4] sm:$0x1]
  %v2071 = vld [vmem:[%s1666 + $0x8] sm:$0xe]
  %v2072 = vld [vmem:[%s1666 + $0xc] sm:$0x1]
  %v2073 = vld [vmem:[%s1666 + $0x10] sm:$0xe]
  %v2074 = vld [vmem:[%s1666 + $0x14] sm:$0x1]
  %v2075 = vld [vmem:[%s1666 + $0x18] sm:$0xe]
  %v2076 = vld [vmem:[%s1666 + $0x1c] sm:$0x1]
  %v2077 = vld [vmem:[%s1666 + $0x20] sm:$0xe]
  %v2078 = vld [vmem:[%s1666 + $0x24] sm:$0x1]
  %v2079 = vld [vmem:[%s1666 + $0x28] sm:$0xe]
  %v2080 = vld [vmem:[%s1666 + $0x2c] sm:$0x1]
  %v2081 = vld [vmem:[%s1666 + $0x30] sm:$0xe]
  %v2082 = vld [vmem:[%s1666 + $0x34] sm:$0x1]
  %v2083 = vld [vmem:[%s1666 + $0x38] sm:$0xe]
  %v2084 = vld [vmem:[%s1666 + $0x3c] sm:$0x1]
  %v2085 = vld [vmem:[%s1666 + $0x50] sm:$0xe]
  %v2086 = vld [vmem:[%s1666 + $0x54] sm:$0x1]
  %v2087 = vld [vmem:[%s1666 + $0x58] sm:$0xe]
  %v2088 = vld [vmem:[%s1666 + $0x5c] sm:$0x1]
  %v2089 = vld [vmem:[%s1666 + $0x60] sm:$0xe]
  %v2090 = vld [vmem:[%s1666 + $0x64] sm:$0x1]
  %v2091 = vld [vmem:[%s1666 + $0x68] sm:$0xe]
  %v2092 = vld [vmem:[%s1666 + $0x6c] sm:$0x1]
  %v2093 = vld [vmem:[%s1666 + $0x70] sm:$0xe]
  %v2094 = vld [vmem:[%s1666 + $0x74] sm:$0x1]
  %v2095 = vld [vmem:[%s1666 + $0x78] sm:$0xe]
  %v2096 = vld [vmem:[%s1666 + $0x7c] sm:$0x1]
  %v2097 = vld [vmem:[%s1666 + $0x80] sm:$0xe]
  %v2098 = vld [vmem:[%s1666 + $0x84] sm:$0x1]
  %v2099 = vld [vmem:[%s1666 + $0x88] sm:$0xe]
  %v2100 = vld [vmem:[%s1666 + $0x8c] sm:$0x1]
  %v2133 = vrot.slane %v2069, 5
  %v2134 = vrot.slane %v2133, 4
  %v2135 = vrot.slane %v2070, 5
  %v2136 = vsel %vm957, %v2134, %v2135
  %v2137 = vrot.slane %v2071, 5
  %v2138 = vrot.slane %v2137, 4
  %v2139 = vrot.slane %v2072, 5
  %v2140 = vsel %vm957, %v2138, %v2139
  %v2141 = vrot.slane %v2073, 5
  %v2142 = vrot.slane %v2141, 4
  %v2143 = vrot.slane %v2074, 5
  %v2144 = vsel %vm957, %v2142, %v2143
  %v2145 = vrot.slane %v2075, 5
  %v2146 = vrot.slane %v2145, 4
  %v2147 = vrot.slane %v2076, 5
  %v2148 = vsel %vm957, %v2146, %v2147
  %v2149 = vrot.slane %v2077, 5
  %v2150 = vrot.slane %v2149, 4
  %v2151 = vrot.slane %v2078, 5
  %v2152 = vsel %vm957, %v2150, %v2151
  %v2153 = vrot.slane %v2079, 5
  %v2154 = vrot.slane %v2153, 4
  %v2155 = vrot.slane %v2080, 5
  %v2156 = vsel %vm957, %v2154, %v2155
  %v2157 = vrot.slane %v2081, 5
  %v2158 = vrot.slane %v2157, 4
  %v2159 = vrot.slane %v2082, 5
  %v2160 = vsel %vm957, %v2158, %v2159
  %v2161 = vrot.slane %v2083, 5
  %v2162 = vrot.slane %v2161, 4
  %v2163 = vrot.slane %v2084, 5
  %v2164 = vsel %vm957, %v2162, %v2163
  %v2165 = vrot.slane %v2085, 5
  %v2166 = vrot.slane %v2165, 4
  %v2167 = vrot.slane %v2086, 5
  %v2168 = vsel %vm957, %v2166, %v2167
  %v2169 = vrot.slane %v2087, 5
  %v2170 = vrot.slane %v2169, 4
  %v2171 = vrot.slane %v2088, 5
  %v2172 = vsel %vm957, %v2170, %v2171
  %v2173 = vrot.slane %v2089, 5
  %v2174 = vrot.slane %v2173, 4
  %v2175 = vrot.slane %v2090, 5
  %v2176 = vsel %vm957, %v2174, %v2175
  %v2177 = vrot.slane %v2091, 5
  %v2178 = vrot.slane %v2177, 4
  %v2179 = vrot.slane %v2092, 5
  %v2180 = vsel %vm957, %v2178, %v2179
  %v2181 = vrot.slane %v2093, 5
  %v2182 = vrot.slane %v2181, 4
  %v2183 = vrot.slane %v2094, 5
  %v2184 = vsel %vm957, %v2182, %v2183
  %v2185 = vrot.slane %v2095, 5
  %v2186 = vrot.slane %v2185, 4
  %v2187 = vrot.slane %v2096, 5
  %v2188 = vsel %vm957, %v2186, %v2187
  %v2189 = vrot.slane %v2097, 5
  %v2190 = vrot.slane %v2189, 4
  %v2191 = vrot.slane %v2098, 5
  %v2192 = vsel %vm957, %v2190, %v2191
  %v2193 = vrot.slane %v2099, 5
  %v2194 = vrot.slane %v2193, 4
  %v2195 = vrot.slane %v2100, 5
  %v2196 = vsel %vm957, %v2194, %v2195
  %v2197 = vunpack.c.l.b16 %v2136
  %v2198 = vunpack.c.l.b16 %v2140
  %v2199 = vunpack.c.l.b16 %v2144
  %v2200 = vunpack.c.l.b16 %v2148
  %v2201 = vunpack.c.l.b16 %v2152
  %v2202 = vunpack.c.l.b16 %v2156
  %v2203 = vunpack.c.l.b16 %v2160
  %v2204 = vunpack.c.l.b16 %v2164
  %v2205 = vunpack.c.l.b16 %v2168
  %v2206 = vunpack.c.l.b16 %v2172
  %v2207 = vunpack.c.l.b16 %v2176
  %v2208 = vunpack.c.l.b16 %v2180
  %v2209 = vunpack.c.l.b16 %v2184
  %v2210 = vunpack.c.l.b16 %v2188
  %v2211 = vunpack.c.l.b16 %v2192
  %v2212 = vunpack.c.l.b16 %v2196
  %v2213 = vpack.c.b16 %v2198, %v2197
  %v2214 = vpack.c.b16 %v2200, %v2199
  %v2215 = vpack.c.b16 %v2202, %v2201
  %v2216 = vpack.c.b16 %v2204, %v2203
  %v2217 = vpack.c.b16 %v2206, %v2205
  %v2218 = vpack.c.b16 %v2208, %v2207
  %v2219 = vpack.c.b16 %v2210, %v2209
  %v2220 = vpack.c.b16 %v2212, %v2211
  %2221 = vrot.lane.b32.xlu0 %v2213, 32
  %v2222 = vpop.permute.xlu0 %2221
  %2223 = vrot.lane.b32.xlu0 %v2214, 32
  %v2224 = vpop.permute.xlu0 %2223
  %2225 = vrot.lane.b32.xlu0 %v2215, 32
  %v2226 = vpop.permute.xlu0 %2225
  %2227 = vrot.lane.b32.xlu0 %v2216, 32
  %v2228 = vpop.permute.xlu0 %2227
  %2229 = vrot.lane.b32.xlu0 %v2217, 32
  %v2230 = vpop.permute.xlu0 %2229
  %2231 = vrot.lane.b32.xlu0 %v2218, 32
  %v2232 = vpop.permute.xlu0 %2231
  %2233 = vrot.lane.b32.xlu0 %v2219, 32
  %v2234 = vpop.permute.xlu0 %2233
  %2235 = vrot.lane.b32.xlu0 %v2220, 32
  %v2236 = vpop.permute.xlu0 %2235
  %vm2245 = vcmask 294144
  %2246 = vst.msk [vmem:[#allocation4] sm:$0xff] %vm2245, %v2222
  %2247 = vst.msk [vmem:[#allocation4 + $0x8] sm:$0xff] %vm2245, %v2224
  %2248 = vst.msk [vmem:[#allocation4 + $0x10] sm:$0xff] %vm2245, %v2226
  %2249 = vst.msk [vmem:[#allocation4 + $0x18] sm:$0xff] %vm2245, %v2228
  %2250 = vst.msk [vmem:[#allocation4 + $0x20] sm:$0xff] %vm2245, %v2230
  %2251 = vst.msk [vmem:[#allocation4 + $0x28] sm:$0xff] %vm2245, %v2232
  %2252 = vst.msk [vmem:[#allocation4 + $0x30] sm:$0xff] %vm2245, %v2234
  %2253 = vst.msk [vmem:[#allocation4 + $0x38] sm:$0xff] %vm2245, %v2236
  %v2254 = vld [vmem:[#allocation4] sm:$0xff]
  %v2255 = vld [vmem:[#allocation4 + $0x8] sm:$0xff]
  %v2256 = vld [vmem:[#allocation4 + $0x10] sm:$0xff]
  %v2257 = vld [vmem:[#allocation4 + $0x18] sm:$0xff]
  %v2258 = vld [vmem:[#allocation4 + $0x20] sm:$0xff]
  %v2259 = vld [vmem:[#allocation4 + $0x28] sm:$0xff]
  %v2260 = vld [vmem:[#allocation4 + $0x30] sm:$0xff]
  %v2261 = vld [vmem:[#allocation4 + $0x38] sm:$0xff]
  %v2262 = vld [vmem:[%s1] sm:$0xf]
  %v2263 = vld [vmem:[%s1 + $0x4] sm:$0xf]
  %v2264 = vld [vmem:[%s1 + $0x8] sm:$0xf]
  %v2265 = vld [vmem:[%s1 + $0xc] sm:$0xf]
  %v2266 = vld [vmem:[%s1 + $0x10] sm:$0x3]
  %v2272 = vunpack.c.l.b16 %v2262
  %v2273 = vunpack.c.l.b16 %v2263
  %v2274 = vunpack.c.l.b16 %v2264
  %v2275 = vunpack.c.l.b16 %v2265
  %v2276 = vunpack.c.l.b16 %v2266
  %v2277 = vpack.c.b16 %v2273, %v2272
  %v2278 = vpack.c.b16 %v2275, %v2274
  %v2279 = vpack.c.b16 %v2276, %v2276
  %vm2282 = vcmask 293888
  %v2284 = vsel %vm2282, %v2254, 0
  %v2287 = vsel %vm2282, %v2255, 0
  %v2290 = vsel %vm2282, %v2256, 0
  %v2293 = vsel %vm2282, %v2257, 0
  %v2296 = vsel %vm2282, %v2258, 0
  %v2299 = vsel %vm2282, %v2259, 0
  %v2302 = vsel %vm2282, %v2260, 0
  %v2305 = vsel %vm2282, %v2261, 0
  %vm2307 = vcmask 1041408
  %v2309 = vsel %vm2307, %v2279, 0
  %2311 = vmatprep.subr.bf16.mxu0 0
  %2312 = vmatpush1.bf16.msra.mxu0 %v2277
  %2313 = vmatprep.subr.bf16.mxu0 0
  %2314 = vmatpush1.bf16.msra.mxu0 %v2278
  %2315 = vmatprep.subr.bf16.mxu0 0
  %2316 = vmatpush1.bf16.msra.mxu0 %v2309
  %2317 = vmatprep.subr.bf16.mxu0 0
  %2318 = vmatpush1.bf16.msra.mxu0 0
  %2319 = vmatprep.subr.bf16.mxu0 0
  %2320 = vmatpush1.bf16.msra.mxu0 0
  %2321 = vmatprep.subr.bf16.mxu0 0
  %2322 = vmatpush1.bf16.msra.mxu0 0
  %2323 = vmatprep.subr.bf16.mxu0 0
  %2324 = vmatpush1.bf16.msra.mxu0 0
  %2325 = vmatprep.subr.bf16.mxu0 0
  %2326 = vmatpush1.bf16.msra.mxu0 0
  %2327 = vmatprep.subr.bf16.mxu0 0
  %2328 = vmatpush1.bf16.msra.mxu0 0
  %2329 = vmatprep.subr.bf16.mxu0 0
  %2330 = vmatpush1.bf16.msra.mxu0 0
  %2331 = vmatprep.subr.bf16.mxu0 0
  %2332 = vmatpush1.bf16.msra.mxu0 0
  %2333 = vmatprep.subr.bf16.mxu0 0
  %2334 = vmatpush1.bf16.msra.mxu0 0
  %2335 = vmatprep.subr.bf16.mxu0 0
  %2336 = vmatpush1.bf16.msra.mxu0 0
  %2337 = vmatprep.subr.bf16.mxu0 0
  %2338 = vmatpush1.bf16.msra.mxu0 0
  %2339 = vmatprep.subr.bf16.mxu0 0
  %2340 = vmatpush1.bf16.msra.mxu0 0
  %2341 = vmatprep.subr.bf16.mxu0 0
  %2342 = vmatpush1.bf16.msra.mxu0 0
  %2343 = vmatprep.mubr.bf16.mxu0 0
  %2344 = vmatmul.mubr.bf16.gmra.mrb[0].mxu0 %v2284
  %v2345 = vpop.f32.mrb[0].mxu0
  %v2346 = vadd.f32 0.0, %v2345
  %v2347 = vpop.f32.mrb[0].mxu0
  %v2348 = vpop.f32.mrb[0].mxu0
  %v2349 = vadd.f32 0.0, %v2348
  %v2350 = vpop.f32.mrb[0].mxu0
  %2351 = vmatprep.mubr.bf16.mxu0 0
  %2352 = vmatmul.mubr.bf16.gmra.mrb[0].mxu0 %v2287
  %v2353 = vpop.f32.mrb[0].mxu0
  %v2354 = vadd.f32 0.0, %v2353
  %v2355 = vpop.f32.mrb[0].mxu0
  %v2356 = vpop.f32.mrb[0].mxu0
  %v2357 = vadd.f32 0.0, %v2356
  %v2358 = vpop.f32.mrb[0].mxu0
  %2359 = vmatprep.mubr.bf16.mxu0 0
  %2360 = vmatmul.mubr.bf16.gmra.mrb[0].mxu0 %v2290
  %v2361 = vpop.f32.mrb[0].mxu0
  %v2362 = vadd.f32 0.0, %v2361
  %v2363 = vpop.f32.mrb[0].mxu0
  %v2364 = vpop.f32.mrb[0].mxu0
  %v2365 = vadd.f32 0.0, %v2364
  %v2366 = vpop.f32.mrb[0].mxu0
  %2367 = vmatprep.mubr.bf16.mxu0 0
  %2368 = vmatmul.mubr.bf16.gmra.mrb[0].mxu0 %v2293
  %v2369 = vpop.f32.mrb[0].mxu0
  %v2370 = vadd.f32 0.0, %v2369
  %v2371 = vpop.f32.mrb[0].mxu0
  %v2372 = vpop.f32.mrb[0].mxu0
  %v2373 = vadd.f32 0.0, %v2372
  %v2374 = vpop.f32.mrb[0].mxu0
  %2375 = vmatprep.mubr.bf16.mxu0 0
  %2376 = vmatmul.mubr.bf16.gmra.mrb[0].mxu0 %v2296
  %v2377 = vpop.f32.mrb[0].mxu0
  %v2378 = vadd.f32 0.0, %v2377
  %v2379 = vpop.f32.mrb[0].mxu0
  %v2380 = vpop.f32.mrb[0].mxu0
  %v2381 = vadd.f32 0.0, %v2380
  %v2382 = vpop.f32.mrb[0].mxu0
  %2383 = vmatprep.mubr.bf16.mxu0 0
  %2384 = vmatmul.mubr.bf16.gmra.mrb[0].mxu0 %v2299
  %v2385 = vpop.f32.mrb[0].mxu0
  %v2386 = vadd.f32 0.0, %v2385
  %v2387 = vpop.f32.mrb[0].mxu0
  %v2388 = vpop.f32.mrb[0].mxu0
  %v2389 = vadd.f32 0.0, %v2388
  %v2390 = vpop.f32.mrb[0].mxu0
  %2391 = vmatprep.mubr.bf16.mxu0 0
  %2392 = vmatmul.mubr.bf16.gmra.mrb[0].mxu0 %v2302
  %v2393 = vpop.f32.mrb[0].mxu0
  %v2394 = vadd.f32 0.0, %v2393
  %v2395 = vpop.f32.mrb[0].mxu0
  %v2396 = vpop.f32.mrb[0].mxu0
  %v2397 = vadd.f32 0.0, %v2396
  %v2398 = vpop.f32.mrb[0].mxu0
  %2399 = vmatprep.mubr.bf16.mxu0 0
  %2400 = vmatmul.mubr.bf16.gmra.mrb[0].mxu0 %v2305
  %v2401 = vpop.f32.mrb[0].mxu0
  %v2402 = vadd.f32 0.0, %v2401
  %v2403 = vpop.f32.mrb[0].mxu0
  %v2404 = vpop.f32.mrb[0].mxu0
  %v2405 = vadd.f32 0.0, %v2404
  %v2406 = vpop.f32.mrb[0].mxu0
  %2407 = vdwg.mxu0
  %vm2408 = vcmask 64512
  %v2409 = vsel %vm2408, %v2346, 0.0
  %v2410 = vsel %vm2408, %v2349, 0.0
  %v2411 = vadd.f32 %v2409, %v2410
  %v2412 = vsel %vm2408, %v2354, 0.0
  %v2413 = vadd.f32 %v2411, %v2412
  %v2414 = vsel %vm2408, %v2357, 0.0
  %v2415 = vadd.f32 %v2413, %v2414
  %v2416 = vsel %vm2408, %v2362, 0.0
  %v2417 = vadd.f32 %v2415, %v2416
  %v2418 = vsel %vm2408, %v2365, 0.0
  %v2419 = vadd.f32 %v2417, %v2418
  %v2420 = vsel %vm2408, %v2370, 0.0
  %v2421 = vadd.f32 %v2419, %v2420
  %v2422 = vsel %vm2408, %v2373, 0.0
  %v2423 = vadd.f32 %v2421, %v2422
  %v2424 = vsel %vm2408, %v2378, 0.0
  %v2425 = vadd.f32 %v2423, %v2424
  %v2426 = vsel %vm2408, %v2381, 0.0
  %v2427 = vadd.f32 %v2425, %v2426
  %v2428 = vsel %vm2408, %v2386, 0.0
  %v2429 = vadd.f32 %v2427, %v2428
  %v2430 = vsel %vm2408, %v2389, 0.0
  %v2431 = vadd.f32 %v2429, %v2430
  %v2432 = vsel %vm2408, %v2394, 0.0
  %v2433 = vadd.f32 %v2431, %v2432
  %v2434 = vsel %vm2408, %v2397, 0.0
  %v2435 = vadd.f32 %v2433, %v2434
  %v2436 = vsel %vm2408, %v2402, 0.0
  %v2437 = vadd.f32 %v2435, %v2436
  %v2438 = vsel %vm2408, %v2405, 0.0
  %v2439 = vadd.f32 %v2437, %v2438
  %v2440 = vrot.slane %v2439, 4
  %v2441 = vadd.f32 %v2439, %v2440
  %v2442 = vrot.slane %v2441, 2
  %v2443 = vadd.f32 %v2441, %v2442
  %v2444 = vrot.slane %v2443, 1
  %v2445 = vadd.f32 %v2443, %v2444
  %v2446 = vmul.f32 %v2445, 0.0078125
  %v2447 = vsub.f32 %v2346, %v2446
  %v2448 = vsub.f32 %v2349, %v2446
  %v2449 = vsub.f32 %v2354, %v2446
  %v2450 = vsub.f32 %v2357, %v2446
  %v2451 = vsub.f32 %v2362, %v2446
  %v2452 = vsub.f32 %v2365, %v2446
  %v2453 = vsub.f32 %v2370, %v2446
  %v2454 = vsub.f32 %v2373, %v2446
  %v2455 = vsub.f32 %v2378, %v2446
  %v2456 = vsub.f32 %v2381, %v2446
  %v2457 = vsub.f32 %v2386, %v2446
  %v2458 = vsub.f32 %v2389, %v2446
  %v2459 = vsub.f32 %v2394, %v2446
  %v2460 = vsub.f32 %v2397, %v2446
  %v2461 = vsub.f32 %v2402, %v2446
  %v2462 = vsub.f32 %v2405, %v2446
  %v2463 = vmul.f32 %v2447, %v2447
  %v2464 = vmul.f32 %v2448, %v2448
  %v2465 = vmul.f32 %v2449, %v2449
  %v2466 = vmul.f32 %v2450, %v2450
  %v2467 = vmul.f32 %v2451, %v2451
  %v2468 = vmul.f32 %v2452, %v2452
  %v2469 = vmul.f32 %v2453, %v2453
  %v2470 = vmul.f32 %v2454, %v2454
  %v2471 = vmul.f32 %v2455, %v2455
  %v2472 = vmul.f32 %v2456, %v2456
  %v2473 = vmul.f32 %v2457, %v2457
  %v2474 = vmul.f32 %v2458, %v2458
  %v2475 = vmul.f32 %v2459, %v2459
  %v2476 = vmul.f32 %v2460, %v2460
  %v2477 = vmul.f32 %v2461, %v2461
  %v2478 = vmul.f32 %v2462, %v2462
  %v2479 = vsel %vm2408, %v2463, 0.0
  %v2480 = vsel %vm2408, %v2464, 0.0
  %v2481 = vadd.f32 %v2479, %v2480
  %v2482 = vsel %vm2408, %v2465, 0.0
  %v2483 = vadd.f32 %v2481, %v2482
  %v2484 = vsel %vm2408, %v2466, 0.0
  %v2485 = vadd.f32 %v2483, %v2484
  %v2486 = vsel %vm2408, %v2467, 0.0
  %v2487 = vadd.f32 %v2485, %v2486
  %v2488 = vsel %vm2408, %v2468, 0.0
  %v2489 = vadd.f32 %v2487, %v2488
  %v2490 = vsel %vm2408, %v2469, 0.0
  %v2491 = vadd.f32 %v2489, %v2490
  %v2492 = vsel %vm2408, %v2470, 0.0
  %v2493 = vadd.f32 %v2491, %v2492
  %v2494 = vsel %vm2408, %v2471, 0.0
  %v2495 = vadd.f32 %v2493, %v2494
  %v2496 = vsel %vm2408, %v2472, 0.0
  %v2497 = vadd.f32 %v2495, %v2496
  %v2498 = vsel %vm2408, %v2473, 0.0
  %v2499 = vadd.f32 %v2497, %v2498
  %v2500 = vsel %vm2408, %v2474, 0.0
  %v2501 = vadd.f32 %v2499, %v2500
  %v2502 = vsel %vm2408, %v2475, 0.0
  %v2503 = vadd.f32 %v2501, %v2502
  %v2504 = vsel %vm2408, %v2476, 0.0
  %v2505 = vadd.f32 %v2503, %v2504
  %v2506 = vsel %vm2408, %v2477, 0.0
  %v2507 = vadd.f32 %v2505, %v2506
  %v2508 = vsel %vm2408, %v2478, 0.0
  %v2509 = vadd.f32 %v2507, %v2508
  %v2510 = vrot.slane %v2509, 4
  %v2511 = vadd.f32 %v2509, %v2510
  %v2512 = vrot.slane %v2511, 2
  %v2513 = vadd.f32 %v2511, %v2512
  %v2514 = vrot.slane %v2513, 1
  %v2515 = vadd.f32 %v2513, %v2514
  %v2516 = vmul.f32 %v2515, 0.0078125
  %v2517 = vmax.f32 %v2516, 0.0
  %v2518 = vadd.f32 %v2517, 1e-05
  %v2519 = vrsqrt.pop %v2518
  %v2520 = vmul.f32 %v2519, %v500
  %v2521 = vlaneseq
  %v2522 = vshrl.u32 %v2521, 7
  %v2523 = vsub.s32 0, %v2522
  %v2524 = vrot.slane %v2520, %v2523
  %v2525 = vmul.f32 %v2447, %v2524
  %v2526 = vmul.f32 %v2448, %v2524
  %v2527 = vmul.f32 %v2449, %v2524
  %v2528 = vmul.f32 %v2450, %v2524
  %v2529 = vmul.f32 %v2451, %v2524
  %v2530 = vmul.f32 %v2452, %v2524
  %v2531 = vmul.f32 %v2453, %v2524
  %v2532 = vmul.f32 %v2454, %v2524
  %v2533 = vmul.f32 %v2455, %v2524
  %v2534 = vmul.f32 %v2456, %v2524
  %v2535 = vmul.f32 %v2457, %v2524
  %v2536 = vmul.f32 %v2458, %v2524
  %v2537 = vmul.f32 %v2459, %v2524
  %v2538 = vmul.f32 %v2460, %v2524
  %v2539 = vmul.f32 %v2461, %v2524
  %v2540 = vmul.f32 %v2462, %v2524
  %v2542 = vlaneseq
  %v2543 = vshrl.u32 %v2542, 7
  %v2544 = vsub.s32 0, %v2543
  %v2545 = vrot.slane %v501, %v2544
  %v2547 = vadd.f32 %v2525, %v2545
  %v2548 = vadd.f32 %v2526, %v2545
  %v2549 = vadd.f32 %v2527, %v2545
  %v2550 = vadd.f32 %v2528, %v2545
  %v2551 = vadd.f32 %v2529, %v2545
  %v2552 = vadd.f32 %v2530, %v2545
  %v2553 = vadd.f32 %v2531, %v2545
  %v2554 = vadd.f32 %v2532, %v2545
  %v2555 = vadd.f32 %v2533, %v2545
  %v2556 = vadd.f32 %v2534, %v2545
  %v2557 = vadd.f32 %v2535, %v2545
  %v2558 = vadd.f32 %v2536, %v2545
  %v2559 = vadd.f32 %v2537, %v2545
  %v2560 = vadd.f32 %v2538, %v2545
  %v2561 = vadd.f32 %v2539, %v2545
  %v2562 = vadd.f32 %v2540, %v2545
  %v2563 = vmax.f32 %v2547, 0.0
  %v2564 = vmax.f32 %v2548, 0.0
  %v2565 = vmax.f32 %v2549, 0.0
  %v2566 = vmax.f32 %v2550, 0.0
  %v2567 = vmax.f32 %v2551, 0.0
  %v2568 = vmax.f32 %v2552, 0.0
  %v2569 = vmax.f32 %v2553, 0.0
  %v2570 = vmax.f32 %v2554, 0.0
  %v2571 = vmax.f32 %v2555, 0.0
  %v2572 = vmax.f32 %v2556, 0.0
  %v2573 = vmax.f32 %v2557, 0.0
  %v2574 = vmax.f32 %v2558, 0.0
  %v2575 = vmax.f32 %v2559, 0.0
  %v2576 = vmax.f32 %v2560, 0.0
  %v2577 = vmax.f32 %v2561, 0.0
  %v2578 = vmax.f32 %v2562, 0.0
  %v2579 = vpack.c.bf16 %v2563, %v2563
  %v2580 = vpack.c.bf16 %v2564, %v2564
  %v2581 = vpack.c.bf16 %v2565, %v2565
  %v2582 = vpack.c.bf16 %v2566, %v2566
  %v2583 = vpack.c.bf16 %v2567, %v2567
  %v2584 = vpack.c.bf16 %v2568, %v2568
  %v2585 = vpack.c.bf16 %v2569, %v2569
  %v2586 = vpack.c.bf16 %v2570, %v2570
  %v2587 = vpack.c.bf16 %v2571, %v2571
  %v2588 = vpack.c.bf16 %v2572, %v2572
  %v2589 = vpack.c.bf16 %v2573, %v2573
  %v2590 = vpack.c.bf16 %v2574, %v2574
  %v2591 = vpack.c.bf16 %v2575, %v2575
  %v2592 = vpack.c.bf16 %v2576, %v2576
  %v2593 = vpack.c.bf16 %v2577, %v2577
  %v2594 = vpack.c.bf16 %v2578, %v2578
  %v2596 = vshrl.u32 %v2579, 16
  %v2598 = vrot.slane %v2596, 7
  %v2599 = vshll.u32 %v2579, 16
  %v2601 = vor.u32 %v2598, %v2599
  %v2603 = vshrl.u32 %v2580, 16
  %v2605 = vrot.slane %v2603, 7
  %v2606 = vshll.u32 %v2580, 16
  %v2608 = vor.u32 %v2605, %v2606
  %v2610 = vshrl.u32 %v2581, 16
  %v2612 = vrot.slane %v2610, 7
  %v2613 = vshll.u32 %v2581, 16
  %v2615 = vor.u32 %v2612, %v2613
  %v2617 = vshrl.u32 %v2582, 16
  %v2619 = vrot.slane %v2617, 7
  %v2620 = vshll.u32 %v2582, 16
  %v2622 = vor.u32 %v2619, %v2620
  %v2624 = vshrl.u32 %v2583, 16
  %v2626 = vrot.slane %v2624, 7
  %v2627 = vshll.u32 %v2583, 16
  %v2629 = vor.u32 %v2626, %v2627
  %v2631 = vshrl.u32 %v2584, 16
  %v2633 = vrot.slane %v2631, 7
  %v2634 = vshll.u32 %v2584, 16
  %v2636 = vor.u32 %v2633, %v2634
  %v2638 = vshrl.u32 %v2585, 16
  %v2640 = vrot.slane %v2638, 7
  %v2641 = vshll.u32 %v2585, 16
  %v2643 = vor.u32 %v2640, %v2641
  %v2645 = vshrl.u32 %v2586, 16
  %v2647 = vrot.slane %v2645, 7
  %v2648 = vshll.u32 %v2586, 16
  %v2650 = vor.u32 %v2647, %v2648
  %v2652 = vshrl.u32 %v2587, 16
  %v2654 = vrot.slane %v2652, 7
  %v2655 = vshll.u32 %v2587, 16
  %v2657 = vor.u32 %v2654, %v2655
  %v2659 = vshrl.u32 %v2588, 16
  %v2661 = vrot.slane %v2659, 7
  %v2662 = vshll.u32 %v2588, 16
  %v2664 = vor.u32 %v2661, %v2662
  %v2666 = vshrl.u32 %v2589, 16
  %v2668 = vrot.slane %v2666, 7
  %v2669 = vshll.u32 %v2589, 16
  %v2671 = vor.u32 %v2668, %v2669
  %v2673 = vshrl.u32 %v2590, 16
  %v2675 = vrot.slane %v2673, 7
  %v2676 = vshll.u32 %v2590, 16
  %v2678 = vor.u32 %v2675, %v2676
  %v2680 = vshrl.u32 %v2591, 16
  %v2682 = vrot.slane %v2680, 7
  %v2683 = vshll.u32 %v2591, 16
  %v2685 = vor.u32 %v2682, %v2683
  %v2687 = vshrl.u32 %v2592, 16
  %v2689 = vrot.slane %v2687, 7
  %v2690 = vshll.u32 %v2592, 16
  %v2692 = vor.u32 %v2689, %v2690
  %v2694 = vshrl.u32 %v2593, 16
  %v2696 = vrot.slane %v2694, 7
  %v2697 = vshll.u32 %v2593, 16
  %v2699 = vor.u32 %v2696, %v2697
  %v2701 = vshrl.u32 %v2594, 16
  %v2703 = vrot.slane %v2701, 7
  %v2704 = vshll.u32 %v2594, 16
  %v2706 = vor.u32 %v2703, %v2704
  %v2723 = vsel %vm319, 0, %v2601
  %v2724 = vsel %vm319, 0, %v2608
  %v2725 = vsel %vm319, 0, %v2615
  %v2726 = vsel %vm319, 0, %v2622
  %v2727 = vsel %vm319, 0, %v2629
  %v2728 = vsel %vm319, 0, %v2636
  %v2729 = vsel %vm319, 0, %v2643
  %v2730 = vsel %vm319, 0, %v2650
  %v2731 = vsel %vm319, 0, %v2657
  %v2732 = vsel %vm319, 0, %v2664
  %v2733 = vsel %vm319, 0, %v2671
  %v2734 = vsel %vm319, 0, %v2678
  %v2735 = vsel %vm319, 0, %v2685
  %v2736 = vsel %vm319, 0, %v2692
  %v2737 = vsel %vm319, 0, %v2699
  %v2738 = vsel %vm319, 0, %v2706
  %v2739 = vsel %vm338, %v2723, 0
  %v2740 = vsel %vm338, %v2724, 0
  %v2741 = vsel %vm338, %v2725, 0
  %v2742 = vsel %vm338, %v2726, 0
  %v2743 = vsel %vm338, %v2727, 0
  %v2744 = vsel %vm338, %v2728, 0
  %v2745 = vsel %vm338, %v2729, 0
  %v2746 = vsel %vm338, %v2730, 0
  %v2747 = vsel %vm338, %v2731, 0
  %v2748 = vsel %vm338, %v2732, 0
  %v2749 = vsel %vm338, %v2733, 0
  %v2750 = vsel %vm338, %v2734, 0
  %v2751 = vsel %vm338, %v2735, 0
  %v2752 = vsel %vm338, %v2736, 0
  %v2753 = vsel %vm338, %v2737, 0
  %v2754 = vsel %vm338, %v2738, 0
  %v2771 = vunpack.c.l.b16 %v2739
  %v2772 = vunpack.c.h.b16 %v2739
  %v2773 = vunpack.c.l.b16 %v2740
  %v2774 = vunpack.c.h.b16 %v2740
  %v2775 = vunpack.c.l.b16 %v2741
  %v2776 = vunpack.c.h.b16 %v2741
  %v2777 = vunpack.c.l.b16 %v2742
  %v2778 = vunpack.c.h.b16 %v2742
  %v2779 = vunpack.c.l.b16 %v2743
  %v2780 = vunpack.c.h.b16 %v2743
  %v2781 = vunpack.c.l.b16 %v2744
  %v2782 = vunpack.c.h.b16 %v2744
  %v2783 = vunpack.c.l.b16 %v2745
  %v2784 = vunpack.c.h.b16 %v2745
  %v2785 = vunpack.c.l.b16 %v2746
  %v2786 = vunpack.c.h.b16 %v2746
  %v2787 = vunpack.c.l.b16 %v2747
  %v2788 = vunpack.c.h.b16 %v2747
  %v2789 = vunpack.c.l.b16 %v2748
  %v2790 = vunpack.c.h.b16 %v2748
  %v2791 = vunpack.c.l.b16 %v2749
  %v2792 = vunpack.c.h.b16 %v2749
  %v2793 = vunpack.c.l.b16 %v2750
  %v2794 = vunpack.c.h.b16 %v2750
  %v2795 = vunpack.c.l.b16 %v2751
  %v2796 = vunpack.c.h.b16 %v2751
  %v2797 = vunpack.c.l.b16 %v2752
  %v2798 = vunpack.c.h.b16 %v2752
  %v2799 = vunpack.c.l.b16 %v2753
  %v2800 = vunpack.c.h.b16 %v2753
  %v2801 = vunpack.c.l.b16 %v2754
  %v2802 = vunpack.c.h.b16 %v2754
  %v2803 = vpack.c.b16 %v2771, %v2771
  %v2804 = vpack.c.b16 %v2772, %v2772
  %v2805 = vpack.c.b16 %v2773, %v2773
  %v2806 = vpack.c.b16 %v2774, %v2774
  %v2807 = vpack.c.b16 %v2775, %v2775
  %v2808 = vpack.c.b16 %v2776, %v2776
  %v2809 = vpack.c.b16 %v2777, %v2777
  %v2810 = vpack.c.b16 %v2778, %v2778
  %v2811 = vpack.c.b16 %v2779, %v2779
  %v2812 = vpack.c.b16 %v2780, %v2780
  %v2813 = vpack.c.b16 %v2781, %v2781
  %v2814 = vpack.c.b16 %v2782, %v2782
  %v2815 = vpack.c.b16 %v2783, %v2783
  %v2816 = vpack.c.b16 %v2784, %v2784
  %v2817 = vpack.c.b16 %v2785, %v2785
  %v2818 = vpack.c.b16 %v2786, %v2786
  %v2819 = vpack.c.b16 %v2787, %v2787
  %v2820 = vpack.c.b16 %v2788, %v2788
  %v2821 = vpack.c.b16 %v2789, %v2789
  %v2822 = vpack.c.b16 %v2790, %v2790
  %v2823 = vpack.c.b16 %v2791, %v2791
  %v2824 = vpack.c.b16 %v2792, %v2792
  %v2825 = vpack.c.b16 %v2793, %v2793
  %v2826 = vpack.c.b16 %v2794, %v2794
  %v2827 = vpack.c.b16 %v2795, %v2795
  %v2828 = vpack.c.b16 %v2796, %v2796
  %v2829 = vpack.c.b16 %v2797, %v2797
  %v2830 = vpack.c.b16 %v2798, %v2798
  %v2831 = vpack.c.b16 %v2799, %v2799
  %v2832 = vpack.c.b16 %v2800, %v2800
  %v2833 = vpack.c.b16 %v2801, %v2801
  %v2834 = vpack.c.b16 %v2802, %v2802
  %s2867 = scalar_lea.vmem [#allocation3], 8
  %2868 = vst.msk [vmem:[%s2867] sm:$0xf] %vm162, %v2803
  %2869 = vst.msk [vmem:[%s2867 + $0x4] sm:$0x1] %vm164, %v2804
  %2870 = vst.msk [vmem:[%s2867 + $0x8] sm:$0xf] %vm162, %v2805
  %2871 = vst.msk [vmem:[%s2867 + $0xc] sm:$0x1] %vm164, %v2806
  %2872 = vst.msk [vmem:[%s2867 + $0x10] sm:$0xf] %vm162, %v2807
  %2873 = vst.msk [vmem:[%s2867 + $0x14] sm:$0x1] %vm164, %v2808
  %2874 = vst.msk [vmem:[%s2867 + $0x18] sm:$0xf] %vm162, %v2809
  %2875 = vst.msk [vmem:[%s2867 + $0x1c] sm:$0x1] %vm164, %v2810
  %2876 = vst.msk [vmem:[%s2867 + $0x20] sm:$0xf] %vm162, %v2811
  %2877 = vst.msk [vmem:[%s2867 + $0x24] sm:$0x1] %vm164, %v2812
  %2878 = vst.msk [vmem:[%s2867 + $0x28] sm:$0xf] %vm162, %v2813
  %2879 = vst.msk [vmem:[%s2867 + $0x2c] sm:$0x1] %vm164, %v2814
  %2880 = vst.msk [vmem:[%s2867 + $0x30] sm:$0xf] %vm162, %v2815
  %2881 = vst.msk [vmem:[%s2867 + $0x34] sm:$0x1] %vm164, %v2816
  %2882 = vst.msk [vmem:[%s2867 + $0x38] sm:$0xf] %vm162, %v2817
  %2883 = vst.msk [vmem:[%s2867 + $0x3c] sm:$0x1] %vm164, %v2818
  %2884 = vst.msk [vmem:[%s2867 + $0x50] sm:$0xf] %vm162, %v2819
  %2885 = vst.msk [vmem:[%s2867 + $0x54] sm:$0x1] %vm164, %v2820
  %2886 = vst.msk [vmem:[%s2867 + $0x58] sm:$0xf] %vm162, %v2821
  %2887 = vst.msk [vmem:[%s2867 + $0x5c] sm:$0x1] %vm164, %v2822
  %2888 = vst.msk [vmem:[%s2867 + $0x60] sm:$0xf] %vm162, %v2823
  %2889 = vst.msk [vmem:[%s2867 + $0x64] sm:$0x1] %vm164, %v2824
  %2890 = vst.msk [vmem:[%s2867 + $0x68] sm:$0xf] %vm162, %v2825
  %2891 = vst.msk [vmem:[%s2867 + $0x6c] sm:$0x1] %vm164, %v2826
  %2892 = vst.msk [vmem:[%s2867 + $0x70] sm:$0xf] %vm162, %v2827
  %2893 = vst.msk [vmem:[%s2867 + $0x74] sm:$0x1] %vm164, %v2828
  %2894 = vst.msk [vmem:[%s2867 + $0x78] sm:$0xf] %vm162, %v2829
  %2895 = vst.msk [vmem:[%s2867 + $0x7c] sm:$0x1] %vm164, %v2830
  %2896 = vst.msk [vmem:[%s2867 + $0x80] sm:$0xf] %vm162, %v2831
  %2897 = vst.msk [vmem:[%s2867 + $0x84] sm:$0x1] %vm164, %v2832
  %2898 = vst.msk [vmem:[%s2867 + $0x88] sm:$0xf] %vm162, %v2833
  %2899 = vst.msk [vmem:[%s2867 + $0x8c] sm:$0x1] %vm164, %v2834
  %v2900 = vld [vmem:[%s5] sm:$0x1]
  %v2901 = vld [vmem:[%s6] sm:$0x1]
  %v2902 = vld [vmem:[#allocation3] sm:$0xf]
  %v2903 = vld [vmem:[#allocation3 + $0x8] sm:$0xf]
  %v2904 = vld [vmem:[#allocation3 + $0x10] sm:$0xf]
  %v2905 = vld [vmem:[#allocation3 + $0x18] sm:$0xf]
  %v2906 = vld [vmem:[#allocation3 + $0x20] sm:$0xf]
  %v2907 = vld [vmem:[#allocation3 + $0x28] sm:$0xf]
  %v2908 = vld [vmem:[#allocation3 + $0x30] sm:$0xf]
  %v2909 = vld [vmem:[#allocation3 + $0x38] sm:$0xf]
  %v2910 = vld [vmem:[#allocation3 + $0x50] sm:$0xf]
  %v2911 = vld [vmem:[#allocation3 + $0x58] sm:$0xf]
  %v2912 = vld [vmem:[#allocation3 + $0x60] sm:$0xf]
  %v2913 = vld [vmem:[#allocation3 + $0x68] sm:$0xf]
  %v2914 = vld [vmem:[#allocation3 + $0x70] sm:$0xf]
  %v2915 = vld [vmem:[#allocation3 + $0x78] sm:$0xf]
  %v2916 = vld [vmem:[#allocation3 + $0x80] sm:$0xf]
  %v2917 = vld [vmem:[#allocation3 + $0x88] sm:$0xf]
  %v2934 = vunpack.c.l.b16 %v2902
  %v2935 = vunpack.c.l.b16 %v2903
  %v2936 = vunpack.c.l.b16 %v2904
  %v2937 = vunpack.c.l.b16 %v2905
  %v2938 = vunpack.c.l.b16 %v2906
  %v2939 = vunpack.c.l.b16 %v2907
  %v2940 = vunpack.c.l.b16 %v2908
  %v2941 = vunpack.c.l.b16 %v2909
  %v2942 = vunpack.c.l.b16 %v2910
  %v2943 = vunpack.c.l.b16 %v2911
  %v2944 = vunpack.c.l.b16 %v2912
  %v2945 = vunpack.c.l.b16 %v2913
  %v2946 = vunpack.c.l.b16 %v2914
  %v2947 = vunpack.c.l.b16 %v2915
  %v2948 = vunpack.c.l.b16 %v2916
  %v2949 = vunpack.c.l.b16 %v2917
  %v2950 = vpack.c.b16 %v2935, %v2934
  %v2951 = vpack.c.b16 %v2937, %v2936
  %v2952 = vpack.c.b16 %v2939, %v2938
  %v2953 = vpack.c.b16 %v2941, %v2940
  %v2954 = vpack.c.b16 %v2943, %v2942
  %v2955 = vpack.c.b16 %v2945, %v2944
  %v2956 = vpack.c.b16 %v2947, %v2946
  %v2957 = vpack.c.b16 %v2949, %v2948
  %2966 = vst.msk [vmem:[#allocation5] sm:$0xff] %vm2408, %v2950
  %2967 = vst.msk [vmem:[#allocation5 + $0x8] sm:$0xff] %vm2408, %v2951
  %2968 = vst.msk [vmem:[#allocation5 + $0x10] sm:$0xff] %vm2408, %v2952
  %2969 = vst.msk [vmem:[#allocation5 + $0x18] sm:$0xff] %vm2408, %v2953
  %2970 = vst.msk [vmem:[#allocation5 + $0x20] sm:$0xff] %vm2408, %v2954
  %2971 = vst.msk [vmem:[#allocation5 + $0x28] sm:$0xff] %vm2408, %v2955
  %2972 = vst.msk [vmem:[#allocation5 + $0x30] sm:$0xff] %vm2408, %v2956
  %2973 = vst.msk [vmem:[#allocation5 + $0x38] sm:$0xff] %vm2408, %v2957
  %v2974 = vld [vmem:[#allocation3] sm:$0xf]
  %v2975 = vld [vmem:[#allocation3 + $0x4] sm:$0x1]
  %v2976 = vld [vmem:[#allocation3 + $0x8] sm:$0xf]
  %v2977 = vld [vmem:[#allocation3 + $0xc] sm:$0x1]
  %v2978 = vld [vmem:[#allocation3 + $0x10] sm:$0xf]
  %v2979 = vld [vmem:[#allocation3 + $0x14] sm:$0x1]
  %v2980 = vld [vmem:[#allocation3 + $0x18] sm:$0xf]
  %v2981 = vld [vmem:[#allocation3 + $0x1c] sm:$0x1]
  %v2982 = vld [vmem:[#allocation3 + $0x20] sm:$0xf]
  %v2983 = vld [vmem:[#allocation3 + $0x24] sm:$0x1]
  %v2984 = vld [vmem:[#allocation3 + $0x28] sm:$0xf]
  %v2985 = vld [vmem:[#allocation3 + $0x2c] sm:$0x1]
  %v2986 = vld [vmem:[#allocation3 + $0x30] sm:$0xf]
  %v2987 = vld [vmem:[#allocation3 + $0x34] sm:$0x1]
  %v2988 = vld [vmem:[#allocation3 + $0x38] sm:$0xf]
  %v2989 = vld [vmem:[#allocation3 + $0x3c] sm:$0x1]
  %v2990 = vld [vmem:[#allocation3 + $0x50] sm:$0xf]
  %v2991 = vld [vmem:[#allocation3 + $0x54] sm:$0x1]
  %v2992 = vld [vmem:[#allocation3 + $0x58] sm:$0xf]
  %v2993 = vld [vmem:[#allocation3 + $0x5c] sm:$0x1]
  %v2994 = vld [vmem:[#allocation3 + $0x60] sm:$0xf]
  %v2995 = vld [vmem:[#allocation3 + $0x64] sm:$0x1]
  %v2996 = vld [vmem:[#allocation3 + $0x68] sm:$0xf]
  %v2997 = vld [vmem:[#allocation3 + $0x6c] sm:$0x1]
  %v2998 = vld [vmem:[#allocation3 + $0x70] sm:$0xf]
  %v2999 = vld [vmem:[#allocation3 + $0x74] sm:$0x1]
  %v3000 = vld [vmem:[#allocation3 + $0x78] sm:$0xf]
  %v3001 = vld [vmem:[#allocation3 + $0x7c] sm:$0x1]
  %v3002 = vld [vmem:[#allocation3 + $0x80] sm:$0xf]
  %v3003 = vld [vmem:[#allocation3 + $0x84] sm:$0x1]
  %v3004 = vld [vmem:[#allocation3 + $0x88] sm:$0xf]
  %v3005 = vld [vmem:[#allocation3 + $0x8c] sm:$0x1]
  %v3007 = vshrl.u32 %v2974, 16
  %v3009 = vrot.slane %v3007, 4
  %v3010 = vshll.u32 %v2974, 16
  %v3012 = vrot.slane %v3010, 5
  %v3013 = vor.u32 %v3009, %v3012
  %v3014 = vrot.slane %v3013, 4
  %v3016 = vshll.u32 %v2975, 16
  %v3018 = vrot.slane %v3016, 5
  %v3019 = vsel %vm609, %v3014, %v3018
  %v3021 = vshrl.u32 %v2976, 16
  %v3023 = vrot.slane %v3021, 4
  %v3024 = vshll.u32 %v2976, 16
  %v3026 = vrot.slane %v3024, 5
  %v3027 = vor.u32 %v3023, %v3026
  %v3028 = vrot.slane %v3027, 4
  %v3030 = vshll.u32 %v2977, 16
  %v3032 = vrot.slane %v3030, 5
  %v3033 = vsel %vm609, %v3028, %v3032
  %v3035 = vshrl.u32 %v2978, 16
  %v3037 = vrot.slane %v3035, 4
  %v3038 = vshll.u32 %v2978, 16
  %v3040 = vrot.slane %v3038, 5
  %v3041 = vor.u32 %v3037, %v3040
  %v3042 = vrot.slane %v3041, 4
  %v3044 = vshll.u32 %v2979, 16
  %v3046 = vrot.slane %v3044, 5
  %v3047 = vsel %vm609, %v3042, %v3046
  %v3049 = vshrl.u32 %v2980, 16
  %v3051 = vrot.slane %v3049, 4
  %v3052 = vshll.u32 %v2980, 16
  %v3054 = vrot.slane %v3052, 5
  %v3055 = vor.u32 %v3051, %v3054
  %v3056 = vrot.slane %v3055, 4
  %v3058 = vshll.u32 %v2981, 16
  %v3060 = vrot.slane %v3058, 5
  %v3061 = vsel %vm609, %v3056, %v3060
  %v3063 = vshrl.u32 %v2982, 16
  %v3065 = vrot.slane %v3063, 4
  %v3066 = vshll.u32 %v2982, 16
  %v3068 = vrot.slane %v3066, 5
  %v3069 = vor.u32 %v3065, %v3068
  %v3070 = vrot.slane %v3069, 4
  %v3072 = vshll.u32 %v2983, 16
  %v3074 = vrot.slane %v3072, 5
  %v3075 = vsel %vm609, %v3070, %v3074
  %v3077 = vshrl.u32 %v2984, 16
  %v3079 = vrot.slane %v3077, 4
  %v3080 = vshll.u32 %v2984, 16
  %v3082 = vrot.slane %v3080, 5
  %v3083 = vor.u32 %v3079, %v3082
  %v3084 = vrot.slane %v3083, 4
  %v3086 = vshll.u32 %v2985, 16
  %v3088 = vrot.slane %v3086, 5
  %v3089 = vsel %vm609, %v3084, %v3088
  %v3091 = vshrl.u32 %v2986, 16
  %v3093 = vrot.slane %v3091, 4
  %v3094 = vshll.u32 %v2986, 16
  %v3096 = vrot.slane %v3094, 5
  %v3097 = vor.u32 %v3093, %v3096
  %v3098 = vrot.slane %v3097, 4
  %v3100 = vshll.u32 %v2987, 16
  %v3102 = vrot.slane %v3100, 5
  %v3103 = vsel %vm609, %v3098, %v3102
  %v3105 = vshrl.u32 %v2988, 16
  %v3107 = vrot.slane %v3105, 4
  %v3108 = vshll.u32 %v2988, 16
  %v3110 = vrot.slane %v3108, 5
  %v3111 = vor.u32 %v3107, %v3110
  %v3112 = vrot.slane %v3111, 4
  %v3114 = vshll.u32 %v2989, 16
  %v3116 = vrot.slane %v3114, 5
  %v3117 = vsel %vm609, %v3112, %v3116
  %v3119 = vshrl.u32 %v2990, 16
  %v3121 = vrot.slane %v3119, 4
  %v3122 = vshll.u32 %v2990, 16
  %v3124 = vrot.slane %v3122, 5
  %v3125 = vor.u32 %v3121, %v3124
  %v3126 = vrot.slane %v3125, 4
  %v3128 = vshll.u32 %v2991, 16
  %v3130 = vrot.slane %v3128, 5
  %v3131 = vsel %vm609, %v3126, %v3130
  %v3133 = vshrl.u32 %v2992, 16
  %v3135 = vrot.slane %v3133, 4
  %v3136 = vshll.u32 %v2992, 16
  %v3138 = vrot.slane %v3136, 5
  %v3139 = vor.u32 %v3135, %v3138
  %v3140 = vrot.slane %v3139, 4
  %v3142 = vshll.u32 %v2993, 16
  %v3144 = vrot.slane %v3142, 5
  %v3145 = vsel %vm609, %v3140, %v3144
  %v3147 = vshrl.u32 %v2994, 16
  %v3149 = vrot.slane %v3147, 4
  %v3150 = vshll.u32 %v2994, 16
  %v3152 = vrot.slane %v3150, 5
  %v3153 = vor.u32 %v3149, %v3152
  %v3154 = vrot.slane %v3153, 4
  %v3156 = vshll.u32 %v2995, 16
  %v3158 = vrot.slane %v3156, 5
  %v3159 = vsel %vm609, %v3154, %v3158
  %v3161 = vshrl.u32 %v2996, 16
  %v3163 = vrot.slane %v3161, 4
  %v3164 = vshll.u32 %v2996, 16
  %v3166 = vrot.slane %v3164, 5
  %v3167 = vor.u32 %v3163, %v3166
  %v3168 = vrot.slane %v3167, 4
  %v3170 = vshll.u32 %v2997, 16
  %v3172 = vrot.slane %v3170, 5
  %v3173 = vsel %vm609, %v3168, %v3172
  %v3175 = vshrl.u32 %v2998, 16
  %v3177 = vrot.slane %v3175, 4
  %v3178 = vshll.u32 %v2998, 16
  %v3180 = vrot.slane %v3178, 5
  %v3181 = vor.u32 %v3177, %v3180
  %v3182 = vrot.slane %v3181, 4
  %v3184 = vshll.u32 %v2999, 16
  %v3186 = vrot.slane %v3184, 5
  %v3187 = vsel %vm609, %v3182, %v3186
  %v3189 = vshrl.u32 %v3000, 16
  %v3191 = vrot.slane %v3189, 4
  %v3192 = vshll.u32 %v3000, 16
  %v3194 = vrot.slane %v3192, 5
  %v3195 = vor.u32 %v3191, %v3194
  %v3196 = vrot.slane %v3195, 4
  %v3198 = vshll.u32 %v3001, 16
  %v3200 = vrot.slane %v3198, 5
  %v3201 = vsel %vm609, %v3196, %v3200
  %v3203 = vshrl.u32 %v3002, 16
  %v3205 = vrot.slane %v3203, 4
  %v3206 = vshll.u32 %v3002, 16
  %v3208 = vrot.slane %v3206, 5
  %v3209 = vor.u32 %v3205, %v3208
  %v3210 = vrot.slane %v3209, 4
  %v3212 = vshll.u32 %v3003, 16
  %v3214 = vrot.slane %v3212, 5
  %v3215 = vsel %vm609, %v3210, %v3214
  %v3217 = vshrl.u32 %v3004, 16
  %v3219 = vrot.slane %v3217, 4
  %v3220 = vshll.u32 %v3004, 16
  %v3222 = vrot.slane %v3220, 5
  %v3223 = vor.u32 %v3219, %v3222
  %v3224 = vrot.slane %v3223, 4
  %v3226 = vshll.u32 %v3005, 16
  %v3228 = vrot.slane %v3226, 5
  %v3229 = vsel %vm609, %v3224, %v3228
  %v3230 = vunpack.c.l.b16 %v3019
  %v3231 = vunpack.c.l.b16 %v3033
  %v3232 = vunpack.c.l.b16 %v3047
  %v3233 = vunpack.c.l.b16 %v3061
  %v3234 = vunpack.c.l.b16 %v3075
  %v3235 = vunpack.c.l.b16 %v3089
  %v3236 = vunpack.c.l.b16 %v3103
  %v3237 = vunpack.c.l.b16 %v3117
  %v3238 = vunpack.c.l.b16 %v3131
  %v3239 = vunpack.c.l.b16 %v3145
  %v3240 = vunpack.c.l.b16 %v3159
  %v3241 = vunpack.c.l.b16 %v3173
  %v3242 = vunpack.c.l.b16 %v3187
  %v3243 = vunpack.c.l.b16 %v3201
  %v3244 = vunpack.c.l.b16 %v3215
  %v3245 = vunpack.c.l.b16 %v3229
  %v3246 = vpack.c.b16 %v3231, %v3230
  %v3247 = vpack.c.b16 %v3233, %v3232
  %v3248 = vpack.c.b16 %v3235, %v3234
  %v3249 = vpack.c.b16 %v3237, %v3236
  %v3250 = vpack.c.b16 %v3239, %v3238
  %v3251 = vpack.c.b16 %v3241, %v3240
  %v3252 = vpack.c.b16 %v3243, %v3242
  %v3253 = vpack.c.b16 %v3245, %v3244
  %3254 = vrot.lane.b32.xlu0 %v3246, 8
  %v3255 = vpop.permute.xlu0 %3254
  %3256 = vrot.lane.b32.xlu0 %v3247, 8
  %v3257 = vpop.permute.xlu0 %3256
  %3258 = vrot.lane.b32.xlu0 %v3248, 8
  %v3259 = vpop.permute.xlu0 %3258
  %3260 = vrot.lane.b32.xlu0 %v3249, 8
  %v3261 = vpop.permute.xlu0 %3260
  %3262 = vrot.lane.b32.xlu0 %v3250, 8
  %v3263 = vpop.permute.xlu0 %3262
  %3264 = vrot.lane.b32.xlu0 %v3251, 8
  %v3265 = vpop.permute.xlu0 %3264
  %3266 = vrot.lane.b32.xlu0 %v3252, 8
  %v3267 = vpop.permute.xlu0 %3266
  %3268 = vrot.lane.b32.xlu0 %v3253, 8
  %v3269 = vpop.permute.xlu0 %3268
  %vm3278 = vcmask 130112
  %3279 = vst.msk [vmem:[#allocation5] sm:$0xff] %vm3278, %v3255
  %3280 = vst.msk [vmem:[#allocation5 + $0x8] sm:$0xff] %vm3278, %v3257
  %3281 = vst.msk [vmem:[#allocation5 + $0x10] sm:$0xff] %vm3278, %v3259
  %3282 = vst.msk [vmem:[#allocation5 + $0x18] sm:$0xff] %vm3278, %v3261
  %3283 = vst.msk [vmem:[#allocation5 + $0x20] sm:$0xff] %vm3278, %v3263
  %3284 = vst.msk [vmem:[#allocation5 + $0x28] sm:$0xff] %vm3278, %v3265
  %3285 = vst.msk [vmem:[#allocation5 + $0x30] sm:$0xff] %vm3278, %v3267
  %3286 = vst.msk [vmem:[#allocation5 + $0x38] sm:$0xff] %vm3278, %v3269
  %v3287 = vld [vmem:[#allocation3] sm:$0xe]
  %v3288 = vld [vmem:[#allocation3 + $0x4] sm:$0x1]
  %v3289 = vld [vmem:[#allocation3 + $0x8] sm:$0xe]
  %v3290 = vld [vmem:[#allocation3 + $0xc] sm:$0x1]
  %v3291 = vld [vmem:[#allocation3 + $0x10] sm:$0xe]
  %v3292 = vld [vmem:[#allocation3 + $0x14] sm:$0x1]
  %v3293 = vld [vmem:[#allocation3 + $0x18] sm:$0xe]
  %v3294 = vld [vmem:[#allocation3 + $0x1c] sm:$0x1]
  %v3295 = vld [vmem:[#allocation3 + $0x20] sm:$0xe]
  %v3296 = vld [vmem:[#allocation3 + $0x24] sm:$0x1]
  %v3297 = vld [vmem:[#allocation3 + $0x28] sm:$0xe]
  %v3298 = vld [vmem:[#allocation3 + $0x2c] sm:$0x1]
  %v3299 = vld [vmem:[#allocation3 + $0x30] sm:$0xe]
  %v3300 = vld [vmem:[#allocation3 + $0x34] sm:$0x1]
  %v3301 = vld [vmem:[#allocation3 + $0x38] sm:$0xe]
  %v3302 = vld [vmem:[#allocation3 + $0x3c] sm:$0x1]
  %v3303 = vld [vmem:[#allocation3 + $0x50] sm:$0xe]
  %v3304 = vld [vmem:[#allocation3 + $0x54] sm:$0x1]
  %v3305 = vld [vmem:[#allocation3 + $0x58] sm:$0xe]
  %v3306 = vld [vmem:[#allocation3 + $0x5c] sm:$0x1]
  %v3307 = vld [vmem:[#allocation3 + $0x60] sm:$0xe]
  %v3308 = vld [vmem:[#allocation3 + $0x64] sm:$0x1]
  %v3309 = vld [vmem:[#allocation3 + $0x68] sm:$0xe]
  %v3310 = vld [vmem:[#allocation3 + $0x6c] sm:$0x1]
  %v3311 = vld [vmem:[#allocation3 + $0x70] sm:$0xe]
  %v3312 = vld [vmem:[#allocation3 + $0x74] sm:$0x1]
  %v3313 = vld [vmem:[#allocation3 + $0x78] sm:$0xe]
  %v3314 = vld [vmem:[#allocation3 + $0x7c] sm:$0x1]
  %v3315 = vld [vmem:[#allocation3 + $0x80] sm:$0xe]
  %v3316 = vld [vmem:[#allocation3 + $0x84] sm:$0x1]
  %v3317 = vld [vmem:[#allocation3 + $0x88] sm:$0xe]
  %v3318 = vld [vmem:[#allocation3 + $0x8c] sm:$0x1]
  %v3351 = vrot.slane %v3287, 5
  %v3352 = vrot.slane %v3351, 4
  %v3353 = vrot.slane %v3288, 5
  %v3354 = vsel %vm957, %v3352, %v3353
  %v3355 = vrot.slane %v3289, 5
  %v3356 = vrot.slane %v3355, 4
  %v3357 = vrot.slane %v3290, 5
  %v3358 = vsel %vm957, %v3356, %v3357
  %v3359 = vrot.slane %v3291, 5
  %v3360 = vrot.slane %v3359, 4
  %v3361 = vrot.slane %v3292, 5
  %v3362 = vsel %vm957, %v3360, %v3361
  %v3363 = vrot.slane %v3293, 5
  %v3364 = vrot.slane %v3363, 4
  %v3365 = vrot.slane %v3294, 5
  %v3366 = vsel %vm957, %v3364, %v3365
  %v3367 = vrot.slane %v3295, 5
  %v3368 = vrot.slane %v3367, 4
  %v3369 = vrot.slane %v3296, 5
  %v3370 = vsel %vm957, %v3368, %v3369
  %v3371 = vrot.slane %v3297, 5
  %v3372 = vrot.slane %v3371, 4
  %v3373 = vrot.slane %v3298, 5
  %v3374 = vsel %vm957, %v3372, %v3373
  %v3375 = vrot.slane %v3299, 5
  %v3376 = vrot.slane %v3375, 4
  %v3377 = vrot.slane %v3300, 5
  %v3378 = vsel %vm957, %v3376, %v3377
  %v3379 = vrot.slane %v3301, 5
  %v3380 = vrot.slane %v3379, 4
  %v3381 = vrot.slane %v3302, 5
  %v3382 = vsel %vm957, %v3380, %v3381
  %v3383 = vrot.slane %v3303, 5
  %v3384 = vrot.slane %v3383, 4
  %v3385 = vrot.slane %v3304, 5
  %v3386 = vsel %vm957, %v3384, %v3385
  %v3387 = vrot.slane %v3305, 5
  %v3388 = vrot.slane %v3387, 4
  %v3389 = vrot.slane %v3306, 5
  %v3390 = vsel %vm957, %v3388, %v3389
  %v3391 = vrot.slane %v3307, 5
  %v3392 = vrot.slane %v3391, 4
  %v3393 = vrot.slane %v3308, 5
  %v3394 = vsel %vm957, %v3392, %v3393
  %v3395 = vrot.slane %v3309, 5
  %v3396 = vrot.slane %v3395, 4
  %v3397 = vrot.slane %v3310, 5
  %v3398 = vsel %vm957, %v3396, %v3397
  %v3399 = vrot.slane %v3311, 5
  %v3400 = vrot.slane %v3399, 4
  %v3401 = vrot.slane %v3312, 5
  %v3402 = vsel %vm957, %v3400, %v3401
  %v3403 = vrot.slane %v3313, 5
  %v3404 = vrot.slane %v3403, 4
  %v3405 = vrot.slane %v3314, 5
  %v3406 = vsel %vm957, %v3404, %v3405
  %v3407 = vrot.slane %v3315, 5
  %v3408 = vrot.slane %v3407, 4
  %v3409 = vrot.slane %v3316, 5
  %v3410 = vsel %vm957, %v3408, %v3409
  %v3411 = vrot.slane %v3317, 5
  %v3412 = vrot.slane %v3411, 4
  %v3413 = vrot.slane %v3318, 5
  %v3414 = vsel %vm957, %v3412, %v3413
  %v3415 = vunpack.c.l.b16 %v3354
  %v3416 = vunpack.c.l.b16 %v3358
  %v3417 = vunpack.c.l.b16 %v3362
  %v3418 = vunpack.c.l.b16 %v3366
  %v3419 = vunpack.c.l.b16 %v3370
  %v3420 = vunpack.c.l.b16 %v3374
  %v3421 = vunpack.c.l.b16 %v3378
  %v3422 = vunpack.c.l.b16 %v3382
  %v3423 = vunpack.c.l.b16 %v3386
  %v3424 = vunpack.c.l.b16 %v3390
  %v3425 = vunpack.c.l.b16 %v3394
  %v3426 = vunpack.c.l.b16 %v3398
  %v3427 = vunpack.c.l.b16 %v3402
  %v3428 = vunpack.c.l.b16 %v3406
  %v3429 = vunpack.c.l.b16 %v3410
  %v3430 = vunpack.c.l.b16 %v3414
  %v3431 = vpack.c.b16 %v3416, %v3415
  %v3432 = vpack.c.b16 %v3418, %v3417
  %v3433 = vpack.c.b16 %v3420, %v3419
  %v3434 = vpack.c.b16 %v3422, %v3421
  %v3435 = vpack.c.b16 %v3424, %v3423
  %v3436 = vpack.c.b16 %v3426, %v3425
  %v3437 = vpack.c.b16 %v3428, %v3427
  %v3438 = vpack.c.b16 %v3430, %v3429
  %3439 = vrot.lane.b32.xlu0 %v3431, 16
  %v3440 = vpop.permute.xlu0 %3439
  %3441 = vrot.lane.b32.xlu0 %v3432, 16
  %v3442 = vpop.permute.xlu0 %3441
  %3443 = vrot.lane.b32.xlu0 %v3433, 16
  %v3444 = vpop.permute.xlu0 %3443
  %3445 = vrot.lane.b32.xlu0 %v3434, 16
  %v3446 = vpop.permute.xlu0 %3445
  %3447 = vrot.lane.b32.xlu0 %v3435, 16
  %v3448 = vpop.permute.xlu0 %3447
  %3449 = vrot.lane.b32.xlu0 %v3436, 16
  %v3450 = vpop.permute.xlu0 %3449
  %3451 = vrot.lane.b32.xlu0 %v3437, 16
  %v3452 = vpop.permute.xlu0 %3451
  %3453 = vrot.lane.b32.xlu0 %v3438, 16
  %v3454 = vpop.permute.xlu0 %3453
  %vm3463 = vcmask 195712
  %3464 = vst.msk [vmem:[#allocation5] sm:$0xff] %vm3463, %v3440
  %3465 = vst.msk [vmem:[#allocation5 + $0x8] sm:$0xff] %vm3463, %v3442
  %3466 = vst.msk [vmem:[#allocation5 + $0x10] sm:$0xff] %vm3463, %v3444
  %3467 = vst.msk [vmem:[#allocation5 + $0x18] sm:$0xff] %vm3463, %v3446
  %3468 = vst.msk [vmem:[#allocation5 + $0x20] sm:$0xff] %vm3463, %v3448
  %3469 = vst.msk [vmem:[#allocation5 + $0x28] sm:$0xff] %vm3463, %v3450
  %3470 = vst.msk [vmem:[#allocation5 + $0x30] sm:$0xff] %vm3463, %v3452
  %3471 = vst.msk [vmem:[#allocation5 + $0x38] sm:$0xff] %vm3463, %v3454
  %v3472 = vld [vmem:[%s2867] sm:$0xf]
  %v3473 = vld [vmem:[%s2867 + $0x8] sm:$0xf]
  %v3474 = vld [vmem:[%s2867 + $0x10] sm:$0xf]
  %v3475 = vld [vmem:[%s2867 + $0x18] sm:$0xf]
  %v3476 = vld [vmem:[%s2867 + $0x20] sm:$0xf]
  %v3477 = vld [vmem:[%s2867 + $0x28] sm:$0xf]
  %v3478 = vld [vmem:[%s2867 + $0x30] sm:$0xf]
  %v3479 = vld [vmem:[%s2867 + $0x38] sm:$0xf]
  %v3480 = vld [vmem:[%s2867 + $0x50] sm:$0xf]
  %v3481 = vld [vmem:[%s2867 + $0x58] sm:$0xf]
  %v3482 = vld [vmem:[%s2867 + $0x60] sm:$0xf]
  %v3483 = vld [vmem:[%s2867 + $0x68] sm:$0xf]
  %v3484 = vld [vmem:[%s2867 + $0x70] sm:$0xf]
  %v3485 = vld [vmem:[%s2867 + $0x78] sm:$0xf]
  %v3486 = vld [vmem:[%s2867 + $0x80] sm:$0xf]
  %v3487 = vld [vmem:[%s2867 + $0x88] sm:$0xf]
  %v3504 = vunpack.c.l.b16 %v3472
  %v3505 = vunpack.c.l.b16 %v3473
  %v3506 = vunpack.c.l.b16 %v3474
  %v3507 = vunpack.c.l.b16 %v3475
  %v3508 = vunpack.c.l.b16 %v3476
  %v3509 = vunpack.c.l.b16 %v3477
  %v3510 = vunpack.c.l.b16 %v3478
  %v3511 = vunpack.c.l.b16 %v3479
  %v3512 = vunpack.c.l.b16 %v3480
  %v3513 = vunpack.c.l.b16 %v3481
  %v3514 = vunpack.c.l.b16 %v3482
  %v3515 = vunpack.c.l.b16 %v3483
  %v3516 = vunpack.c.l.b16 %v3484
  %v3517 = vunpack.c.l.b16 %v3485
  %v3518 = vunpack.c.l.b16 %v3486
  %v3519 = vunpack.c.l.b16 %v3487
  %v3520 = vpack.c.b16 %v3505, %v3504
  %v3521 = vpack.c.b16 %v3507, %v3506
  %v3522 = vpack.c.b16 %v3509, %v3508
  %v3523 = vpack.c.b16 %v3511, %v3510
  %v3524 = vpack.c.b16 %v3513, %v3512
  %v3525 = vpack.c.b16 %v3515, %v3514
  %v3526 = vpack.c.b16 %v3517, %v3516
  %v3527 = vpack.c.b16 %v3519, %v3518
  %3528 = vrot.lane.b32.xlu0 %v3520, 24
  %v3529 = vpop.permute.xlu0 %3528
  %3530 = vrot.lane.b32.xlu0 %v3521, 24
  %v3531 = vpop.permute.xlu0 %3530
  %3532 = vrot.lane.b32.xlu0 %v3522, 24
  %v3533 = vpop.permute.xlu0 %3532
  %3534 = vrot.lane.b32.xlu0 %v3523, 24
  %v3535 = vpop.permute.xlu0 %3534
  %3536 = vrot.lane.b32.xlu0 %v3524, 24
  %v3537 = vpop.permute.xlu0 %3536
  %3538 = vrot.lane.b32.xlu0 %v3525, 24
  %v3539 = vpop.permute.xlu0 %3538
  %3540 = vrot.lane.b32.xlu0 %v3526, 24
  %v3541 = vpop.permute.xlu0 %3540
  %3542 = vrot.lane.b32.xlu0 %v3527, 24
  %v3543 = vpop.permute.xlu0 %3542
  %vm3552 = vcmask 261312
  %3553 = vst.msk [vmem:[#allocation5] sm:$0xff] %vm3552, %v3529
  %3554 = vst.msk [vmem:[#allocation5 + $0x8] sm:$0xff] %vm3552, %v3531
  %3555 = vst.msk [vmem:[#allocation5 + $0x10] sm:$0xff] %vm3552, %v3533
  %3556 = vst.msk [vmem:[#allocation5 + $0x18] sm:$0xff] %vm3552, %v3535
  %3557 = vst.msk [vmem:[#allocation5 + $0x20] sm:$0xff] %vm3552, %v3537
  %3558 = vst.msk [vmem:[#allocation5 + $0x28] sm:$0xff] %vm3552, %v3539
  %3559 = vst.msk [vmem:[#allocation5 + $0x30] sm:$0xff] %vm3552, %v3541
  %3560 = vst.msk [vmem:[#allocation5 + $0x38] sm:$0xff] %vm3552, %v3543
  %v3561 = vld [vmem:[%s2867] sm:$0xf]
  %v3562 = vld [vmem:[%s2867 + $0x4] sm:$0x1]
  %v3563 = vld [vmem:[%s2867 + $0x8] sm:$0xf]
  %v3564 = vld [vmem:[%s2867 + $0xc] sm:$0x1]
  %v3565 = vld [vmem:[%s2867 + $0x10] sm:$0xf]
  %v3566 = vld [vmem:[%s2867 + $0x14] sm:$0x1]
  %v3567 = vld [vmem:[%s2867 + $0x18] sm:$0xf]
  %v3568 = vld [vmem:[%s2867 + $0x1c] sm:$0x1]
  %v3569 = vld [vmem:[%s2867 + $0x20] sm:$0xf]
  %v3570 = vld [vmem:[%s2867 + $0x24] sm:$0x1]
  %v3571 = vld [vmem:[%s2867 + $0x28] sm:$0xf]
  %v3572 = vld [vmem:[%s2867 + $0x2c] sm:$0x1]
  %v3573 = vld [vmem:[%s2867 + $0x30] sm:$0xf]
  %v3574 = vld [vmem:[%s2867 + $0x34] sm:$0x1]
  %v3575 = vld [vmem:[%s2867 + $0x38] sm:$0xf]
  %v3576 = vld [vmem:[%s2867 + $0x3c] sm:$0x1]
  %v3577 = vld [vmem:[%s2867 + $0x50] sm:$0xf]
  %v3578 = vld [vmem:[%s2867 + $0x54] sm:$0x1]
  %v3579 = vld [vmem:[%s2867 + $0x58] sm:$0xf]
  %v3580 = vld [vmem:[%s2867 + $0x5c] sm:$0x1]
  %v3581 = vld [vmem:[%s2867 + $0x60] sm:$0xf]
  %v3582 = vld [vmem:[%s2867 + $0x64] sm:$0x1]
  %v3583 = vld [vmem:[%s2867 + $0x68] sm:$0xf]
  %v3584 = vld [vmem:[%s2867 + $0x6c] sm:$0x1]
  %v3585 = vld [vmem:[%s2867 + $0x70] sm:$0xf]
  %v3586 = vld [vmem:[%s2867 + $0x74] sm:$0x1]
  %v3587 = vld [vmem:[%s2867 + $0x78] sm:$0xf]
  %v3588 = vld [vmem:[%s2867 + $0x7c] sm:$0x1]
  %v3589 = vld [vmem:[%s2867 + $0x80] sm:$0xf]
  %v3590 = vld [vmem:[%s2867 + $0x84] sm:$0x1]
  %v3591 = vld [vmem:[%s2867 + $0x88] sm:$0xf]
  %v3592 = vld [vmem:[%s2867 + $0x8c] sm:$0x1]
  %v3594 = vshrl.u32 %v3561, 16
  %v3596 = vrot.slane %v3594, 4
  %v3597 = vshll.u32 %v3561, 16
  %v3599 = vrot.slane %v3597, 5
  %v3600 = vor.u32 %v3596, %v3599
  %v3601 = vrot.slane %v3600, 4
  %v3603 = vshll.u32 %v3562, 16
  %v3605 = vrot.slane %v3603, 5
  %v3606 = vsel %vm609, %v3601, %v3605
  %v3608 = vshrl.u32 %v3563, 16
  %v3610 = vrot.slane %v3608, 4
  %v3611 = vshll.u32 %v3563, 16
  %v3613 = vrot.slane %v3611, 5
  %v3614 = vor.u32 %v3610, %v3613
  %v3615 = vrot.slane %v3614, 4
  %v3617 = vshll.u32 %v3564, 16
  %v3619 = vrot.slane %v3617, 5
  %v3620 = vsel %vm609, %v3615, %v3619
  %v3622 = vshrl.u32 %v3565, 16
  %v3624 = vrot.slane %v3622, 4
  %v3625 = vshll.u32 %v3565, 16
  %v3627 = vrot.slane %v3625, 5
  %v3628 = vor.u32 %v3624, %v3627
  %v3629 = vrot.slane %v3628, 4
  %v3631 = vshll.u32 %v3566, 16
  %v3633 = vrot.slane %v3631, 5
  %v3634 = vsel %vm609, %v3629, %v3633
  %v3636 = vshrl.u32 %v3567, 16
  %v3638 = vrot.slane %v3636, 4
  %v3639 = vshll.u32 %v3567, 16
  %v3641 = vrot.slane %v3639, 5
  %v3642 = vor.u32 %v3638, %v3641
  %v3643 = vrot.slane %v3642, 4
  %v3645 = vshll.u32 %v3568, 16
  %v3647 = vrot.slane %v3645, 5
  %v3648 = vsel %vm609, %v3643, %v3647
  %v3650 = vshrl.u32 %v3569, 16
  %v3652 = vrot.slane %v3650, 4
  %v3653 = vshll.u32 %v3569, 16
  %v3655 = vrot.slane %v3653, 5
  %v3656 = vor.u32 %v3652, %v3655
  %v3657 = vrot.slane %v3656, 4
  %v3659 = vshll.u32 %v3570, 16
  %v3661 = vrot.slane %v3659, 5
  %v3662 = vsel %vm609, %v3657, %v3661
  %v3664 = vshrl.u32 %v3571, 16
  %v3666 = vrot.slane %v3664, 4
  %v3667 = vshll.u32 %v3571, 16
  %v3669 = vrot.slane %v3667, 5
  %v3670 = vor.u32 %v3666, %v3669
  %v3671 = vrot.slane %v3670, 4
  %v3673 = vshll.u32 %v3572, 16
  %v3675 = vrot.slane %v3673, 5
  %v3676 = vsel %vm609, %v3671, %v3675
  %v3678 = vshrl.u32 %v3573, 16
  %v3680 = vrot.slane %v3678, 4
  %v3681 = vshll.u32 %v3573, 16
  %v3683 = vrot.slane %v3681, 5
  %v3684 = vor.u32 %v3680, %v3683
  %v3685 = vrot.slane %v3684, 4
  %v3687 = vshll.u32 %v3574, 16
  %v3689 = vrot.slane %v3687, 5
  %v3690 = vsel %vm609, %v3685, %v3689
  %v3692 = vshrl.u32 %v3575, 16
  %v3694 = vrot.slane %v3692, 4
  %v3695 = vshll.u32 %v3575, 16
  %v3697 = vrot.slane %v3695, 5
  %v3698 = vor.u32 %v3694, %v3697
  %v3699 = vrot.slane %v3698, 4
  %v3701 = vshll.u32 %v3576, 16
  %v3703 = vrot.slane %v3701, 5
  %v3704 = vsel %vm609, %v3699, %v3703
  %v3706 = vshrl.u32 %v3577, 16
  %v3708 = vrot.slane %v3706, 4
  %v3709 = vshll.u32 %v3577, 16
  %v3711 = vrot.slane %v3709, 5
  %v3712 = vor.u32 %v3708, %v3711
  %v3713 = vrot.slane %v3712, 4
  %v3715 = vshll.u32 %v3578, 16
  %v3717 = vrot.slane %v3715, 5
  %v3718 = vsel %vm609, %v3713, %v3717
  %v3720 = vshrl.u32 %v3579, 16
  %v3722 = vrot.slane %v3720, 4
  %v3723 = vshll.u32 %v3579, 16
  %v3725 = vrot.slane %v3723, 5
  %v3726 = vor.u32 %v3722, %v3725
  %v3727 = vrot.slane %v3726, 4
  %v3729 = vshll.u32 %v3580, 16
  %v3731 = vrot.slane %v3729, 5
  %v3732 = vsel %vm609, %v3727, %v3731
  %v3734 = vshrl.u32 %v3581, 16
  %v3736 = vrot.slane %v3734, 4
  %v3737 = vshll.u32 %v3581, 16
  %v3739 = vrot.slane %v3737, 5
  %v3740 = vor.u32 %v3736, %v3739
  %v3741 = vrot.slane %v3740, 4
  %v3743 = vshll.u32 %v3582, 16
  %v3745 = vrot.slane %v3743, 5
  %v3746 = vsel %vm609, %v3741, %v3745
  %v3748 = vshrl.u32 %v3583, 16
  %v3750 = vrot.slane %v3748, 4
  %v3751 = vshll.u32 %v3583, 16
  %v3753 = vrot.slane %v3751, 5
  %v3754 = vor.u32 %v3750, %v3753
  %v3755 = vrot.slane %v3754, 4
  %v3757 = vshll.u32 %v3584, 16
  %v3759 = vrot.slane %v3757, 5
  %v3760 = vsel %vm609, %v3755, %v3759
  %v3762 = vshrl.u32 %v3585, 16
  %v3764 = vrot.slane %v3762, 4
  %v3765 = vshll.u32 %v3585, 16
  %v3767 = vrot.slane %v3765, 5
  %v3768 = vor.u32 %v3764, %v3767
  %v3769 = vrot.slane %v3768, 4
  %v3771 = vshll.u32 %v3586, 16
  %v3773 = vrot.slane %v3771, 5
  %v3774 = vsel %vm609, %v3769, %v3773
  %v3776 = vshrl.u32 %v3587, 16
  %v3778 = vrot.slane %v3776, 4
  %v3779 = vshll.u32 %v3587, 16
  %v3781 = vrot.slane %v3779, 5
  %v3782 = vor.u32 %v3778, %v3781
  %v3783 = vrot.slane %v3782, 4
  %v3785 = vshll.u32 %v3588, 16
  %v3787 = vrot.slane %v3785, 5
  %v3788 = vsel %vm609, %v3783, %v3787
  %v3790 = vshrl.u32 %v3589, 16
  %v3792 = vrot.slane %v3790, 4
  %v3793 = vshll.u32 %v3589, 16
  %v3795 = vrot.slane %v3793, 5
  %v3796 = vor.u32 %v3792, %v3795
  %v3797 = vrot.slane %v3796, 4
  %v3799 = vshll.u32 %v3590, 16
  %v3801 = vrot.slane %v3799, 5
  %v3802 = vsel %vm609, %v3797, %v3801
  %v3804 = vshrl.u32 %v3591, 16
  %v3806 = vrot.slane %v3804, 4
  %v3807 = vshll.u32 %v3591, 16
  %v3809 = vrot.slane %v3807, 5
  %v3810 = vor.u32 %v3806, %v3809
  %v3811 = vrot.slane %v3810, 4
  %v3813 = vshll.u32 %v3592, 16
  %v3815 = vrot.slane %v3813, 5
  %v3816 = vsel %vm609, %v3811, %v3815
  %v3817 = vunpack.c.l.b16 %v3606
  %v3818 = vunpack.c.l.b16 %v3620
  %v3819 = vunpack.c.l.b16 %v3634
  %v3820 = vunpack.c.l.b16 %v3648
  %v3821 = vunpack.c.l.b16 %v3662
  %v3822 = vunpack.c.l.b16 %v3676
  %v3823 = vunpack.c.l.b16 %v3690
  %v3824 = vunpack.c.l.b16 %v3704
  %v3825 = vunpack.c.l.b16 %v3718
  %v3826 = vunpack.c.l.b16 %v3732
  %v3827 = vunpack.c.l.b16 %v3746
  %v3828 = vunpack.c.l.b16 %v3760
  %v3829 = vunpack.c.l.b16 %v3774
  %v3830 = vunpack.c.l.b16 %v3788
  %v3831 = vunpack.c.l.b16 %v3802
  %v3832 = vunpack.c.l.b16 %v3816
  %v3833 = vpack.c.b16 %v3818, %v3817
  %v3834 = vpack.c.b16 %v3820, %v3819
  %v3835 = vpack.c.b16 %v3822, %v3821
  %v3836 = vpack.c.b16 %v3824, %v3823
  %v3837 = vpack.c.b16 %v3826, %v3825
  %v3838 = vpack.c.b16 %v3828, %v3827
  %v3839 = vpack.c.b16 %v3830, %v3829
  %v3840 = vpack.c.b16 %v3832, %v3831
  %3841 = vrot.lane.b32.xlu0 %v3833, 32
  %v3842 = vpop.permute.xlu0 %3841
  %3843 = vrot.lane.b32.xlu0 %v3834, 32
  %v3844 = vpop.permute.xlu0 %3843
  %3845 = vrot.lane.b32.xlu0 %v3835, 32
  %v3846 = vpop.permute.xlu0 %3845
  %3847 = vrot.lane.b32.xlu0 %v3836, 32
  %v3848 = vpop.permute.xlu0 %3847
  %3849 = vrot.lane.b32.xlu0 %v3837, 32
  %v3850 = vpop.permute.xlu0 %3849
  %3851 = vrot.lane.b32.xlu0 %v3838, 32
  %v3852 = vpop.permute.xlu0 %3851
  %3853 = vrot.lane.b32.xlu0 %v3839, 32
  %v3854 = vpop.permute.xlu0 %3853
  %3855 = vrot.lane.b32.xlu0 %v3840, 32
  %v3856 = vpop.permute.xlu0 %3855
  %vm3865 = vcmask 326912
  %3866 = vst.msk [vmem:[#allocation5] sm:$0xff] %vm3865, %v3842
  %3867 = vst.msk [vmem:[#allocation5 + $0x8] sm:$0xff] %vm3865, %v3844
  %3868 = vst.msk [vmem:[#allocation5 + $0x10] sm:$0xff] %vm3865, %v3846
  %3869 = vst.msk [vmem:[#allocation5 + $0x18] sm:$0xff] %vm3865, %v3848
  %3870 = vst.msk [vmem:[#allocation5 + $0x20] sm:$0xff] %vm3865, %v3850
  %3871 = vst.msk [vmem:[#allocation5 + $0x28] sm:$0xff] %vm3865, %v3852
  %3872 = vst.msk [vmem:[#allocation5 + $0x30] sm:$0xff] %vm3865, %v3854
  %3873 = vst.msk [vmem:[#allocation5 + $0x38] sm:$0xff] %vm3865, %v3856
  %v3874 = vld [vmem:[%s2867] sm:$0xe]
  %v3875 = vld [vmem:[%s2867 + $0x4] sm:$0x1]
  %v3876 = vld [vmem:[%s2867 + $0x8] sm:$0xe]
  %v3877 = vld [vmem:[%s2867 + $0xc] sm:$0x1]
  %v3878 = vld [vmem:[%s2867 + $0x10] sm:$0xe]
  %v3879 = vld [vmem:[%s2867 + $0x14] sm:$0x1]
  %v3880 = vld [vmem:[%s2867 + $0x18] sm:$0xe]
  %v3881 = vld [vmem:[%s2867 + $0x1c] sm:$0x1]
  %v3882 = vld [vmem:[%s2867 + $0x20] sm:$0xe]
  %v3883 = vld [vmem:[%s2867 + $0x24] sm:$0x1]
  %v3884 = vld [vmem:[%s2867 + $0x28] sm:$0xe]
  %v3885 = vld [vmem:[%s2867 + $0x2c] sm:$0x1]
  %v3886 = vld [vmem:[%s2867 + $0x30] sm:$0xe]
  %v3887 = vld [vmem:[%s2867 + $0x34] sm:$0x1]
  %v3888 = vld [vmem:[%s2867 + $0x38] sm:$0xe]
  %v3889 = vld [vmem:[%s2867 + $0x3c] sm:$0x1]
  %v3890 = vld [vmem:[%s2867 + $0x50] sm:$0xe]
  %v3891 = vld [vmem:[%s2867 + $0x54] sm:$0x1]
  %v3892 = vld [vmem:[%s2867 + $0x58] sm:$0xe]
  %v3893 = vld [vmem:[%s2867 + $0x5c] sm:$0x1]
  %v3894 = vld [vmem:[%s2867 + $0x60] sm:$0xe]
  %v3895 = vld [vmem:[%s2867 + $0x64] sm:$0x1]
  %v3896 = vld [vmem:[%s2867 + $0x68] sm:$0xe]
  %v3897 = vld [vmem:[%s2867 + $0x6c] sm:$0x1]
  %v3898 = vld [vmem:[%s2867 + $0x70] sm:$0xe]
  %v3899 = vld [vmem:[%s2867 + $0x74] sm:$0x1]
  %v3900 = vld [vmem:[%s2867 + $0x78] sm:$0xe]
  %v3901 = vld [vmem:[%s2867 + $0x7c] sm:$0x1]
  %v3902 = vld [vmem:[%s2867 + $0x80] sm:$0xe]
  %v3903 = vld [vmem:[%s2867 + $0x84] sm:$0x1]
  %v3904 = vld [vmem:[%s2867 + $0x88] sm:$0xe]
  %v3905 = vld [vmem:[%s2867 + $0x8c] sm:$0x1]
  %v3938 = vrot.slane %v3874, 5
  %v3939 = vrot.slane %v3938, 4
  %v3940 = vrot.slane %v3875, 5
  %v3941 = vsel %vm957, %v3939, %v3940
  %v3942 = vrot.slane %v3876, 5
  %v3943 = vrot.slane %v3942, 4
  %v3944 = vrot.slane %v3877, 5
  %v3945 = vsel %vm957, %v3943, %v3944
  %v3946 = vrot.slane %v3878, 5
  %v3947 = vrot.slane %v3946, 4
  %v3948 = vrot.slane %v3879, 5
  %v3949 = vsel %vm957, %v3947, %v3948
  %v3950 = vrot.slane %v3880, 5
  %v3951 = vrot.slane %v3950, 4
  %v3952 = vrot.slane %v3881, 5
  %v3953 = vsel %vm957, %v3951, %v3952
  %v3954 = vrot.slane %v3882, 5
  %v3955 = vrot.slane %v3954, 4
  %v3956 = vrot.slane %v3883, 5
  %v3957 = vsel %vm957, %v3955, %v3956
  %v3958 = vrot.slane %v3884, 5
  %v3959 = vrot.slane %v3958, 4
  %v3960 = vrot.slane %v3885, 5
  %v3961 = vsel %vm957, %v3959, %v3960
  %v3962 = vrot.slane %v3886, 5
  %v3963 = vrot.slane %v3962, 4
  %v3964 = vrot.slane %v3887, 5
  %v3965 = vsel %vm957, %v3963, %v3964
  %v3966 = vrot.slane %v3888, 5
  %v3967 = vrot.slane %v3966, 4
  %v3968 = vrot.slane %v3889, 5
  %v3969 = vsel %vm957, %v3967, %v3968
  %v3970 = vrot.slane %v3890, 5
  %v3971 = vrot.slane %v3970, 4
  %v3972 = vrot.slane %v3891, 5
  %v3973 = vsel %vm957, %v3971, %v3972
  %v3974 = vrot.slane %v3892, 5
  %v3975 = vrot.slane %v3974, 4
  %v3976 = vrot.slane %v3893, 5
  %v3977 = vsel %vm957, %v3975, %v3976
  %v3978 = vrot.slane %v3894, 5
  %v3979 = vrot.slane %v3978, 4
  %v3980 = vrot.slane %v3895, 5
  %v3981 = vsel %vm957, %v3979, %v3980
  %v3982 = vrot.slane %v3896, 5
  %v3983 = vrot.slane %v3982, 4
  %v3984 = vrot.slane %v3897, 5
  %v3985 = vsel %vm957, %v3983, %v3984
  %v3986 = vrot.slane %v3898, 5
  %v3987 = vrot.slane %v3986, 4
  %v3988 = vrot.slane %v3899, 5
  %v3989 = vsel %vm957, %v3987, %v3988
  %v3990 = vrot.slane %v3900, 5
  %v3991 = vrot.slane %v3990, 4
  %v3992 = vrot.slane %v3901, 5
  %v3993 = vsel %vm957, %v3991, %v3992
  %v3994 = vrot.slane %v3902, 5
  %v3995 = vrot.slane %v3994, 4
  %v3996 = vrot.slane %v3903, 5
  %v3997 = vsel %vm957, %v3995, %v3996
  %v3998 = vrot.slane %v3904, 5
  %v3999 = vrot.slane %v3998, 4
  %v4000 = vrot.slane %v3905, 5
  %v4001 = vsel %vm957, %v3999, %v4000
  %v4002 = vunpack.c.l.b16 %v3941
  %v4003 = vunpack.c.l.b16 %v3945
  %v4004 = vunpack.c.l.b16 %v3949
  %v4005 = vunpack.c.l.b16 %v3953
  %v4006 = vunpack.c.l.b16 %v3957
  %v4007 = vunpack.c.l.b16 %v3961
  %v4008 = vunpack.c.l.b16 %v3965
  %v4009 = vunpack.c.l.b16 %v3969
  %v4010 = vunpack.c.l.b16 %v3973
  %v4011 = vunpack.c.l.b16 %v3977
  %v4012 = vunpack.c.l.b16 %v3981
  %v4013 = vunpack.c.l.b16 %v3985
  %v4014 = vunpack.c.l.b16 %v3989
  %v4015 = vunpack.c.l.b16 %v3993
  %v4016 = vunpack.c.l.b16 %v3997
  %v4017 = vunpack.c.l.b16 %v4001
  %v4018 = vpack.c.b16 %v4003, %v4002
  %v4019 = vpack.c.b16 %v4005, %v4004
  %v4020 = vpack.c.b16 %v4007, %v4006
  %v4021 = vpack.c.b16 %v4009, %v4008
  %v4022 = vpack.c.b16 %v4011, %v4010
  %v4023 = vpack.c.b16 %v4013, %v4012
  %v4024 = vpack.c.b16 %v4015, %v4014
  %v4025 = vpack.c.b16 %v4017, %v4016
  %4026 = vrot.lane.b32.xlu0 %v4018, 40
  %v4027 = vpop.permute.xlu0 %4026
  %4028 = vrot.lane.b32.xlu0 %v4019, 40
  %v4029 = vpop.permute.xlu0 %4028
  %4030 = vrot.lane.b32.xlu0 %v4020, 40
  %v4031 = vpop.permute.xlu0 %4030
  %4032 = vrot.lane.b32.xlu0 %v4021, 40
  %v4033 = vpop.permute.xlu0 %4032
  %4034 = vrot.lane.b32.xlu0 %v4022, 40
  %v4035 = vpop.permute.xlu0 %4034
  %4036 = vrot.lane.b32.xlu0 %v4023, 40
  %v4037 = vpop.permute.xlu0 %4036
  %4038 = vrot.lane.b32.xlu0 %v4024, 40
  %v4039 = vpop.permute.xlu0 %4038
  %4040 = vrot.lane.b32.xlu0 %v4025, 40
  %v4041 = vpop.permute.xlu0 %4040
  %vm4050 = vcmask 392512
  %4051 = vst.msk [vmem:[#allocation5] sm:$0xff] %vm4050, %v4027
  %4052 = vst.msk [vmem:[#allocation5 + $0x8] sm:$0xff] %vm4050, %v4029
  %4053 = vst.msk [vmem:[#allocation5 + $0x10] sm:$0xff] %vm4050, %v4031
  %4054 = vst.msk [vmem:[#allocation5 + $0x18] sm:$0xff] %vm4050, %v4033
  %4055 = vst.msk [vmem:[#allocation5 + $0x20] sm:$0xff] %vm4050, %v4035
  %4056 = vst.msk [vmem:[#allocation5 + $0x28] sm:$0xff] %vm4050, %v4037
  %4057 = vst.msk [vmem:[#allocation5 + $0x30] sm:$0xff] %vm4050, %v4039
  %4058 = vst.msk [vmem:[#allocation5 + $0x38] sm:$0xff] %vm4050, %v4041
  %s4059 = scalar_lea.vmem [#allocation3], 16
  %v4060 = vld [vmem:[%s4059] sm:$0xf]
  %v4061 = vld [vmem:[%s4059 + $0x8] sm:$0xf]
  %v4062 = vld [vmem:[%s4059 + $0x10] sm:$0xf]
  %v4063 = vld [vmem:[%s4059 + $0x18] sm:$0xf]
  %v4064 = vld [vmem:[%s4059 + $0x20] sm:$0xf]
  %v4065 = vld [vmem:[%s4059 + $0x28] sm:$0xf]
  %v4066 = vld [vmem:[%s4059 + $0x30] sm:$0xf]
  %v4067 = vld [vmem:[%s4059 + $0x38] sm:$0xf]
  %v4068 = vld [vmem:[%s4059 + $0x50] sm:$0xf]
  %v4069 = vld [vmem:[%s4059 + $0x58] sm:$0xf]
  %v4070 = vld [vmem:[%s4059 + $0x60] sm:$0xf]
  %v4071 = vld [vmem:[%s4059 + $0x68] sm:$0xf]
  %v4072 = vld [vmem:[%s4059 + $0x70] sm:$0xf]
  %v4073 = vld [vmem:[%s4059 + $0x78] sm:$0xf]
  %v4074 = vld [vmem:[%s4059 + $0x80] sm:$0xf]
  %v4075 = vld [vmem:[%s4059 + $0x88] sm:$0xf]
  %v4092 = vunpack.c.l.b16 %v4060
  %v4093 = vunpack.c.l.b16 %v4061
  %v4094 = vunpack.c.l.b16 %v4062
  %v4095 = vunpack.c.l.b16 %v4063
  %v4096 = vunpack.c.l.b16 %v4064
  %v4097 = vunpack.c.l.b16 %v4065
  %v4098 = vunpack.c.l.b16 %v4066
  %v4099 = vunpack.c.l.b16 %v4067
  %v4100 = vunpack.c.l.b16 %v4068
  %v4101 = vunpack.c.l.b16 %v4069
  %v4102 = vunpack.c.l.b16 %v4070
  %v4103 = vunpack.c.l.b16 %v4071
  %v4104 = vunpack.c.l.b16 %v4072
  %v4105 = vunpack.c.l.b16 %v4073
  %v4106 = vunpack.c.l.b16 %v4074
  %v4107 = vunpack.c.l.b16 %v4075
  %v4108 = vpack.c.b16 %v4093, %v4092
  %v4109 = vpack.c.b16 %v4095, %v4094
  %v4110 = vpack.c.b16 %v4097, %v4096
  %v4111 = vpack.c.b16 %v4099, %v4098
  %v4112 = vpack.c.b16 %v4101, %v4100
  %v4113 = vpack.c.b16 %v4103, %v4102
  %v4114 = vpack.c.b16 %v4105, %v4104
  %v4115 = vpack.c.b16 %v4107, %v4106
  %4116 = vrot.lane.b32.xlu0 %v4108, 48
  %v4117 = vpop.permute.xlu0 %4116
  %4118 = vrot.lane.b32.xlu0 %v4109, 48
  %v4119 = vpop.permute.xlu0 %4118
  %4120 = vrot.lane.b32.xlu0 %v4110, 48
  %v4121 = vpop.permute.xlu0 %4120
  %4122 = vrot.lane.b32.xlu0 %v4111, 48
  %v4123 = vpop.permute.xlu0 %4122
  %4124 = vrot.lane.b32.xlu0 %v4112, 48
  %v4125 = vpop.permute.xlu0 %4124
  %4126 = vrot.lane.b32.xlu0 %v4113, 48
  %v4127 = vpop.permute.xlu0 %4126
  %4128 = vrot.lane.b32.xlu0 %v4114, 48
  %v4129 = vpop.permute.xlu0 %4128
  %4130 = vrot.lane.b32.xlu0 %v4115, 48
  %v4131 = vpop.permute.xlu0 %4130
  %vm4140 = vcmask 458112
  %4141 = vst.msk [vmem:[#allocation5] sm:$0xff] %vm4140, %v4117
  %4142 = vst.msk [vmem:[#allocation5 + $0x8] sm:$0xff] %vm4140, %v4119
  %4143 = vst.msk [vmem:[#allocation5 + $0x10] sm:$0xff] %vm4140, %v4121
  %4144 = vst.msk [vmem:[#allocation5 + $0x18] sm:$0xff] %vm4140, %v4123
  %4145 = vst.msk [vmem:[#allocation5 + $0x20] sm:$0xff] %vm4140, %v4125
  %4146 = vst.msk [vmem:[#allocation5 + $0x28] sm:$0xff] %vm4140, %v4127
  %4147 = vst.msk [vmem:[#allocation5 + $0x30] sm:$0xff] %vm4140, %v4129
  %4148 = vst.msk [vmem:[#allocation5 + $0x38] sm:$0xff] %vm4140, %v4131
  %v4149 = vld [vmem:[%s4059] sm:$0xf]
  %v4150 = vld [vmem:[%s4059 + $0x4] sm:$0x1]
  %v4151 = vld [vmem:[%s4059 + $0x8] sm:$0xf]
  %v4152 = vld [vmem:[%s4059 + $0xc] sm:$0x1]
  %v4153 = vld [vmem:[%s4059 + $0x10] sm:$0xf]
  %v4154 = vld [vmem:[%s4059 + $0x14] sm:$0x1]
  %v4155 = vld [vmem:[%s4059 + $0x18] sm:$0xf]
  %v4156 = vld [vmem:[%s4059 + $0x1c] sm:$0x1]
  %v4157 = vld [vmem:[%s4059 + $0x20] sm:$0xf]
  %v4158 = vld [vmem:[%s4059 + $0x24] sm:$0x1]
  %v4159 = vld [vmem:[%s4059 + $0x28] sm:$0xf]
  %v4160 = vld [vmem:[%s4059 + $0x2c] sm:$0x1]
  %v4161 = vld [vmem:[%s4059 + $0x30] sm:$0xf]
  %v4162 = vld [vmem:[%s4059 + $0x34] sm:$0x1]
  %v4163 = vld [vmem:[%s4059 + $0x38] sm:$0xf]
  %v4164 = vld [vmem:[%s4059 + $0x3c] sm:$0x1]
  %v4165 = vld [vmem:[%s4059 + $0x50] sm:$0xf]
  %v4166 = vld [vmem:[%s4059 + $0x54] sm:$0x1]
  %v4167 = vld [vmem:[%s4059 + $0x58] sm:$0xf]
  %v4168 = vld [vmem:[%s4059 + $0x5c] sm:$0x1]
  %v4169 = vld [vmem:[%s4059 + $0x60] sm:$0xf]
  %v4170 = vld [vmem:[%s4059 + $0x64] sm:$0x1]
  %v4171 = vld [vmem:[%s4059 + $0x68] sm:$0xf]
  %v4172 = vld [vmem:[%s4059 + $0x6c] sm:$0x1]
  %v4173 = vld [vmem:[%s4059 + $0x70] sm:$0xf]
  %v4174 = vld [vmem:[%s4059 + $0x74] sm:$0x1]
  %v4175 = vld [vmem:[%s4059 + $0x78] sm:$0xf]
  %v4176 = vld [vmem:[%s4059 + $0x7c] sm:$0x1]
  %v4177 = vld [vmem:[%s4059 + $0x80] sm:$0xf]
  %v4178 = vld [vmem:[%s4059 + $0x84] sm:$0x1]
  %v4179 = vld [vmem:[%s4059 + $0x88] sm:$0xf]
  %v4180 = vld [vmem:[%s4059 + $0x8c] sm:$0x1]
  %v4182 = vshrl.u32 %v4149, 16
  %v4184 = vrot.slane %v4182, 4
  %v4185 = vshll.u32 %v4149, 16
  %v4187 = vrot.slane %v4185, 5
  %v4188 = vor.u32 %v4184, %v4187
  %v4189 = vrot.slane %v4188, 4
  %v4191 = vshll.u32 %v4150, 16
  %v4193 = vrot.slane %v4191, 5
  %v4194 = vsel %vm609, %v4189, %v4193
  %v4196 = vshrl.u32 %v4151, 16
  %v4198 = vrot.slane %v4196, 4
  %v4199 = vshll.u32 %v4151, 16
  %v4201 = vrot.slane %v4199, 5
  %v4202 = vor.u32 %v4198, %v4201
  %v4203 = vrot.slane %v4202, 4
  %v4205 = vshll.u32 %v4152, 16
  %v4207 = vrot.slane %v4205, 5
  %v4208 = vsel %vm609, %v4203, %v4207
  %v4210 = vshrl.u32 %v4153, 16
  %v4212 = vrot.slane %v4210, 4
  %v4213 = vshll.u32 %v4153, 16
  %v4215 = vrot.slane %v4213, 5
  %v4216 = vor.u32 %v4212, %v4215
  %v4217 = vrot.slane %v4216, 4
  %v4219 = vshll.u32 %v4154, 16
  %v4221 = vrot.slane %v4219, 5
  %v4222 = vsel %vm609, %v4217, %v4221
  %v4224 = vshrl.u32 %v4155, 16
  %v4226 = vrot.slane %v4224, 4
  %v4227 = vshll.u32 %v4155, 16
  %v4229 = vrot.slane %v4227, 5
  %v4230 = vor.u32 %v4226, %v4229
  %v4231 = vrot.slane %v4230, 4
  %v4233 = vshll.u32 %v4156, 16
  %v4235 = vrot.slane %v4233, 5
  %v4236 = vsel %vm609, %v4231, %v4235
  %v4238 = vshrl.u32 %v4157, 16
  %v4240 = vrot.slane %v4238, 4
  %v4241 = vshll.u32 %v4157, 16
  %v4243 = vrot.slane %v4241, 5
  %v4244 = vor.u32 %v4240, %v4243
  %v4245 = vrot.slane %v4244, 4
  %v4247 = vshll.u32 %v4158, 16
  %v4249 = vrot.slane %v4247, 5
  %v4250 = vsel %vm609, %v4245, %v4249
  %v4252 = vshrl.u32 %v4159, 16
  %v4254 = vrot.slane %v4252, 4
  %v4255 = vshll.u32 %v4159, 16
  %v4257 = vrot.slane %v4255, 5
  %v4258 = vor.u32 %v4254, %v4257
  %v4259 = vrot.slane %v4258, 4
  %v4261 = vshll.u32 %v4160, 16
  %v4263 = vrot.slane %v4261, 5
  %v4264 = vsel %vm609, %v4259, %v4263
  %v4266 = vshrl.u32 %v4161, 16
  %v4268 = vrot.slane %v4266, 4
  %v4269 = vshll.u32 %v4161, 16
  %v4271 = vrot.slane %v4269, 5
  %v4272 = vor.u32 %v4268, %v4271
  %v4273 = vrot.slane %v4272, 4
  %v4275 = vshll.u32 %v4162, 16
  %v4277 = vrot.slane %v4275, 5
  %v4278 = vsel %vm609, %v4273, %v4277
  %v4280 = vshrl.u32 %v4163, 16
  %v4282 = vrot.slane %v4280, 4
  %v4283 = vshll.u32 %v4163, 16
  %v4285 = vrot.slane %v4283, 5
  %v4286 = vor.u32 %v4282, %v4285
  %v4287 = vrot.slane %v4286, 4
  %v4289 = vshll.u32 %v4164, 16
  %v4291 = vrot.slane %v4289, 5
  %v4292 = vsel %vm609, %v4287, %v4291
  %v4294 = vshrl.u32 %v4165, 16
  %v4296 = vrot.slane %v4294, 4
  %v4297 = vshll.u32 %v4165, 16
  %v4299 = vrot.slane %v4297, 5
  %v4300 = vor.u32 %v4296, %v4299
  %v4301 = vrot.slane %v4300, 4
  %v4303 = vshll.u32 %v4166, 16
  %v4305 = vrot.slane %v4303, 5
  %v4306 = vsel %vm609, %v4301, %v4305
  %v4308 = vshrl.u32 %v4167, 16
  %v4310 = vrot.slane %v4308, 4
  %v4311 = vshll.u32 %v4167, 16
  %v4313 = vrot.slane %v4311, 5
  %v4314 = vor.u32 %v4310, %v4313
  %v4315 = vrot.slane %v4314, 4
  %v4317 = vshll.u32 %v4168, 16
  %v4319 = vrot.slane %v4317, 5
  %v4320 = vsel %vm609, %v4315, %v4319
  %v4322 = vshrl.u32 %v4169, 16
  %v4324 = vrot.slane %v4322, 4
  %v4325 = vshll.u32 %v4169, 16
  %v4327 = vrot.slane %v4325, 5
  %v4328 = vor.u32 %v4324, %v4327
  %v4329 = vrot.slane %v4328, 4
  %v4331 = vshll.u32 %v4170, 16
  %v4333 = vrot.slane %v4331, 5
  %v4334 = vsel %vm609, %v4329, %v4333
  %v4336 = vshrl.u32 %v4171, 16
  %v4338 = vrot.slane %v4336, 4
  %v4339 = vshll.u32 %v4171, 16
  %v4341 = vrot.slane %v4339, 5
  %v4342 = vor.u32 %v4338, %v4341
  %v4343 = vrot.slane %v4342, 4
  %v4345 = vshll.u32 %v4172, 16
  %v4347 = vrot.slane %v4345, 5
  %v4348 = vsel %vm609, %v4343, %v4347
  %v4350 = vshrl.u32 %v4173, 16
  %v4352 = vrot.slane %v4350, 4
  %v4353 = vshll.u32 %v4173, 16
  %v4355 = vrot.slane %v4353, 5
  %v4356 = vor.u32 %v4352, %v4355
  %v4357 = vrot.slane %v4356, 4
  %v4359 = vshll.u32 %v4174, 16
  %v4361 = vrot.slane %v4359, 5
  %v4362 = vsel %vm609, %v4357, %v4361
  %v4364 = vshrl.u32 %v4175, 16
  %v4366 = vrot.slane %v4364, 4
  %v4367 = vshll.u32 %v4175, 16
  %v4369 = vrot.slane %v4367, 5
  %v4370 = vor.u32 %v4366, %v4369
  %v4371 = vrot.slane %v4370, 4
  %v4373 = vshll.u32 %v4176, 16
  %v4375 = vrot.slane %v4373, 5
  %v4376 = vsel %vm609, %v4371, %v4375
  %v4378 = vshrl.u32 %v4177, 16
  %v4380 = vrot.slane %v4378, 4
  %v4381 = vshll.u32 %v4177, 16
  %v4383 = vrot.slane %v4381, 5
  %v4384 = vor.u32 %v4380, %v4383
  %v4385 = vrot.slane %v4384, 4
  %v4387 = vshll.u32 %v4178, 16
  %v4389 = vrot.slane %v4387, 5
  %v4390 = vsel %vm609, %v4385, %v4389
  %v4392 = vshrl.u32 %v4179, 16
  %v4394 = vrot.slane %v4392, 4
  %v4395 = vshll.u32 %v4179, 16
  %v4397 = vrot.slane %v4395, 5
  %v4398 = vor.u32 %v4394, %v4397
  %v4399 = vrot.slane %v4398, 4
  %v4401 = vshll.u32 %v4180, 16
  %v4403 = vrot.slane %v4401, 5
  %v4404 = vsel %vm609, %v4399, %v4403
  %v4405 = vunpack.c.l.b16 %v4194
  %v4406 = vunpack.c.l.b16 %v4208
  %v4407 = vunpack.c.l.b16 %v4222
  %v4408 = vunpack.c.l.b16 %v4236
  %v4409 = vunpack.c.l.b16 %v4250
  %v4410 = vunpack.c.l.b16 %v4264
  %v4411 = vunpack.c.l.b16 %v4278
  %v4412 = vunpack.c.l.b16 %v4292
  %v4413 = vunpack.c.l.b16 %v4306
  %v4414 = vunpack.c.l.b16 %v4320
  %v4415 = vunpack.c.l.b16 %v4334
  %v4416 = vunpack.c.l.b16 %v4348
  %v4417 = vunpack.c.l.b16 %v4362
  %v4418 = vunpack.c.l.b16 %v4376
  %v4419 = vunpack.c.l.b16 %v4390
  %v4420 = vunpack.c.l.b16 %v4404
  %v4421 = vpack.c.b16 %v4406, %v4405
  %v4422 = vpack.c.b16 %v4408, %v4407
  %v4423 = vpack.c.b16 %v4410, %v4409
  %v4424 = vpack.c.b16 %v4412, %v4411
  %v4425 = vpack.c.b16 %v4414, %v4413
  %v4426 = vpack.c.b16 %v4416, %v4415
  %v4427 = vpack.c.b16 %v4418, %v4417
  %v4428 = vpack.c.b16 %v4420, %v4419
  %4429 = vrot.lane.b32.xlu0 %v4421, 56
  %v4430 = vpop.permute.xlu0 %4429
  %4431 = vrot.lane.b32.xlu0 %v4422, 56
  %v4432 = vpop.permute.xlu0 %4431
  %4433 = vrot.lane.b32.xlu0 %v4423, 56
  %v4434 = vpop.permute.xlu0 %4433
  %4435 = vrot.lane.b32.xlu0 %v4424, 56
  %v4436 = vpop.permute.xlu0 %4435
  %4437 = vrot.lane.b32.xlu0 %v4425, 56
  %v4438 = vpop.permute.xlu0 %4437
  %4439 = vrot.lane.b32.xlu0 %v4426, 56
  %v4440 = vpop.permute.xlu0 %4439
  %4441 = vrot.lane.b32.xlu0 %v4427, 56
  %v4442 = vpop.permute.xlu0 %4441
  %4443 = vrot.lane.b32.xlu0 %v4428, 56
  %v4444 = vpop.permute.xlu0 %4443
  %vm4453 = vcmask 523712
  %4454 = vst.msk [vmem:[#allocation5] sm:$0xff] %vm4453, %v4430
  %4455 = vst.msk [vmem:[#allocation5 + $0x8] sm:$0xff] %vm4453, %v4432
  %4456 = vst.msk [vmem:[#allocation5 + $0x10] sm:$0xff] %vm4453, %v4434
  %4457 = vst.msk [vmem:[#allocation5 + $0x18] sm:$0xff] %vm4453, %v4436
  %4458 = vst.msk [vmem:[#allocation5 + $0x20] sm:$0xff] %vm4453, %v4438
  %4459 = vst.msk [vmem:[#allocation5 + $0x28] sm:$0xff] %vm4453, %v4440
  %4460 = vst.msk [vmem:[#allocation5 + $0x30] sm:$0xff] %vm4453, %v4442
  %4461 = vst.msk [vmem:[#allocation5 + $0x38] sm:$0xff] %vm4453, %v4444
  %v4462 = vld [vmem:[%s4059] sm:$0xe]
  %v4463 = vld [vmem:[%s4059 + $0x4] sm:$0x1]
  %v4464 = vld [vmem:[%s4059 + $0x8] sm:$0xe]
  %v4465 = vld [vmem:[%s4059 + $0xc] sm:$0x1]
  %v4466 = vld [vmem:[%s4059 + $0x10] sm:$0xe]
  %v4467 = vld [vmem:[%s4059 + $0x14] sm:$0x1]
  %v4468 = vld [vmem:[%s4059 + $0x18] sm:$0xe]
  %v4469 = vld [vmem:[%s4059 + $0x1c] sm:$0x1]
  %v4470 = vld [vmem:[%s4059 + $0x20] sm:$0xe]
  %v4471 = vld [vmem:[%s4059 + $0x24] sm:$0x1]
  %v4472 = vld [vmem:[%s4059 + $0x28] sm:$0xe]
  %v4473 = vld [vmem:[%s4059 + $0x2c] sm:$0x1]
  %v4474 = vld [vmem:[%s4059 + $0x30] sm:$0xe]
  %v4475 = vld [vmem:[%s4059 + $0x34] sm:$0x1]
  %v4476 = vld [vmem:[%s4059 + $0x38] sm:$0xe]
  %v4477 = vld [vmem:[%s4059 + $0x3c] sm:$0x1]
  %v4478 = vld [vmem:[%s4059 + $0x50] sm:$0xe]
  %v4479 = vld [vmem:[%s4059 + $0x54] sm:$0x1]
  %v4480 = vld [vmem:[%s4059 + $0x58] sm:$0xe]
  %v4481 = vld [vmem:[%s4059 + $0x5c] sm:$0x1]
  %v4482 = vld [vmem:[%s4059 + $0x60] sm:$0xe]
  %v4483 = vld [vmem:[%s4059 + $0x64] sm:$0x1]
  %v4484 = vld [vmem:[%s4059 + $0x68] sm:$0xe]
  %v4485 = vld [vmem:[%s4059 + $0x6c] sm:$0x1]
  %v4486 = vld [vmem:[%s4059 + $0x70] sm:$0xe]
  %v4487 = vld [vmem:[%s4059 + $0x74] sm:$0x1]
  %v4488 = vld [vmem:[%s4059 + $0x78] sm:$0xe]
  %v4489 = vld [vmem:[%s4059 + $0x7c] sm:$0x1]
  %v4490 = vld [vmem:[%s4059 + $0x80] sm:$0xe]
  %v4491 = vld [vmem:[%s4059 + $0x84] sm:$0x1]
  %v4492 = vld [vmem:[%s4059 + $0x88] sm:$0xe]
  %v4493 = vld [vmem:[%s4059 + $0x8c] sm:$0x1]
  %v4526 = vrot.slane %v4462, 5
  %v4527 = vrot.slane %v4526, 4
  %v4528 = vrot.slane %v4463, 5
  %v4529 = vsel %vm957, %v4527, %v4528
  %v4530 = vrot.slane %v4464, 5
  %v4531 = vrot.slane %v4530, 4
  %v4532 = vrot.slane %v4465, 5
  %v4533 = vsel %vm957, %v4531, %v4532
  %v4534 = vrot.slane %v4466, 5
  %v4535 = vrot.slane %v4534, 4
  %v4536 = vrot.slane %v4467, 5
  %v4537 = vsel %vm957, %v4535, %v4536
  %v4538 = vrot.slane %v4468, 5
  %v4539 = vrot.slane %v4538, 4
  %v4540 = vrot.slane %v4469, 5
  %v4541 = vsel %vm957, %v4539, %v4540
  %v4542 = vrot.slane %v4470, 5
  %v4543 = vrot.slane %v4542, 4
  %v4544 = vrot.slane %v4471, 5
  %v4545 = vsel %vm957, %v4543, %v4544
  %v4546 = vrot.slane %v4472, 5
  %v4547 = vrot.slane %v4546, 4
  %v4548 = vrot.slane %v4473, 5
  %v4549 = vsel %vm957, %v4547, %v4548
  %v4550 = vrot.slane %v4474, 5
  %v4551 = vrot.slane %v4550, 4
  %v4552 = vrot.slane %v4475, 5
  %v4553 = vsel %vm957, %v4551, %v4552
  %v4554 = vrot.slane %v4476, 5
  %v4555 = vrot.slane %v4554, 4
  %v4556 = vrot.slane %v4477, 5
  %v4557 = vsel %vm957, %v4555, %v4556
  %v4558 = vrot.slane %v4478, 5
  %v4559 = vrot.slane %v4558, 4
  %v4560 = vrot.slane %v4479, 5
  %v4561 = vsel %vm957, %v4559, %v4560
  %v4562 = vrot.slane %v4480, 5
  %v4563 = vrot.slane %v4562, 4
  %v4564 = vrot.slane %v4481, 5
  %v4565 = vsel %vm957, %v4563, %v4564
  %v4566 = vrot.slane %v4482, 5
  %v4567 = vrot.slane %v4566, 4
  %v4568 = vrot.slane %v4483, 5
  %v4569 = vsel %vm957, %v4567, %v4568
  %v4570 = vrot.slane %v4484, 5
  %v4571 = vrot.slane %v4570, 4
  %v4572 = vrot.slane %v4485, 5
  %v4573 = vsel %vm957, %v4571, %v4572
  %v4574 = vrot.slane %v4486, 5
  %v4575 = vrot.slane %v4574, 4
  %v4576 = vrot.slane %v4487, 5
  %v4577 = vsel %vm957, %v4575, %v4576
  %v4578 = vrot.slane %v4488, 5
  %v4579 = vrot.slane %v4578, 4
  %v4580 = vrot.slane %v4489, 5
  %v4581 = vsel %vm957, %v4579, %v4580
  %v4582 = vrot.slane %v4490, 5
  %v4583 = vrot.slane %v4582, 4
  %v4584 = vrot.slane %v4491, 5
  %v4585 = vsel %vm957, %v4583, %v4584
  %v4586 = vrot.slane %v4492, 5
  %v4587 = vrot.slane %v4586, 4
  %v4588 = vrot.slane %v4493, 5
  %v4589 = vsel %vm957, %v4587, %v4588
  %v4590 = vunpack.c.l.b16 %v4529
  %v4591 = vunpack.c.l.b16 %v4533
  %v4592 = vunpack.c.l.b16 %v4537
  %v4593 = vunpack.c.l.b16 %v4541
  %v4594 = vunpack.c.l.b16 %v4545
  %v4595 = vunpack.c.l.b16 %v4549
  %v4596 = vunpack.c.l.b16 %v4553
  %v4597 = vunpack.c.l.b16 %v4557
  %v4598 = vunpack.c.l.b16 %v4561
  %v4599 = vunpack.c.l.b16 %v4565
  %v4600 = vunpack.c.l.b16 %v4569
  %v4601 = vunpack.c.l.b16 %v4573
  %v4602 = vunpack.c.l.b16 %v4577
  %v4603 = vunpack.c.l.b16 %v4581
  %v4604 = vunpack.c.l.b16 %v4585
  %v4605 = vunpack.c.l.b16 %v4589
  %v4606 = vpack.c.b16 %v4591, %v4590
  %v4607 = vpack.c.b16 %v4593, %v4592
  %v4608 = vpack.c.b16 %v4595, %v4594
  %v4609 = vpack.c.b16 %v4597, %v4596
  %v4610 = vpack.c.b16 %v4599, %v4598
  %v4611 = vpack.c.b16 %v4601, %v4600
  %v4612 = vpack.c.b16 %v4603, %v4602
  %v4613 = vpack.c.b16 %v4605, %v4604
  %4614 = vrot.lane.b32.xlu0 %v4606, 64
  %v4615 = vpop.permute.xlu0 %4614
  %4616 = vrot.lane.b32.xlu0 %v4607, 64
  %v4617 = vpop.permute.xlu0 %4616
  %4618 = vrot.lane.b32.xlu0 %v4608, 64
  %v4619 = vpop.permute.xlu0 %4618
  %4620 = vrot.lane.b32.xlu0 %v4609, 64
  %v4621 = vpop.permute.xlu0 %4620
  %4622 = vrot.lane.b32.xlu0 %v4610, 64
  %v4623 = vpop.permute.xlu0 %4622
  %4624 = vrot.lane.b32.xlu0 %v4611, 64
  %v4625 = vpop.permute.xlu0 %4624
  %4626 = vrot.lane.b32.xlu0 %v4612, 64
  %v4627 = vpop.permute.xlu0 %4626
  %4628 = vrot.lane.b32.xlu0 %v4613, 64
  %v4629 = vpop.permute.xlu0 %4628
  %vm4638 = vcmask 589312
  %4639 = vst.msk [vmem:[#allocation5] sm:$0xff] %vm4638, %v4615
  %4640 = vst.msk [vmem:[#allocation5 + $0x8] sm:$0xff] %vm4638, %v4617
  %4641 = vst.msk [vmem:[#allocation5 + $0x10] sm:$0xff] %vm4638, %v4619
  %4642 = vst.msk [vmem:[#allocation5 + $0x18] sm:$0xff] %vm4638, %v4621
  %4643 = vst.msk [vmem:[#allocation5 + $0x20] sm:$0xff] %vm4638, %v4623
  %4644 = vst.msk [vmem:[#allocation5 + $0x28] sm:$0xff] %vm4638, %v4625
  %4645 = vst.msk [vmem:[#allocation5 + $0x30] sm:$0xff] %vm4638, %v4627
  %4646 = vst.msk [vmem:[#allocation5 + $0x38] sm:$0xff] %vm4638, %v4629
  %v4647 = vld [vmem:[#allocation5] sm:$0xff]
  %v4648 = vld [vmem:[#allocation5 + $0x8] sm:$0xff]
  %v4649 = vld [vmem:[#allocation5 + $0x10] sm:$0xff]
  %v4650 = vld [vmem:[#allocation5 + $0x18] sm:$0xff]
  %v4651 = vld [vmem:[#allocation5 + $0x20] sm:$0xff]
  %v4652 = vld [vmem:[#allocation5 + $0x28] sm:$0xff]
  %v4653 = vld [vmem:[#allocation5 + $0x30] sm:$0xff]
  %v4654 = vld [vmem:[#allocation5 + $0x38] sm:$0xff]
  %v4655 = vld [vmem:[%s4] sm:$0xf]
  %v4656 = vld [vmem:[%s4 + $0x4] sm:$0xf]
  %v4657 = vld [vmem:[%s4 + $0x8] sm:$0xf]
  %v4658 = vld [vmem:[%s4 + $0xc] sm:$0xf]
  %v4659 = vld [vmem:[%s4 + $0x10] sm:$0xf]
  %v4660 = vld [vmem:[%s4 + $0x14] sm:$0xf]
  %v4661 = vld [vmem:[%s4 + $0x18] sm:$0xf]
  %v4662 = vld [vmem:[%s4 + $0x1c] sm:$0xf]
  %v4663 = vld [vmem:[%s4 + $0x20] sm:$0xf]
  %v4673 = vunpack.c.l.b16 %v4655
  %v4674 = vunpack.c.l.b16 %v4656
  %v4675 = vunpack.c.l.b16 %v4657
  %v4676 = vunpack.c.l.b16 %v4658
  %v4677 = vunpack.c.l.b16 %v4659
  %v4678 = vunpack.c.l.b16 %v4660
  %v4679 = vunpack.c.l.b16 %v4661
  %v4680 = vunpack.c.l.b16 %v4662
  %v4681 = vunpack.c.l.b16 %v4663
  %v4682 = vpack.c.b16 %v4674, %v4673
  %v4683 = vpack.c.b16 %v4676, %v4675
  %v4684 = vpack.c.b16 %v4678, %v4677
  %v4685 = vpack.c.b16 %v4680, %v4679
  %v4686 = vpack.c.b16 %v4681, %v4681
  %vm4691 = vcmask 588800
  %v4693 = vsel %vm4691, %v4647, 0
  %v4696 = vsel %vm4691, %v4648, 0
  %v4699 = vsel %vm4691, %v4649, 0
  %v4702 = vsel %vm4691, %v4650, 0
  %v4705 = vsel %vm4691, %v4651, 0
  %v4708 = vsel %vm4691, %v4652, 0
  %v4711 = vsel %vm4691, %v4653, 0
  %v4714 = vsel %vm4691, %v4654, 0
  %vm4716 = vcmask 1043456
  %v4718 = vsel %vm4716, %v4686, 0
  %4720 = vmatprep.subr.bf16.mxu0 0
  %4721 = vmatpush1.bf16.msra.mxu0 %v4682
  %4722 = vmatprep.subr.bf16.mxu0 0
  %4723 = vmatpush1.bf16.msra.mxu0 %v4683
  %4724 = vmatprep.subr.bf16.mxu0 0
  %4725 = vmatpush1.bf16.msra.mxu0 %v4684
  %4726 = vmatprep.subr.bf16.mxu0 0
  %4727 = vmatpush1.bf16.msra.mxu0 %v4685
  %4728 = vmatprep.subr.bf16.mxu0 0
  %4729 = vmatpush1.bf16.msra.mxu0 %v4718
  %4730 = vmatprep.subr.bf16.mxu0 0
  %4731 = vmatpush1.bf16.msra.mxu0 0
  %4732 = vmatprep.subr.bf16.mxu0 0
  %4733 = vmatpush1.bf16.msra.mxu0 0
  %4734 = vmatprep.subr.bf16.mxu0 0
  %4735 = vmatpush1.bf16.msra.mxu0 0
  %4736 = vmatprep.subr.bf16.mxu0 0
  %4737 = vmatpush1.bf16.msra.mxu0 0
  %4738 = vmatprep.subr.bf16.mxu0 0
  %4739 = vmatpush1.bf16.msra.mxu0 0
  %4740 = vmatprep.subr.bf16.mxu0 0
  %4741 = vmatpush1.bf16.msra.mxu0 0
  %4742 = vmatprep.subr.bf16.mxu0 0
  %4743 = vmatpush1.bf16.msra.mxu0 0
  %4744 = vmatprep.subr.bf16.mxu0 0
  %4745 = vmatpush1.bf16.msra.mxu0 0
  %4746 = vmatprep.subr.bf16.mxu0 0
  %4747 = vmatpush1.bf16.msra.mxu0 0
  %4748 = vmatprep.subr.bf16.mxu0 0
  %4749 = vmatpush1.bf16.msra.mxu0 0
  %4750 = vmatprep.subr.bf16.mxu0 0
  %4751 = vmatpush1.bf16.msra.mxu0 0
  %4752 = vmatprep.mubr.bf16.mxu0 0
  %4753 = vmatmul.mubr.bf16.gmra.mrb[0].mxu0 %v4693
  %v4754 = vpop.f32.mrb[0].mxu0
  %v4755 = vadd.f32 0.0, %v4754
  %v4756 = vpop.f32.mrb[0].mxu0
  %v4757 = vpop.f32.mrb[0].mxu0
  %v4758 = vadd.f32 0.0, %v4757
  %v4759 = vpop.f32.mrb[0].mxu0
  %4760 = vmatprep.mubr.bf16.mxu0 0
  %4761 = vmatmul.mubr.bf16.gmra.mrb[0].mxu0 %v4696
  %v4762 = vpop.f32.mrb[0].mxu0
  %v4763 = vadd.f32 0.0, %v4762
  %v4764 = vpop.f32.mrb[0].mxu0
  %v4765 = vpop.f32.mrb[0].mxu0
  %v4766 = vadd.f32 0.0, %v4765
  %v4767 = vpop.f32.mrb[0].mxu0
  %4768 = vmatprep.mubr.bf16.mxu0 0
  %4769 = vmatmul.mubr.bf16.gmra.mrb[0].mxu0 %v4699
  %v4770 = vpop.f32.mrb[0].mxu0
  %v4771 = vadd.f32 0.0, %v4770
  %v4772 = vpop.f32.mrb[0].mxu0
  %v4773 = vpop.f32.mrb[0].mxu0
  %v4774 = vadd.f32 0.0, %v4773
  %v4775 = vpop.f32.mrb[0].mxu0
  %4776 = vmatprep.mubr.bf16.mxu0 0
  %4777 = vmatmul.mubr.bf16.gmra.mrb[0].mxu0 %v4702
  %v4778 = vpop.f32.mrb[0].mxu0
  %v4779 = vadd.f32 0.0, %v4778
  %v4780 = vpop.f32.mrb[0].mxu0
  %v4781 = vpop.f32.mrb[0].mxu0
  %v4782 = vadd.f32 0.0, %v4781
  %v4783 = vpop.f32.mrb[0].mxu0
  %4784 = vmatprep.mubr.bf16.mxu0 0
  %4785 = vmatmul.mubr.bf16.gmra.mrb[0].mxu0 %v4705
  %v4786 = vpop.f32.mrb[0].mxu0
  %v4787 = vadd.f32 0.0, %v4786
  %v4788 = vpop.f32.mrb[0].mxu0
  %v4789 = vpop.f32.mrb[0].mxu0
  %v4790 = vadd.f32 0.0, %v4789
  %v4791 = vpop.f32.mrb[0].mxu0
  %4792 = vmatprep.mubr.bf16.mxu0 0
  %4793 = vmatmul.mubr.bf16.gmra.mrb[0].mxu0 %v4708
  %v4794 = vpop.f32.mrb[0].mxu0
  %v4795 = vadd.f32 0.0, %v4794
  %v4796 = vpop.f32.mrb[0].mxu0
  %v4797 = vpop.f32.mrb[0].mxu0
  %v4798 = vadd.f32 0.0, %v4797
  %v4799 = vpop.f32.mrb[0].mxu0
  %4800 = vmatprep.mubr.bf16.mxu0 0
  %4801 = vmatmul.mubr.bf16.gmra.mrb[0].mxu0 %v4711
  %v4802 = vpop.f32.mrb[0].mxu0
  %v4803 = vadd.f32 0.0, %v4802
  %v4804 = vpop.f32.mrb[0].mxu0
  %v4805 = vpop.f32.mrb[0].mxu0
  %v4806 = vadd.f32 0.0, %v4805
  %v4807 = vpop.f32.mrb[0].mxu0
  %4808 = vmatprep.mubr.bf16.mxu0 0
  %4809 = vmatmul.mubr.bf16.gmra.mrb[0].mxu0 %v4714
  %v4810 = vpop.f32.mrb[0].mxu0
  %v4811 = vadd.f32 0.0, %v4810
  %v4812 = vpop.f32.mrb[0].mxu0
  %v4813 = vpop.f32.mrb[0].mxu0
  %v4814 = vadd.f32 0.0, %v4813
  %v4815 = vpop.f32.mrb[0].mxu0
  %4816 = vdwg.mxu0
  %v4817 = vsel %vm2408, %v4755, 0.0
  %v4818 = vsel %vm2408, %v4758, 0.0
  %v4819 = vadd.f32 %v4817, %v4818
  %v4820 = vsel %vm2408, %v4763, 0.0
  %v4821 = vadd.f32 %v4819, %v4820
  %v4822 = vsel %vm2408, %v4766, 0.0
  %v4823 = vadd.f32 %v4821, %v4822
  %v4824 = vsel %vm2408, %v4771, 0.0
  %v4825 = vadd.f32 %v4823, %v4824
  %v4826 = vsel %vm2408, %v4774, 0.0
  %v4827 = vadd.f32 %v4825, %v4826
  %v4828 = vsel %vm2408, %v4779, 0.0
  %v4829 = vadd.f32 %v4827, %v4828
  %v4830 = vsel %vm2408, %v4782, 0.0
  %v4831 = vadd.f32 %v4829, %v4830
  %v4832 = vsel %vm2408, %v4787, 0.0
  %v4833 = vadd.f32 %v4831, %v4832
  %v4834 = vsel %vm2408, %v4790, 0.0
  %v4835 = vadd.f32 %v4833, %v4834
  %v4836 = vsel %vm2408, %v4795, 0.0
  %v4837 = vadd.f32 %v4835, %v4836
  %v4838 = vsel %vm2408, %v4798, 0.0
  %v4839 = vadd.f32 %v4837, %v4838
  %v4840 = vsel %vm2408, %v4803, 0.0
  %v4841 = vadd.f32 %v4839, %v4840
  %v4842 = vsel %vm2408, %v4806, 0.0
  %v4843 = vadd.f32 %v4841, %v4842
  %v4844 = vsel %vm2408, %v4811, 0.0
  %v4845 = vadd.f32 %v4843, %v4844
  %v4846 = vsel %vm2408, %v4814, 0.0
  %v4847 = vadd.f32 %v4845, %v4846
  %v4848 = vrot.slane %v4847, 4
  %v4849 = vadd.f32 %v4847, %v4848
  %v4850 = vrot.slane %v4849, 2
  %v4851 = vadd.f32 %v4849, %v4850
  %v4852 = vrot.slane %v4851, 1
  %v4853 = vadd.f32 %v4851, %v4852
  %v4854 = vmul.f32 %v4853, 0.0078125
  %v4855 = vsub.f32 %v4755, %v4854
  %v4856 = vsub.f32 %v4758, %v4854
  %v4857 = vsub.f32 %v4763, %v4854
  %v4858 = vsub.f32 %v4766, %v4854
  %v4859 = vsub.f32 %v4771, %v4854
  %v4860 = vsub.f32 %v4774, %v4854
  %v4861 = vsub.f32 %v4779, %v4854
  %v4862 = vsub.f32 %v4782, %v4854
  %v4863 = vsub.f32 %v4787, %v4854
  %v4864 = vsub.f32 %v4790, %v4854
  %v4865 = vsub.f32 %v4795, %v4854
  %v4866 = vsub.f32 %v4798, %v4854
  %v4867 = vsub.f32 %v4803, %v4854
  %v4868 = vsub.f32 %v4806, %v4854
  %v4869 = vsub.f32 %v4811, %v4854
  %v4870 = vsub.f32 %v4814, %v4854
  %v4871 = vmul.f32 %v4855, %v4855
  %v4872 = vmul.f32 %v4856, %v4856
  %v4873 = vmul.f32 %v4857, %v4857
  %v4874 = vmul.f32 %v4858, %v4858
  %v4875 = vmul.f32 %v4859, %v4859
  %v4876 = vmul.f32 %v4860, %v4860
  %v4877 = vmul.f32 %v4861, %v4861
  %v4878 = vmul.f32 %v4862, %v4862
  %v4879 = vmul.f32 %v4863, %v4863
  %v4880 = vmul.f32 %v4864, %v4864
  %v4881 = vmul.f32 %v4865, %v4865
  %v4882 = vmul.f32 %v4866, %v4866
  %v4883 = vmul.f32 %v4867, %v4867
  %v4884 = vmul.f32 %v4868, %v4868
  %v4885 = vmul.f32 %v4869, %v4869
  %v4886 = vmul.f32 %v4870, %v4870
  %v4887 = vsel %vm2408, %v4871, 0.0
  %v4888 = vsel %vm2408, %v4872, 0.0
  %v4889 = vadd.f32 %v4887, %v4888
  %v4890 = vsel %vm2408, %v4873, 0.0
  %v4891 = vadd.f32 %v4889, %v4890
  %v4892 = vsel %vm2408, %v4874, 0.0
  %v4893 = vadd.f32 %v4891, %v4892
  %v4894 = vsel %vm2408, %v4875, 0.0
  %v4895 = vadd.f32 %v4893, %v4894
  %v4896 = vsel %vm2408, %v4876, 0.0
  %v4897 = vadd.f32 %v4895, %v4896
  %v4898 = vsel %vm2408, %v4877, 0.0
  %v4899 = vadd.f32 %v4897, %v4898
  %v4900 = vsel %vm2408, %v4878, 0.0
  %v4901 = vadd.f32 %v4899, %v4900
  %v4902 = vsel %vm2408, %v4879, 0.0
  %v4903 = vadd.f32 %v4901, %v4902
  %v4904 = vsel %vm2408, %v4880, 0.0
  %v4905 = vadd.f32 %v4903, %v4904
  %v4906 = vsel %vm2408, %v4881, 0.0
  %v4907 = vadd.f32 %v4905, %v4906
  %v4908 = vsel %vm2408, %v4882, 0.0
  %v4909 = vadd.f32 %v4907, %v4908
  %v4910 = vsel %vm2408, %v4883, 0.0
  %v4911 = vadd.f32 %v4909, %v4910
  %v4912 = vsel %vm2408, %v4884, 0.0
  %v4913 = vadd.f32 %v4911, %v4912
  %v4914 = vsel %vm2408, %v4885, 0.0
  %v4915 = vadd.f32 %v4913, %v4914
  %v4916 = vsel %vm2408, %v4886, 0.0
  %v4917 = vadd.f32 %v4915, %v4916
  %v4918 = vrot.slane %v4917, 4
  %v4919 = vadd.f32 %v4917, %v4918
  %v4920 = vrot.slane %v4919, 2
  %v4921 = vadd.f32 %v4919, %v4920
  %v4922 = vrot.slane %v4921, 1
  %v4923 = vadd.f32 %v4921, %v4922
  %v4924 = vmul.f32 %v4923, 0.0078125
  %v4925 = vmax.f32 %v4924, 0.0
  %v4926 = vadd.f32 %v4925, 1e-05
  %v4927 = vrsqrt.pop %v4926
  %v4928 = vmul.f32 %v4927, %v2900
  %v4929 = vlaneseq
  %v4930 = vshrl.u32 %v4929, 7
  %v4931 = vsub.s32 0, %v4930
  %v4932 = vrot.slane %v4928, %v4931
  %v4933 = vmul.f32 %v4855, %v4932
  %v4934 = vmul.f32 %v4856, %v4932
  %v4935 = vmul.f32 %v4857, %v4932
  %v4936 = vmul.f32 %v4858, %v4932
  %v4937 = vmul.f32 %v4859, %v4932
  %v4938 = vmul.f32 %v4860, %v4932
  %v4939 = vmul.f32 %v4861, %v4932
  %v4940 = vmul.f32 %v4862, %v4932
  %v4941 = vmul.f32 %v4863, %v4932
  %v4942 = vmul.f32 %v4864, %v4932
  %v4943 = vmul.f32 %v4865, %v4932
  %v4944 = vmul.f32 %v4866, %v4932
  %v4945 = vmul.f32 %v4867, %v4932
  %v4946 = vmul.f32 %v4868, %v4932
  %v4947 = vmul.f32 %v4869, %v4932
  %v4948 = vmul.f32 %v4870, %v4932
  %v4950 = vlaneseq
  %v4951 = vshrl.u32 %v4950, 7
  %v4952 = vsub.s32 0, %v4951
  %v4953 = vrot.slane %v2901, %v4952
  %v4955 = vadd.f32 %v4933, %v4953
  %v4956 = vadd.f32 %v4934, %v4953
  %v4957 = vadd.f32 %v4935, %v4953
  %v4958 = vadd.f32 %v4936, %v4953
  %v4959 = vadd.f32 %v4937, %v4953
  %v4960 = vadd.f32 %v4938, %v4953
  %v4961 = vadd.f32 %v4939, %v4953
  %v4962 = vadd.f32 %v4940, %v4953
  %v4963 = vadd.f32 %v4941, %v4953
  %v4964 = vadd.f32 %v4942, %v4953
  %v4965 = vadd.f32 %v4943, %v4953
  %v4966 = vadd.f32 %v4944, %v4953
  %v4967 = vadd.f32 %v4945, %v4953
  %v4968 = vadd.f32 %v4946, %v4953
  %v4969 = vadd.f32 %v4947, %v4953
  %v4970 = vadd.f32 %v4948, %v4953
  %v4971 = vmax.f32 %v4955, 0.0
  %v4972 = vmax.f32 %v4956, 0.0
  %v4973 = vmax.f32 %v4957, 0.0
  %v4974 = vmax.f32 %v4958, 0.0
  %v4975 = vmax.f32 %v4959, 0.0
  %v4976 = vmax.f32 %v4960, 0.0
  %v4977 = vmax.f32 %v4961, 0.0
  %v4978 = vmax.f32 %v4962, 0.0
  %v4979 = vmax.f32 %v4963, 0.0
  %v4980 = vmax.f32 %v4964, 0.0
  %v4981 = vmax.f32 %v4965, 0.0
  %v4982 = vmax.f32 %v4966, 0.0
  %v4983 = vmax.f32 %v4967, 0.0
  %v4984 = vmax.f32 %v4968, 0.0
  %v4985 = vmax.f32 %v4969, 0.0
  %v4986 = vmax.f32 %v4970, 0.0
  %v4987 = vpack.c.bf16 %v4971, %v4971
  %v4988 = vpack.c.bf16 %v4972, %v4972
  %v4989 = vpack.c.bf16 %v4973, %v4973
  %v4990 = vpack.c.bf16 %v4974, %v4974
  %v4991 = vpack.c.bf16 %v4975, %v4975
  %v4992 = vpack.c.bf16 %v4976, %v4976
  %v4993 = vpack.c.bf16 %v4977, %v4977
  %v4994 = vpack.c.bf16 %v4978, %v4978
  %v4995 = vpack.c.bf16 %v4979, %v4979
  %v4996 = vpack.c.bf16 %v4980, %v4980
  %v4997 = vpack.c.bf16 %v4981, %v4981
  %v4998 = vpack.c.bf16 %v4982, %v4982
  %v4999 = vpack.c.bf16 %v4983, %v4983
  %v5000 = vpack.c.bf16 %v4984, %v4984
  %v5001 = vpack.c.bf16 %v4985, %v4985
  %v5002 = vpack.c.bf16 %v4986, %v4986
  %v5004 = vshrl.u32 %v4987, 16
  %v5006 = vrot.slane %v5004, 7
  %v5007 = vshll.u32 %v4987, 16
  %v5009 = vor.u32 %v5006, %v5007
  %v5011 = vshrl.u32 %v4988, 16
  %v5013 = vrot.slane %v5011, 7
  %v5014 = vshll.u32 %v4988, 16
  %v5016 = vor.u32 %v5013, %v5014
  %v5018 = vshrl.u32 %v4989, 16
  %v5020 = vrot.slane %v5018, 7
  %v5021 = vshll.u32 %v4989, 16
  %v5023 = vor.u32 %v5020, %v5021
  %v5025 = vshrl.u32 %v4990, 16
  %v5027 = vrot.slane %v5025, 7
  %v5028 = vshll.u32 %v4990, 16
  %v5030 = vor.u32 %v5027, %v5028
  %v5032 = vshrl.u32 %v4991, 16
  %v5034 = vrot.slane %v5032, 7
  %v5035 = vshll.u32 %v4991, 16
  %v5037 = vor.u32 %v5034, %v5035
  %v5039 = vshrl.u32 %v4992, 16
  %v5041 = vrot.slane %v5039, 7
  %v5042 = vshll.u32 %v4992, 16
  %v5044 = vor.u32 %v5041, %v5042
  %v5046 = vshrl.u32 %v4993, 16
  %v5048 = vrot.slane %v5046, 7
  %v5049 = vshll.u32 %v4993, 16
  %v5051 = vor.u32 %v5048, %v5049
  %v5053 = vshrl.u32 %v4994, 16
  %v5055 = vrot.slane %v5053, 7
  %v5056 = vshll.u32 %v4994, 16
  %v5058 = vor.u32 %v5055, %v5056
  %v5060 = vshrl.u32 %v4995, 16
  %v5062 = vrot.slane %v5060, 7
  %v5063 = vshll.u32 %v4995, 16
  %v5065 = vor.u32 %v5062, %v5063
  %v5067 = vshrl.u32 %v4996, 16
  %v5069 = vrot.slane %v5067, 7
  %v5070 = vshll.u32 %v4996, 16
  %v5072 = vor.u32 %v5069, %v5070
  %v5074 = vshrl.u32 %v4997, 16
  %v5076 = vrot.slane %v5074, 7
  %v5077 = vshll.u32 %v4997, 16
  %v5079 = vor.u32 %v5076, %v5077
  %v5081 = vshrl.u32 %v4998, 16
  %v5083 = vrot.slane %v5081, 7
  %v5084 = vshll.u32 %v4998, 16
  %v5086 = vor.u32 %v5083, %v5084
  %v5088 = vshrl.u32 %v4999, 16
  %v5090 = vrot.slane %v5088, 7
  %v5091 = vshll.u32 %v4999, 16
  %v5093 = vor.u32 %v5090, %v5091
  %v5095 = vshrl.u32 %v5000, 16
  %v5097 = vrot.slane %v5095, 7
  %v5098 = vshll.u32 %v5000, 16
  %v5100 = vor.u32 %v5097, %v5098
  %v5102 = vshrl.u32 %v5001, 16
  %v5104 = vrot.slane %v5102, 7
  %v5105 = vshll.u32 %v5001, 16
  %v5107 = vor.u32 %v5104, %v5105
  %v5109 = vshrl.u32 %v5002, 16
  %v5111 = vrot.slane %v5109, 7
  %v5112 = vshll.u32 %v5002, 16
  %v5114 = vor.u32 %v5111, %v5112
  %v5131 = vsel %vm319, 0, %v5009
  %v5132 = vsel %vm319, 0, %v5016
  %v5133 = vsel %vm319, 0, %v5023
  %v5134 = vsel %vm319, 0, %v5030
  %v5135 = vsel %vm319, 0, %v5037
  %v5136 = vsel %vm319, 0, %v5044
  %v5137 = vsel %vm319, 0, %v5051
  %v5138 = vsel %vm319, 0, %v5058
  %v5139 = vsel %vm319, 0, %v5065
  %v5140 = vsel %vm319, 0, %v5072
  %v5141 = vsel %vm319, 0, %v5079
  %v5142 = vsel %vm319, 0, %v5086
  %v5143 = vsel %vm319, 0, %v5093
  %v5144 = vsel %vm319, 0, %v5100
  %v5145 = vsel %vm319, 0, %v5107
  %v5146 = vsel %vm319, 0, %v5114
  %v5147 = vsel %vm338, %v5131, 0
  %v5148 = vsel %vm338, %v5132, 0
  %v5149 = vsel %vm338, %v5133, 0
  %v5150 = vsel %vm338, %v5134, 0
  %v5151 = vsel %vm338, %v5135, 0
  %v5152 = vsel %vm338, %v5136, 0
  %v5153 = vsel %vm338, %v5137, 0
  %v5154 = vsel %vm338, %v5138, 0
  %v5155 = vsel %vm338, %v5139, 0
  %v5156 = vsel %vm338, %v5140, 0
  %v5157 = vsel %vm338, %v5141, 0
  %v5158 = vsel %vm338, %v5142, 0
  %v5159 = vsel %vm338, %v5143, 0
  %v5160 = vsel %vm338, %v5144, 0
  %v5161 = vsel %vm338, %v5145, 0
  %v5162 = vsel %vm338, %v5146, 0
  %v5179 = vunpack.c.l.b16 %v5147
  %v5180 = vunpack.c.h.b16 %v5147
  %v5181 = vunpack.c.l.b16 %v5148
  %v5182 = vunpack.c.h.b16 %v5148
  %v5183 = vunpack.c.l.b16 %v5149
  %v5184 = vunpack.c.h.b16 %v5149
  %v5185 = vunpack.c.l.b16 %v5150
  %v5186 = vunpack.c.h.b16 %v5150
  %v5187 = vunpack.c.l.b16 %v5151
  %v5188 = vunpack.c.h.b16 %v5151
  %v5189 = vunpack.c.l.b16 %v5152
  %v5190 = vunpack.c.h.b16 %v5152
  %v5191 = vunpack.c.l.b16 %v5153
  %v5192 = vunpack.c.h.b16 %v5153
  %v5193 = vunpack.c.l.b16 %v5154
  %v5194 = vunpack.c.h.b16 %v5154
  %v5195 = vunpack.c.l.b16 %v5155
  %v5196 = vunpack.c.h.b16 %v5155
  %v5197 = vunpack.c.l.b16 %v5156
  %v5198 = vunpack.c.h.b16 %v5156
  %v5199 = vunpack.c.l.b16 %v5157
  %v5200 = vunpack.c.h.b16 %v5157
  %v5201 = vunpack.c.l.b16 %v5158
  %v5202 = vunpack.c.h.b16 %v5158
  %v5203 = vunpack.c.l.b16 %v5159
  %v5204 = vunpack.c.h.b16 %v5159
  %v5205 = vunpack.c.l.b16 %v5160
  %v5206 = vunpack.c.h.b16 %v5160
  %v5207 = vunpack.c.l.b16 %v5161
  %v5208 = vunpack.c.h.b16 %v5161
  %v5209 = vunpack.c.l.b16 %v5162
  %v5210 = vunpack.c.h.b16 %v5162
  %v5211 = vpack.c.b16 %v5179, %v5179
  %v5212 = vpack.c.b16 %v5180, %v5180
  %v5213 = vpack.c.b16 %v5181, %v5181
  %v5214 = vpack.c.b16 %v5182, %v5182
  %v5215 = vpack.c.b16 %v5183, %v5183
  %v5216 = vpack.c.b16 %v5184, %v5184
  %v5217 = vpack.c.b16 %v5185, %v5185
  %v5218 = vpack.c.b16 %v5186, %v5186
  %v5219 = vpack.c.b16 %v5187, %v5187
  %v5220 = vpack.c.b16 %v5188, %v5188
  %v5221 = vpack.c.b16 %v5189, %v5189
  %v5222 = vpack.c.b16 %v5190, %v5190
  %v5223 = vpack.c.b16 %v5191, %v5191
  %v5224 = vpack.c.b16 %v5192, %v5192
  %v5225 = vpack.c.b16 %v5193, %v5193
  %v5226 = vpack.c.b16 %v5194, %v5194
  %v5227 = vpack.c.b16 %v5195, %v5195
  %v5228 = vpack.c.b16 %v5196, %v5196
  %v5229 = vpack.c.b16 %v5197, %v5197
  %v5230 = vpack.c.b16 %v5198, %v5198
  %v5231 = vpack.c.b16 %v5199, %v5199
  %v5232 = vpack.c.b16 %v5200, %v5200
  %v5233 = vpack.c.b16 %v5201, %v5201
  %v5234 = vpack.c.b16 %v5202, %v5202
  %v5235 = vpack.c.b16 %v5203, %v5203
  %v5236 = vpack.c.b16 %v5204, %v5204
  %v5237 = vpack.c.b16 %v5205, %v5205
  %v5238 = vpack.c.b16 %v5206, %v5206
  %v5239 = vpack.c.b16 %v5207, %v5207
  %v5240 = vpack.c.b16 %v5208, %v5208
  %v5241 = vpack.c.b16 %v5209, %v5209
  %v5242 = vpack.c.b16 %v5210, %v5210
  %5275 = vst.msk [vmem:[%s2867] sm:$0xf] %vm162, %v5211
  %5276 = vst.msk [vmem:[%s2867 + $0x4] sm:$0x1] %vm164, %v5212
  %5277 = vst.msk [vmem:[%s2867 + $0x8] sm:$0xf] %vm162, %v5213
  %5278 = vst.msk [vmem:[%s2867 + $0xc] sm:$0x1] %vm164, %v5214
  %5279 = vst.msk [vmem:[%s2867 + $0x10] sm:$0xf] %vm162, %v5215
  %5280 = vst.msk [vmem:[%s2867 + $0x14] sm:$0x1] %vm164, %v5216
  %5281 = vst.msk [vmem:[%s2867 + $0x18] sm:$0xf] %vm162, %v5217
  %5282 = vst.msk [vmem:[%s2867 + $0x1c] sm:$0x1] %vm164, %v5218
  %5283 = vst.msk [vmem:[%s2867 + $0x20] sm:$0xf] %vm162, %v5219
  %5284 = vst.msk [vmem:[%s2867 + $0x24] sm:$0x1] %vm164, %v5220
  %5285 = vst.msk [vmem:[%s2867 + $0x28] sm:$0xf] %vm162, %v5221
  %5286 = vst.msk [vmem:[%s2867 + $0x2c] sm:$0x1] %vm164, %v5222
  %5287 = vst.msk [vmem:[%s2867 + $0x30] sm:$0xf] %vm162, %v5223
  %5288 = vst.msk [vmem:[%s2867 + $0x34] sm:$0x1] %vm164, %v5224
  %5289 = vst.msk [vmem:[%s2867 + $0x38] sm:$0xf] %vm162, %v5225
  %5290 = vst.msk [vmem:[%s2867 + $0x3c] sm:$0x1] %vm164, %v5226
  %5291 = vst.msk [vmem:[%s2867 + $0x50] sm:$0xf] %vm162, %v5227
  %5292 = vst.msk [vmem:[%s2867 + $0x54] sm:$0x1] %vm164, %v5228
  %5293 = vst.msk [vmem:[%s2867 + $0x58] sm:$0xf] %vm162, %v5229
  %5294 = vst.msk [vmem:[%s2867 + $0x5c] sm:$0x1] %vm164, %v5230
  %5295 = vst.msk [vmem:[%s2867 + $0x60] sm:$0xf] %vm162, %v5231
  %5296 = vst.msk [vmem:[%s2867 + $0x64] sm:$0x1] %vm164, %v5232
  %5297 = vst.msk [vmem:[%s2867 + $0x68] sm:$0xf] %vm162, %v5233
  %5298 = vst.msk [vmem:[%s2867 + $0x6c] sm:$0x1] %vm164, %v5234
  %5299 = vst.msk [vmem:[%s2867 + $0x70] sm:$0xf] %vm162, %v5235
  %5300 = vst.msk [vmem:[%s2867 + $0x74] sm:$0x1] %vm164, %v5236
  %5301 = vst.msk [vmem:[%s2867 + $0x78] sm:$0xf] %vm162, %v5237
  %5302 = vst.msk [vmem:[%s2867 + $0x7c] sm:$0x1] %vm164, %v5238
  %5303 = vst.msk [vmem:[%s2867 + $0x80] sm:$0xf] %vm162, %v5239
  %5304 = vst.msk [vmem:[%s2867 + $0x84] sm:$0x1] %vm164, %v5240
  %5305 = vst.msk [vmem:[%s2867 + $0x88] sm:$0xf] %vm162, %v5241
  %5306 = vst.msk [vmem:[%s2867 + $0x8c] sm:$0x1] %vm164, %v5242
  %v5307 = vld [vmem:[%s8] sm:$0x1]
  %v5308 = vld [vmem:[%s9] sm:$0x1]
  %v5309 = vld [vmem:[#allocation3] sm:$0xf]
  %v5310 = vld [vmem:[#allocation3 + $0x8] sm:$0xf]
  %v5311 = vld [vmem:[#allocation3 + $0x10] sm:$0xf]
  %v5312 = vld [vmem:[#allocation3 + $0x18] sm:$0xf]
  %v5313 = vld [vmem:[#allocation3 + $0x20] sm:$0xf]
  %v5314 = vld [vmem:[#allocation3 + $0x28] sm:$0xf]
  %v5315 = vld [vmem:[#allocation3 + $0x30] sm:$0xf]
  %v5316 = vld [vmem:[#allocation3 + $0x38] sm:$0xf]
  %v5317 = vld [vmem:[#allocation3 + $0x50] sm:$0xf]
  %v5318 = vld [vmem:[#allocation3 + $0x58] sm:$0xf]
  %v5319 = vld [vmem:[#allocation3 + $0x60] sm:$0xf]
  %v5320 = vld [vmem:[#allocation3 + $0x68] sm:$0xf]
  %v5321 = vld [vmem:[#allocation3 + $0x70] sm:$0xf]
  %v5322 = vld [vmem:[#allocation3 + $0x78] sm:$0xf]
  %v5323 = vld [vmem:[#allocation3 + $0x80] sm:$0xf]
  %v5324 = vld [vmem:[#allocation3 + $0x88] sm:$0xf]
  %v5341 = vunpack.c.l.b16 %v5309
  %v5342 = vunpack.c.l.b16 %v5310
  %v5343 = vunpack.c.l.b16 %v5311
  %v5344 = vunpack.c.l.b16 %v5312
  %v5345 = vunpack.c.l.b16 %v5313
  %v5346 = vunpack.c.l.b16 %v5314
  %v5347 = vunpack.c.l.b16 %v5315
  %v5348 = vunpack.c.l.b16 %v5316
  %v5349 = vunpack.c.l.b16 %v5317
  %v5350 = vunpack.c.l.b16 %v5318
  %v5351 = vunpack.c.l.b16 %v5319
  %v5352 = vunpack.c.l.b16 %v5320
  %v5353 = vunpack.c.l.b16 %v5321
  %v5354 = vunpack.c.l.b16 %v5322
  %v5355 = vunpack.c.l.b16 %v5323
  %v5356 = vunpack.c.l.b16 %v5324
  %v5357 = vpack.c.b16 %v5342, %v5341
  %v5358 = vpack.c.b16 %v5344, %v5343
  %v5359 = vpack.c.b16 %v5346, %v5345
  %v5360 = vpack.c.b16 %v5348, %v5347
  %v5361 = vpack.c.b16 %v5350, %v5349
  %v5362 = vpack.c.b16 %v5352, %v5351
  %v5363 = vpack.c.b16 %v5354, %v5353
  %v5364 = vpack.c.b16 %v5356, %v5355
  %5373 = vst.msk [vmem:[#allocation5] sm:$0xff] %vm2408, %v5357
  %5374 = vst.msk [vmem:[#allocation5 + $0x8] sm:$0xff] %vm2408, %v5358
  %5375 = vst.msk [vmem:[#allocation5 + $0x10] sm:$0xff] %vm2408, %v5359
  %5376 = vst.msk [vmem:[#allocation5 + $0x18] sm:$0xff] %vm2408, %v5360
  %5377 = vst.msk [vmem:[#allocation5 + $0x20] sm:$0xff] %vm2408, %v5361
  %5378 = vst.msk [vmem:[#allocation5 + $0x28] sm:$0xff] %vm2408, %v5362
  %5379 = vst.msk [vmem:[#allocation5 + $0x30] sm:$0xff] %vm2408, %v5363
  %5380 = vst.msk [vmem:[#allocation5 + $0x38] sm:$0xff] %vm2408, %v5364
  %v5381 = vld [vmem:[#allocation3] sm:$0xf]
  %v5382 = vld [vmem:[#allocation3 + $0x4] sm:$0x1]
  %v5383 = vld [vmem:[#allocation3 + $0x8] sm:$0xf]
  %v5384 = vld [vmem:[#allocation3 + $0xc] sm:$0x1]
  %v5385 = vld [vmem:[#allocation3 + $0x10] sm:$0xf]
  %v5386 = vld [vmem:[#allocation3 + $0x14] sm:$0x1]
  %v5387 = vld [vmem:[#allocation3 + $0x18] sm:$0xf]
  %v5388 = vld [vmem:[#allocation3 + $0x1c] sm:$0x1]
  %v5389 = vld [vmem:[#allocation3 + $0x20] sm:$0xf]
  %v5390 = vld [vmem:[#allocation3 + $0x24] sm:$0x1]
  %v5391 = vld [vmem:[#allocation3 + $0x28] sm:$0xf]
  %v5392 = vld [vmem:[#allocation3 + $0x2c] sm:$0x1]
  %v5393 = vld [vmem:[#allocation3 + $0x30] sm:$0xf]
  %v5394 = vld [vmem:[#allocation3 + $0x34] sm:$0x1]
  %v5395 = vld [vmem:[#allocation3 + $0x38] sm:$0xf]
  %v5396 = vld [vmem:[#allocation3 + $0x3c] sm:$0x1]
  %v5397 = vld [vmem:[#allocation3 + $0x50] sm:$0xf]
  %v5398 = vld [vmem:[#allocation3 + $0x54] sm:$0x1]
  %v5399 = vld [vmem:[#allocation3 + $0x58] sm:$0xf]
  %v5400 = vld [vmem:[#allocation3 + $0x5c] sm:$0x1]
  %v5401 = vld [vmem:[#allocation3 + $0x60] sm:$0xf]
  %v5402 = vld [vmem:[#allocation3 + $0x64] sm:$0x1]
  %v5403 = vld [vmem:[#allocation3 + $0x68] sm:$0xf]
  %v5404 = vld [vmem:[#allocation3 + $0x6c] sm:$0x1]
  %v5405 = vld [vmem:[#allocation3 + $0x70] sm:$0xf]
  %v5406 = vld [vmem:[#allocation3 + $0x74] sm:$0x1]
  %v5407 = vld [vmem:[#allocation3 + $0x78] sm:$0xf]
  %v5408 = vld [vmem:[#allocation3 + $0x7c] sm:$0x1]
  %v5409 = vld [vmem:[#allocation3 + $0x80] sm:$0xf]
  %v5410 = vld [vmem:[#allocation3 + $0x84] sm:$0x1]
  %v5411 = vld [vmem:[#allocation3 + $0x88] sm:$0xf]
  %v5412 = vld [vmem:[#allocation3 + $0x8c] sm:$0x1]
  %v5414 = vshrl.u32 %v5381, 16
  %v5416 = vrot.slane %v5414, 4
  %v5417 = vshll.u32 %v5381, 16
  %v5419 = vrot.slane %v5417, 5
  %v5420 = vor.u32 %v5416, %v5419
  %v5421 = vrot.slane %v5420, 4
  %v5423 = vshll.u32 %v5382, 16
  %v5425 = vrot.slane %v5423, 5
  %v5426 = vsel %vm609, %v5421, %v5425
  %v5428 = vshrl.u32 %v5383, 16
  %v5430 = vrot.slane %v5428, 4
  %v5431 = vshll.u32 %v5383, 16
  %v5433 = vrot.slane %v5431, 5
  %v5434 = vor.u32 %v5430, %v5433
  %v5435 = vrot.slane %v5434, 4
  %v5437 = vshll.u32 %v5384, 16
  %v5439 = vrot.slane %v5437, 5
  %v5440 = vsel %vm609, %v5435, %v5439
  %v5442 = vshrl.u32 %v5385, 16
  %v5444 = vrot.slane %v5442, 4
  %v5445 = vshll.u32 %v5385, 16
  %v5447 = vrot.slane %v5445, 5
  %v5448 = vor.u32 %v5444, %v5447
  %v5449 = vrot.slane %v5448, 4
  %v5451 = vshll.u32 %v5386, 16
  %v5453 = vrot.slane %v5451, 5
  %v5454 = vsel %vm609, %v5449, %v5453
  %v5456 = vshrl.u32 %v5387, 16
  %v5458 = vrot.slane %v5456, 4
  %v5459 = vshll.u32 %v5387, 16
  %v5461 = vrot.slane %v5459, 5
  %v5462 = vor.u32 %v5458, %v5461
  %v5463 = vrot.slane %v5462, 4
  %v5465 = vshll.u32 %v5388, 16
  %v5467 = vrot.slane %v5465, 5
  %v5468 = vsel %vm609, %v5463, %v5467
  %v5470 = vshrl.u32 %v5389, 16
  %v5472 = vrot.slane %v5470, 4
  %v5473 = vshll.u32 %v5389, 16
  %v5475 = vrot.slane %v5473, 5
  %v5476 = vor.u32 %v5472, %v5475
  %v5477 = vrot.slane %v5476, 4
  %v5479 = vshll.u32 %v5390, 16
  %v5481 = vrot.slane %v5479, 5
  %v5482 = vsel %vm609, %v5477, %v5481
  %v5484 = vshrl.u32 %v5391, 16
  %v5486 = vrot.slane %v5484, 4
  %v5487 = vshll.u32 %v5391, 16
  %v5489 = vrot.slane %v5487, 5
  %v5490 = vor.u32 %v5486, %v5489
  %v5491 = vrot.slane %v5490, 4
  %v5493 = vshll.u32 %v5392, 16
  %v5495 = vrot.slane %v5493, 5
  %v5496 = vsel %vm609, %v5491, %v5495
  %v5498 = vshrl.u32 %v5393, 16
  %v5500 = vrot.slane %v5498, 4
  %v5501 = vshll.u32 %v5393, 16
  %v5503 = vrot.slane %v5501, 5
  %v5504 = vor.u32 %v5500, %v5503
  %v5505 = vrot.slane %v5504, 4
  %v5507 = vshll.u32 %v5394, 16
  %v5509 = vrot.slane %v5507, 5
  %v5510 = vsel %vm609, %v5505, %v5509
  %v5512 = vshrl.u32 %v5395, 16
  %v5514 = vrot.slane %v5512, 4
  %v5515 = vshll.u32 %v5395, 16
  %v5517 = vrot.slane %v5515, 5
  %v5518 = vor.u32 %v5514, %v5517
  %v5519 = vrot.slane %v5518, 4
  %v5521 = vshll.u32 %v5396, 16
  %v5523 = vrot.slane %v5521, 5
  %v5524 = vsel %vm609, %v5519, %v5523
  %v5526 = vshrl.u32 %v5397, 16
  %v5528 = vrot.slane %v5526, 4
  %v5529 = vshll.u32 %v5397, 16
  %v5531 = vrot.slane %v5529, 5
  %v5532 = vor.u32 %v5528, %v5531
  %v5533 = vrot.slane %v5532, 4
  %v5535 = vshll.u32 %v5398, 16
  %v5537 = vrot.slane %v5535, 5
  %v5538 = vsel %vm609, %v5533, %v5537
  %v5540 = vshrl.u32 %v5399, 16
  %v5542 = vrot.slane %v5540, 4
  %v5543 = vshll.u32 %v5399, 16
  %v5545 = vrot.slane %v5543, 5
  %v5546 = vor.u32 %v5542, %v5545
  %v5547 = vrot.slane %v5546, 4
  %v5549 = vshll.u32 %v5400, 16
  %v5551 = vrot.slane %v5549, 5
  %v5552 = vsel %vm609, %v5547, %v5551
  %v5554 = vshrl.u32 %v5401, 16
  %v5556 = vrot.slane %v5554, 4
  %v5557 = vshll.u32 %v5401, 16
  %v5559 = vrot.slane %v5557, 5
  %v5560 = vor.u32 %v5556, %v5559
  %v5561 = vrot.slane %v5560, 4
  %v5563 = vshll.u32 %v5402, 16
  %v5565 = vrot.slane %v5563, 5
  %v5566 = vsel %vm609, %v5561, %v5565
  %v5568 = vshrl.u32 %v5403, 16
  %v5570 = vrot.slane %v5568, 4
  %v5571 = vshll.u32 %v5403, 16
  %v5573 = vrot.slane %v5571, 5
  %v5574 = vor.u32 %v5570, %v5573
  %v5575 = vrot.slane %v5574, 4
  %v5577 = vshll.u32 %v5404, 16
  %v5579 = vrot.slane %v5577, 5
  %v5580 = vsel %vm609, %v5575, %v5579
  %v5582 = vshrl.u32 %v5405, 16
  %v5584 = vrot.slane %v5582, 4
  %v5585 = vshll.u32 %v5405, 16
  %v5587 = vrot.slane %v5585, 5
  %v5588 = vor.u32 %v5584, %v5587
  %v5589 = vrot.slane %v5588, 4
  %v5591 = vshll.u32 %v5406, 16
  %v5593 = vrot.slane %v5591, 5
  %v5594 = vsel %vm609, %v5589, %v5593
  %v5596 = vshrl.u32 %v5407, 16
  %v5598 = vrot.slane %v5596, 4
  %v5599 = vshll.u32 %v5407, 16
  %v5601 = vrot.slane %v5599, 5
  %v5602 = vor.u32 %v5598, %v5601
  %v5603 = vrot.slane %v5602, 4
  %v5605 = vshll.u32 %v5408, 16
  %v5607 = vrot.slane %v5605, 5
  %v5608 = vsel %vm609, %v5603, %v5607
  %v5610 = vshrl.u32 %v5409, 16
  %v5612 = vrot.slane %v5610, 4
  %v5613 = vshll.u32 %v5409, 16
  %v5615 = vrot.slane %v5613, 5
  %v5616 = vor.u32 %v5612, %v5615
  %v5617 = vrot.slane %v5616, 4
  %v5619 = vshll.u32 %v5410, 16
  %v5621 = vrot.slane %v5619, 5
  %v5622 = vsel %vm609, %v5617, %v5621
  %v5624 = vshrl.u32 %v5411, 16
  %v5626 = vrot.slane %v5624, 4
  %v5627 = vshll.u32 %v5411, 16
  %v5629 = vrot.slane %v5627, 5
  %v5630 = vor.u32 %v5626, %v5629
  %v5631 = vrot.slane %v5630, 4
  %v5633 = vshll.u32 %v5412, 16
  %v5635 = vrot.slane %v5633, 5
  %v5636 = vsel %vm609, %v5631, %v5635
  %v5637 = vunpack.c.l.b16 %v5426
  %v5638 = vunpack.c.l.b16 %v5440
  %v5639 = vunpack.c.l.b16 %v5454
  %v5640 = vunpack.c.l.b16 %v5468
  %v5641 = vunpack.c.l.b16 %v5482
  %v5642 = vunpack.c.l.b16 %v5496
  %v5643 = vunpack.c.l.b16 %v5510
  %v5644 = vunpack.c.l.b16 %v5524
  %v5645 = vunpack.c.l.b16 %v5538
  %v5646 = vunpack.c.l.b16 %v5552
  %v5647 = vunpack.c.l.b16 %v5566
  %v5648 = vunpack.c.l.b16 %v5580
  %v5649 = vunpack.c.l.b16 %v5594
  %v5650 = vunpack.c.l.b16 %v5608
  %v5651 = vunpack.c.l.b16 %v5622
  %v5652 = vunpack.c.l.b16 %v5636
  %v5653 = vpack.c.b16 %v5638, %v5637
  %v5654 = vpack.c.b16 %v5640, %v5639
  %v5655 = vpack.c.b16 %v5642, %v5641
  %v5656 = vpack.c.b16 %v5644, %v5643
  %v5657 = vpack.c.b16 %v5646, %v5645
  %v5658 = vpack.c.b16 %v5648, %v5647
  %v5659 = vpack.c.b16 %v5650, %v5649
  %v5660 = vpack.c.b16 %v5652, %v5651
  %5661 = vrot.lane.b32.xlu0 %v5653, 8
  %v5662 = vpop.permute.xlu0 %5661
  %5663 = vrot.lane.b32.xlu0 %v5654, 8
  %v5664 = vpop.permute.xlu0 %5663
  %5665 = vrot.lane.b32.xlu0 %v5655, 8
  %v5666 = vpop.permute.xlu0 %5665
  %5667 = vrot.lane.b32.xlu0 %v5656, 8
  %v5668 = vpop.permute.xlu0 %5667
  %5669 = vrot.lane.b32.xlu0 %v5657, 8
  %v5670 = vpop.permute.xlu0 %5669
  %5671 = vrot.lane.b32.xlu0 %v5658, 8
  %v5672 = vpop.permute.xlu0 %5671
  %5673 = vrot.lane.b32.xlu0 %v5659, 8
  %v5674 = vpop.permute.xlu0 %5673
  %5675 = vrot.lane.b32.xlu0 %v5660, 8
  %v5676 = vpop.permute.xlu0 %5675
  %5685 = vst.msk [vmem:[#allocation5] sm:$0xff] %vm3278, %v5662
  %5686 = vst.msk [vmem:[#allocation5 + $0x8] sm:$0xff] %vm3278, %v5664
  %5687 = vst.msk [vmem:[#allocation5 + $0x10] sm:$0xff] %vm3278, %v5666
  %5688 = vst.msk [vmem:[#allocation5 + $0x18] sm:$0xff] %vm3278, %v5668
  %5689 = vst.msk [vmem:[#allocation5 + $0x20] sm:$0xff] %vm3278, %v5670
  %5690 = vst.msk [vmem:[#allocation5 + $0x28] sm:$0xff] %vm3278, %v5672
  %5691 = vst.msk [vmem:[#allocation5 + $0x30] sm:$0xff] %vm3278, %v5674
  %5692 = vst.msk [vmem:[#allocation5 + $0x38] sm:$0xff] %vm3278, %v5676
  %v5693 = vld [vmem:[#allocation3] sm:$0xe]
  %v5694 = vld [vmem:[#allocation3 + $0x4] sm:$0x1]
  %v5695 = vld [vmem:[#allocation3 + $0x8] sm:$0xe]
  %v5696 = vld [vmem:[#allocation3 + $0xc] sm:$0x1]
  %v5697 = vld [vmem:[#allocation3 + $0x10] sm:$0xe]
  %v5698 = vld [vmem:[#allocation3 + $0x14] sm:$0x1]
  %v5699 = vld [vmem:[#allocation3 + $0x18] sm:$0xe]
  %v5700 = vld [vmem:[#allocation3 + $0x1c] sm:$0x1]
  %v5701 = vld [vmem:[#allocation3 + $0x20] sm:$0xe]
  %v5702 = vld [vmem:[#allocation3 + $0x24] sm:$0x1]
  %v5703 = vld [vmem:[#allocation3 + $0x28] sm:$0xe]
  %v5704 = vld [vmem:[#allocation3 + $0x2c] sm:$0x1]
  %v5705 = vld [vmem:[#allocation3 + $0x30] sm:$0xe]
  %v5706 = vld [vmem:[#allocation3 + $0x34] sm:$0x1]
  %v5707 = vld [vmem:[#allocation3 + $0x38] sm:$0xe]
  %v5708 = vld [vmem:[#allocation3 + $0x3c] sm:$0x1]
  %v5709 = vld [vmem:[#allocation3 + $0x50] sm:$0xe]
  %v5710 = vld [vmem:[#allocation3 + $0x54] sm:$0x1]
  %v5711 = vld [vmem:[#allocation3 + $0x58] sm:$0xe]
  %v5712 = vld [vmem:[#allocation3 + $0x5c] sm:$0x1]
  %v5713 = vld [vmem:[#allocation3 + $0x60] sm:$0xe]
  %v5714 = vld [vmem:[#allocation3 + $0x64] sm:$0x1]
  %v5715 = vld [vmem:[#allocation3 + $0x68] sm:$0xe]
  %v5716 = vld [vmem:[#allocation3 + $0x6c] sm:$0x1]
  %v5717 = vld [vmem:[#allocation3 + $0x70] sm:$0xe]
  %v5718 = vld [vmem:[#allocation3 + $0x74] sm:$0x1]
  %v5719 = vld [vmem:[#allocation3 + $0x78] sm:$0xe]
  %v5720 = vld [vmem:[#allocation3 + $0x7c] sm:$0x1]
  %v5721 = vld [vmem:[#allocation3 + $0x80] sm:$0xe]
  %v5722 = vld [vmem:[#allocation3 + $0x84] sm:$0x1]
  %v5723 = vld [vmem:[#allocation3 + $0x88] sm:$0xe]
  %v5724 = vld [vmem:[#allocation3 + $0x8c] sm:$0x1]
  %v5757 = vrot.slane %v5693, 5
  %v5758 = vrot.slane %v5757, 4
  %v5759 = vrot.slane %v5694, 5
  %v5760 = vsel %vm957, %v5758, %v5759
  %v5761 = vrot.slane %v5695, 5
  %v5762 = vrot.slane %v5761, 4
  %v5763 = vrot.slane %v5696, 5
  %v5764 = vsel %vm957, %v5762, %v5763
  %v5765 = vrot.slane %v5697, 5
  %v5766 = vrot.slane %v5765, 4
  %v5767 = vrot.slane %v5698, 5
  %v5768 = vsel %vm957, %v5766, %v5767
  %v5769 = vrot.slane %v5699, 5
  %v5770 = vrot.slane %v5769, 4
  %v5771 = vrot.slane %v5700, 5
  %v5772 = vsel %vm957, %v5770, %v5771
  %v5773 = vrot.slane %v5701, 5
  %v5774 = vrot.slane %v5773, 4
  %v5775 = vrot.slane %v5702, 5
  %v5776 = vsel %vm957, %v5774, %v5775
  %v5777 = vrot.slane %v5703, 5
  %v5778 = vrot.slane %v5777, 4
  %v5779 = vrot.slane %v5704, 5
  %v5780 = vsel %vm957, %v5778, %v5779
  %v5781 = vrot.slane %v5705, 5
  %v5782 = vrot.slane %v5781, 4
  %v5783 = vrot.slane %v5706, 5
  %v5784 = vsel %vm957, %v5782, %v5783
  %v5785 = vrot.slane %v5707, 5
  %v5786 = vrot.slane %v5785, 4
  %v5787 = vrot.slane %v5708, 5
  %v5788 = vsel %vm957, %v5786, %v5787
  %v5789 = vrot.slane %v5709, 5
  %v5790 = vrot.slane %v5789, 4
  %v5791 = vrot.slane %v5710, 5
  %v5792 = vsel %vm957, %v5790, %v5791
  %v5793 = vrot.slane %v5711, 5
  %v5794 = vrot.slane %v5793, 4
  %v5795 = vrot.slane %v5712, 5
  %v5796 = vsel %vm957, %v5794, %v5795
  %v5797 = vrot.slane %v5713, 5
  %v5798 = vrot.slane %v5797, 4
  %v5799 = vrot.slane %v5714, 5
  %v5800 = vsel %vm957, %v5798, %v5799
  %v5801 = vrot.slane %v5715, 5
  %v5802 = vrot.slane %v5801, 4
  %v5803 = vrot.slane %v5716, 5
  %v5804 = vsel %vm957, %v5802, %v5803
  %v5805 = vrot.slane %v5717, 5
  %v5806 = vrot.slane %v5805, 4
  %v5807 = vrot.slane %v5718, 5
  %v5808 = vsel %vm957, %v5806, %v5807
  %v5809 = vrot.slane %v5719, 5
  %v5810 = vrot.slane %v5809, 4
  %v5811 = vrot.slane %v5720, 5
  %v5812 = vsel %vm957, %v5810, %v5811
  %v5813 = vrot.slane %v5721, 5
  %v5814 = vrot.slane %v5813, 4
  %v5815 = vrot.slane %v5722, 5
  %v5816 = vsel %vm957, %v5814, %v5815
  %v5817 = vrot.slane %v5723, 5
  %v5818 = vrot.slane %v5817, 4
  %v5819 = vrot.slane %v5724, 5
  %v5820 = vsel %vm957, %v5818, %v5819
  %v5821 = vunpack.c.l.b16 %v5760
  %v5822 = vunpack.c.l.b16 %v5764
  %v5823 = vunpack.c.l.b16 %v5768
  %v5824 = vunpack.c.l.b16 %v5772
  %v5825 = vunpack.c.l.b16 %v5776
  %v5826 = vunpack.c.l.b16 %v5780
  %v5827 = vunpack.c.l.b16 %v5784
  %v5828 = vunpack.c.l.b16 %v5788
  %v5829 = vunpack.c.l.b16 %v5792
  %v5830 = vunpack.c.l.b16 %v5796
  %v5831 = vunpack.c.l.b16 %v5800
  %v5832 = vunpack.c.l.b16 %v5804
  %v5833 = vunpack.c.l.b16 %v5808
  %v5834 = vunpack.c.l.b16 %v5812
  %v5835 = vunpack.c.l.b16 %v5816
  %v5836 = vunpack.c.l.b16 %v5820
  %v5837 = vpack.c.b16 %v5822, %v5821
  %v5838 = vpack.c.b16 %v5824, %v5823
  %v5839 = vpack.c.b16 %v5826, %v5825
  %v5840 = vpack.c.b16 %v5828, %v5827
  %v5841 = vpack.c.b16 %v5830, %v5829
  %v5842 = vpack.c.b16 %v5832, %v5831
  %v5843 = vpack.c.b16 %v5834, %v5833
  %v5844 = vpack.c.b16 %v5836, %v5835
  %5845 = vrot.lane.b32.xlu0 %v5837, 16
  %v5846 = vpop.permute.xlu0 %5845
  %5847 = vrot.lane.b32.xlu0 %v5838, 16
  %v5848 = vpop.permute.xlu0 %5847
  %5849 = vrot.lane.b32.xlu0 %v5839, 16
  %v5850 = vpop.permute.xlu0 %5849
  %5851 = vrot.lane.b32.xlu0 %v5840, 16
  %v5852 = vpop.permute.xlu0 %5851
  %5853 = vrot.lane.b32.xlu0 %v5841, 16
  %v5854 = vpop.permute.xlu0 %5853
  %5855 = vrot.lane.b32.xlu0 %v5842, 16
  %v5856 = vpop.permute.xlu0 %5855
  %5857 = vrot.lane.b32.xlu0 %v5843, 16
  %v5858 = vpop.permute.xlu0 %5857
  %5859 = vrot.lane.b32.xlu0 %v5844, 16
  %v5860 = vpop.permute.xlu0 %5859
  %5869 = vst.msk [vmem:[#allocation5] sm:$0xff] %vm3463, %v5846
  %5870 = vst.msk [vmem:[#allocation5 + $0x8] sm:$0xff] %vm3463, %v5848
  %5871 = vst.msk [vmem:[#allocation5 + $0x10] sm:$0xff] %vm3463, %v5850
  %5872 = vst.msk [vmem:[#allocation5 + $0x18] sm:$0xff] %vm3463, %v5852
  %5873 = vst.msk [vmem:[#allocation5 + $0x20] sm:$0xff] %vm3463, %v5854
  %5874 = vst.msk [vmem:[#allocation5 + $0x28] sm:$0xff] %vm3463, %v5856
  %5875 = vst.msk [vmem:[#allocation5 + $0x30] sm:$0xff] %vm3463, %v5858
  %5876 = vst.msk [vmem:[#allocation5 + $0x38] sm:$0xff] %vm3463, %v5860
  %v5877 = vld [vmem:[%s2867] sm:$0xf]
  %v5878 = vld [vmem:[%s2867 + $0x8] sm:$0xf]
  %v5879 = vld [vmem:[%s2867 + $0x10] sm:$0xf]
  %v5880 = vld [vmem:[%s2867 + $0x18] sm:$0xf]
  %v5881 = vld [vmem:[%s2867 + $0x20] sm:$0xf]
  %v5882 = vld [vmem:[%s2867 + $0x28] sm:$0xf]
  %v5883 = vld [vmem:[%s2867 + $0x30] sm:$0xf]
  %v5884 = vld [vmem:[%s2867 + $0x38] sm:$0xf]
  %v5885 = vld [vmem:[%s2867 + $0x50] sm:$0xf]
  %v5886 = vld [vmem:[%s2867 + $0x58] sm:$0xf]
  %v5887 = vld [vmem:[%s2867 + $0x60] sm:$0xf]
  %v5888 = vld [vmem:[%s2867 + $0x68] sm:$0xf]
  %v5889 = vld [vmem:[%s2867 + $0x70] sm:$0xf]
  %v5890 = vld [vmem:[%s2867 + $0x78] sm:$0xf]
  %v5891 = vld [vmem:[%s2867 + $0x80] sm:$0xf]
  %v5892 = vld [vmem:[%s2867 + $0x88] sm:$0xf]
  %v5909 = vunpack.c.l.b16 %v5877
  %v5910 = vunpack.c.l.b16 %v5878
  %v5911 = vunpack.c.l.b16 %v5879
  %v5912 = vunpack.c.l.b16 %v5880
  %v5913 = vunpack.c.l.b16 %v5881
  %v5914 = vunpack.c.l.b16 %v5882
  %v5915 = vunpack.c.l.b16 %v5883
  %v5916 = vunpack.c.l.b16 %v5884
  %v5917 = vunpack.c.l.b16 %v5885
  %v5918 = vunpack.c.l.b16 %v5886
  %v5919 = vunpack.c.l.b16 %v5887
  %v5920 = vunpack.c.l.b16 %v5888
  %v5921 = vunpack.c.l.b16 %v5889
  %v5922 = vunpack.c.l.b16 %v5890
  %v5923 = vunpack.c.l.b16 %v5891
  %v5924 = vunpack.c.l.b16 %v5892
  %v5925 = vpack.c.b16 %v5910, %v5909
  %v5926 = vpack.c.b16 %v5912, %v5911
  %v5927 = vpack.c.b16 %v5914, %v5913
  %v5928 = vpack.c.b16 %v5916, %v5915
  %v5929 = vpack.c.b16 %v5918, %v5917
  %v5930 = vpack.c.b16 %v5920, %v5919
  %v5931 = vpack.c.b16 %v5922, %v5921
  %v5932 = vpack.c.b16 %v5924, %v5923
  %5933 = vrot.lane.b32.xlu0 %v5925, 24
  %v5934 = vpop.permute.xlu0 %5933
  %5935 = vrot.lane.b32.xlu0 %v5926, 24
  %v5936 = vpop.permute.xlu0 %5935
  %5937 = vrot.lane.b32.xlu0 %v5927, 24
  %v5938 = vpop.permute.xlu0 %5937
  %5939 = vrot.lane.b32.xlu0 %v5928, 24
  %v5940 = vpop.permute.xlu0 %5939
  %5941 = vrot.lane.b32.xlu0 %v5929, 24
  %v5942 = vpop.permute.xlu0 %5941
  %5943 = vrot.lane.b32.xlu0 %v5930, 24
  %v5944 = vpop.permute.xlu0 %5943
  %5945 = vrot.lane.b32.xlu0 %v5931, 24
  %v5946 = vpop.permute.xlu0 %5945
  %5947 = vrot.lane.b32.xlu0 %v5932, 24
  %v5948 = vpop.permute.xlu0 %5947
  %5957 = vst.msk [vmem:[#allocation5] sm:$0xff] %vm3552, %v5934
  %5958 = vst.msk [vmem:[#allocation5 + $0x8] sm:$0xff] %vm3552, %v5936
  %5959 = vst.msk [vmem:[#allocation5 + $0x10] sm:$0xff] %vm3552, %v5938
  %5960 = vst.msk [vmem:[#allocation5 + $0x18] sm:$0xff] %vm3552, %v5940
  %5961 = vst.msk [vmem:[#allocation5 + $0x20] sm:$0xff] %vm3552, %v5942
  %5962 = vst.msk [vmem:[#allocation5 + $0x28] sm:$0xff] %vm3552, %v5944
  %5963 = vst.msk [vmem:[#allocation5 + $0x30] sm:$0xff] %vm3552, %v5946
  %5964 = vst.msk [vmem:[#allocation5 + $0x38] sm:$0xff] %vm3552, %v5948
  %v5965 = vld [vmem:[%s2867] sm:$0xf]
  %v5966 = vld [vmem:[%s2867 + $0x4] sm:$0x1]
  %v5967 = vld [vmem:[%s2867 + $0x8] sm:$0xf]
  %v5968 = vld [vmem:[%s2867 + $0xc] sm:$0x1]
  %v5969 = vld [vmem:[%s2867 + $0x10] sm:$0xf]
  %v5970 = vld [vmem:[%s2867 + $0x14] sm:$0x1]
  %v5971 = vld [vmem:[%s2867 + $0x18] sm:$0xf]
  %v5972 = vld [vmem:[%s2867 + $0x1c] sm:$0x1]
  %v5973 = vld [vmem:[%s2867 + $0x20] sm:$0xf]
  %v5974 = vld [vmem:[%s2867 + $0x24] sm:$0x1]
  %v5975 = vld [vmem:[%s2867 + $0x28] sm:$0xf]
  %v5976 = vld [vmem:[%s2867 + $0x2c] sm:$0x1]
  %v5977 = vld [vmem:[%s2867 + $0x30] sm:$0xf]
  %v5978 = vld [vmem:[%s2867 + $0x34] sm:$0x1]
  %v5979 = vld [vmem:[%s2867 + $0x38] sm:$0xf]
  %v5980 = vld [vmem:[%s2867 + $0x3c] sm:$0x1]
  %v5981 = vld [vmem:[%s2867 + $0x50] sm:$0xf]
  %v5982 = vld [vmem:[%s2867 + $0x54] sm:$0x1]
  %v5983 = vld [vmem:[%s2867 + $0x58] sm:$0xf]
  %v5984 = vld [vmem:[%s2867 + $0x5c] sm:$0x1]
  %v5985 = vld [vmem:[%s2867 + $0x60] sm:$0xf]
  %v5986 = vld [vmem:[%s2867 + $0x64] sm:$0x1]
  %v5987 = vld [vmem:[%s2867 + $0x68] sm:$0xf]
  %v5988 = vld [vmem:[%s2867 + $0x6c] sm:$0x1]
  %v5989 = vld [vmem:[%s2867 + $0x70] sm:$0xf]
  %v5990 = vld [vmem:[%s2867 + $0x74] sm:$0x1]
  %v5991 = vld [vmem:[%s2867 + $0x78] sm:$0xf]
  %v5992 = vld [vmem:[%s2867 + $0x7c] sm:$0x1]
  %v5993 = vld [vmem:[%s2867 + $0x80] sm:$0xf]
  %v5994 = vld [vmem:[%s2867 + $0x84] sm:$0x1]
  %v5995 = vld [vmem:[%s2867 + $0x88] sm:$0xf]
  %v5996 = vld [vmem:[%s2867 + $0x8c] sm:$0x1]
  %v5998 = vshrl.u32 %v5965, 16
  %v6000 = vrot.slane %v5998, 4
  %v6001 = vshll.u32 %v5965, 16
  %v6003 = vrot.slane %v6001, 5
  %v6004 = vor.u32 %v6000, %v6003
  %v6005 = vrot.slane %v6004, 4
  %v6007 = vshll.u32 %v5966, 16
  %v6009 = vrot.slane %v6007, 5
  %v6010 = vsel %vm609, %v6005, %v6009
  %v6012 = vshrl.u32 %v5967, 16
  %v6014 = vrot.slane %v6012, 4
  %v6015 = vshll.u32 %v5967, 16
  %v6017 = vrot.slane %v6015, 5
  %v6018 = vor.u32 %v6014, %v6017
  %v6019 = vrot.slane %v6018, 4
  %v6021 = vshll.u32 %v5968, 16
  %v6023 = vrot.slane %v6021, 5
  %v6024 = vsel %vm609, %v6019, %v6023
  %v6026 = vshrl.u32 %v5969, 16
  %v6028 = vrot.slane %v6026, 4
  %v6029 = vshll.u32 %v5969, 16
  %v6031 = vrot.slane %v6029, 5
  %v6032 = vor.u32 %v6028, %v6031
  %v6033 = vrot.slane %v6032, 4
  %v6035 = vshll.u32 %v5970, 16
  %v6037 = vrot.slane %v6035, 5
  %v6038 = vsel %vm609, %v6033, %v6037
  %v6040 = vshrl.u32 %v5971, 16
  %v6042 = vrot.slane %v6040, 4
  %v6043 = vshll.u32 %v5971, 16
  %v6045 = vrot.slane %v6043, 5
  %v6046 = vor.u32 %v6042, %v6045
  %v6047 = vrot.slane %v6046, 4
  %v6049 = vshll.u32 %v5972, 16
  %v6051 = vrot.slane %v6049, 5
  %v6052 = vsel %vm609, %v6047, %v6051
  %v6054 = vshrl.u32 %v5973, 16
  %v6056 = vrot.slane %v6054, 4
  %v6057 = vshll.u32 %v5973, 16
  %v6059 = vrot.slane %v6057, 5
  %v6060 = vor.u32 %v6056, %v6059
  %v6061 = vrot.slane %v6060, 4
  %v6063 = vshll.u32 %v5974, 16
  %v6065 = vrot.slane %v6063, 5
  %v6066 = vsel %vm609, %v6061, %v6065
  %v6068 = vshrl.u32 %v5975, 16
  %v6070 = vrot.slane %v6068, 4
  %v6071 = vshll.u32 %v5975, 16
  %v6073 = vrot.slane %v6071, 5
  %v6074 = vor.u32 %v6070, %v6073
  %v6075 = vrot.slane %v6074, 4
  %v6077 = vshll.u32 %v5976, 16
  %v6079 = vrot.slane %v6077, 5
  %v6080 = vsel %vm609, %v6075, %v6079
  %v6082 = vshrl.u32 %v5977, 16
  %v6084 = vrot.slane %v6082, 4
  %v6085 = vshll.u32 %v5977, 16
  %v6087 = vrot.slane %v6085, 5
  %v6088 = vor.u32 %v6084, %v6087
  %v6089 = vrot.slane %v6088, 4
  %v6091 = vshll.u32 %v5978, 16
  %v6093 = vrot.slane %v6091, 5
  %v6094 = vsel %vm609, %v6089, %v6093
  %v6096 = vshrl.u32 %v5979, 16
  %v6098 = vrot.slane %v6096, 4
  %v6099 = vshll.u32 %v5979, 16
  %v6101 = vrot.slane %v6099, 5
  %v6102 = vor.u32 %v6098, %v6101
  %v6103 = vrot.slane %v6102, 4
  %v6105 = vshll.u32 %v5980, 16
  %v6107 = vrot.slane %v6105, 5
  %v6108 = vsel %vm609, %v6103, %v6107
  %v6110 = vshrl.u32 %v5981, 16
  %v6112 = vrot.slane %v6110, 4
  %v6113 = vshll.u32 %v5981, 16
  %v6115 = vrot.slane %v6113, 5
  %v6116 = vor.u32 %v6112, %v6115
  %v6117 = vrot.slane %v6116, 4
  %v6119 = vshll.u32 %v5982, 16
  %v6121 = vrot.slane %v6119, 5
  %v6122 = vsel %vm609, %v6117, %v6121
  %v6124 = vshrl.u32 %v5983, 16
  %v6126 = vrot.slane %v6124, 4
  %v6127 = vshll.u32 %v5983, 16
  %v6129 = vrot.slane %v6127, 5
  %v6130 = vor.u32 %v6126, %v6129
  %v6131 = vrot.slane %v6130, 4
  %v6133 = vshll.u32 %v5984, 16
  %v6135 = vrot.slane %v6133, 5
  %v6136 = vsel %vm609, %v6131, %v6135
  %v6138 = vshrl.u32 %v5985, 16
  %v6140 = vrot.slane %v6138, 4
  %v6141 = vshll.u32 %v5985, 16
  %v6143 = vrot.slane %v6141, 5
  %v6144 = vor.u32 %v6140, %v6143
  %v6145 = vrot.slane %v6144, 4
  %v6147 = vshll.u32 %v5986, 16
  %v6149 = vrot.slane %v6147, 5
  %v6150 = vsel %vm609, %v6145, %v6149
  %v6152 = vshrl.u32 %v5987, 16
  %v6154 = vrot.slane %v6152, 4
  %v6155 = vshll.u32 %v5987, 16
  %v6157 = vrot.slane %v6155, 5
  %v6158 = vor.u32 %v6154, %v6157
  %v6159 = vrot.slane %v6158, 4
  %v6161 = vshll.u32 %v5988, 16
  %v6163 = vrot.slane %v6161, 5
  %v6164 = vsel %vm609, %v6159, %v6163
  %v6166 = vshrl.u32 %v5989, 16
  %v6168 = vrot.slane %v6166, 4
  %v6169 = vshll.u32 %v5989, 16
  %v6171 = vrot.slane %v6169, 5
  %v6172 = vor.u32 %v6168, %v6171
  %v6173 = vrot.slane %v6172, 4
  %v6175 = vshll.u32 %v5990, 16
  %v6177 = vrot.slane %v6175, 5
  %v6178 = vsel %vm609, %v6173, %v6177
  %v6180 = vshrl.u32 %v5991, 16
  %v6182 = vrot.slane %v6180, 4
  %v6183 = vshll.u32 %v5991, 16
  %v6185 = vrot.slane %v6183, 5
  %v6186 = vor.u32 %v6182, %v6185
  %v6187 = vrot.slane %v6186, 4
  %v6189 = vshll.u32 %v5992, 16
  %v6191 = vrot.slane %v6189, 5
  %v6192 = vsel %vm609, %v6187, %v6191
  %v6194 = vshrl.u32 %v5993, 16
  %v6196 = vrot.slane %v6194, 4
  %v6197 = vshll.u32 %v5993, 16
  %v6199 = vrot.slane %v6197, 5
  %v6200 = vor.u32 %v6196, %v6199
  %v6201 = vrot.slane %v6200, 4
  %v6203 = vshll.u32 %v5994, 16
  %v6205 = vrot.slane %v6203, 5
  %v6206 = vsel %vm609, %v6201, %v6205
  %v6208 = vshrl.u32 %v5995, 16
  %v6210 = vrot.slane %v6208, 4
  %v6211 = vshll.u32 %v5995, 16
  %v6213 = vrot.slane %v6211, 5
  %v6214 = vor.u32 %v6210, %v6213
  %v6215 = vrot.slane %v6214, 4
  %v6217 = vshll.u32 %v5996, 16
  %v6219 = vrot.slane %v6217, 5
  %v6220 = vsel %vm609, %v6215, %v6219
  %v6221 = vunpack.c.l.b16 %v6010
  %v6222 = vunpack.c.l.b16 %v6024
  %v6223 = vunpack.c.l.b16 %v6038
  %v6224 = vunpack.c.l.b16 %v6052
  %v6225 = vunpack.c.l.b16 %v6066
  %v6226 = vunpack.c.l.b16 %v6080
  %v6227 = vunpack.c.l.b16 %v6094
  %v6228 = vunpack.c.l.b16 %v6108
  %v6229 = vunpack.c.l.b16 %v6122
  %v6230 = vunpack.c.l.b16 %v6136
  %v6231 = vunpack.c.l.b16 %v6150
  %v6232 = vunpack.c.l.b16 %v6164
  %v6233 = vunpack.c.l.b16 %v6178
  %v6234 = vunpack.c.l.b16 %v6192
  %v6235 = vunpack.c.l.b16 %v6206
  %v6236 = vunpack.c.l.b16 %v6220
  %v6237 = vpack.c.b16 %v6222, %v6221
  %v6238 = vpack.c.b16 %v6224, %v6223
  %v6239 = vpack.c.b16 %v6226, %v6225
  %v6240 = vpack.c.b16 %v6228, %v6227
  %v6241 = vpack.c.b16 %v6230, %v6229
  %v6242 = vpack.c.b16 %v6232, %v6231
  %v6243 = vpack.c.b16 %v6234, %v6233
  %v6244 = vpack.c.b16 %v6236, %v6235
  %6245 = vrot.lane.b32.xlu0 %v6237, 32
  %v6246 = vpop.permute.xlu0 %6245
  %6247 = vrot.lane.b32.xlu0 %v6238, 32
  %v6248 = vpop.permute.xlu0 %6247
  %6249 = vrot.lane.b32.xlu0 %v6239, 32
  %v6250 = vpop.permute.xlu0 %6249
  %6251 = vrot.lane.b32.xlu0 %v6240, 32
  %v6252 = vpop.permute.xlu0 %6251
  %6253 = vrot.lane.b32.xlu0 %v6241, 32
  %v6254 = vpop.permute.xlu0 %6253
  %6255 = vrot.lane.b32.xlu0 %v6242, 32
  %v6256 = vpop.permute.xlu0 %6255
  %6257 = vrot.lane.b32.xlu0 %v6243, 32
  %v6258 = vpop.permute.xlu0 %6257
  %6259 = vrot.lane.b32.xlu0 %v6244, 32
  %v6260 = vpop.permute.xlu0 %6259
  %6269 = vst.msk [vmem:[#allocation5] sm:$0xff] %vm3865, %v6246
  %6270 = vst.msk [vmem:[#allocation5 + $0x8] sm:$0xff] %vm3865, %v6248
  %6271 = vst.msk [vmem:[#allocation5 + $0x10] sm:$0xff] %vm3865, %v6250
  %6272 = vst.msk [vmem:[#allocation5 + $0x18] sm:$0xff] %vm3865, %v6252
  %6273 = vst.msk [vmem:[#allocation5 + $0x20] sm:$0xff] %vm3865, %v6254
  %6274 = vst.msk [vmem:[#allocation5 + $0x28] sm:$0xff] %vm3865, %v6256
  %6275 = vst.msk [vmem:[#allocation5 + $0x30] sm:$0xff] %vm3865, %v6258
  %6276 = vst.msk [vmem:[#allocation5 + $0x38] sm:$0xff] %vm3865, %v6260
  %v6277 = vld [vmem:[%s2867] sm:$0xe]
  %v6278 = vld [vmem:[%s2867 + $0x4] sm:$0x1]
  %v6279 = vld [vmem:[%s2867 + $0x8] sm:$0xe]
  %v6280 = vld [vmem:[%s2867 + $0xc] sm:$0x1]
  %v6281 = vld [vmem:[%s2867 + $0x10] sm:$0xe]
  %v6282 = vld [vmem:[%s2867 + $0x14] sm:$0x1]
  %v6283 = vld [vmem:[%s2867 + $0x18] sm:$0xe]
  %v6284 = vld [vmem:[%s2867 + $0x1c] sm:$0x1]
  %v6285 = vld [vmem:[%s2867 + $0x20] sm:$0xe]
  %v6286 = vld [vmem:[%s2867 + $0x24] sm:$0x1]
  %v6287 = vld [vmem:[%s2867 + $0x28] sm:$0xe]
  %v6288 = vld [vmem:[%s2867 + $0x2c] sm:$0x1]
  %v6289 = vld [vmem:[%s2867 + $0x30] sm:$0xe]
  %v6290 = vld [vmem:[%s2867 + $0x34] sm:$0x1]
  %v6291 = vld [vmem:[%s2867 + $0x38] sm:$0xe]
  %v6292 = vld [vmem:[%s2867 + $0x3c] sm:$0x1]
  %v6293 = vld [vmem:[%s2867 + $0x50] sm:$0xe]
  %v6294 = vld [vmem:[%s2867 + $0x54] sm:$0x1]
  %v6295 = vld [vmem:[%s2867 + $0x58] sm:$0xe]
  %v6296 = vld [vmem:[%s2867 + $0x5c] sm:$0x1]
  %v6297 = vld [vmem:[%s2867 + $0x60] sm:$0xe]
  %v6298 = vld [vmem:[%s2867 + $0x64] sm:$0x1]
  %v6299 = vld [vmem:[%s2867 + $0x68] sm:$0xe]
  %v6300 = vld [vmem:[%s2867 + $0x6c] sm:$0x1]
  %v6301 = vld [vmem:[%s2867 + $0x70] sm:$0xe]
  %v6302 = vld [vmem:[%s2867 + $0x74] sm:$0x1]
  %v6303 = vld [vmem:[%s2867 + $0x78] sm:$0xe]
  %v6304 = vld [vmem:[%s2867 + $0x7c] sm:$0x1]
  %v6305 = vld [vmem:[%s2867 + $0x80] sm:$0xe]
  %v6306 = vld [vmem:[%s2867 + $0x84] sm:$0x1]
  %v6307 = vld [vmem:[%s2867 + $0x88] sm:$0xe]
  %v6308 = vld [vmem:[%s2867 + $0x8c] sm:$0x1]
  %v6341 = vrot.slane %v6277, 5
  %v6342 = vrot.slane %v6341, 4
  %v6343 = vrot.slane %v6278, 5
  %v6344 = vsel %vm957, %v6342, %v6343
  %v6345 = vrot.slane %v6279, 5
  %v6346 = vrot.slane %v6345, 4
  %v6347 = vrot.slane %v6280, 5
  %v6348 = vsel %vm957, %v6346, %v6347
  %v6349 = vrot.slane %v6281, 5
  %v6350 = vrot.slane %v6349, 4
  %v6351 = vrot.slane %v6282, 5
  %v6352 = vsel %vm957, %v6350, %v6351
  %v6353 = vrot.slane %v6283, 5
  %v6354 = vrot.slane %v6353, 4
  %v6355 = vrot.slane %v6284, 5
  %v6356 = vsel %vm957, %v6354, %v6355
  %v6357 = vrot.slane %v6285, 5
  %v6358 = vrot.slane %v6357, 4
  %v6359 = vrot.slane %v6286, 5
  %v6360 = vsel %vm957, %v6358, %v6359
  %v6361 = vrot.slane %v6287, 5
  %v6362 = vrot.slane %v6361, 4
  %v6363 = vrot.slane %v6288, 5
  %v6364 = vsel %vm957, %v6362, %v6363
  %v6365 = vrot.slane %v6289, 5
  %v6366 = vrot.slane %v6365, 4
  %v6367 = vrot.slane %v6290, 5
  %v6368 = vsel %vm957, %v6366, %v6367
  %v6369 = vrot.slane %v6291, 5
  %v6370 = vrot.slane %v6369, 4
  %v6371 = vrot.slane %v6292, 5
  %v6372 = vsel %vm957, %v6370, %v6371
  %v6373 = vrot.slane %v6293, 5
  %v6374 = vrot.slane %v6373, 4
  %v6375 = vrot.slane %v6294, 5
  %v6376 = vsel %vm957, %v6374, %v6375
  %v6377 = vrot.slane %v6295, 5
  %v6378 = vrot.slane %v6377, 4
  %v6379 = vrot.slane %v6296, 5
  %v6380 = vsel %vm957, %v6378, %v6379
  %v6381 = vrot.slane %v6297, 5
  %v6382 = vrot.slane %v6381, 4
  %v6383 = vrot.slane %v6298, 5
  %v6384 = vsel %vm957, %v6382, %v6383
  %v6385 = vrot.slane %v6299, 5
  %v6386 = vrot.slane %v6385, 4
  %v6387 = vrot.slane %v6300, 5
  %v6388 = vsel %vm957, %v6386, %v6387
  %v6389 = vrot.slane %v6301, 5
  %v6390 = vrot.slane %v6389, 4
  %v6391 = vrot.slane %v6302, 5
  %v6392 = vsel %vm957, %v6390, %v6391
  %v6393 = vrot.slane %v6303, 5
  %v6394 = vrot.slane %v6393, 4
  %v6395 = vrot.slane %v6304, 5
  %v6396 = vsel %vm957, %v6394, %v6395
  %v6397 = vrot.slane %v6305, 5
  %v6398 = vrot.slane %v6397, 4
  %v6399 = vrot.slane %v6306, 5
  %v6400 = vsel %vm957, %v6398, %v6399
  %v6401 = vrot.slane %v6307, 5
  %v6402 = vrot.slane %v6401, 4
  %v6403 = vrot.slane %v6308, 5
  %v6404 = vsel %vm957, %v6402, %v6403
  %v6405 = vunpack.c.l.b16 %v6344
  %v6406 = vunpack.c.l.b16 %v6348
  %v6407 = vunpack.c.l.b16 %v6352
  %v6408 = vunpack.c.l.b16 %v6356
  %v6409 = vunpack.c.l.b16 %v6360
  %v6410 = vunpack.c.l.b16 %v6364
  %v6411 = vunpack.c.l.b16 %v6368
  %v6412 = vunpack.c.l.b16 %v6372
  %v6413 = vunpack.c.l.b16 %v6376
  %v6414 = vunpack.c.l.b16 %v6380
  %v6415 = vunpack.c.l.b16 %v6384
  %v6416 = vunpack.c.l.b16 %v6388
  %v6417 = vunpack.c.l.b16 %v6392
  %v6418 = vunpack.c.l.b16 %v6396
  %v6419 = vunpack.c.l.b16 %v6400
  %v6420 = vunpack.c.l.b16 %v6404
  %v6421 = vpack.c.b16 %v6406, %v6405
  %v6422 = vpack.c.b16 %v6408, %v6407
  %v6423 = vpack.c.b16 %v6410, %v6409
  %v6424 = vpack.c.b16 %v6412, %v6411
  %v6425 = vpack.c.b16 %v6414, %v6413
  %v6426 = vpack.c.b16 %v6416, %v6415
  %v6427 = vpack.c.b16 %v6418, %v6417
  %v6428 = vpack.c.b16 %v6420, %v6419
  %6429 = vrot.lane.b32.xlu0 %v6421, 40
  %v6430 = vpop.permute.xlu0 %6429
  %6431 = vrot.lane.b32.xlu0 %v6422, 40
  %v6432 = vpop.permute.xlu0 %6431
  %6433 = vrot.lane.b32.xlu0 %v6423, 40
  %v6434 = vpop.permute.xlu0 %6433
  %6435 = vrot.lane.b32.xlu0 %v6424, 40
  %v6436 = vpop.permute.xlu0 %6435
  %6437 = vrot.lane.b32.xlu0 %v6425, 40
  %v6438 = vpop.permute.xlu0 %6437
  %6439 = vrot.lane.b32.xlu0 %v6426, 40
  %v6440 = vpop.permute.xlu0 %6439
  %6441 = vrot.lane.b32.xlu0 %v6427, 40
  %v6442 = vpop.permute.xlu0 %6441
  %6443 = vrot.lane.b32.xlu0 %v6428, 40
  %v6444 = vpop.permute.xlu0 %6443
  %6453 = vst.msk [vmem:[#allocation5] sm:$0xff] %vm4050, %v6430
  %6454 = vst.msk [vmem:[#allocation5 + $0x8] sm:$0xff] %vm4050, %v6432
  %6455 = vst.msk [vmem:[#allocation5 + $0x10] sm:$0xff] %vm4050, %v6434
  %6456 = vst.msk [vmem:[#allocation5 + $0x18] sm:$0xff] %vm4050, %v6436
  %6457 = vst.msk [vmem:[#allocation5 + $0x20] sm:$0xff] %vm4050, %v6438
  %6458 = vst.msk [vmem:[#allocation5 + $0x28] sm:$0xff] %vm4050, %v6440
  %6459 = vst.msk [vmem:[#allocation5 + $0x30] sm:$0xff] %vm4050, %v6442
  %6460 = vst.msk [vmem:[#allocation5 + $0x38] sm:$0xff] %vm4050, %v6444
  %v6461 = vld [vmem:[%s4059] sm:$0xf]
  %v6462 = vld [vmem:[%s4059 + $0x8] sm:$0xf]
  %v6463 = vld [vmem:[%s4059 + $0x10] sm:$0xf]
  %v6464 = vld [vmem:[%s4059 + $0x18] sm:$0xf]
  %v6465 = vld [vmem:[%s4059 + $0x20] sm:$0xf]
  %v6466 = vld [vmem:[%s4059 + $0x28] sm:$0xf]
  %v6467 = vld [vmem:[%s4059 + $0x30] sm:$0xf]
  %v6468 = vld [vmem:[%s4059 + $0x38] sm:$0xf]
  %v6469 = vld [vmem:[%s4059 + $0x50] sm:$0xf]
  %v6470 = vld [vmem:[%s4059 + $0x58] sm:$0xf]
  %v6471 = vld [vmem:[%s4059 + $0x60] sm:$0xf]
  %v6472 = vld [vmem:[%s4059 + $0x68] sm:$0xf]
  %v6473 = vld [vmem:[%s4059 + $0x70] sm:$0xf]
  %v6474 = vld [vmem:[%s4059 + $0x78] sm:$0xf]
  %v6475 = vld [vmem:[%s4059 + $0x80] sm:$0xf]
  %v6476 = vld [vmem:[%s4059 + $0x88] sm:$0xf]
  %v6493 = vunpack.c.l.b16 %v6461
  %v6494 = vunpack.c.l.b16 %v6462
  %v6495 = vunpack.c.l.b16 %v6463
  %v6496 = vunpack.c.l.b16 %v6464
  %v6497 = vunpack.c.l.b16 %v6465
  %v6498 = vunpack.c.l.b16 %v6466
  %v6499 = vunpack.c.l.b16 %v6467
  %v6500 = vunpack.c.l.b16 %v6468
  %v6501 = vunpack.c.l.b16 %v6469
  %v6502 = vunpack.c.l.b16 %v6470
  %v6503 = vunpack.c.l.b16 %v6471
  %v6504 = vunpack.c.l.b16 %v6472
  %v6505 = vunpack.c.l.b16 %v6473
  %v6506 = vunpack.c.l.b16 %v6474
  %v6507 = vunpack.c.l.b16 %v6475
  %v6508 = vunpack.c.l.b16 %v6476
  %v6509 = vpack.c.b16 %v6494, %v6493
  %v6510 = vpack.c.b16 %v6496, %v6495
  %v6511 = vpack.c.b16 %v6498, %v6497
  %v6512 = vpack.c.b16 %v6500, %v6499
  %v6513 = vpack.c.b16 %v6502, %v6501
  %v6514 = vpack.c.b16 %v6504, %v6503
  %v6515 = vpack.c.b16 %v6506, %v6505
  %v6516 = vpack.c.b16 %v6508, %v6507
  %6517 = vrot.lane.b32.xlu0 %v6509, 48
  %v6518 = vpop.permute.xlu0 %6517
  %6519 = vrot.lane.b32.xlu0 %v6510, 48
  %v6520 = vpop.permute.xlu0 %6519
  %6521 = vrot.lane.b32.xlu0 %v6511, 48
  %v6522 = vpop.permute.xlu0 %6521
  %6523 = vrot.lane.b32.xlu0 %v6512, 48
  %v6524 = vpop.permute.xlu0 %6523
  %6525 = vrot.lane.b32.xlu0 %v6513, 48
  %v6526 = vpop.permute.xlu0 %6525
  %6527 = vrot.lane.b32.xlu0 %v6514, 48
  %v6528 = vpop.permute.xlu0 %6527
  %6529 = vrot.lane.b32.xlu0 %v6515, 48
  %v6530 = vpop.permute.xlu0 %6529
  %6531 = vrot.lane.b32.xlu0 %v6516, 48
  %v6532 = vpop.permute.xlu0 %6531
  %6541 = vst.msk [vmem:[#allocation5] sm:$0xff] %vm4140, %v6518
  %6542 = vst.msk [vmem:[#allocation5 + $0x8] sm:$0xff] %vm4140, %v6520
  %6543 = vst.msk [vmem:[#allocation5 + $0x10] sm:$0xff] %vm4140, %v6522
  %6544 = vst.msk [vmem:[#allocation5 + $0x18] sm:$0xff] %vm4140, %v6524
  %6545 = vst.msk [vmem:[#allocation5 + $0x20] sm:$0xff] %vm4140, %v6526
  %6546 = vst.msk [vmem:[#allocation5 + $0x28] sm:$0xff] %vm4140, %v6528
  %6547 = vst.msk [vmem:[#allocation5 + $0x30] sm:$0xff] %vm4140, %v6530
  %6548 = vst.msk [vmem:[#allocation5 + $0x38] sm:$0xff] %vm4140, %v6532
  %v6549 = vld [vmem:[%s4059] sm:$0xf]
  %v6550 = vld [vmem:[%s4059 + $0x4] sm:$0x1]
  %v6551 = vld [vmem:[%s4059 + $0x8] sm:$0xf]
  %v6552 = vld [vmem:[%s4059 + $0xc] sm:$0x1]
  %v6553 = vld [vmem:[%s4059 + $0x10] sm:$0xf]
  %v6554 = vld [vmem:[%s4059 + $0x14] sm:$0x1]
  %v6555 = vld [vmem:[%s4059 + $0x18] sm:$0xf]
  %v6556 = vld [vmem:[%s4059 + $0x1c] sm:$0x1]
  %v6557 = vld [vmem:[%s4059 + $0x20] sm:$0xf]
  %v6558 = vld [vmem:[%s4059 + $0x24] sm:$0x1]
  %v6559 = vld [vmem:[%s4059 + $0x28] sm:$0xf]
  %v6560 = vld [vmem:[%s4059 + $0x2c] sm:$0x1]
  %v6561 = vld [vmem:[%s4059 + $0x30] sm:$0xf]
  %v6562 = vld [vmem:[%s4059 + $0x34] sm:$0x1]
  %v6563 = vld [vmem:[%s4059 + $0x38] sm:$0xf]
  %v6564 = vld [vmem:[%s4059 + $0x3c] sm:$0x1]
  %v6565 = vld [vmem:[%s4059 + $0x50] sm:$0xf]
  %v6566 = vld [vmem:[%s4059 + $0x54] sm:$0x1]
  %v6567 = vld [vmem:[%s4059 + $0x58] sm:$0xf]
  %v6568 = vld [vmem:[%s4059 + $0x5c] sm:$0x1]
  %v6569 = vld [vmem:[%s4059 + $0x60] sm:$0xf]
  %v6570 = vld [vmem:[%s4059 + $0x64] sm:$0x1]
  %v6571 = vld [vmem:[%s4059 + $0x68] sm:$0xf]
  %v6572 = vld [vmem:[%s4059 + $0x6c] sm:$0x1]
  %v6573 = vld [vmem:[%s4059 + $0x70] sm:$0xf]
  %v6574 = vld [vmem:[%s4059 + $0x74] sm:$0x1]
  %v6575 = vld [vmem:[%s4059 + $0x78] sm:$0xf]
  %v6576 = vld [vmem:[%s4059 + $0x7c] sm:$0x1]
  %v6577 = vld [vmem:[%s4059 + $0x80] sm:$0xf]
  %v6578 = vld [vmem:[%s4059 + $0x84] sm:$0x1]
  %v6579 = vld [vmem:[%s4059 + $0x88] sm:$0xf]
  %v6580 = vld [vmem:[%s4059 + $0x8c] sm:$0x1]
  %v6582 = vshrl.u32 %v6549, 16
  %v6584 = vrot.slane %v6582, 4
  %v6585 = vshll.u32 %v6549, 16
  %v6587 = vrot.slane %v6585, 5
  %v6588 = vor.u32 %v6584, %v6587
  %v6589 = vrot.slane %v6588, 4
  %v6591 = vshll.u32 %v6550, 16
  %v6593 = vrot.slane %v6591, 5
  %v6594 = vsel %vm609, %v6589, %v6593
  %v6596 = vshrl.u32 %v6551, 16
  %v6598 = vrot.slane %v6596, 4
  %v6599 = vshll.u32 %v6551, 16
  %v6601 = vrot.slane %v6599, 5
  %v6602 = vor.u32 %v6598, %v6601
  %v6603 = vrot.slane %v6602, 4
  %v6605 = vshll.u32 %v6552, 16
  %v6607 = vrot.slane %v6605, 5
  %v6608 = vsel %vm609, %v6603, %v6607
  %v6610 = vshrl.u32 %v6553, 16
  %v6612 = vrot.slane %v6610, 4
  %v6613 = vshll.u32 %v6553, 16
  %v6615 = vrot.slane %v6613, 5
  %v6616 = vor.u32 %v6612, %v6615
  %v6617 = vrot.slane %v6616, 4
  %v6619 = vshll.u32 %v6554, 16
  %v6621 = vrot.slane %v6619, 5
  %v6622 = vsel %vm609, %v6617, %v6621
  %v6624 = vshrl.u32 %v6555, 16
  %v6626 = vrot.slane %v6624, 4
  %v6627 = vshll.u32 %v6555, 16
  %v6629 = vrot.slane %v6627, 5
  %v6630 = vor.u32 %v6626, %v6629
  %v6631 = vrot.slane %v6630, 4
  %v6633 = vshll.u32 %v6556, 16
  %v6635 = vrot.slane %v6633, 5
  %v6636 = vsel %vm609, %v6631, %v6635
  %v6638 = vshrl.u32 %v6557, 16
  %v6640 = vrot.slane %v6638, 4
  %v6641 = vshll.u32 %v6557, 16
  %v6643 = vrot.slane %v6641, 5
  %v6644 = vor.u32 %v6640, %v6643
  %v6645 = vrot.slane %v6644, 4
  %v6647 = vshll.u32 %v6558, 16
  %v6649 = vrot.slane %v6647, 5
  %v6650 = vsel %vm609, %v6645, %v6649
  %v6652 = vshrl.u32 %v6559, 16
  %v6654 = vrot.slane %v6652, 4
  %v6655 = vshll.u32 %v6559, 16
  %v6657 = vrot.slane %v6655, 5
  %v6658 = vor.u32 %v6654, %v6657
  %v6659 = vrot.slane %v6658, 4
  %v6661 = vshll.u32 %v6560, 16
  %v6663 = vrot.slane %v6661, 5
  %v6664 = vsel %vm609, %v6659, %v6663
  %v6666 = vshrl.u32 %v6561, 16
  %v6668 = vrot.slane %v6666, 4
  %v6669 = vshll.u32 %v6561, 16
  %v6671 = vrot.slane %v6669, 5
  %v6672 = vor.u32 %v6668, %v6671
  %v6673 = vrot.slane %v6672, 4
  %v6675 = vshll.u32 %v6562, 16
  %v6677 = vrot.slane %v6675, 5
  %v6678 = vsel %vm609, %v6673, %v6677
  %v6680 = vshrl.u32 %v6563, 16
  %v6682 = vrot.slane %v6680, 4
  %v6683 = vshll.u32 %v6563, 16
  %v6685 = vrot.slane %v6683, 5
  %v6686 = vor.u32 %v6682, %v6685
  %v6687 = vrot.slane %v6686, 4
  %v6689 = vshll.u32 %v6564, 16
  %v6691 = vrot.slane %v6689, 5
  %v6692 = vsel %vm609, %v6687, %v6691
  %v6694 = vshrl.u32 %v6565, 16
  %v6696 = vrot.slane %v6694, 4
  %v6697 = vshll.u32 %v6565, 16
  %v6699 = vrot.slane %v6697, 5
  %v6700 = vor.u32 %v6696, %v6699
  %v6701 = vrot.slane %v6700, 4
  %v6703 = vshll.u32 %v6566, 16
  %v6705 = vrot.slane %v6703, 5
  %v6706 = vsel %vm609, %v6701, %v6705
  %v6708 = vshrl.u32 %v6567, 16
  %v6710 = vrot.slane %v6708, 4
  %v6711 = vshll.u32 %v6567, 16
  %v6713 = vrot.slane %v6711, 5
  %v6714 = vor.u32 %v6710, %v6713
  %v6715 = vrot.slane %v6714, 4
  %v6717 = vshll.u32 %v6568, 16
  %v6719 = vrot.slane %v6717, 5
  %v6720 = vsel %vm609, %v6715, %v6719
  %v6722 = vshrl.u32 %v6569, 16
  %v6724 = vrot.slane %v6722, 4
  %v6725 = vshll.u32 %v6569, 16
  %v6727 = vrot.slane %v6725, 5
  %v6728 = vor.u32 %v6724, %v6727
  %v6729 = vrot.slane %v6728, 4
  %v6731 = vshll.u32 %v6570, 16
  %v6733 = vrot.slane %v6731, 5
  %v6734 = vsel %vm609, %v6729, %v6733
  %v6736 = vshrl.u32 %v6571, 16
  %v6738 = vrot.slane %v6736, 4
  %v6739 = vshll.u32 %v6571, 16
  %v6741 = vrot.slane %v6739, 5
  %v6742 = vor.u32 %v6738, %v6741
  %v6743 = vrot.slane %v6742, 4
  %v6745 = vshll.u32 %v6572, 16
  %v6747 = vrot.slane %v6745, 5
  %v6748 = vsel %vm609, %v6743, %v6747
  %v6750 = vshrl.u32 %v6573, 16
  %v6752 = vrot.slane %v6750, 4
  %v6753 = vshll.u32 %v6573, 16
  %v6755 = vrot.slane %v6753, 5
  %v6756 = vor.u32 %v6752, %v6755
  %v6757 = vrot.slane %v6756, 4
  %v6759 = vshll.u32 %v6574, 16
  %v6761 = vrot.slane %v6759, 5
  %v6762 = vsel %vm609, %v6757, %v6761
  %v6764 = vshrl.u32 %v6575, 16
  %v6766 = vrot.slane %v6764, 4
  %v6767 = vshll.u32 %v6575, 16
  %v6769 = vrot.slane %v6767, 5
  %v6770 = vor.u32 %v6766, %v6769
  %v6771 = vrot.slane %v6770, 4
  %v6773 = vshll.u32 %v6576, 16
  %v6775 = vrot.slane %v6773, 5
  %v6776 = vsel %vm609, %v6771, %v6775
  %v6778 = vshrl.u32 %v6577, 16
  %v6780 = vrot.slane %v6778, 4
  %v6781 = vshll.u32 %v6577, 16
  %v6783 = vrot.slane %v6781, 5
  %v6784 = vor.u32 %v6780, %v6783
  %v6785 = vrot.slane %v6784, 4
  %v6787 = vshll.u32 %v6578, 16
  %v6789 = vrot.slane %v6787, 5
  %v6790 = vsel %vm609, %v6785, %v6789
  %v6792 = vshrl.u32 %v6579, 16
  %v6794 = vrot.slane %v6792, 4
  %v6795 = vshll.u32 %v6579, 16
  %v6797 = vrot.slane %v6795, 5
  %v6798 = vor.u32 %v6794, %v6797
  %v6799 = vrot.slane %v6798, 4
  %v6801 = vshll.u32 %v6580, 16
  %v6803 = vrot.slane %v6801, 5
  %v6804 = vsel %vm609, %v6799, %v6803
  %v6805 = vunpack.c.l.b16 %v6594
  %v6806 = vunpack.c.l.b16 %v6608
  %v6807 = vunpack.c.l.b16 %v6622
  %v6808 = vunpack.c.l.b16 %v6636
  %v6809 = vunpack.c.l.b16 %v6650
  %v6810 = vunpack.c.l.b16 %v6664
  %v6811 = vunpack.c.l.b16 %v6678
  %v6812 = vunpack.c.l.b16 %v6692
  %v6813 = vunpack.c.l.b16 %v6706
  %v6814 = vunpack.c.l.b16 %v6720
  %v6815 = vunpack.c.l.b16 %v6734
  %v6816 = vunpack.c.l.b16 %v6748
  %v6817 = vunpack.c.l.b16 %v6762
  %v6818 = vunpack.c.l.b16 %v6776
  %v6819 = vunpack.c.l.b16 %v6790
  %v6820 = vunpack.c.l.b16 %v6804
  %v6821 = vpack.c.b16 %v6806, %v6805
  %v6822 = vpack.c.b16 %v6808, %v6807
  %v6823 = vpack.c.b16 %v6810, %v6809
  %v6824 = vpack.c.b16 %v6812, %v6811
  %v6825 = vpack.c.b16 %v6814, %v6813
  %v6826 = vpack.c.b16 %v6816, %v6815
  %v6827 = vpack.c.b16 %v6818, %v6817
  %v6828 = vpack.c.b16 %v6820, %v6819
  %6829 = vrot.lane.b32.xlu0 %v6821, 56
  %v6830 = vpop.permute.xlu0 %6829
  %6831 = vrot.lane.b32.xlu0 %v6822, 56
  %v6832 = vpop.permute.xlu0 %6831
  %6833 = vrot.lane.b32.xlu0 %v6823, 56
  %v6834 = vpop.permute.xlu0 %6833
  %6835 = vrot.lane.b32.xlu0 %v6824, 56
  %v6836 = vpop.permute.xlu0 %6835
  %6837 = vrot.lane.b32.xlu0 %v6825, 56
  %v6838 = vpop.permute.xlu0 %6837
  %6839 = vrot.lane.b32.xlu0 %v6826, 56
  %v6840 = vpop.permute.xlu0 %6839
  %6841 = vrot.lane.b32.xlu0 %v6827, 56
  %v6842 = vpop.permute.xlu0 %6841
  %6843 = vrot.lane.b32.xlu0 %v6828, 56
  %v6844 = vpop.permute.xlu0 %6843
  %6853 = vst.msk [vmem:[#allocation5] sm:$0xff] %vm4453, %v6830
  %6854 = vst.msk [vmem:[#allocation5 + $0x8] sm:$0xff] %vm4453, %v6832
  %6855 = vst.msk [vmem:[#allocation5 + $0x10] sm:$0xff] %vm4453, %v6834
  %6856 = vst.msk [vmem:[#allocation5 + $0x18] sm:$0xff] %vm4453, %v6836
  %6857 = vst.msk [vmem:[#allocation5 + $0x20] sm:$0xff] %vm4453, %v6838
  %6858 = vst.msk [vmem:[#allocation5 + $0x28] sm:$0xff] %vm4453, %v6840
  %6859 = vst.msk [vmem:[#allocation5 + $0x30] sm:$0xff] %vm4453, %v6842
  %6860 = vst.msk [vmem:[#allocation5 + $0x38] sm:$0xff] %vm4453, %v6844
  %v6861 = vld [vmem:[%s4059] sm:$0xe]
  %v6862 = vld [vmem:[%s4059 + $0x4] sm:$0x1]
  %v6863 = vld [vmem:[%s4059 + $0x8] sm:$0xe]
  %v6864 = vld [vmem:[%s4059 + $0xc] sm:$0x1]
  %v6865 = vld [vmem:[%s4059 + $0x10] sm:$0xe]
  %v6866 = vld [vmem:[%s4059 + $0x14] sm:$0x1]
  %v6867 = vld [vmem:[%s4059 + $0x18] sm:$0xe]
  %v6868 = vld [vmem:[%s4059 + $0x1c] sm:$0x1]
  %v6869 = vld [vmem:[%s4059 + $0x20] sm:$0xe]
  %v6870 = vld [vmem:[%s4059 + $0x24] sm:$0x1]
  %v6871 = vld [vmem:[%s4059 + $0x28] sm:$0xe]
  %v6872 = vld [vmem:[%s4059 + $0x2c] sm:$0x1]
  %v6873 = vld [vmem:[%s4059 + $0x30] sm:$0xe]
  %v6874 = vld [vmem:[%s4059 + $0x34] sm:$0x1]
  %v6875 = vld [vmem:[%s4059 + $0x38] sm:$0xe]
  %v6876 = vld [vmem:[%s4059 + $0x3c] sm:$0x1]
  %v6877 = vld [vmem:[%s4059 + $0x50] sm:$0xe]
  %v6878 = vld [vmem:[%s4059 + $0x54] sm:$0x1]
  %v6879 = vld [vmem:[%s4059 + $0x58] sm:$0xe]
  %v6880 = vld [vmem:[%s4059 + $0x5c] sm:$0x1]
  %v6881 = vld [vmem:[%s4059 + $0x60] sm:$0xe]
  %v6882 = vld [vmem:[%s4059 + $0x64] sm:$0x1]
  %v6883 = vld [vmem:[%s4059 + $0x68] sm:$0xe]
  %v6884 = vld [vmem:[%s4059 + $0x6c] sm:$0x1]
  %v6885 = vld [vmem:[%s4059 + $0x70] sm:$0xe]
  %v6886 = vld [vmem:[%s4059 + $0x74] sm:$0x1]
  %v6887 = vld [vmem:[%s4059 + $0x78] sm:$0xe]
  %v6888 = vld [vmem:[%s4059 + $0x7c] sm:$0x1]
  %v6889 = vld [vmem:[%s4059 + $0x80] sm:$0xe]
  %v6890 = vld [vmem:[%s4059 + $0x84] sm:$0x1]
  %v6891 = vld [vmem:[%s4059 + $0x88] sm:$0xe]
  %v6892 = vld [vmem:[%s4059 + $0x8c] sm:$0x1]
  %v6925 = vrot.slane %v6861, 5
  %v6926 = vrot.slane %v6925, 4
  %v6927 = vrot.slane %v6862, 5
  %v6928 = vsel %vm957, %v6926, %v6927
  %v6929 = vrot.slane %v6863, 5
  %v6930 = vrot.slane %v6929, 4
  %v6931 = vrot.slane %v6864, 5
  %v6932 = vsel %vm957, %v6930, %v6931
  %v6933 = vrot.slane %v6865, 5
  %v6934 = vrot.slane %v6933, 4
  %v6935 = vrot.slane %v6866, 5
  %v6936 = vsel %vm957, %v6934, %v6935
  %v6937 = vrot.slane %v6867, 5
  %v6938 = vrot.slane %v6937, 4
  %v6939 = vrot.slane %v6868, 5
  %v6940 = vsel %vm957, %v6938, %v6939
  %v6941 = vrot.slane %v6869, 5
  %v6942 = vrot.slane %v6941, 4
  %v6943 = vrot.slane %v6870, 5
  %v6944 = vsel %vm957, %v6942, %v6943
  %v6945 = vrot.slane %v6871, 5
  %v6946 = vrot.slane %v6945, 4
  %v6947 = vrot.slane %v6872, 5
  %v6948 = vsel %vm957, %v6946, %v6947
  %v6949 = vrot.slane %v6873, 5
  %v6950 = vrot.slane %v6949, 4
  %v6951 = vrot.slane %v6874, 5
  %v6952 = vsel %vm957, %v6950, %v6951
  %v6953 = vrot.slane %v6875, 5
  %v6954 = vrot.slane %v6953, 4
  %v6955 = vrot.slane %v6876, 5
  %v6956 = vsel %vm957, %v6954, %v6955
  %v6957 = vrot.slane %v6877, 5
  %v6958 = vrot.slane %v6957, 4
  %v6959 = vrot.slane %v6878, 5
  %v6960 = vsel %vm957, %v6958, %v6959
  %v6961 = vrot.slane %v6879, 5
  %v6962 = vrot.slane %v6961, 4
  %v6963 = vrot.slane %v6880, 5
  %v6964 = vsel %vm957, %v6962, %v6963
  %v6965 = vrot.slane %v6881, 5
  %v6966 = vrot.slane %v6965, 4
  %v6967 = vrot.slane %v6882, 5
  %v6968 = vsel %vm957, %v6966, %v6967
  %v6969 = vrot.slane %v6883, 5
  %v6970 = vrot.slane %v6969, 4
  %v6971 = vrot.slane %v6884, 5
  %v6972 = vsel %vm957, %v6970, %v6971
  %v6973 = vrot.slane %v6885, 5
  %v6974 = vrot.slane %v6973, 4
  %v6975 = vrot.slane %v6886, 5
  %v6976 = vsel %vm957, %v6974, %v6975
  %v6977 = vrot.slane %v6887, 5
  %v6978 = vrot.slane %v6977, 4
  %v6979 = vrot.slane %v6888, 5
  %v6980 = vsel %vm957, %v6978, %v6979
  %v6981 = vrot.slane %v6889, 5
  %v6982 = vrot.slane %v6981, 4
  %v6983 = vrot.slane %v6890, 5
  %v6984 = vsel %vm957, %v6982, %v6983
  %v6985 = vrot.slane %v6891, 5
  %v6986 = vrot.slane %v6985, 4
  %v6987 = vrot.slane %v6892, 5
  %v6988 = vsel %vm957, %v6986, %v6987
  %v6989 = vunpack.c.l.b16 %v6928
  %v6990 = vunpack.c.l.b16 %v6932
  %v6991 = vunpack.c.l.b16 %v6936
  %v6992 = vunpack.c.l.b16 %v6940
  %v6993 = vunpack.c.l.b16 %v6944
  %v6994 = vunpack.c.l.b16 %v6948
  %v6995 = vunpack.c.l.b16 %v6952
  %v6996 = vunpack.c.l.b16 %v6956
  %v6997 = vunpack.c.l.b16 %v6960
  %v6998 = vunpack.c.l.b16 %v6964
  %v6999 = vunpack.c.l.b16 %v6968
  %v7000 = vunpack.c.l.b16 %v6972
  %v7001 = vunpack.c.l.b16 %v6976
  %v7002 = vunpack.c.l.b16 %v6980
  %v7003 = vunpack.c.l.b16 %v6984
  %v7004 = vunpack.c.l.b16 %v6988
  %v7005 = vpack.c.b16 %v6990, %v6989
  %v7006 = vpack.c.b16 %v6992, %v6991
  %v7007 = vpack.c.b16 %v6994, %v6993
  %v7008 = vpack.c.b16 %v6996, %v6995
  %v7009 = vpack.c.b16 %v6998, %v6997
  %v7010 = vpack.c.b16 %v7000, %v6999
  %v7011 = vpack.c.b16 %v7002, %v7001
  %v7012 = vpack.c.b16 %v7004, %v7003
  %7013 = vrot.lane.b32.xlu0 %v7005, 64
  %v7014 = vpop.permute.xlu0 %7013
  %7015 = vrot.lane.b32.xlu0 %v7006, 64
  %v7016 = vpop.permute.xlu0 %7015
  %7017 = vrot.lane.b32.xlu0 %v7007, 64
  %v7018 = vpop.permute.xlu0 %7017
  %7019 = vrot.lane.b32.xlu0 %v7008, 64
  %v7020 = vpop.permute.xlu0 %7019
  %7021 = vrot.lane.b32.xlu0 %v7009, 64
  %v7022 = vpop.permute.xlu0 %7021
  %7023 = vrot.lane.b32.xlu0 %v7010, 64
  %v7024 = vpop.permute.xlu0 %7023
  %7025 = vrot.lane.b32.xlu0 %v7011, 64
  %v7026 = vpop.permute.xlu0 %7025
  %7027 = vrot.lane.b32.xlu0 %v7012, 64
  %v7028 = vpop.permute.xlu0 %7027
  %7037 = vst.msk [vmem:[#allocation5] sm:$0xff] %vm4638, %v7014
  %7038 = vst.msk [vmem:[#allocation5 + $0x8] sm:$0xff] %vm4638, %v7016
  %7039 = vst.msk [vmem:[#allocation5 + $0x10] sm:$0xff] %vm4638, %v7018
  %7040 = vst.msk [vmem:[#allocation5 + $0x18] sm:$0xff] %vm4638, %v7020
  %7041 = vst.msk [vmem:[#allocation5 + $0x20] sm:$0xff] %vm4638, %v7022
  %7042 = vst.msk [vmem:[#allocation5 + $0x28] sm:$0xff] %vm4638, %v7024
  %7043 = vst.msk [vmem:[#allocation5 + $0x30] sm:$0xff] %vm4638, %v7026
  %7044 = vst.msk [vmem:[#allocation5 + $0x38] sm:$0xff] %vm4638, %v7028
  %v7045 = vld [vmem:[#allocation5] sm:$0xff]
  %v7046 = vld [vmem:[#allocation5 + $0x8] sm:$0xff]
  %v7047 = vld [vmem:[#allocation5 + $0x10] sm:$0xff]
  %v7048 = vld [vmem:[#allocation5 + $0x18] sm:$0xff]
  %v7049 = vld [vmem:[#allocation5 + $0x20] sm:$0xff]
  %v7050 = vld [vmem:[#allocation5 + $0x28] sm:$0xff]
  %v7051 = vld [vmem:[#allocation5 + $0x30] sm:$0xff]
  %v7052 = vld [vmem:[#allocation5 + $0x38] sm:$0xff]
  %v7053 = vld [vmem:[%s7] sm:$0xf]
  %v7054 = vld [vmem:[%s7 + $0x4] sm:$0xf]
  %v7055 = vld [vmem:[%s7 + $0x8] sm:$0xf]
  %v7056 = vld [vmem:[%s7 + $0xc] sm:$0xf]
  %v7057 = vld [vmem:[%s7 + $0x10] sm:$0xf]
  %v7058 = vld [vmem:[%s7 + $0x14] sm:$0xf]
  %v7059 = vld [vmem:[%s7 + $0x18] sm:$0xf]
  %v7060 = vld [vmem:[%s7 + $0x1c] sm:$0xf]
  %v7061 = vld [vmem:[%s7 + $0x20] sm:$0xf]
  %v7071 = vunpack.c.l.b16 %v7053
  %v7072 = vunpack.c.l.b16 %v7054
  %v7073 = vunpack.c.l.b16 %v7055
  %v7074 = vunpack.c.l.b16 %v7056
  %v7075 = vunpack.c.l.b16 %v7057
  %v7076 = vunpack.c.l.b16 %v7058
  %v7077 = vunpack.c.l.b16 %v7059
  %v7078 = vunpack.c.l.b16 %v7060
  %v7079 = vunpack.c.l.b16 %v7061
  %v7080 = vpack.c.b16 %v7072, %v7071
  %v7081 = vpack.c.b16 %v7074, %v7073
  %v7082 = vpack.c.b16 %v7076, %v7075
  %v7083 = vpack.c.b16 %v7078, %v7077
  %v7084 = vpack.c.b16 %v7079, %v7079
  %v7090 = vsel %vm4691, %v7045, 0
  %v7093 = vsel %vm4691, %v7046, 0
  %v7096 = vsel %vm4691, %v7047, 0
  %v7099 = vsel %vm4691, %v7048, 0
  %v7102 = vsel %vm4691, %v7049, 0
  %v7105 = vsel %vm4691, %v7050, 0
  %v7108 = vsel %vm4691, %v7051, 0
  %v7111 = vsel %vm4691, %v7052, 0
  %v7114 = vsel %vm4716, %v7084, 0
  %7116 = vmatprep.subr.bf16.mxu0 0
  %7117 = vmatpush1.bf16.msra.mxu0 %v7080
  %7118 = vmatprep.subr.bf16.mxu0 0
  %7119 = vmatpush1.bf16.msra.mxu0 %v7081
  %7120 = vmatprep.subr.bf16.mxu0 0
  %7121 = vmatpush1.bf16.msra.mxu0 %v7082
  %7122 = vmatprep.subr.bf16.mxu0 0
  %7123 = vmatpush1.bf16.msra.mxu0 %v7083
  %7124 = vmatprep.subr.bf16.mxu0 0
  %7125 = vmatpush1.bf16.msra.mxu0 %v7114
  %7126 = vmatprep.subr.bf16.mxu0 0
  %7127 = vmatpush1.bf16.msra.mxu0 0
  %7128 = vmatprep.subr.bf16.mxu0 0
  %7129 = vmatpush1.bf16.msra.mxu0 0
  %7130 = vmatprep.subr.bf16.mxu0 0
  %7131 = vmatpush1.bf16.msra.mxu0 0
  %7132 = vmatprep.subr.bf16.mxu0 0
  %7133 = vmatpush1.bf16.msra.mxu0 0
  %7134 = vmatprep.subr.bf16.mxu0 0
  %7135 = vmatpush1.bf16.msra.mxu0 0
  %7136 = vmatprep.subr.bf16.mxu0 0
  %7137 = vmatpush1.bf16.msra.mxu0 0
  %7138 = vmatprep.subr.bf16.mxu0 0
  %7139 = vmatpush1.bf16.msra.mxu0 0
  %7140 = vmatprep.subr.bf16.mxu0 0
  %7141 = vmatpush1.bf16.msra.mxu0 0
  %7142 = vmatprep.subr.bf16.mxu0 0
  %7143 = vmatpush1.bf16.msra.mxu0 0
  %7144 = vmatprep.subr.bf16.mxu0 0
  %7145 = vmatpush1.bf16.msra.mxu0 0
  %7146 = vmatprep.subr.bf16.mxu0 0
  %7147 = vmatpush1.bf16.msra.mxu0 0
  %7148 = vmatprep.mubr.bf16.mxu0 0
  %7149 = vmatmul.mubr.bf16.gmra.mrb[0].mxu0 %v7090
  %v7150 = vpop.f32.mrb[0].mxu0
  %v7151 = vadd.f32 0.0, %v7150
  %v7152 = vpop.f32.mrb[0].mxu0
  %v7153 = vpop.f32.mrb[0].mxu0
  %v7154 = vadd.f32 0.0, %v7153
  %v7155 = vpop.f32.mrb[0].mxu0
  %7156 = vmatprep.mubr.bf16.mxu0 0
  %7157 = vmatmul.mubr.bf16.gmra.mrb[0].mxu0 %v7093
  %v7158 = vpop.f32.mrb[0].mxu0
  %v7159 = vadd.f32 0.0, %v7158
  %v7160 = vpop.f32.mrb[0].mxu0
  %v7161 = vpop.f32.mrb[0].mxu0
  %v7162 = vadd.f32 0.0, %v7161
  %v7163 = vpop.f32.mrb[0].mxu0
  %7164 = vmatprep.mubr.bf16.mxu0 0
  %7165 = vmatmul.mubr.bf16.gmra.mrb[0].mxu0 %v7096
  %v7166 = vpop.f32.mrb[0].mxu0
  %v7167 = vadd.f32 0.0, %v7166
  %v7168 = vpop.f32.mrb[0].mxu0
  %v7169 = vpop.f32.mrb[0].mxu0
  %v7170 = vadd.f32 0.0, %v7169
  %v7171 = vpop.f32.mrb[0].mxu0
  %7172 = vmatprep.mubr.bf16.mxu0 0
  %7173 = vmatmul.mubr.bf16.gmra.mrb[0].mxu0 %v7099
  %v7174 = vpop.f32.mrb[0].mxu0
  %v7175 = vadd.f32 0.0, %v7174
  %v7176 = vpop.f32.mrb[0].mxu0
  %v7177 = vpop.f32.mrb[0].mxu0
  %v7178 = vadd.f32 0.0, %v7177
  %v7179 = vpop.f32.mrb[0].mxu0
  %7180 = vmatprep.mubr.bf16.mxu0 0
  %7181 = vmatmul.mubr.bf16.gmra.mrb[0].mxu0 %v7102
  %v7182 = vpop.f32.mrb[0].mxu0
  %v7183 = vadd.f32 0.0, %v7182
  %v7184 = vpop.f32.mrb[0].mxu0
  %v7185 = vpop.f32.mrb[0].mxu0
  %v7186 = vadd.f32 0.0, %v7185
  %v7187 = vpop.f32.mrb[0].mxu0
  %7188 = vmatprep.mubr.bf16.mxu0 0
  %7189 = vmatmul.mubr.bf16.gmra.mrb[0].mxu0 %v7105
  %v7190 = vpop.f32.mrb[0].mxu0
  %v7191 = vadd.f32 0.0, %v7190
  %v7192 = vpop.f32.mrb[0].mxu0
  %v7193 = vpop.f32.mrb[0].mxu0
  %v7194 = vadd.f32 0.0, %v7193
  %v7195 = vpop.f32.mrb[0].mxu0
  %7196 = vmatprep.mubr.bf16.mxu0 0
  %7197 = vmatmul.mubr.bf16.gmra.mrb[0].mxu0 %v7108
  %v7198 = vpop.f32.mrb[0].mxu0
  %v7199 = vadd.f32 0.0, %v7198
  %v7200 = vpop.f32.mrb[0].mxu0
  %v7201 = vpop.f32.mrb[0].mxu0
  %v7202 = vadd.f32 0.0, %v7201
  %v7203 = vpop.f32.mrb[0].mxu0
  %7204 = vmatprep.mubr.bf16.mxu0 0
  %7205 = vmatmul.mubr.bf16.gmra.mrb[0].mxu0 %v7111
  %v7206 = vpop.f32.mrb[0].mxu0
  %v7207 = vadd.f32 0.0, %v7206
  %v7208 = vpop.f32.mrb[0].mxu0
  %v7209 = vpop.f32.mrb[0].mxu0
  %v7210 = vadd.f32 0.0, %v7209
  %v7211 = vpop.f32.mrb[0].mxu0
  %7212 = vdwg.mxu0
  %v7213 = vsel %vm2408, %v7151, 0.0
  %v7214 = vsel %vm2408, %v7154, 0.0
  %v7215 = vadd.f32 %v7213, %v7214
  %v7216 = vsel %vm2408, %v7159, 0.0
  %v7217 = vadd.f32 %v7215, %v7216
  %v7218 = vsel %vm2408, %v7162, 0.0
  %v7219 = vadd.f32 %v7217, %v7218
  %v7220 = vsel %vm2408, %v7167, 0.0
  %v7221 = vadd.f32 %v7219, %v7220
  %v7222 = vsel %vm2408, %v7170, 0.0
  %v7223 = vadd.f32 %v7221, %v7222
  %v7224 = vsel %vm2408, %v7175, 0.0
  %v7225 = vadd.f32 %v7223, %v7224
  %v7226 = vsel %vm2408, %v7178, 0.0
  %v7227 = vadd.f32 %v7225, %v7226
  %v7228 = vsel %vm2408, %v7183, 0.0
  %v7229 = vadd.f32 %v7227, %v7228
  %v7230 = vsel %vm2408, %v7186, 0.0
  %v7231 = vadd.f32 %v7229, %v7230
  %v7232 = vsel %vm2408, %v7191, 0.0
  %v7233 = vadd.f32 %v7231, %v7232
  %v7234 = vsel %vm2408, %v7194, 0.0
  %v7235 = vadd.f32 %v7233, %v7234
  %v7236 = vsel %vm2408, %v7199, 0.0
  %v7237 = vadd.f32 %v7235, %v7236
  %v7238 = vsel %vm2408, %v7202, 0.0
  %v7239 = vadd.f32 %v7237, %v7238
  %v7240 = vsel %vm2408, %v7207, 0.0
  %v7241 = vadd.f32 %v7239, %v7240
  %v7242 = vsel %vm2408, %v7210, 0.0
  %v7243 = vadd.f32 %v7241, %v7242
  %v7244 = vrot.slane %v7243, 4
  %v7245 = vadd.f32 %v7243, %v7244
  %v7246 = vrot.slane %v7245, 2
  %v7247 = vadd.f32 %v7245, %v7246
  %v7248 = vrot.slane %v7247, 1
  %v7249 = vadd.f32 %v7247, %v7248
  %v7250 = vmul.f32 %v7249, 0.0078125
  %v7251 = vsub.f32 %v7151, %v7250
  %v7252 = vsub.f32 %v7154, %v7250
  %v7253 = vsub.f32 %v7159, %v7250
  %v7254 = vsub.f32 %v7162, %v7250
  %v7255 = vsub.f32 %v7167, %v7250
  %v7256 = vsub.f32 %v7170, %v7250
  %v7257 = vsub.f32 %v7175, %v7250
  %v7258 = vsub.f32 %v7178, %v7250
  %v7259 = vsub.f32 %v7183, %v7250
  %v7260 = vsub.f32 %v7186, %v7250
  %v7261 = vsub.f32 %v7191, %v7250
  %v7262 = vsub.f32 %v7194, %v7250
  %v7263 = vsub.f32 %v7199, %v7250
  %v7264 = vsub.f32 %v7202, %v7250
  %v7265 = vsub.f32 %v7207, %v7250
  %v7266 = vsub.f32 %v7210, %v7250
  %v7267 = vmul.f32 %v7251, %v7251
  %v7268 = vmul.f32 %v7252, %v7252
  %v7269 = vmul.f32 %v7253, %v7253
  %v7270 = vmul.f32 %v7254, %v7254
  %v7271 = vmul.f32 %v7255, %v7255
  %v7272 = vmul.f32 %v7256, %v7256
  %v7273 = vmul.f32 %v7257, %v7257
  %v7274 = vmul.f32 %v7258, %v7258
  %v7275 = vmul.f32 %v7259, %v7259
  %v7276 = vmul.f32 %v7260, %v7260
  %v7277 = vmul.f32 %v7261, %v7261
  %v7278 = vmul.f32 %v7262, %v7262
  %v7279 = vmul.f32 %v7263, %v7263
  %v7280 = vmul.f32 %v7264, %v7264
  %v7281 = vmul.f32 %v7265, %v7265
  %v7282 = vmul.f32 %v7266, %v7266
  %v7283 = vsel %vm2408, %v7267, 0.0
  %v7284 = vsel %vm2408, %v7268, 0.0
  %v7285 = vadd.f32 %v7283, %v7284
  %v7286 = vsel %vm2408, %v7269, 0.0
  %v7287 = vadd.f32 %v7285, %v7286
  %v7288 = vsel %vm2408, %v7270, 0.0
  %v7289 = vadd.f32 %v7287, %v7288
  %v7290 = vsel %vm2408, %v7271, 0.0
  %v7291 = vadd.f32 %v7289, %v7290
  %v7292 = vsel %vm2408, %v7272, 0.0
  %v7293 = vadd.f32 %v7291, %v7292
  %v7294 = vsel %vm2408, %v7273, 0.0
  %v7295 = vadd.f32 %v7293, %v7294
  %v7296 = vsel %vm2408, %v7274, 0.0
  %v7297 = vadd.f32 %v7295, %v7296
  %v7298 = vsel %vm2408, %v7275, 0.0
  %v7299 = vadd.f32 %v7297, %v7298
  %v7300 = vsel %vm2408, %v7276, 0.0
  %v7301 = vadd.f32 %v7299, %v7300
  %v7302 = vsel %vm2408, %v7277, 0.0
  %v7303 = vadd.f32 %v7301, %v7302
  %v7304 = vsel %vm2408, %v7278, 0.0
  %v7305 = vadd.f32 %v7303, %v7304
  %v7306 = vsel %vm2408, %v7279, 0.0
  %v7307 = vadd.f32 %v7305, %v7306
  %v7308 = vsel %vm2408, %v7280, 0.0
  %v7309 = vadd.f32 %v7307, %v7308
  %v7310 = vsel %vm2408, %v7281, 0.0
  %v7311 = vadd.f32 %v7309, %v7310
  %v7312 = vsel %vm2408, %v7282, 0.0
  %v7313 = vadd.f32 %v7311, %v7312
  %v7314 = vrot.slane %v7313, 4
  %v7315 = vadd.f32 %v7313, %v7314
  %v7316 = vrot.slane %v7315, 2
  %v7317 = vadd.f32 %v7315, %v7316
  %v7318 = vrot.slane %v7317, 1
  %v7319 = vadd.f32 %v7317, %v7318
  %v7320 = vmul.f32 %v7319, 0.0078125
  %v7321 = vmax.f32 %v7320, 0.0
  %v7322 = vadd.f32 %v7321, 1e-05
  %v7323 = vrsqrt.pop %v7322
  %v7324 = vmul.f32 %v7323, %v5307
  %v7325 = vlaneseq
  %v7326 = vshrl.u32 %v7325, 7
  %v7327 = vsub.s32 0, %v7326
  %v7328 = vrot.slane %v7324, %v7327
  %v7329 = vmul.f32 %v7251, %v7328
  %v7330 = vmul.f32 %v7252, %v7328
  %v7331 = vmul.f32 %v7253, %v7328
  %v7332 = vmul.f32 %v7254, %v7328
  %v7333 = vmul.f32 %v7255, %v7328
  %v7334 = vmul.f32 %v7256, %v7328
  %v7335 = vmul.f32 %v7257, %v7328
  %v7336 = vmul.f32 %v7258, %v7328
  %v7337 = vmul.f32 %v7259, %v7328
  %v7338 = vmul.f32 %v7260, %v7328
  %v7339 = vmul.f32 %v7261, %v7328
  %v7340 = vmul.f32 %v7262, %v7328
  %v7341 = vmul.f32 %v7263, %v7328
  %v7342 = vmul.f32 %v7264, %v7328
  %v7343 = vmul.f32 %v7265, %v7328
  %v7344 = vmul.f32 %v7266, %v7328
  %v7346 = vlaneseq
  %v7347 = vshrl.u32 %v7346, 7
  %v7348 = vsub.s32 0, %v7347
  %v7349 = vrot.slane %v5308, %v7348
  %v7351 = vadd.f32 %v7329, %v7349
  %v7352 = vadd.f32 %v7330, %v7349
  %v7353 = vadd.f32 %v7331, %v7349
  %v7354 = vadd.f32 %v7332, %v7349
  %v7355 = vadd.f32 %v7333, %v7349
  %v7356 = vadd.f32 %v7334, %v7349
  %v7357 = vadd.f32 %v7335, %v7349
  %v7358 = vadd.f32 %v7336, %v7349
  %v7359 = vadd.f32 %v7337, %v7349
  %v7360 = vadd.f32 %v7338, %v7349
  %v7361 = vadd.f32 %v7339, %v7349
  %v7362 = vadd.f32 %v7340, %v7349
  %v7363 = vadd.f32 %v7341, %v7349
  %v7364 = vadd.f32 %v7342, %v7349
  %v7365 = vadd.f32 %v7343, %v7349
  %v7366 = vadd.f32 %v7344, %v7349
  %v7367 = vmax.f32 %v7351, 0.0
  %v7368 = vmax.f32 %v7352, 0.0
  %v7369 = vmax.f32 %v7353, 0.0
  %v7370 = vmax.f32 %v7354, 0.0
  %v7371 = vmax.f32 %v7355, 0.0
  %v7372 = vmax.f32 %v7356, 0.0
  %v7373 = vmax.f32 %v7357, 0.0
  %v7374 = vmax.f32 %v7358, 0.0
  %v7375 = vmax.f32 %v7359, 0.0
  %v7376 = vmax.f32 %v7360, 0.0
  %v7377 = vmax.f32 %v7361, 0.0
  %v7378 = vmax.f32 %v7362, 0.0
  %v7379 = vmax.f32 %v7363, 0.0
  %v7380 = vmax.f32 %v7364, 0.0
  %v7381 = vmax.f32 %v7365, 0.0
  %v7382 = vmax.f32 %v7366, 0.0
  %7383 = vst.msk [vmem:[%s10] sm:$0xff] %vm2408, %v7367
  %7384 = vst.msk [vmem:[%s10 + $0x8] sm:$0xff] %vm2408, %v7368
  %7385 = vst.msk [vmem:[%s10 + $0x10] sm:$0xff] %vm2408, %v7369
  %7386 = vst.msk [vmem:[%s10 + $0x18] sm:$0xff] %vm2408, %v7370
  %7387 = vst.msk [vmem:[%s10 + $0x20] sm:$0xff] %vm2408, %v7371
  %7388 = vst.msk [vmem:[%s10 + $0x28] sm:$0xff] %vm2408, %v7372
  %7389 = vst.msk [vmem:[%s10 + $0x30] sm:$0xff] %vm2408, %v7373
  %7390 = vst.msk [vmem:[%s10 + $0x38] sm:$0xff] %vm2408, %v7374
  %7391 = vst.msk [vmem:[%s10 + $0x40] sm:$0xff] %vm2408, %v7375
  %7392 = vst.msk [vmem:[%s10 + $0x48] sm:$0xff] %vm2408, %v7376
  %7393 = vst.msk [vmem:[%s10 + $0x50] sm:$0xff] %vm2408, %v7377
  %7394 = vst.msk [vmem:[%s10 + $0x58] sm:$0xff] %vm2408, %v7378
  %7395 = vst.msk [vmem:[%s10 + $0x60] sm:$0xff] %vm2408, %v7379
  %7396 = vst.msk [vmem:[%s10 + $0x68] sm:$0xff] %vm2408, %v7380
  %7397 = vst.msk [vmem:[%s10 + $0x70] sm:$0xff] %vm2408, %v7381
  %7398 = vst.msk [vmem:[%s10 + $0x78] sm:$0xff] %vm2408, %v7382
  // Predicated region
  $region42: #{unet_down_block_forward.1} parent=0 // pred_check
    _
  $region43: #{unet_down_block_forward.1} parent=0 // pred_check_branch
    %7400 = sbr.rel (0) target = $region45
  $region44: #{unet_down_block_forward.1} parent=0 // pred_region
    _
  $region45: #{unet_down_block_forward.1} parent=0 // pred_fallthru
    _
  // Predicated region
  $region46: #{unet_down_block_forward.1} parent=0 // pred_check
    _
  $region47: #{unet_down_block_forward.1} parent=0 // pred_check_branch
    %7402 = sbr.rel (0) target = $region49
  $region48: #{unet_down_block_forward.1} parent=0 // pred_region
    _
  $region49: #{unet_down_block_forward.1} parent=0 // pred_fallthru
    _

</llo_original>
